<compile_context>
chip_gen: v5e
topology: v5e:2x2
jax: 0.10.0
libtpu: 0.0.40
codegen_flags: <defaults>
</compile_context>

<pallas_src>
import functools
import math

import jax
import jax.numpy as jnp
import numpy as np
from jax.experimental import pallas as pl
from jax.experimental.pallas import tpu as pltpu

LN_EPS = 1e-5
BN_EPS = 1e-5
_HI = jax.lax.Precision.HIGHEST


def _row_of(b, t, B, N):
    """Row index of token t of batch b inside the stacked (R, C) slab."""
    return b * N + t if t < N else B * N + (t - N) * B + b


def _batch_of_row(r, B, N):
    return r // N if r < B * N else (r - B * N) % B


# ----------------------------------------------------------------------------
# host-side packing
# ----------------------------------------------------------------------------
def _pack_rows(entries, width):
    """Stack (name, array) row-wise into one (rows, width) f32 slab.

    Multi-row entries are aligned to an 8-row (sublane) boundary so the static
    in-kernel slices stay tile-aligned. Returns (slab, {name: (offset, rows)}).
    """
    parts, offs, cur = [], {}, 0
    for name, a in entries:
        a = jnp.asarray(a, jnp.float32)
        if a.ndim == 1:
            a = a[None, :]
        if a.shape[0] > 1 and cur % 8:
            pad = 8 - cur % 8
            parts.append(jnp.zeros((pad, width), jnp.float32))
            cur += pad
        if a.shape[1] < width:
            a = jnp.pad(a, ((0, 0), (0, width - a.shape[1])))
        offs[name] = (cur, a.shape[0])
        parts.append(a)
        cur += a.shape[0]
    return jnp.concatenate(parts, axis=0), offs


def _prepare_inputs(x, params, dims):
    """Host-side constant folding + packing of all kernel inputs into 8 slabs."""
    B, N, C, H, Dh = (dims[k] for k in ("B", "N", "C", "H", "Dh"))
    inner, hidden, K = dims["inner"], dims["hidden"], dims["K"]
    BN, BH = B * N, B * H
    T = N + H
    R = B * T
    HR = H * R

    # --- averaging / selection constants (numpy, compile-time) ---
    avg_c = np.full((C, C), 1.0 / C, np.float32)              # LN stats on the MXU
    avg_bn = np.full((BN, BN), 1.0 / BN, np.float32)          # BN stats on the MXU

    grp = (np.arange(C)[:, None] // Dh) == (np.arange(C)[None, :] // Dh)
    grp_avg = grp.astype(np.float32) / float(Dh)              # grouped-LN stats

    rep_avg = np.zeros((BH, BN), np.float32)                  # row h*B+b: batch-b token mean
    headmask_ht = np.zeros((BH, C), np.float32)               # head-h lanes for row h*B+b
    kv_headmask = np.zeros((HR, C), np.float32)               # head-h lanes for K/V block h
    for h in range(H):
        for b in range(B):
            rep_avg[h * B + b, b * N:(b + 1) * N] = 1.0 / N
        headmask_ht[h * B:(h + 1) * B, h * Dh:(h + 1) * Dh] = 1.0
        kv_headmask[h * R:(h + 1) * R, h * Dh:(h + 1) * Dh] = 1.0

    # additive bias killing cross-batch attention, tiled over the H head blocks
    row_batch = np.array([_batch_of_row(r, B, N) for r in range(R)])
    bias = np.where(row_batch[:, None] == row_batch[None, :], 0.0, -1e9).astype(np.float32)
    bias_all = np.tile(bias, (1, H))                          # (R, H*R)
    # per-head softmax denominator via one block-diagonal ones matmul
    segsum = np.kron(np.eye(H, dtype=np.float32), np.ones((R, R), np.float32))

    # cls/patch/ht recombination (cls += mean(patch) + mean(ht)) as a matmul
    sel = np.zeros((BN, R), np.float32)
    for b in range(B):
        sel[b * N, _row_of(b, 0, B, N)] += 1.0
        for j in range(1, N):
            sel[b * N, _row_of(b, j, B, N)] += 1.0 / (N - 1)
        for j in range(H):
            sel[b * N, _row_of(b, N + j, B, N)] += 1.0 / H
        for i in range(1, N):
            sel[b * N + i, _row_of(b, i, B, N)] += 1.0

    # depthwise conv as shift-select / tap-multiply / sum matmuls.  Only the
    # 2N-1 taps that can touch real rows are kept; batch-boundary validity is
    # folded into the 0/1 shift matrix.
    pad_l = K // 2
    pad_r = pad_l - (K + 1) % 2
    s_lo = max(-pad_l, -(N - 1))
    s_hi = min(pad_r, N - 1)
    n_taps = s_hi - s_lo + 1
    conv_shift = np.zeros((n_taps * BN, BN), np.float32)
    conv_sum = np.zeros((BN, n_taps * BN), np.float32)
    for j in range(n_taps):
        s = s_lo + j
        for r in range(BN):
            if 0 <= (r % N) + s < N:
                conv_shift[j * BN + r, r + s] = 1.0
            conv_sum[r, j * BN + r] = 1.0
    tap = jnp.repeat(params["dw_w"][pad_l + s_lo:pad_l + s_hi + 1], BN, axis=0)

    # --- parameter-derived pieces ---
    htn_g = jnp.tile(params["htn_g_raw"], H)                  # grouped-LN gamma, (C,)
    htn_b = jnp.tile(params["htn_b_raw"], H)
    pos_emb = jnp.repeat(params["pos_emb"], B, axis=0)        # rows h*B + b
    htp_tiled = jnp.tile(params["htp_w"], (H, 1))             # (C, C): rows h*Dh+d = htp_w[d]

    # --- packed slabs ---
    s32, l32 = _pack_rows([
        ("ln1_g", params["ln1_g"]), ("ln1_b", params["ln1_b"]),
        ("ff1_b2", params["ff1_b2"]),
        ("lna_g", params["lna_g"]), ("lna_b", params["lna_b"]),
        ("htp_b", params["htp_b"]), ("htn_g", htn_g), ("htn_b", htn_b),
        ("proj_b", params["proj_b"]),
        ("lnc_g", params["lnc_g"]), ("lnc_b", params["lnc_b"]),
        ("pw2_b", params["pw2_b"]),
        ("ln2_g", params["ln2_g"]), ("ln2_b", params["ln2_b"]),
        ("ff2_b2", params["ff2_b2"]),
        ("pn_g", params["pn_g"]), ("pn_b", params["pn_b"]),
        ("pos_emb", pos_emb),
        ("avg_c", avg_c), ("grp_avg", grp_avg), ("htp_tiled", htp_tiled),
        ("headmask_ht", headmask_ht), ("kv_headmask", kv_headmask),
        ("ff1_w2", params["ff1_w2"]), ("ff2_w2", params["ff2_w2"]),
        ("pw2_w", params["pw2_w"]), ("proj_w", params["proj_w"]),
    ], C)

    s128, l128 = _pack_rows([
        ("ff1_w1", params["ff1_w1"]), ("pw1_w", params["pw1_w"]),
        ("ff2_w1", params["ff2_w1"]),
        ("ff1_b1", params["ff1_b1"]), ("pw1_b", params["pw1_b"]),
        ("ff2_b1", params["ff2_b1"]),
    ], max(hidden, 2 * inner))

    s96, l96 = _pack_rows([
        ("qkv_w", params["qkv_w"]), ("bias_all", bias_all), ("segsum", segsum),
    ], max(3 * C, HR))

    s16, l16 = _pack_rows([
        ("conv_shift", conv_shift), ("rep_avg", rep_avg), ("avg_bn", avg_bn),
    ], BN)

    s64, l64 = _pack_rows([
        ("tap", tap), ("dw_b", params["dw_b"]),
        ("bn_g", params["bn_g"]), ("bn_b", params["bn_b"]),
    ], inner)

    args = (x.reshape(BN, C).astype(jnp.float32), s32, s128, s96, s16, s64,
            jnp.asarray(sel), jnp.asarray(conv_sum))
    layout = {"s32": l32, "s128": l128, "s96": l96, "s16": l16, "s64": l64}
    return args, layout


# ----------------------------------------------------------------------------
# kernel
# ----------------------------------------------------------------------------
def _conformer_kernel(dims, lay, x_ref, s32_ref, s128_ref, s96_ref, s16_ref,
                      s64_ref, sel_ref, csum_ref, out_ref, attn_ref):
    B, N, C, H, Dh = (dims[k] for k in ("B", "N", "C", "H", "Dh"))
    inner, hidden = dims["inner"], dims["hidden"]
    R = B * (N + H)
    HR = H * R
    scale = Dh ** -0.5

    def rd(ref, ld, name, cols=None):
        off, rows = ld[name]
        v = ref[off:off + rows, :]                     # static, 8-aligned slice
        return v if cols is None or cols == v.shape[1] else v[:, :cols]

    r32 = functools.partial(rd, s32_ref, lay["s32"])
    r128 = functools.partial(rd, s128_ref, lay["s128"])
    r96 = functools.partial(rd, s96_ref, lay["s96"])
    r16 = functools.partial(rd, s16_ref, lay["s16"])
    r64 = functools.partial(rd, s64_ref, lay["s64"])

    def dot(a, b):
        return jnp.dot(a, b, preferred_element_type=jnp.float32)

    def dot_hi(a, b):
        # exact-precision MXU pass for statistics / selection / softmax-sum matmuls
        return jnp.dot(a, b, preferred_element_type=jnp.float32, precision=_HI)

    avg_c = r32("avg_c")

    def layernorm(x, g, b):
        mu = dot_hi(x, avg_c)                          # lane-broadcast row mean (MXU)
        cen = x - mu
        var = dot_hi(cen * cen, avg_c)                 # centered variance (MXU)
        return cen * jax.lax.rsqrt(var + LN_EPS) * r32(g) + r32(b)

    def sigmoid(x):
        # numerically stable; 1/(1+z) via the EUP (approx reciprocal).
        z = jnp.exp(-jnp.abs(x))
        r = pl.reciprocal(1.0 + z, approx=True)
        return jnp.where(x >= 0.0, r, z * r)

    def swish(x):
        return x * sigmoid(x)

    def erf_poly(x):
        # TODO(synk): exact lax.erf has no Mosaic lowering; A&S 7.1.26 polynomial
        # (|err| < 1.5e-7) built from exp/mul/add is used instead.
        s = jnp.where(x >= 0.0, 1.0, -1.0)
        ax = jnp.abs(x)
        t = 1.0 / (1.0 + 0.3275911 * ax)
        poly = t * (0.254829592 + t * (-0.284496736 + t * (1.421413741
                    + t * (-1.453152027 + t * 1.061405429))))
        return s * (1.0 - poly * jnp.exp(-ax * ax))

    def gelu(x):
        return 0.5 * x * (1.0 + erf_poly(x * (1.0 / math.sqrt(2.0))))

    def feed_forward(x, w1, b1, w2, b2):
        h = swish(dot(x, r128(w1, hidden)) + r128(b1, hidden))
        return dot(h, r32(w2)) + r32(b2)

    x0 = x_ref[...]                                            # (B*N, C)

    # ---- ff1: Scale(0.5, PreNorm(FeedForward)) + residual ----
    x1 = 0.5 * feed_forward(layernorm(x0, "ln1_g", "ln1_b"),
                            "ff1_w1", "ff1_b1", "ff1_w2", "ff1_b2") + x0

    # ---- attention: PreNorm(Attention) + residual ----
    xa = layernorm(x1, "lna_g", "lna_b")                       # (B*N, C)

    # head tokens: batch token mean replicated per head (one matmul), masked to
    # that head's lanes, through the H-tiled ht_proj -> grouped LN -> GELU.
    tm = dot_hi(r16("rep_avg"), xa)                            # (B*H, C)
    hv = dot(tm * r32("headmask_ht"), r32("htp_tiled")) + r32("htp_b")
    grp = r32("grp_avg")
    gcen = hv - dot_hi(hv, grp)
    gvar = dot_hi(gcen * gcen, grp)
    hn = gcen * jax.lax.rsqrt(gvar + LN_EPS) * r32("htn_g") + r32("htn_b")
    xht = gelu(hn) + r32("pos_emb")                            # (B*H, C)

    # stacked token slab: [patch tokens (B*N rows); head tokens (B*H rows)]
    xall = jnp.concatenate([xa, xht], axis=0)                  # (R, C)
    qkv = dot(xall, r96("qkv_w", 3 * C))                       # (R, 3C) -- one matmul
    q = qkv[:, :C]
    k = qkv[:, C:2 * C]
    v = qkv[:, 2 * C:3 * C]

    # single lane-stacked attention pass over all H heads:
    #  K/V stacked per head & masked to that head's lanes; one (R, H*R) logits
    #  matrix with a host-built additive cross-batch bias; one global-max
    #  softmax whose per-head denominators come from a block-diagonal matmul.
    kv_mask = r32("kv_headmask")                               # (H*R, C)
    k_stack = jnp.concatenate([k] * H, axis=0) * kv_mask
    v_stack = jnp.concatenate([v] * H, axis=0) * kv_mask
    logits = jax.lax.dot_general(q, k_stack, (((1,), (1,)), ((), ())),
                                 preferred_element_type=jnp.float32)
    logits = logits * scale + r96("bias_all", HR)              # cross-batch -> -1e9
    e = jnp.exp(logits - jnp.max(logits, axis=-1, keepdims=True))
    denom = dot_hi(e, r96("segsum", HR))                       # per-head row sums
    probs = e * pl.reciprocal(denom, approx=True)
    attn_ref[...] = probs                                      # single (R, H*R) store

    o = dot(probs, v_stack)                                    # heads land in own lanes
    o = dot(o, r32("proj_w")) + r32("proj_b")                  # (R, C)
    x2 = dot_hi(sel_ref[...], o) + x1                          # cls/patch/ht recombination

    # ---- conv module: LN -> pointwise -> GLU -> depthwise -> BN -> Swish -> pointwise ----
    xc = layernorm(x2, "lnc_g", "lnc_b")
    y = dot(xc, r128("pw1_w", 2 * inner)) + r128("pw1_b", 2 * inner)
    glu = y[:, :inner] * sigmoid(y[:, inner:2 * inner])        # (B*N, inner)

    # depthwise conv as two MXU matmuls:
    #   shifted[j*BN + r] = glu[r + s_j] (0 across batch edges), x tap weight,
    #   then a 0/1 summing matmul collapses the taps per output row.
    shifted = dot_hi(r16("conv_shift"), glu)                   # (n_taps*B*N, inner)
    ydw = dot_hi(csum_ref[...], shifted * r64("tap")) + r64("dw_b")

    # BatchNorm1d (training-mode biased batch stats over (B, N)) via MXU matmuls.
    avg_bn = r16("avg_bn")
    cb = ydw - dot_hi(avg_bn, ydw)
    bvar = dot_hi(avg_bn, cb * cb)
    yn = cb * jax.lax.rsqrt(bvar + BN_EPS) * r64("bn_g") + r64("bn_b")
    x3 = dot(swish(yn), r32("pw2_w")) + r32("pw2_b") + x2

    # ---- ff2: Scale(0.5, PreNorm(FeedForward)) + residual, then post-norm ----
    x4 = 0.5 * feed_forward(layernorm(x3, "ln2_g", "ln2_b"),
                            "ff2_w1", "ff2_b1", "ff2_w2", "ff2_b2") + x3
    out_ref[...] = layernorm(x4, "pn_g", "pn_b")               # single (B*N, C) store


# ----------------------------------------------------------------------------
# wrapper
# ----------------------------------------------------------------------------
def conformer_block_pallas(x, params, dims):
    B, N, C, H = dims["B"], dims["N"], dims["C"], dims["H"]
    T = N + H
    R = B * T

    args, layout = _prepare_inputs(x, params, dims)
    vmem = pl.BlockSpec(memory_space=pltpu.MemorySpace.VMEM)
    kernel = functools.partial(_conformer_kernel, dims, layout)

    out2d, attn_raw = pl.pallas_call(
        kernel,
        out_shape=(jax.ShapeDtypeStruct((B * N, C), jnp.float32),
                   jax.ShapeDtypeStruct((R, H * R), jnp.float32)),
        in_specs=[vmem] * len(args),
        out_specs=(vmem, vmem),
    )(*args)

    out = out2d.reshape(B, N, C)
    # lane-stacked per-head probs -> (B, H, T, T); cheap host-side gather.
    A = attn_raw.reshape(R, H, R)
    idx = np.array([[_row_of(b, t, B, N) for t in range(T)] for b in range(B)])
    attn = jnp.stack(
        [A[idx[b]][:, :, idx[b]].transpose(1, 0, 2) for b in range(B)], axis=0)
    return out, attn


# ----------------------------------------------------------------------------
# params + pure-JAX reference
# ----------------------------------------------------------------------------
def init_params(key, dims):
    C, H, Dh, inner, K, hidden = (dims[k] for k in ("C", "H", "Dh", "inner", "K", "hidden"))
    keys = iter(jax.random.split(key, 64))

    def w(shape, s=0.1):
        return (s * jax.random.normal(next(keys), shape)).astype(jnp.float32)

    def gamma(n):
        return (1.0 + 0.05 * jax.random.normal(next(keys), (1, n))).astype(jnp.float32)

    def beta(n):
        return (0.05 * jax.random.normal(next(keys), (1, n))).astype(jnp.float32)

    p = {}
    p["ln1_g"], p["ln1_b"] = gamma(C), beta(C)
    p["ff1_w1"], p["ff1_b1"] = w((C, hidden)), w((1, hidden))
    p["ff1_w2"], p["ff1_b2"] = w((hidden, C)), w((1, C))
    p["lna_g"], p["lna_b"] = gamma(C), beta(C)
    p["qkv_w"] = w((C, 3 * C))
    p["proj_w"], p["proj_b"] = w((C, C)), w((1, C))
    p["htp_w"], p["htp_b"] = w((Dh, C)), w((1, C))
    p["htn_g_raw"] = (1.0 + 0.05 * jax.random.normal(next(keys), (Dh,))).astype(jnp.float32)
    p["htn_b_raw"] = (0.05 * jax.random.normal(next(keys), (Dh,))).astype(jnp.float32)
    p["pos_emb"] = w((H, C), s=0.02)
    p["lnc_g"], p["lnc_b"] = gamma(C), beta(C)
    p["pw1_w"], p["pw1_b"] = w((C, 2 * inner)), w((1, 2 * inner))
    p["dw_w"], p["dw_b"] = w((K, inner)), w((1, inner))
    p["bn_g"], p["bn_b"] = gamma(inner), beta(inner)
    p["pw2_w"], p["pw2_b"] = w((inner, C)), w((1, C))
    p["ln2_g"], p["ln2_b"] = gamma(C), beta(C)
    p["ff2_w1"], p["ff2_b1"] = w((C, hidden)), w((1, hidden))
    p["ff2_w2"], p["ff2_b2"] = w((hidden, C)), w((1, C))
    p["pn_g"], p["pn_b"] = gamma(C), beta(C)
    return p


def conformer_block_reference(x, p, dims):
    """Pure-JAX mirror of the PyTorch forward (for validation)."""
    B, N, C = x.shape
    H, Dh, inner, K = dims["H"], dims["Dh"], dims["inner"], dims["K"]
    T = N + H
    scale = Dh ** -0.5

    def ln(v, g, b):
        g = g.reshape(-1); b = b.reshape(-1)
        mu = v.mean(-1, keepdims=True)
        var = ((v - mu) ** 2).mean(-1, keepdims=True)
        return (v - mu) / jnp.sqrt(var + LN_EPS) * g + b

    def swish(v):
        return v * jax.nn.sigmoid(v)

    def ff(v, w1, b1, w2, b2):
        return swish(v @ w1 + b1.reshape(-1)) @ w2 + b2.reshape(-1)

    x1 = 0.5 * ff(ln(x, p["ln1_g"], p["ln1_b"]),
                  p["ff1_w1"], p["ff1_b1"], p["ff1_w2"], p["ff1_b2"]) + x

    xa = ln(x1, p["lna_g"], p["lna_b"])
    x_ = xa.reshape(B, N, H, Dh).transpose(0, 2, 1, 3).mean(axis=2)
    x_ = (x_ @ p["htp_w"] + p["htp_b"].reshape(-1)).reshape(B, H, H, Dh)
    x_ = jax.nn.gelu(ln(x_, p["htn_g_raw"], p["htn_b_raw"]), approximate=False)
    x_ = x_.reshape(B, H, C) + p["pos_emb"][None]
    xcat = jnp.concatenate([xa, x_], axis=1)
    qkv = (xcat @ p["qkv_w"]).reshape(B, T, 3, H, Dh).transpose(2, 0, 3, 1, 4)
    q, k, v = qkv[0], qkv[1], qkv[2]
    attn = jax.nn.softmax(jnp.einsum("bhtd,bhsd->bhts", q, k) * scale, axis=-1)
    o = jnp.einsum("bhts,bhsd->bhtd", attn, v).transpose(0, 2, 1, 3).reshape(B, T, C)
    o = o @ p["proj_w"] + p["proj_b"].reshape(-1)
    cls, patch, ht = o[:, :1], o[:, 1:N], o[:, N:]
    cls = cls + ht.mean(axis=1, keepdims=True) + patch.mean(axis=1, keepdims=True)
    x2 = jnp.concatenate([cls, patch], axis=1) + x1

    xc = ln(x2, p["lnc_g"], p["lnc_b"])
    y = xc @ p["pw1_w"] + p["pw1_b"].reshape(-1)
    glu = y[..., :inner] * jax.nn.sigmoid(y[..., inner:])
    pad_l = K // 2
    pad_r = pad_l - (K + 1) % 2
    xp = jnp.pad(glu, ((0, 0), (pad_l, pad_r), (0, 0)))
    ydw = sum(xp[:, kk:kk + N, :] * p["dw_w"][kk] for kk in range(K)) + p["dw_b"].reshape(-1)
    mu = ydw.mean(axis=(0, 1))
    var = ydw.var(axis=(0, 1))
    yn = (ydw - mu) / jnp.sqrt(var + BN_EPS) * p["bn_g"].reshape(-1) + p["bn_b"].reshape(-1)
    x3 = swish(yn) @ p["pw2_w"] + p["pw2_b"].reshape(-1) + x2

    x4 = 0.5 * ff(ln(x3, p["ln2_g"], p["ln2_b"]),
                  p["ff2_w1"], p["ff2_b1"], p["ff2_w2"], p["ff2_b2"]) + x3
    return ln(x4, p["pn_g"], p["pn_b"]), attn


if __name__ == "__main__":
    B, N = 2, 8
    heads, dim_head = 4, 8
    dim = heads * dim_head          # Attention's reshape requires dim == heads * dim_head
    dims = dict(B=B, N=N, C=dim, H=heads, Dh=dim_head,
                inner=dim * 2, K=31, hidden=dim * 4)

    root = jax.random.PRNGKey(0)
    kx, kp_ = jax.random.split(root)
    x = jax.random.normal(kx, (B, N, dim), dtype=jnp.float32)
    params = init_params(kp_, dims)

    fwd = jax.jit(functools.partial(conformer_block_pallas, dims=dims))
    out, attn_w = fwd(x, params)
    out, attn_w = jax.block_until_ready((out, attn_w))

    ref_out, ref_attn = conformer_block_reference(x, params, dims)
    assert out.shape == (B, N, dim)
    assert attn_w.shape == (B, heads, N + heads, N + heads)
    assert bool(jnp.all(jnp.isfinite(out))) and bool(jnp.all(jnp.isfinite(attn_w)))
    # 5e-3 tolerance: approx EUP reciprocal in sigmoid/softmax + erf polynomial.
    assert bool(jnp.allclose(out, ref_out, atol=5e-3, rtol=5e-3)), \
        float(jnp.max(jnp.abs(out - ref_out)))
    assert bool(jnp.allclose(attn_w, ref_attn, atol=5e-3, rtol=5e-3)), \
        float(jnp.max(jnp.abs(attn_w - ref_attn)))
    print("KERNEL_OK")
</pallas_src>

<mosaic_0001>
module attributes {stable_mosaic.version = 11 : i64} {
  func.func @_conformer_kernel(%arg0: memref<16x32xf32, #tpu.memory_space<vmem>>, %arg1: memref<584x32xf32, #tpu.memory_space<vmem>>, %arg2: memref<99x128xf32, #tpu.memory_space<vmem>>, %arg3: memref<152x96xf32, #tpu.memory_space<vmem>>, %arg4: memref<264x16xf32, #tpu.memory_space<vmem>>, %arg5: memref<243x64xf32, #tpu.memory_space<vmem>>, %arg6: memref<16x24xf32, #tpu.memory_space<vmem>>, %arg7: memref<16x240xf32, #tpu.memory_space<vmem>>, %arg8: memref<16x32xf32, #tpu.memory_space<vmem>>, %arg9: memref<24x96xf32, #tpu.memory_space<vmem>>) attributes {dimension_semantics = [], scalar_prefetch = 0 : i64, scratch_operands = 0 : i64, tpu.core_type = #tpu.core_type<tc>} {
    %c32 = arith.constant 32 : index
    %c0 = arith.constant 0 : index
    %0 = vector.load %arg1[%c32, %c0] : memref<584x32xf32, #tpu.memory_space<vmem>>, vector<32x32xf32>
    %c0_0 = arith.constant 0 : index
    %c0_1 = arith.constant 0 : index
    %1 = vector.load %arg0[%c0_0, %c0_1] : memref<16x32xf32, #tpu.memory_space<vmem>>, vector<16x32xf32>
    %cst = arith.constant dense<0.000000e+00> : vector<16x32xf32>
    %2 = tpu.matmul %1, %0, %cst {dimension_numbers = #tpu.dot_dimension_numbers<[1], [0], [0], [1], [0, 0, 1, 1], [], []>, precision = #tpu.contract_precision<fp32>} : vector<16x32xf32>, vector<32x32xf32>, vector<16x32xf32> -> vector<16x32xf32>
    %3 = arith.subf %1, %2 : vector<16x32xf32>
    %4 = arith.mulf %3, %3 : vector<16x32xf32>
    %cst_2 = arith.constant dense<0.000000e+00> : vector<16x32xf32>
    %5 = tpu.matmul %4, %0, %cst_2 {dimension_numbers = #tpu.dot_dimension_numbers<[1], [0], [0], [1], [0, 0, 1, 1], [], []>, precision = #tpu.contract_precision<fp32>} : vector<16x32xf32>, vector<32x32xf32>, vector<16x32xf32> -> vector<16x32xf32>
    %cst_3 = arith.constant 9.99999974E-6 : f32
    %6 = vector.broadcast %cst_3 : f32 to vector<16x32xf32>
    %7 = arith.addf %5, %6 : vector<16x32xf32>
    %8 = math.rsqrt %7 : vector<16x32xf32>
    %9 = arith.mulf %3, %8 : vector<16x32xf32>
    %c0_4 = arith.constant 0 : index
    %c0_5 = arith.constant 0 : index
    %10 = vector.load %arg1[%c0_4, %c0_5] : memref<584x32xf32, #tpu.memory_space<vmem>>, vector<1x32xf32>
    %11 = vector.broadcast %10 : vector<1x32xf32> to vector<16x32xf32>
    %12 = arith.mulf %9, %11 : vector<16x32xf32>
    %c1 = arith.constant 1 : index
    %c0_6 = arith.constant 0 : index
    %13 = vector.load %arg1[%c1, %c0_6] : memref<584x32xf32, #tpu.memory_space<vmem>>, vector<1x32xf32>
    %14 = vector.broadcast %13 : vector<1x32xf32> to vector<16x32xf32>
    %15 = arith.addf %12, %14 : vector<16x32xf32>
    %c0_7 = arith.constant 0 : index
    %c0_8 = arith.constant 0 : index
    %16 = vector.load %arg2[%c0_7, %c0_8] : memref<99x128xf32, #tpu.memory_space<vmem>>, vector<32x128xf32>
    %cst_9 = arith.constant dense<0.000000e+00> : vector<16x128xf32>
    %17 = tpu.matmul %15, %16, %cst_9 {dimension_numbers = #tpu.dot_dimension_numbers<[1], [0], [0], [1], [0, 0, 1, 1], [], []>} : vector<16x32xf32>, vector<32x128xf32>, vector<16x128xf32> -> vector<16x128xf32>
    %c96 = arith.constant 96 : index
    %c0_10 = arith.constant 0 : index
    %18 = vector.load %arg2[%c96, %c0_10] : memref<99x128xf32, #tpu.memory_space<vmem>>, vector<1x128xf32>
    %19 = vector.broadcast %18 : vector<1x128xf32> to vector<16x128xf32>
    %20 = arith.addf %17, %19 : vector<16x128xf32>
    %21 = math.absf %20 : vector<16x128xf32>
    %cst_11 = arith.constant 0.000000e+00 : f32
    %22 = vector.broadcast %cst_11 : f32 to vector<16x128xf32>
    %23 = arith.subf %22, %21 : vector<16x128xf32>
    %24 = math.exp %23 : vector<16x128xf32>
    %cst_12 = arith.constant 1.000000e+00 : f32
    %25 = vector.broadcast %cst_12 : f32 to vector<16x128xf32>
    %26 = arith.addf %25, %24 : vector<16x128xf32>
    %27 = tpu.reciprocal %26 {approx = true} : vector<16x128xf32> -> vector<16x128xf32>
    %cst_13 = arith.constant 0.000000e+00 : f32
    %28 = vector.broadcast %cst_13 : f32 to vector<16x128xf32>
    %29 = arith.cmpf oge, %20, %28 : vector<16x128xf32>
    %30 = arith.mulf %24, %27 : vector<16x128xf32>
    %31 = arith.select %29, %27, %30 : vector<16x128xi1>, vector<16x128xf32>
    %32 = arith.mulf %20, %31 : vector<16x128xf32>
    %c232 = arith.constant 232 : index
    %c0_14 = arith.constant 0 : index
    %33 = vector.load %arg1[%c232, %c0_14] : memref<584x32xf32, #tpu.memory_space<vmem>>, vector<128x32xf32>
    %cst_15 = arith.constant dense<0.000000e+00> : vector<16x32xf32>
    %34 = tpu.matmul %32, %33, %cst_15 {dimension_numbers = #tpu.dot_dimension_numbers<[1], [0], [0], [1], [0, 0, 1, 1], [], []>} : vector<16x128xf32>, vector<128x32xf32>, vector<16x32xf32> -> vector<16x32xf32>
    %c2 = arith.constant 2 : index
    %c0_16 = arith.constant 0 : index
    %35 = vector.load %arg1[%c2, %c0_16] : memref<584x32xf32, #tpu.memory_space<vmem>>, vector<1x32xf32>
    %36 = vector.broadcast %35 : vector<1x32xf32> to vector<16x32xf32>
    %37 = arith.addf %34, %36 : vector<16x32xf32>
    %cst_17 = arith.constant 5.000000e-01 : f32
    %38 = vector.broadcast %cst_17 : f32 to vector<16x32xf32>
    %39 = arith.mulf %38, %37 : vector<16x32xf32>
    %40 = arith.addf %39, %1 : vector<16x32xf32>
    %cst_18 = arith.constant dense<0.000000e+00> : vector<16x32xf32>
    %41 = tpu.matmul %40, %0, %cst_18 {dimension_numbers = #tpu.dot_dimension_numbers<[1], [0], [0], [1], [0, 0, 1, 1], [], []>, precision = #tpu.contract_precision<fp32>} : vector<16x32xf32>, vector<32x32xf32>, vector<16x32xf32> -> vector<16x32xf32>
    %42 = arith.subf %40, %41 : vector<16x32xf32>
    %43 = arith.mulf %42, %42 : vector<16x32xf32>
    %cst_19 = arith.constant dense<0.000000e+00> : vector<16x32xf32>
    %44 = tpu.matmul %43, %0, %cst_19 {dimension_numbers = #tpu.dot_dimension_numbers<[1], [0], [0], [1], [0, 0, 1, 1], [], []>, precision = #tpu.contract_precision<fp32>} : vector<16x32xf32>, vector<32x32xf32>, vector<16x32xf32> -> vector<16x32xf32>
    %cst_20 = arith.constant 9.99999974E-6 : f32
    %45 = vector.broadcast %cst_20 : f32 to vector<16x32xf32>
    %46 = arith.addf %44, %45 : vector<16x32xf32>
    %47 = math.rsqrt %46 : vector<16x32xf32>
    %48 = arith.mulf %42, %47 : vector<16x32xf32>
    %c3 = arith.constant 3 : index
    %c0_21 = arith.constant 0 : index
    %49 = vector.load %arg1[%c3, %c0_21] : memref<584x32xf32, #tpu.memory_space<vmem>>, vector<1x32xf32>
    %50 = vector.broadcast %49 : vector<1x32xf32> to vector<16x32xf32>
    %51 = arith.mulf %48, %50 : vector<16x32xf32>
    %c4 = arith.constant 4 : index
    %c0_22 = arith.constant 0 : index
    %52 = vector.load %arg1[%c4, %c0_22] : memref<584x32xf32, #tpu.memory_space<vmem>>, vector<1x32xf32>
    %53 = vector.broadcast %52 : vector<1x32xf32> to vector<16x32xf32>
    %54 = arith.addf %51, %53 : vector<16x32xf32>
    %c240 = arith.constant 240 : index
    %c0_23 = arith.constant 0 : index
    %55 = vector.load %arg4[%c240, %c0_23] : memref<264x16xf32, #tpu.memory_space<vmem>>, vector<8x16xf32>
    %cst_24 = arith.constant dense<0.000000e+00> : vector<8x32xf32>
    %56 = tpu.matmul %55, %54, %cst_24 {dimension_numbers = #tpu.dot_dimension_numbers<[1], [0], [0], [1], [0, 0, 1, 1], [], []>, precision = #tpu.contract_precision<fp32>} : vector<8x16xf32>, vector<16x32xf32>, vector<8x32xf32> -> vector<8x32xf32>
    %c128 = arith.constant 128 : index
    %c0_25 = arith.constant 0 : index
    %57 = vector.load %arg1[%c128, %c0_25] : memref<584x32xf32, #tpu.memory_space<vmem>>, vector<8x32xf32>
    %58 = arith.mulf %56, %57 : vector<8x32xf32>
    %c96_26 = arith.constant 96 : index
    %c0_27 = arith.constant 0 : index
    %59 = vector.load %arg1[%c96_26, %c0_27] : memref<584x32xf32, #tpu.memory_space<vmem>>, vector<32x32xf32>
    %cst_28 = arith.constant dense<0.000000e+00> : vector<8x32xf32>
    %60 = tpu.matmul %58, %59, %cst_28 {dimension_numbers = #tpu.dot_dimension_numbers<[1], [0], [0], [1], [0, 0, 1, 1], [], []>} : vector<8x32xf32>, vector<32x32xf32>, vector<8x32xf32> -> vector<8x32xf32>
    %c5 = arith.constant 5 : index
    %c0_29 = arith.constant 0 : index
    %61 = vector.load %arg1[%c5, %c0_29] : memref<584x32xf32, #tpu.memory_space<vmem>>, vector<1x32xf32>
    %62 = vector.broadcast %61 : vector<1x32xf32> to vector<8x32xf32>
    %63 = arith.addf %60, %62 : vector<8x32xf32>
    %c64 = arith.constant 64 : index
    %c0_30 = arith.constant 0 : index
    %64 = vector.load %arg1[%c64, %c0_30] : memref<584x32xf32, #tpu.memory_space<vmem>>, vector<32x32xf32>
    %cst_31 = arith.constant dense<0.000000e+00> : vector<8x32xf32>
    %65 = tpu.matmul %63, %64, %cst_31 {dimension_numbers = #tpu.dot_dimension_numbers<[1], [0], [0], [1], [0, 0, 1, 1], [], []>, precision = #tpu.contract_precision<fp32>} : vector<8x32xf32>, vector<32x32xf32>, vector<8x32xf32> -> vector<8x32xf32>
    %66 = arith.subf %63, %65 : vector<8x32xf32>
    %67 = arith.mulf %66, %66 : vector<8x32xf32>
    %cst_32 = arith.constant dense<0.000000e+00> : vector<8x32xf32>
    %68 = tpu.matmul %67, %64, %cst_32 {dimension_numbers = #tpu.dot_dimension_numbers<[1], [0], [0], [1], [0, 0, 1, 1], [], []>, precision = #tpu.contract_precision<fp32>} : vector<8x32xf32>, vector<32x32xf32>, vector<8x32xf32> -> vector<8x32xf32>
    %cst_33 = arith.constant 9.99999974E-6 : f32
    %69 = vector.broadcast %cst_33 : f32 to vector<8x32xf32>
    %70 = arith.addf %68, %69 : vector<8x32xf32>
    %71 = math.rsqrt %70 : vector<8x32xf32>
    %72 = arith.mulf %66, %71 : vector<8x32xf32>
    %c6 = arith.constant 6 : index
    %c0_34 = arith.constant 0 : index
    %73 = vector.load %arg1[%c6, %c0_34] : memref<584x32xf32, #tpu.memory_space<vmem>>, vector<1x32xf32>
    %74 = vector.broadcast %73 : vector<1x32xf32> to vector<8x32xf32>
    %75 = arith.mulf %72, %74 : vector<8x32xf32>
    %c7 = arith.constant 7 : index
    %c0_35 = arith.constant 0 : index
    %76 = vector.load %arg1[%c7, %c0_35] : memref<584x32xf32, #tpu.memory_space<vmem>>, vector<1x32xf32>
    %77 = vector.broadcast %76 : vector<1x32xf32> to vector<8x32xf32>
    %78 = arith.addf %75, %77 : vector<8x32xf32>
    %cst_36 = arith.constant 5.000000e-01 : f32
    %79 = vector.broadcast %cst_36 : f32 to vector<8x32xf32>
    %80 = arith.mulf %79, %78 : vector<8x32xf32>
    %cst_37 = arith.constant 0.707106769 : f32
    %81 = vector.broadcast %cst_37 : f32 to vector<8x32xf32>
    %82 = arith.mulf %78, %81 : vector<8x32xf32>
    %cst_38 = arith.constant 0.000000e+00 : f32
    %83 = vector.broadcast %cst_38 : f32 to vector<8x32xf32>
    %84 = arith.cmpf oge, %82, %83 : vector<8x32xf32>
    %cst_39 = arith.constant 1.000000e+00 : f32
    %cst_40 = arith.constant -1.000000e+00 : f32
    %85 = vector.broadcast %cst_39 : f32 to vector<8x32xf32>
    %86 = vector.broadcast %cst_40 : f32 to vector<8x32xf32>
    %87 = arith.select %84, %85, %86 : vector<8x32xi1>, vector<8x32xf32>
    %88 = math.absf %82 : vector<8x32xf32>
    %cst_41 = arith.constant 0.327591091 : f32
    %89 = vector.broadcast %cst_41 : f32 to vector<8x32xf32>
    %90 = arith.mulf %89, %88 : vector<8x32xf32>
    %cst_42 = arith.constant 1.000000e+00 : f32
    %91 = vector.broadcast %cst_42 : f32 to vector<8x32xf32>
    %92 = arith.addf %91, %90 : vector<8x32xf32>
    %cst_43 = arith.constant 1.000000e+00 : f32
    %93 = vector.broadcast %cst_43 : f32 to vector<8x32xf32>
    %94 = arith.divf %93, %92 : vector<8x32xf32>
    %cst_44 = arith.constant 1.06140542 : f32
    %95 = vector.broadcast %cst_44 : f32 to vector<8x32xf32>
    %96 = arith.mulf %94, %95 : vector<8x32xf32>
    %cst_45 = arith.constant -1.45315206 : f32
    %97 = vector.broadcast %cst_45 : f32 to vector<8x32xf32>
    %98 = arith.addf %97, %96 : vector<8x32xf32>
    %99 = arith.mulf %94, %98 : vector<8x32xf32>
    %cst_46 = arith.constant 1.42141378 : f32
    %100 = vector.broadcast %cst_46 : f32 to vector<8x32xf32>
    %101 = arith.addf %100, %99 : vector<8x32xf32>
    %102 = arith.mulf %94, %101 : vector<8x32xf32>
    %cst_47 = arith.constant -0.284496725 : f32
    %103 = vector.broadcast %cst_47 : f32 to vector<8x32xf32>
    %104 = arith.addf %103, %102 : vector<8x32xf32>
    %105 = arith.mulf %94, %104 : vector<8x32xf32>
    %cst_48 = arith.constant 0.254829586 : f32
    %106 = vector.broadcast %cst_48 : f32 to vector<8x32xf32>
    %107 = arith.addf %106, %105 : vector<8x32xf32>
    %108 = arith.mulf %94, %107 : vector<8x32xf32>
    %cst_49 = arith.constant 0.000000e+00 : f32
    %109 = vector.broadcast %cst_49 : f32 to vector<8x32xf32>
    %110 = arith.subf %109, %88 : vector<8x32xf32>
    %111 = arith.mulf %110, %88 : vector<8x32xf32>
    %112 = math.exp %111 : vector<8x32xf32>
    %113 = arith.mulf %108, %112 : vector<8x32xf32>
    %cst_50 = arith.constant 1.000000e+00 : f32
    %114 = vector.broadcast %cst_50 : f32 to vector<8x32xf32>
    %115 = arith.subf %114, %113 : vector<8x32xf32>
    %116 = arith.mulf %87, %115 : vector<8x32xf32>
    %cst_51 = arith.constant 1.000000e+00 : f32
    %117 = vector.broadcast %cst_51 : f32 to vector<8x32xf32>
    %118 = arith.addf %117, %116 : vector<8x32xf32>
    %119 = arith.mulf %80, %118 : vector<8x32xf32>
    %c24 = arith.constant 24 : index
    %c0_52 = arith.constant 0 : index
    %120 = vector.load %arg1[%c24, %c0_52] : memref<584x32xf32, #tpu.memory_space<vmem>>, vector<8x32xf32>
    %121 = arith.addf %119, %120 : vector<8x32xf32>
    %122 = tpu.concatenate %54, %121 in 0 : vector<16x32xf32>, vector<8x32xf32> -> vector<24x32xf32>
    %c0_53 = arith.constant 0 : index
    %c0_54 = arith.constant 0 : index
    %123 = vector.load %arg3[%c0_53, %c0_54] : memref<152x96xf32, #tpu.memory_space<vmem>>, vector<32x96xf32>
    %cst_55 = arith.constant dense<0.000000e+00> : vector<24x96xf32>
    %124 = tpu.matmul %122, %123, %cst_55 {dimension_numbers = #tpu.dot_dimension_numbers<[1], [0], [0], [1], [0, 0, 1, 1], [], []>} : vector<24x32xf32>, vector<32x96xf32>, vector<24x96xf32> -> vector<24x96xf32>
    %125 = vector.extract_strided_slice %124 {offsets = [0, 0], sizes = [24, 32], strides = [1, 1]} : vector<24x96xf32> to vector<24x32xf32>
    %126 = vector.extract_strided_slice %124 {offsets = [0, 32], sizes = [24, 32], strides = [1, 1]} : vector<24x96xf32> to vector<24x32xf32>
    %127 = vector.extract_strided_slice %124 {offsets = [0, 64], sizes = [24, 32], strides = [1, 1]} : vector<24x96xf32> to vector<24x32xf32>
    %c136 = arith.constant 136 : index
    %c0_56 = arith.constant 0 : index
    %128 = vector.load %arg1[%c136, %c0_56] : memref<584x32xf32, #tpu.memory_space<vmem>>, vector<96x32xf32>
    %129 = tpu.concatenate %126, %126, %126, %126 in 0 : vector<24x32xf32>, vector<24x32xf32>, vector<24x32xf32>, vector<24x32xf32> -> vector<96x32xf32>
    %130 = arith.mulf %129, %128 : vector<96x32xf32>
    %131 = tpu.concatenate %127, %127, %127, %127 in 0 : vector<24x32xf32>, vector<24x32xf32>, vector<24x32xf32>, vector<24x32xf32> -> vector<96x32xf32>
    %132 = arith.mulf %131, %128 : vector<96x32xf32>
    %cst_57 = arith.constant dense<0.000000e+00> : vector<24x96xf32>
    %133 = tpu.matmul %125, %130, %cst_57 {dimension_numbers = #tpu.dot_dimension_numbers<[1], [1], [0], [0], [0, 0, 1, 0], [], []>} : vector<24x32xf32>, vector<96x32xf32>, vector<24x96xf32> -> vector<24x96xf32>
    %cst_58 = arith.constant 0.353553385 : f32
    %134 = vector.broadcast %cst_58 : f32 to vector<24x96xf32>
    %135 = arith.mulf %133, %134 : vector<24x96xf32>
    %c32_59 = arith.constant 32 : index
    %c0_60 = arith.constant 0 : index
    %136 = vector.load %arg3[%c32_59, %c0_60] : memref<152x96xf32, #tpu.memory_space<vmem>>, vector<24x96xf32>
    %137 = arith.addf %135, %136 : vector<24x96xf32>
    %cst_61 = arith.constant dense<0xFF800000> : vector<24xf32>
    %138 = vector.multi_reduction <maximumf>, %137, %cst_61 [1] : vector<24x96xf32> to vector<24xf32>
    %139 = vector.shape_cast %138 : vector<24xf32> to vector<24x1xf32>
    %140 = vector.broadcast %139 : vector<24x1xf32> to vector<24x96xf32>
    %141 = arith.subf %137, %140 : vector<24x96xf32>
    %142 = math.exp %141 : vector<24x96xf32>
    %c56 = arith.constant 56 : index
    %c0_62 = arith.constant 0 : index
    %143 = vector.load %arg3[%c56, %c0_62] : memref<152x96xf32, #tpu.memory_space<vmem>>, vector<96x96xf32>
    %cst_63 = arith.constant dense<0.000000e+00> : vector<24x96xf32>
    %144 = tpu.matmul %142, %143, %cst_63 {dimension_numbers = #tpu.dot_dimension_numbers<[1], [0], [0], [1], [0, 0, 1, 1], [], []>, precision = #tpu.contract_precision<fp32>} : vector<24x96xf32>, vector<96x96xf32>, vector<24x96xf32> -> vector<24x96xf32>
    %145 = tpu.reciprocal %144 {approx = true} : vector<24x96xf32> -> vector<24x96xf32>
    %146 = arith.mulf %142, %145 : vector<24x96xf32>
    %c0_64 = arith.constant 0 : index
    %c0_65 = arith.constant 0 : index
    %147 = vector.load %arg9[%c0_64, %c0_65] : memref<24x96xf32, #tpu.memory_space<vmem>>, vector<24x96xf32>
    tpu.vector_store %arg9[%c0_64, %c0_65], %146 {strides = array<i32>} : memref<24x96xf32, #tpu.memory_space<vmem>>, vector<24x96xf32>,
    %cst_66 = arith.constant dense<0.000000e+00> : vector<24x32xf32>
    %148 = tpu.matmul %146, %132, %cst_66 {dimension_numbers = #tpu.dot_dimension_numbers<[1], [0], [0], [1], [0, 0, 1, 1], [], []>} : vector<24x96xf32>, vector<96x32xf32>, vector<24x32xf32> -> vector<24x32xf32>
    %c552 = arith.constant 552 : index
    %c0_67 = arith.constant 0 : index
    %149 = vector.load %arg1[%c552, %c0_67] : memref<584x32xf32, #tpu.memory_space<vmem>>, vector<32x32xf32>
    %cst_68 = arith.constant dense<0.000000e+00> : vector<24x32xf32>
    %150 = tpu.matmul %148, %149, %cst_68 {dimension_numbers = #tpu.dot_dimension_numbers<[1], [0], [0], [1], [0, 0, 1, 1], [], []>} : vector<24x32xf32>, vector<32x32xf32>, vector<24x32xf32> -> vector<24x32xf32>
    %c8 = arith.constant 8 : index
    %c0_69 = arith.constant 0 : index
    %151 = vector.load %arg1[%c8, %c0_69] : memref<584x32xf32, #tpu.memory_space<vmem>>, vector<1x32xf32>
    %152 = vector.broadcast %151 : vector<1x32xf32> to vector<24x32xf32>
    %153 = arith.addf %150, %152 : vector<24x32xf32>
    %c0_70 = arith.constant 0 : index
    %c0_71 = arith.constant 0 : index
    %154 = vector.load %arg6[%c0_70, %c0_71] : memref<16x24xf32, #tpu.memory_space<vmem>>, vector<16x24xf32>
    %cst_72 = arith.constant dense<0.000000e+00> : vector<16x32xf32>
    %155 = tpu.matmul %154, %153, %cst_72 {dimension_numbers = #tpu.dot_dimension_numbers<[1], [0], [0], [1], [0, 0, 1, 1], [], []>, precision = #tpu.contract_precision<fp32>} : vector<16x24xf32>, vector<24x32xf32>, vector<16x32xf32> -> vector<16x32xf32>
    %156 = arith.addf %155, %40 : vector<16x32xf32>
    %cst_73 = arith.constant dense<0.000000e+00> : vector<16x32xf32>
    %157 = tpu.matmul %156, %0, %cst_73 {dimension_numbers = #tpu.dot_dimension_numbers<[1], [0], [0], [1], [0, 0, 1, 1], [], []>, precision = #tpu.contract_precision<fp32>} : vector<16x32xf32>, vector<32x32xf32>, vector<16x32xf32> -> vector<16x32xf32>
    %158 = arith.subf %156, %157 : vector<16x32xf32>
    %159 = arith.mulf %158, %158 : vector<16x32xf32>
    %cst_74 = arith.constant dense<0.000000e+00> : vector<16x32xf32>
    %160 = tpu.matmul %159, %0, %cst_74 {dimension_numbers = #tpu.dot_dimension_numbers<[1], [0], [0], [1], [0, 0, 1, 1], [], []>, precision = #tpu.contract_precision<fp32>} : vector<16x32xf32>, vector<32x32xf32>, vector<16x32xf32> -> vector<16x32xf32>
    %cst_75 = arith.constant 9.99999974E-6 : f32
    %161 = vector.broadcast %cst_75 : f32 to vector<16x32xf32>
    %162 = arith.addf %160, %161 : vector<16x32xf32>
    %163 = math.rsqrt %162 : vector<16x32xf32>
    %164 = arith.mulf %158, %163 : vector<16x32xf32>
    %c9 = arith.constant 9 : index
    %c0_76 = arith.constant 0 : index
    %165 = vector.load %arg1[%c9, %c0_76] : memref<584x32xf32, #tpu.memory_space<vmem>>, vector<1x32xf32>
    %166 = vector.broadcast %165 : vector<1x32xf32> to vector<16x32xf32>
    %167 = arith.mulf %164, %166 : vector<16x32xf32>
    %c10 = arith.constant 10 : index
    %c0_77 = arith.constant 0 : index
    %168 = vector.load %arg1[%c10, %c0_77] : memref<584x32xf32, #tpu.memory_space<vmem>>, vector<1x32xf32>
    %169 = vector.broadcast %168 : vector<1x32xf32> to vector<16x32xf32>
    %170 = arith.addf %167, %169 : vector<16x32xf32>
    %c32_78 = arith.constant 32 : index
    %c0_79 = arith.constant 0 : index
    %171 = vector.load %arg2[%c32_78, %c0_79] : memref<99x128xf32, #tpu.memory_space<vmem>>, vector<32x128xf32>
    %cst_80 = arith.constant dense<0.000000e+00> : vector<16x128xf32>
    %172 = tpu.matmul %170, %171, %cst_80 {dimension_numbers = #tpu.dot_dimension_numbers<[1], [0], [0], [1], [0, 0, 1, 1], [], []>} : vector<16x32xf32>, vector<32x128xf32>, vector<16x128xf32> -> vector<16x128xf32>
    %c97 = arith.constant 97 : index
    %c0_81 = arith.constant 0 : index
    %173 = vector.load %arg2[%c97, %c0_81] : memref<99x128xf32, #tpu.memory_space<vmem>>, vector<1x128xf32>
    %174 = vector.broadcast %173 : vector<1x128xf32> to vector<16x128xf32>
    %175 = arith.addf %172, %174 : vector<16x128xf32>
    %176 = vector.extract_strided_slice %175 {offsets = [0, 0], sizes = [16, 64], strides = [1, 1]} : vector<16x128xf32> to vector<16x64xf32>
    %177 = vector.extract_strided_slice %175 {offsets = [0, 64], sizes = [16, 64], strides = [1, 1]} : vector<16x128xf32> to vector<16x64xf32>
    %178 = math.absf %177 : vector<16x64xf32>
    %cst_82 = arith.constant 0.000000e+00 : f32
    %179 = vector.broadcast %cst_82 : f32 to vector<16x64xf32>
    %180 = arith.subf %179, %178 : vector<16x64xf32>
    %181 = math.exp %180 : vector<16x64xf32>
    %cst_83 = arith.constant 1.000000e+00 : f32
    %182 = vector.broadcast %cst_83 : f32 to vector<16x64xf32>
    %183 = arith.addf %182, %181 : vector<16x64xf32>
    %184 = tpu.reciprocal %183 {approx = true} : vector<16x64xf32> -> vector<16x64xf32>
    %cst_84 = arith.constant 0.000000e+00 : f32
    %185 = vector.broadcast %cst_84 : f32 to vector<16x64xf32>
    %186 = arith.cmpf oge, %177, %185 : vector<16x64xf32>
    %187 = arith.mulf %181, %184 : vector<16x64xf32>
    %188 = arith.select %186, %184, %187 : vector<16x64xi1>, vector<16x64xf32>
    %189 = arith.mulf %176, %188 : vector<16x64xf32>
    %c0_85 = arith.constant 0 : index
    %c0_86 = arith.constant 0 : index
    %190 = vector.load %arg4[%c0_85, %c0_86] : memref<264x16xf32, #tpu.memory_space<vmem>>, vector<240x16xf32>
    %cst_87 = arith.constant dense<0.000000e+00> : vector<240x64xf32>
    %191 = tpu.matmul %190, %189, %cst_87 {dimension_numbers = #tpu.dot_dimension_numbers<[1], [0], [0], [1], [0, 0, 1, 1], [], []>, precision = #tpu.contract_precision<fp32>} : vector<240x16xf32>, vector<16x64xf32>, vector<240x64xf32> -> vector<240x64xf32>
    %c0_88 = arith.constant 0 : index
    %c0_89 = arith.constant 0 : index
    %192 = vector.load %arg7[%c0_88, %c0_89] : memref<16x240xf32, #tpu.memory_space<vmem>>, vector<16x240xf32>
    %c0_90 = arith.constant 0 : index
    %c0_91 = arith.constant 0 : index
    %193 = vector.load %arg5[%c0_90, %c0_91] : memref<243x64xf32, #tpu.memory_space<vmem>>, vector<240x64xf32>
    %194 = arith.mulf %191, %193 : vector<240x64xf32>
    %cst_92 = arith.constant dense<0.000000e+00> : vector<16x64xf32>
    %195 = tpu.matmul %192, %194, %cst_92 {dimension_numbers = #tpu.dot_dimension_numbers<[1], [0], [0], [1], [0, 0, 1, 1], [], []>, precision = #tpu.contract_precision<fp32>} : vector<16x240xf32>, vector<240x64xf32>, vector<16x64xf32> -> vector<16x64xf32>
    %c240_93 = arith.constant 240 : index
    %c0_94 = arith.constant 0 : index
    %196 = vector.load %arg5[%c240_93, %c0_94] : memref<243x64xf32, #tpu.memory_space<vmem>>, vector<1x64xf32>
    %197 = vector.broadcast %196 : vector<1x64xf32> to vector<16x64xf32>
    %198 = arith.addf %195, %197 : vector<16x64xf32>
    %c248 = arith.constant 248 : index
    %c0_95 = arith.constant 0 : index
    %199 = vector.load %arg4[%c248, %c0_95] : memref<264x16xf32, #tpu.memory_space<vmem>>, vector<16x16xf32>
    %cst_96 = arith.constant dense<0.000000e+00> : vector<16x64xf32>
    %200 = tpu.matmul %199, %198, %cst_96 {dimension_numbers = #tpu.dot_dimension_numbers<[1], [0], [0], [1], [0, 0, 1, 1], [], []>, precision = #tpu.contract_precision<fp32>} : vector<16x16xf32>, vector<16x64xf32>, vector<16x64xf32> -> vector<16x64xf32>
    %201 = arith.subf %198, %200 : vector<16x64xf32>
    %202 = arith.mulf %201, %201 : vector<16x64xf32>
    %cst_97 = arith.constant dense<0.000000e+00> : vector<16x64xf32>
    %203 = tpu.matmul %199, %202, %cst_97 {dimension_numbers = #tpu.dot_dimension_numbers<[1], [0], [0], [1], [0, 0, 1, 1], [], []>, precision = #tpu.contract_precision<fp32>} : vector<16x16xf32>, vector<16x64xf32>, vector<16x64xf32> -> vector<16x64xf32>
    %cst_98 = arith.constant 9.99999974E-6 : f32
    %204 = vector.broadcast %cst_98 : f32 to vector<16x64xf32>
    %205 = arith.addf %203, %204 : vector<16x64xf32>
    %206 = math.rsqrt %205 : vector<16x64xf32>
    %207 = arith.mulf %201, %206 : vector<16x64xf32>
    %c241 = arith.constant 241 : index
    %c0_99 = arith.constant 0 : index
    %208 = vector.load %arg5[%c241, %c0_99] : memref<243x64xf32, #tpu.memory_space<vmem>>, vector<1x64xf32>
    %209 = vector.broadcast %208 : vector<1x64xf32> to vector<16x64xf32>
    %210 = arith.mulf %207, %209 : vector<16x64xf32>
    %c242 = arith.constant 242 : index
    %c0_100 = arith.constant 0 : index
    %211 = vector.load %arg5[%c242, %c0_100] : memref<243x64xf32, #tpu.memory_space<vmem>>, vector<1x64xf32>
    %212 = vector.broadcast %211 : vector<1x64xf32> to vector<16x64xf32>
    %213 = arith.addf %210, %212 : vector<16x64xf32>
    %214 = math.absf %213 : vector<16x64xf32>
    %cst_101 = arith.constant 0.000000e+00 : f32
    %215 = vector.broadcast %cst_101 : f32 to vector<16x64xf32>
    %216 = arith.subf %215, %214 : vector<16x64xf32>
    %217 = math.exp %216 : vector<16x64xf32>
    %cst_102 = arith.constant 1.000000e+00 : f32
    %218 = vector.broadcast %cst_102 : f32 to vector<16x64xf32>
    %219 = arith.addf %218, %217 : vector<16x64xf32>
    %220 = tpu.reciprocal %219 {approx = true} : vector<16x64xf32> -> vector<16x64xf32>
    %cst_103 = arith.constant 0.000000e+00 : f32
    %221 = vector.broadcast %cst_103 : f32 to vector<16x64xf32>
    %222 = arith.cmpf oge, %213, %221 : vector<16x64xf32>
    %223 = arith.mulf %217, %220 : vector<16x64xf32>
    %224 = arith.select %222, %220, %223 : vector<16x64xi1>, vector<16x64xf32>
    %225 = arith.mulf %213, %224 : vector<16x64xf32>
    %c488 = arith.constant 488 : index
    %c0_104 = arith.constant 0 : index
    %226 = vector.load %arg1[%c488, %c0_104] : memref<584x32xf32, #tpu.memory_space<vmem>>, vector<64x32xf32>
    %cst_105 = arith.constant dense<0.000000e+00> : vector<16x32xf32>
    %227 = tpu.matmul %225, %226, %cst_105 {dimension_numbers = #tpu.dot_dimension_numbers<[1], [0], [0], [1], [0, 0, 1, 1], [], []>} : vector<16x64xf32>, vector<64x32xf32>, vector<16x32xf32> -> vector<16x32xf32>
    %c11 = arith.constant 11 : index
    %c0_106 = arith.constant 0 : index
    %228 = vector.load %arg1[%c11, %c0_106] : memref<584x32xf32, #tpu.memory_space<vmem>>, vector<1x32xf32>
    %229 = vector.broadcast %228 : vector<1x32xf32> to vector<16x32xf32>
    %230 = arith.addf %227, %229 : vector<16x32xf32>
    %231 = arith.addf %230, %156 : vector<16x32xf32>
    %cst_107 = arith.constant dense<0.000000e+00> : vector<16x32xf32>
    %232 = tpu.matmul %231, %0, %cst_107 {dimension_numbers = #tpu.dot_dimension_numbers<[1], [0], [0], [1], [0, 0, 1, 1], [], []>, precision = #tpu.contract_precision<fp32>} : vector<16x32xf32>, vector<32x32xf32>, vector<16x32xf32> -> vector<16x32xf32>
    %233 = arith.subf %231, %232 : vector<16x32xf32>
    %234 = arith.mulf %233, %233 : vector<16x32xf32>
    %cst_108 = arith.constant dense<0.000000e+00> : vector<16x32xf32>
    %235 = tpu.matmul %234, %0, %cst_108 {dimension_numbers = #tpu.dot_dimension_numbers<[1], [0], [0], [1], [0, 0, 1, 1], [], []>, precision = #tpu.contract_precision<fp32>} : vector<16x32xf32>, vector<32x32xf32>, vector<16x32xf32> -> vector<16x32xf32>
    %cst_109 = arith.constant 9.99999974E-6 : f32
    %236 = vector.broadcast %cst_109 : f32 to vector<16x32xf32>
    %237 = arith.addf %235, %236 : vector<16x32xf32>
    %238 = math.rsqrt %237 : vector<16x32xf32>
    %239 = arith.mulf %233, %238 : vector<16x32xf32>
    %c12 = arith.constant 12 : index
    %c0_110 = arith.constant 0 : index
    %240 = vector.load %arg1[%c12, %c0_110] : memref<584x32xf32, #tpu.memory_space<vmem>>, vector<1x32xf32>
    %241 = vector.broadcast %240 : vector<1x32xf32> to vector<16x32xf32>
    %242 = arith.mulf %239, %241 : vector<16x32xf32>
    %c13 = arith.constant 13 : index
    %c0_111 = arith.constant 0 : index
    %243 = vector.load %arg1[%c13, %c0_111] : memref<584x32xf32, #tpu.memory_space<vmem>>, vector<1x32xf32>
    %244 = vector.broadcast %243 : vector<1x32xf32> to vector<16x32xf32>
    %245 = arith.addf %242, %244 : vector<16x32xf32>
    %c64_112 = arith.constant 64 : index
    %c0_113 = arith.constant 0 : index
    %246 = vector.load %arg2[%c64_112, %c0_113] : memref<99x128xf32, #tpu.memory_space<vmem>>, vector<32x128xf32>
    %cst_114 = arith.constant dense<0.000000e+00> : vector<16x128xf32>
    %247 = tpu.matmul %245, %246, %cst_114 {dimension_numbers = #tpu.dot_dimension_numbers<[1], [0], [0], [1], [0, 0, 1, 1], [], []>} : vector<16x32xf32>, vector<32x128xf32>, vector<16x128xf32> -> vector<16x128xf32>
    %c98 = arith.constant 98 : index
    %c0_115 = arith.constant 0 : index
    %248 = vector.load %arg2[%c98, %c0_115] : memref<99x128xf32, #tpu.memory_space<vmem>>, vector<1x128xf32>
    %249 = vector.broadcast %248 : vector<1x128xf32> to vector<16x128xf32>
    %250 = arith.addf %247, %249 : vector<16x128xf32>
    %251 = math.absf %250 : vector<16x128xf32>
    %cst_116 = arith.constant 0.000000e+00 : f32
    %252 = vector.broadcast %cst_116 : f32 to vector<16x128xf32>
    %253 = arith.subf %252, %251 : vector<16x128xf32>
    %254 = math.exp %253 : vector<16x128xf32>
    %cst_117 = arith.constant 1.000000e+00 : f32
    %255 = vector.broadcast %cst_117 : f32 to vector<16x128xf32>
    %256 = arith.addf %255, %254 : vector<16x128xf32>
    %257 = tpu.reciprocal %256 {approx = true} : vector<16x128xf32> -> vector<16x128xf32>
    %cst_118 = arith.constant 0.000000e+00 : f32
    %258 = vector.broadcast %cst_118 : f32 to vector<16x128xf32>
    %259 = arith.cmpf oge, %250, %258 : vector<16x128xf32>
    %260 = arith.mulf %254, %257 : vector<16x128xf32>
    %261 = arith.select %259, %257, %260 : vector<16x128xi1>, vector<16x128xf32>
    %262 = arith.mulf %250, %261 : vector<16x128xf32>
    %c360 = arith.constant 360 : index
    %c0_119 = arith.constant 0 : index
    %263 = vector.load %arg1[%c360, %c0_119] : memref<584x32xf32, #tpu.memory_space<vmem>>, vector<128x32xf32>
    %cst_120 = arith.constant dense<0.000000e+00> : vector<16x32xf32>
    %264 = tpu.matmul %262, %263, %cst_120 {dimension_numbers = #tpu.dot_dimension_numbers<[1], [0], [0], [1], [0, 0, 1, 1], [], []>} : vector<16x128xf32>, vector<128x32xf32>, vector<16x32xf32> -> vector<16x32xf32>
    %c14 = arith.constant 14 : index
    %c0_121 = arith.constant 0 : index
    %265 = vector.load %arg1[%c14, %c0_121] : memref<584x32xf32, #tpu.memory_space<vmem>>, vector<1x32xf32>
    %266 = vector.broadcast %265 : vector<1x32xf32> to vector<16x32xf32>
    %267 = arith.addf %264, %266 : vector<16x32xf32>
    %cst_122 = arith.constant 5.000000e-01 : f32
    %268 = vector.broadcast %cst_122 : f32 to vector<16x32xf32>
    %269 = arith.mulf %268, %267 : vector<16x32xf32>
    %270 = arith.addf %269, %231 : vector<16x32xf32>
    %cst_123 = arith.constant dense<0.000000e+00> : vector<16x32xf32>
    %271 = tpu.matmul %270, %0, %cst_123 {dimension_numbers = #tpu.dot_dimension_numbers<[1], [0], [0], [1], [0, 0, 1, 1], [], []>, precision = #tpu.contract_precision<fp32>} : vector<16x32xf32>, vector<32x32xf32>, vector<16x32xf32> -> vector<16x32xf32>
    %272 = arith.subf %270, %271 : vector<16x32xf32>
    %273 = arith.mulf %272, %272 : vector<16x32xf32>
    %cst_124 = arith.constant dense<0.000000e+00> : vector<16x32xf32>
    %274 = tpu.matmul %273, %0, %cst_124 {dimension_numbers = #tpu.dot_dimension_numbers<[1], [0], [0], [1], [0, 0, 1, 1], [], []>, precision = #tpu.contract_precision<fp32>} : vector<16x32xf32>, vector<32x32xf32>, vector<16x32xf32> -> vector<16x32xf32>
    %cst_125 = arith.constant 9.99999974E-6 : f32
    %275 = vector.broadcast %cst_125 : f32 to vector<16x32xf32>
    %276 = arith.addf %274, %275 : vector<16x32xf32>
    %277 = math.rsqrt %276 : vector<16x32xf32>
    %278 = arith.mulf %272, %277 : vector<16x32xf32>
    %c15 = arith.constant 15 : index
    %c0_126 = arith.constant 0 : index
    %279 = vector.load %arg1[%c15, %c0_126] : memref<584x32xf32, #tpu.memory_space<vmem>>, vector<1x32xf32>
    %280 = vector.broadcast %279 : vector<1x32xf32> to vector<16x32xf32>
    %281 = arith.mulf %278, %280 : vector<16x32xf32>
    %c16 = arith.constant 16 : index
    %c0_127 = arith.constant 0 : index
    %282 = vector.load %arg1[%c16, %c0_127] : memref<584x32xf32, #tpu.memory_space<vmem>>, vector<1x32xf32>
    %283 = vector.broadcast %282 : vector<1x32xf32> to vector<16x32xf32>
    %284 = arith.addf %281, %283 : vector<16x32xf32>
    %c0_128 = arith.constant 0 : index
    %c0_129 = arith.constant 0 : index
    %285 = vector.load %arg8[%c0_128, %c0_129] : memref<16x32xf32, #tpu.memory_space<vmem>>, vector<16x32xf32>
    tpu.vector_store %arg8[%c0_128, %c0_129], %284 {strides = array<i32>} : memref<16x32xf32, #tpu.memory_space<vmem>>, vector<16x32xf32>,
    return
  }
}

</mosaic_0001>

<llo_original>
// kernel: tile.18
$region0: #{tile.18}
  #allocation0 [shape = 's32[1]{0}', space=sflag, size = 0x4, scoped, tag = 'scoped memory for tile.18']
  %s0 = inlined_call_operand.vmem [shape: f32[8], index: 0, kind: input, shape index: {}]
  %s1 = inlined_call_operand.vmem [shape: f32[4,8], index: 1, kind: output, shape index: {}]
  // Predicated region
  $region2: #{tile.18} parent=0 // pred_check
    _
  $region3: #{tile.18} parent=0 // pred_check_branch
    %3 = sbr.rel (0) target = $region5
  $region4: #{tile.18} parent=0 // pred_region
    _
  $region5: #{tile.18} parent=0 // pred_fallthru
    _
  %v4 = vld [vmem:[%s0] ss:$0 sm:$0xff]
  %5 = vst [vmem:[%s1] sm:$0xf] %v4

// kernel: tile.28
$region0: #{tile.28}
  %s0 = inlined_call_operand.vmem [shape: f32[4,8], index: 0, kind: input, shape index: {}]
  %s1 = inlined_call_operand.vmem [shape: f32[1,32], index: 1, kind: output, shape index: {}]
  $region1: #{tile.28} parent=0
    #allocation0 [shape = 'u8[4096]{0}', space=vmem, size = 0x1000, scoped, tag = 'scoped mem for output reshape']
    #allocation1 [shape = 'u8[4096]{0}', space=vmem, size = 0x1000, scoped, tag = 'scoped mem for input reshape']
    %s3 = ssub.s32 16, 1
    %v4 = vld [vmem:[%s0] sm:%s3]
    %5 = vst [vmem:[#allocation1] sm:%s3] %v4
    %v6 = vld [vmem:[#allocation1] sm:$0x1]
    %vm7 = vcmask 64512
    %8 = vst.msk [vmem:[#allocation0] sm:$0x1] %vm7, %v6
    %s9 = scalar_lea.vmem [#allocation1], 3
    %v10 = vld [vmem:[%s9] sm:$0x1]
    %11 = vrot.lane.b32.xlu0 %v10, 24
    %v12 = vpop.permute.xlu0 %11
    %vm13 = vcmask 261312
    %14 = vst.msk [vmem:[#allocation0] sm:$0x1] %vm13, %v12
    %s15 = scalar_lea.vmem [#allocation1], 2
    %v16 = vld [vmem:[%s15] sm:$0x1]
    %17 = vrot.lane.b32.xlu0 %v16, 16
    %v18 = vpop.permute.xlu0 %17
    %vm19 = vcmask 195712
    %20 = vst.msk [vmem:[#allocation0] sm:$0x1] %vm19, %v18
    %s21 = scalar_lea.vmem [#allocation1], 1
    %v22 = vld [vmem:[%s21] sm:$0x1]
    %23 = vrot.lane.b32.xlu0 %v22, 8
    %v24 = vpop.permute.xlu0 %23
    %vm25 = vcmask 130112
    %26 = vst.msk [vmem:[#allocation0] sm:$0x1] %vm25, %v24
    %s28 = ssub.s32 2, 1
    %v29 = vld [vmem:[#allocation0] sm:%s28]
    %s31 = ssub.s32 2, 1
    %32 = vst [vmem:[%s1] sm:%s31] %v29

// kernel: conformer_block_pallas.1
$region0: #{conformer_block_pallas.1}
  #allocation0 [shape = 'u32[]', space=smem, size = 0x4, offset = 0x4, fixed_abs, tag = 'smem constant byte address 0x4 - core index']
  #allocation1 [shape = 'u32[72,128]{1,0:T(1,128)}', space=vmem, size = 0x9000, scoped, tag = 'internal scratch']
  %s0 = inlined_call_operand.vmem [shape: f32[16,32], index: 0, kind: input, shape index: {}]
  %s1 = inlined_call_operand.vmem [shape: f32[584,32], index: 1, kind: input, shape index: {}]
  %s2 = inlined_call_operand.vmem [shape: f32[99,128], index: 2, kind: input, shape index: {}]
  %s3 = inlined_call_operand.vmem [shape: f32[152,96], index: 3, kind: input, shape index: {}]
  %s4 = inlined_call_operand.vmem [shape: f32[264,16], index: 4, kind: input, shape index: {}]
  %s5 = inlined_call_operand.vmem [shape: f32[243,64], index: 5, kind: input, shape index: {}]
  %s6 = inlined_call_operand.vmem [shape: f32[16,24], index: 6, kind: input, shape index: {}]
  %s7 = inlined_call_operand.vmem [shape: f32[16,240], index: 7, kind: input, shape index: {}]
  %s8 = inlined_call_operand.hbm [shape: f32[16,32], index: 8, kind: output, shape index: {0}]
  %s9 = inlined_call_operand.vmem [shape: f32[24,96], index: 9, kind: output, shape index: {1}]
  %10 = xla_tuple %s8, %s9
  %s11 = sld [smem:[#allocation0]]
  $region50: #{conformer_block_pallas.1} parent=0
    _
  %s13 = ssub.s32 1, %s11
  %s14 = scalar_select 0, %s13, %s11
  $region1: #{conformer_block_pallas.1} parent=0
    #allocation2 [shape = 'u8[8192]{0}', space=vmem, size = 0x2000, scoped, tag = 'output window, operand 0, single buffered']
    #allocation3 [shape = 's32[1]{0}', space=sflag, size = 0x4, scoped, tag = 'scoped memory for conformer_block_pallas.1']
    %15 = vsyncpa [#allocation3], 0
    // Predicated region
    $region2: #{conformer_block_pallas.1} parent=1 // pred_check
      _
    $region3: #{conformer_block_pallas.1} parent=1 // pred_check_branch
      %17 = sbr.rel (0) target = $region5
    $region4: #{conformer_block_pallas.1} parent=1 // pred_region
      _
    $region5: #{conformer_block_pallas.1} parent=1 // pred_fallthru
      _
    // Predicated region
    $region6: #{conformer_block_pallas.1} parent=1 // pred_check
      _
    $region7: #{conformer_block_pallas.1} parent=1 // pred_check_branch
      %19 = sbr.rel (0) target = $region9
    $region8: #{conformer_block_pallas.1} parent=1 // pred_region
      _
    $region9: #{conformer_block_pallas.1} parent=1 // pred_fallthru
      _
    // Predicated region
    $region10: #{conformer_block_pallas.1} parent=1 // pred_check
      _
    $region11: #{conformer_block_pallas.1} parent=1 // pred_check_branch
      %21 = sbr.rel (0) target = $region13
    $region12: #{conformer_block_pallas.1} parent=1 // pred_region
      _
    $region13: #{conformer_block_pallas.1} parent=1 // pred_fallthru
      _
    // Predicated region
    $region14: #{conformer_block_pallas.1} parent=1 // pred_check
      _
    $region15: #{conformer_block_pallas.1} parent=1 // pred_check_branch
      %23 = sbr.rel (0) target = $region17
    $region16: #{conformer_block_pallas.1} parent=1 // pred_region
      _
    $region17: #{conformer_block_pallas.1} parent=1 // pred_fallthru
      _
    // Predicated region
    $region18: #{conformer_block_pallas.1} parent=1 // pred_check
      _
    $region19: #{conformer_block_pallas.1} parent=1 // pred_check_branch
      %25 = sbr.rel (0) target = $region21
    $region20: #{conformer_block_pallas.1} parent=1 // pred_region
      _
    $region21: #{conformer_block_pallas.1} parent=1 // pred_fallthru
      _
    // Predicated region
    $region22: #{conformer_block_pallas.1} parent=1 // pred_check
      _
    $region23: #{conformer_block_pallas.1} parent=1 // pred_check_branch
      %27 = sbr.rel (0) target = $region25
    $region24: #{conformer_block_pallas.1} parent=1 // pred_region
      _
    $region25: #{conformer_block_pallas.1} parent=1 // pred_fallthru
      _
    // Predicated region
    $region26: #{conformer_block_pallas.1} parent=1 // pred_check
      _
    $region27: #{conformer_block_pallas.1} parent=1 // pred_check_branch
      %29 = sbr.rel (0) target = $region29
    $region28: #{conformer_block_pallas.1} parent=1 // pred_region
      _
    $region29: #{conformer_block_pallas.1} parent=1 // pred_fallthru
      _
    // Predicated region
    $region30: #{conformer_block_pallas.1} parent=1 // pred_check
      _
    $region31: #{conformer_block_pallas.1} parent=1 // pred_check_branch
      %31 = sbr.rel (0) target = $region33
    $region32: #{conformer_block_pallas.1} parent=1 // pred_region
      _
    $region33: #{conformer_block_pallas.1} parent=1 // pred_fallthru
      _
    %v32 = vld [vmem:[%s1 + $0x20] sm:$0xff]
    %v33 = vld [vmem:[%s1 + $0x28] sm:$0xff]
    %v34 = vld [vmem:[%s1 + $0x30] sm:$0xff]
    %v35 = vld [vmem:[%s1 + $0x38] sm:$0xff]
    %v36 = vld [vmem:[%s0] sm:$0xff]
    %v37 = vld [vmem:[%s0 + $0x8] sm:$0xff]
    %vm38 = vcmask 261120
    %v40 = vsel %vm38, %v36, 0
    %v43 = vsel %vm38, %v37, 0
    %45 = vmatpush.msra.mxu0 0.0
    %46 = vmatpush.msra.mxu0 0.0
    %47 = vmatpush.msra.mxu0 0.0
    %48 = vmatpush.msra.mxu0 0.0
    %49 = vmatpush.msra.mxu0 0.0
    %50 = vmatpush.msra.mxu0 0.0
    %51 = vmatpush.msra.mxu0 0.0
    %52 = vmatpush.msra.mxu0 0.0
    %53 = vmatpush.msra.mxu0 0.0
    %54 = vmatpush.msra.mxu0 0.0
    %55 = vmatpush.msra.mxu0 0.0
    %56 = vmatpush.msra.mxu0 0.0
    %v57 = vand.u32 %v35, 4294901760
    %58 = vmatpush.msra.mxu0 %v57
    %v59 = vand.u32 %v34, 4294901760
    %60 = vmatpush.msra.mxu0 %v59
    %v61 = vand.u32 %v33, 4294901760
    %62 = vmatpush.msra.mxu0 %v61
    %v63 = vand.u32 %v32, 4294901760
    %64 = vmatpush.msra.mxu0 %v63
    %v65 = vand.u32 %v40, 4294901760
    %v66 = vsub.f32 %v40, %v65
    %v67 = vand.u32 %v66, 4294901760
    %v68 = vsub.f32 %v66, %v67
    %v69 = vand.u32 %v68, 4294901760
    %70 = vmatmul.f32.gmra.mxu0 %v69
    %v71 = vpop.f32.mrf.mxu0
    %v72 = vadd.f32 0.0, %v71
    %v73 = vand.u32 %v43, 4294901760
    %v74 = vsub.f32 %v43, %v73
    %v75 = vand.u32 %v74, 4294901760
    %v76 = vsub.f32 %v74, %v75
    %v77 = vand.u32 %v76, 4294901760
    %78 = vmatmul.f32.gmra.mxu0 %v77
    %v79 = vpop.f32.mrf.mxu0
    %v80 = vadd.f32 0.0, %v79
    %81 = vdwg.mxu0
    %82 = vmatpush.msra.mxu0 0.0
    %83 = vmatpush.msra.mxu0 0.0
    %84 = vmatpush.msra.mxu0 0.0
    %85 = vmatpush.msra.mxu0 0.0
    %86 = vmatpush.msra.mxu0 0.0
    %87 = vmatpush.msra.mxu0 0.0
    %88 = vmatpush.msra.mxu0 0.0
    %89 = vmatpush.msra.mxu0 0.0
    %90 = vmatpush.msra.mxu0 0.0
    %91 = vmatpush.msra.mxu0 0.0
    %92 = vmatpush.msra.mxu0 0.0
    %93 = vmatpush.msra.mxu0 0.0
    %v94 = vand.u32 %v35, 4294901760
    %v95 = vsub.f32 %v35, %v94
    %v96 = vand.u32 %v95, 4294901760
    %v97 = vsub.f32 %v95, %v96
    %v98 = vand.u32 %v97, 4294901760
    %99 = vmatpush.msra.mxu0 %v98
    %v100 = vand.u32 %v34, 4294901760
    %v101 = vsub.f32 %v34, %v100
    %v102 = vand.u32 %v101, 4294901760
    %v103 = vsub.f32 %v101, %v102
    %v104 = vand.u32 %v103, 4294901760
    %105 = vmatpush.msra.mxu0 %v104
    %v106 = vand.u32 %v33, 4294901760
    %v107 = vsub.f32 %v33, %v106
    %v108 = vand.u32 %v107, 4294901760
    %v109 = vsub.f32 %v107, %v108
    %v110 = vand.u32 %v109, 4294901760
    %111 = vmatpush.msra.mxu0 %v110
    %v112 = vand.u32 %v32, 4294901760
    %v113 = vsub.f32 %v32, %v112
    %v114 = vand.u32 %v113, 4294901760
    %v115 = vsub.f32 %v113, %v114
    %v116 = vand.u32 %v115, 4294901760
    %117 = vmatpush.msra.mxu0 %v116
    %v118 = vand.u32 %v40, 4294901760
    %119 = vmatmul.f32.gmra.mxu0 %v118
    %v120 = vpop.f32.mrf.mxu0
    %v121 = vadd.f32 %v72, %v120
    %v122 = vand.u32 %v43, 4294901760
    %123 = vmatmul.f32.gmra.mxu0 %v122
    %v124 = vpop.f32.mrf.mxu0
    %v125 = vadd.f32 %v80, %v124
    %126 = vdwg.mxu0
    %127 = vmatpush.msra.mxu0 0.0
    %128 = vmatpush.msra.mxu0 0.0
    %129 = vmatpush.msra.mxu0 0.0
    %130 = vmatpush.msra.mxu0 0.0
    %131 = vmatpush.msra.mxu0 0.0
    %132 = vmatpush.msra.mxu0 0.0
    %133 = vmatpush.msra.mxu0 0.0
    %134 = vmatpush.msra.mxu0 0.0
    %135 = vmatpush.msra.mxu0 0.0
    %136 = vmatpush.msra.mxu0 0.0
    %137 = vmatpush.msra.mxu0 0.0
    %138 = vmatpush.msra.mxu0 0.0
    %v139 = vand.u32 %v35, 4294901760
    %v140 = vsub.f32 %v35, %v139
    %141 = vmatpush.msra.mxu0 %v140
    %v142 = vand.u32 %v34, 4294901760
    %v143 = vsub.f32 %v34, %v142
    %144 = vmatpush.msra.mxu0 %v143
    %v145 = vand.u32 %v33, 4294901760
    %v146 = vsub.f32 %v33, %v145
    %147 = vmatpush.msra.mxu0 %v146
    %v148 = vand.u32 %v32, 4294901760
    %v149 = vsub.f32 %v32, %v148
    %150 = vmatpush.msra.mxu0 %v149
    %v151 = vand.u32 %v40, 4294901760
    %v152 = vsub.f32 %v40, %v151
    %153 = vmatmul.f32.gmra.mxu0 %v152
    %v154 = vpop.f32.mrf.mxu0
    %v155 = vadd.f32 %v121, %v154
    %v156 = vand.u32 %v43, 4294901760
    %v157 = vsub.f32 %v43, %v156
    %158 = vmatmul.f32.gmra.mxu0 %v157
    %v159 = vpop.f32.mrf.mxu0
    %v160 = vadd.f32 %v125, %v159
    %161 = vdwg.mxu0
    %162 = vmatpush.msra.mxu0 0.0
    %163 = vmatpush.msra.mxu0 0.0
    %164 = vmatpush.msra.mxu0 0.0
    %165 = vmatpush.msra.mxu0 0.0
    %166 = vmatpush.msra.mxu0 0.0
    %167 = vmatpush.msra.mxu0 0.0
    %168 = vmatpush.msra.mxu0 0.0
    %169 = vmatpush.msra.mxu0 0.0
    %170 = vmatpush.msra.mxu0 0.0
    %171 = vmatpush.msra.mxu0 0.0
    %172 = vmatpush.msra.mxu0 0.0
    %173 = vmatpush.msra.mxu0 0.0
    %v174 = vand.u32 %v35, 4294901760
    %175 = vmatpush.msra.mxu0 %v174
    %v176 = vand.u32 %v34, 4294901760
    %177 = vmatpush.msra.mxu0 %v176
    %v178 = vand.u32 %v33, 4294901760
    %179 = vmatpush.msra.mxu0 %v178
    %v180 = vand.u32 %v32, 4294901760
    %181 = vmatpush.msra.mxu0 %v180
    %v182 = vand.u32 %v40, 4294901760
    %v183 = vsub.f32 %v40, %v182
    %v184 = vand.u32 %v183, 4294901760
    %185 = vmatmul.f32.gmra.mxu0 %v184
    %v186 = vpop.f32.mrf.mxu0
    %v187 = vadd.f32 %v155, %v186
    %v188 = vand.u32 %v43, 4294901760
    %v189 = vsub.f32 %v43, %v188
    %v190 = vand.u32 %v189, 4294901760
    %191 = vmatmul.f32.gmra.mxu0 %v190
    %v192 = vpop.f32.mrf.mxu0
    %v193 = vadd.f32 %v160, %v192
    %194 = vdwg.mxu0
    %195 = vmatpush.msra.mxu0 0.0
    %196 = vmatpush.msra.mxu0 0.0
    %197 = vmatpush.msra.mxu0 0.0
    %198 = vmatpush.msra.mxu0 0.0
    %199 = vmatpush.msra.mxu0 0.0
    %200 = vmatpush.msra.mxu0 0.0
    %201 = vmatpush.msra.mxu0 0.0
    %202 = vmatpush.msra.mxu0 0.0
    %203 = vmatpush.msra.mxu0 0.0
    %204 = vmatpush.msra.mxu0 0.0
    %205 = vmatpush.msra.mxu0 0.0
    %206 = vmatpush.msra.mxu0 0.0
    %v207 = vand.u32 %v35, 4294901760
    %v208 = vsub.f32 %v35, %v207
    %v209 = vand.u32 %v208, 4294901760
    %210 = vmatpush.msra.mxu0 %v209
    %v211 = vand.u32 %v34, 4294901760
    %v212 = vsub.f32 %v34, %v211
    %v213 = vand.u32 %v212, 4294901760
    %214 = vmatpush.msra.mxu0 %v213
    %v215 = vand.u32 %v33, 4294901760
    %v216 = vsub.f32 %v33, %v215
    %v217 = vand.u32 %v216, 4294901760
    %218 = vmatpush.msra.mxu0 %v217
    %v219 = vand.u32 %v32, 4294901760
    %v220 = vsub.f32 %v32, %v219
    %v221 = vand.u32 %v220, 4294901760
    %222 = vmatpush.msra.mxu0 %v221
    %v223 = vand.u32 %v40, 4294901760
    %224 = vmatmul.f32.gmra.mxu0 %v223
    %v225 = vpop.f32.mrf.mxu0
    %v226 = vadd.f32 %v187, %v225
    %v227 = vand.u32 %v43, 4294901760
    %228 = vmatmul.f32.gmra.mxu0 %v227
    %v229 = vpop.f32.mrf.mxu0
    %v230 = vadd.f32 %v193, %v229
    %231 = vdwg.mxu0
    %232 = vmatpush.msra.mxu0 0.0
    %233 = vmatpush.msra.mxu0 0.0
    %234 = vmatpush.msra.mxu0 0.0
    %235 = vmatpush.msra.mxu0 0.0
    %236 = vmatpush.msra.mxu0 0.0
    %237 = vmatpush.msra.mxu0 0.0
    %238 = vmatpush.msra.mxu0 0.0
    %239 = vmatpush.msra.mxu0 0.0
    %240 = vmatpush.msra.mxu0 0.0
    %241 = vmatpush.msra.mxu0 0.0
    %242 = vmatpush.msra.mxu0 0.0
    %243 = vmatpush.msra.mxu0 0.0
    %v244 = vand.u32 %v35, 4294901760
    %245 = vmatpush.msra.mxu0 %v244
    %v246 = vand.u32 %v34, 4294901760
    %247 = vmatpush.msra.mxu0 %v246
    %v248 = vand.u32 %v33, 4294901760
    %249 = vmatpush.msra.mxu0 %v248
    %v250 = vand.u32 %v32, 4294901760
    %251 = vmatpush.msra.mxu0 %v250
    %v252 = vand.u32 %v40, 4294901760
    %253 = vmatmul.f32.gmra.mxu0 %v252
    %v254 = vpop.f32.mrf.mxu0
    %v255 = vadd.f32 %v226, %v254
    %v256 = vand.u32 %v43, 4294901760
    %257 = vmatmul.f32.gmra.mxu0 %v256
    %v258 = vpop.f32.mrf.mxu0
    %v259 = vadd.f32 %v230, %v258
    %260 = vdwg.mxu0
    %v261 = vsub.f32 %v36, %v255
    %v262 = vsub.f32 %v37, %v259
    %v263 = vmul.f32 %v261, %v261
    %v264 = vmul.f32 %v262, %v262
    %v266 = vsel %vm38, %v263, 0
    %v269 = vsel %vm38, %v264, 0
    %271 = vmatpush.msra.mxu0 0.0
    %272 = vmatpush.msra.mxu0 0.0
    %273 = vmatpush.msra.mxu0 0.0
    %274 = vmatpush.msra.mxu0 0.0
    %275 = vmatpush.msra.mxu0 0.0
    %276 = vmatpush.msra.mxu0 0.0
    %277 = vmatpush.msra.mxu0 0.0
    %278 = vmatpush.msra.mxu0 0.0
    %279 = vmatpush.msra.mxu0 0.0
    %280 = vmatpush.msra.mxu0 0.0
    %281 = vmatpush.msra.mxu0 0.0
    %282 = vmatpush.msra.mxu0 0.0
    %v283 = vand.u32 %v35, 4294901760
    %284 = vmatpush.msra.mxu0 %v283
    %v285 = vand.u32 %v34, 4294901760
    %286 = vmatpush.msra.mxu0 %v285
    %v287 = vand.u32 %v33, 4294901760
    %288 = vmatpush.msra.mxu0 %v287
    %v289 = vand.u32 %v32, 4294901760
    %290 = vmatpush.msra.mxu0 %v289
    %v291 = vand.u32 %v266, 4294901760
    %v292 = vsub.f32 %v266, %v291
    %v293 = vand.u32 %v292, 4294901760
    %v294 = vsub.f32 %v292, %v293
    %v295 = vand.u32 %v294, 4294901760
    %296 = vmatmul.f32.gmra.mxu0 %v295
    %v297 = vpop.f32.mrf.mxu0
    %v298 = vadd.f32 1e-05, %v297
    %v299 = vand.u32 %v269, 4294901760
    %v300 = vsub.f32 %v269, %v299
    %v301 = vand.u32 %v300, 4294901760
    %v302 = vsub.f32 %v300, %v301
    %v303 = vand.u32 %v302, 4294901760
    %304 = vmatmul.f32.gmra.mxu0 %v303
    %v305 = vpop.f32.mrf.mxu0
    %v306 = vadd.f32 1e-05, %v305
    %307 = vdwg.mxu0
    %308 = vmatpush.msra.mxu0 0.0
    %309 = vmatpush.msra.mxu0 0.0
    %310 = vmatpush.msra.mxu0 0.0
    %311 = vmatpush.msra.mxu0 0.0
    %312 = vmatpush.msra.mxu0 0.0
    %313 = vmatpush.msra.mxu0 0.0
    %314 = vmatpush.msra.mxu0 0.0
    %315 = vmatpush.msra.mxu0 0.0
    %316 = vmatpush.msra.mxu0 0.0
    %317 = vmatpush.msra.mxu0 0.0
    %318 = vmatpush.msra.mxu0 0.0
    %319 = vmatpush.msra.mxu0 0.0
    %v320 = vand.u32 %v35, 4294901760
    %v321 = vsub.f32 %v35, %v320
    %v322 = vand.u32 %v321, 4294901760
    %v323 = vsub.f32 %v321, %v322
    %v324 = vand.u32 %v323, 4294901760
    %325 = vmatpush.msra.mxu0 %v324
    %v326 = vand.u32 %v34, 4294901760
    %v327 = vsub.f32 %v34, %v326
    %v328 = vand.u32 %v327, 4294901760
    %v329 = vsub.f32 %v327, %v328
    %v330 = vand.u32 %v329, 4294901760
    %331 = vmatpush.msra.mxu0 %v330
    %v332 = vand.u32 %v33, 4294901760
    %v333 = vsub.f32 %v33, %v332
    %v334 = vand.u32 %v333, 4294901760
    %v335 = vsub.f32 %v333, %v334
    %v336 = vand.u32 %v335, 4294901760
    %337 = vmatpush.msra.mxu0 %v336
    %v338 = vand.u32 %v32, 4294901760
    %v339 = vsub.f32 %v32, %v338
    %v340 = vand.u32 %v339, 4294901760
    %v341 = vsub.f32 %v339, %v340
    %v342 = vand.u32 %v341, 4294901760
    %343 = vmatpush.msra.mxu0 %v342
    %v344 = vand.u32 %v266, 4294901760
    %345 = vmatmul.f32.gmra.mxu0 %v344
    %v346 = vpop.f32.mrf.mxu0
    %v347 = vadd.f32 %v298, %v346
    %v348 = vand.u32 %v269, 4294901760
    %349 = vmatmul.f32.gmra.mxu0 %v348
    %v350 = vpop.f32.mrf.mxu0
    %v351 = vadd.f32 %v306, %v350
    %352 = vdwg.mxu0
    %353 = vmatpush.msra.mxu0 0.0
    %354 = vmatpush.msra.mxu0 0.0
    %355 = vmatpush.msra.mxu0 0.0
    %356 = vmatpush.msra.mxu0 0.0
    %357 = vmatpush.msra.mxu0 0.0
    %358 = vmatpush.msra.mxu0 0.0
    %359 = vmatpush.msra.mxu0 0.0
    %360 = vmatpush.msra.mxu0 0.0
    %361 = vmatpush.msra.mxu0 0.0
    %362 = vmatpush.msra.mxu0 0.0
    %363 = vmatpush.msra.mxu0 0.0
    %364 = vmatpush.msra.mxu0 0.0
    %v365 = vand.u32 %v35, 4294901760
    %v366 = vsub.f32 %v35, %v365
    %367 = vmatpush.msra.mxu0 %v366
    %v368 = vand.u32 %v34, 4294901760
    %v369 = vsub.f32 %v34, %v368
    %370 = vmatpush.msra.mxu0 %v369
    %v371 = vand.u32 %v33, 4294901760
    %v372 = vsub.f32 %v33, %v371
    %373 = vmatpush.msra.mxu0 %v372
    %v374 = vand.u32 %v32, 4294901760
    %v375 = vsub.f32 %v32, %v374
    %376 = vmatpush.msra.mxu0 %v375
    %v377 = vand.u32 %v266, 4294901760
    %v378 = vsub.f32 %v266, %v377
    %379 = vmatmul.f32.gmra.mxu0 %v378
    %v380 = vpop.f32.mrf.mxu0
    %v381 = vadd.f32 %v347, %v380
    %v382 = vand.u32 %v269, 4294901760
    %v383 = vsub.f32 %v269, %v382
    %384 = vmatmul.f32.gmra.mxu0 %v383
    %v385 = vpop.f32.mrf.mxu0
    %v386 = vadd.f32 %v351, %v385
    %387 = vdwg.mxu0
    %388 = vmatpush.msra.mxu0 0.0
    %389 = vmatpush.msra.mxu0 0.0
    %390 = vmatpush.msra.mxu0 0.0
    %391 = vmatpush.msra.mxu0 0.0
    %392 = vmatpush.msra.mxu0 0.0
    %393 = vmatpush.msra.mxu0 0.0
    %394 = vmatpush.msra.mxu0 0.0
    %395 = vmatpush.msra.mxu0 0.0
    %396 = vmatpush.msra.mxu0 0.0
    %397 = vmatpush.msra.mxu0 0.0
    %398 = vmatpush.msra.mxu0 0.0
    %399 = vmatpush.msra.mxu0 0.0
    %v400 = vand.u32 %v35, 4294901760
    %401 = vmatpush.msra.mxu0 %v400
    %v402 = vand.u32 %v34, 4294901760
    %403 = vmatpush.msra.mxu0 %v402
    %v404 = vand.u32 %v33, 4294901760
    %405 = vmatpush.msra.mxu0 %v404
    %v406 = vand.u32 %v32, 4294901760
    %407 = vmatpush.msra.mxu0 %v406
    %v408 = vand.u32 %v266, 4294901760
    %v409 = vsub.f32 %v266, %v408
    %v410 = vand.u32 %v409, 4294901760
    %411 = vmatmul.f32.gmra.mxu0 %v410
    %v412 = vpop.f32.mrf.mxu0
    %v413 = vadd.f32 %v381, %v412
    %v414 = vand.u32 %v269, 4294901760
    %v415 = vsub.f32 %v269, %v414
    %v416 = vand.u32 %v415, 4294901760
    %417 = vmatmul.f32.gmra.mxu0 %v416
    %v418 = vpop.f32.mrf.mxu0
    %v419 = vadd.f32 %v386, %v418
    %420 = vdwg.mxu0
    %421 = vmatpush.msra.mxu0 0.0
    %422 = vmatpush.msra.mxu0 0.0
    %423 = vmatpush.msra.mxu0 0.0
    %424 = vmatpush.msra.mxu0 0.0
    %425 = vmatpush.msra.mxu0 0.0
    %426 = vmatpush.msra.mxu0 0.0
    %427 = vmatpush.msra.mxu0 0.0
    %428 = vmatpush.msra.mxu0 0.0
    %429 = vmatpush.msra.mxu0 0.0
    %430 = vmatpush.msra.mxu0 0.0
    %431 = vmatpush.msra.mxu0 0.0
    %432 = vmatpush.msra.mxu0 0.0
    %v433 = vand.u32 %v35, 4294901760
    %v434 = vsub.f32 %v35, %v433
    %v435 = vand.u32 %v434, 4294901760
    %436 = vmatpush.msra.mxu0 %v435
    %v437 = vand.u32 %v34, 4294901760
    %v438 = vsub.f32 %v34, %v437
    %v439 = vand.u32 %v438, 4294901760
    %440 = vmatpush.msra.mxu0 %v439
    %v441 = vand.u32 %v33, 4294901760
    %v442 = vsub.f32 %v33, %v441
    %v443 = vand.u32 %v442, 4294901760
    %444 = vmatpush.msra.mxu0 %v443
    %v445 = vand.u32 %v32, 4294901760
    %v446 = vsub.f32 %v32, %v445
    %v447 = vand.u32 %v446, 4294901760
    %448 = vmatpush.msra.mxu0 %v447
    %v449 = vand.u32 %v266, 4294901760
    %450 = vmatmul.f32.gmra.mxu0 %v449
    %v451 = vpop.f32.mrf.mxu0
    %v452 = vadd.f32 %v413, %v451
    %v453 = vand.u32 %v269, 4294901760
    %454 = vmatmul.f32.gmra.mxu0 %v453
    %v455 = vpop.f32.mrf.mxu0
    %v456 = vadd.f32 %v419, %v455
    %457 = vdwg.mxu0
    %458 = vmatpush.msra.mxu0 0.0
    %459 = vmatpush.msra.mxu0 0.0
    %460 = vmatpush.msra.mxu0 0.0
    %461 = vmatpush.msra.mxu0 0.0
    %462 = vmatpush.msra.mxu0 0.0
    %463 = vmatpush.msra.mxu0 0.0
    %464 = vmatpush.msra.mxu0 0.0
    %465 = vmatpush.msra.mxu0 0.0
    %466 = vmatpush.msra.mxu0 0.0
    %467 = vmatpush.msra.mxu0 0.0
    %468 = vmatpush.msra.mxu0 0.0
    %469 = vmatpush.msra.mxu0 0.0
    %v470 = vand.u32 %v35, 4294901760
    %471 = vmatpush.msra.mxu0 %v470
    %v472 = vand.u32 %v34, 4294901760
    %473 = vmatpush.msra.mxu0 %v472
    %v474 = vand.u32 %v33, 4294901760
    %475 = vmatpush.msra.mxu0 %v474
    %v476 = vand.u32 %v32, 4294901760
    %477 = vmatpush.msra.mxu0 %v476
    %v478 = vand.u32 %v266, 4294901760
    %479 = vmatmul.f32.gmra.mxu0 %v478
    %v480 = vpop.f32.mrf.mxu0
    %v481 = vadd.f32 %v452, %v480
    %v482 = vand.u32 %v269, 4294901760
    %483 = vmatmul.f32.gmra.mxu0 %v482
    %v484 = vpop.f32.mrf.mxu0
    %v485 = vadd.f32 %v456, %v484
    %486 = vdwg.mxu0
    %v487 = vrsqrt.pop %v481
    %v488 = vmul.f32 %v487, %v481
    %v489 = vmul.f32 %v488, %v487
    %v490 = vmul.f32 0.5, %v489
    %v491 = vsub.f32 1.5, %v490
    %v492 = vmul.f32 %v487, %v491
    %vm493 = vweird.f32 %v481
    %vm494 = vweird.f32 %v487
    %vm495 = vmor %vm493, %vm494
    %v496 = vsel %vm495, %v487, %v492
    %v497 = vrsqrt.pop %v485
    %v498 = vmul.f32 %v497, %v485
    %v499 = vmul.f32 %v498, %v497
    %v500 = vmul.f32 0.5, %v499
    %v501 = vsub.f32 1.5, %v500
    %v502 = vmul.f32 %v497, %v501
    %vm503 = vweird.f32 %v485
    %vm504 = vweird.f32 %v497
    %vm505 = vmor %vm503, %vm504
    %v506 = vsel %vm505, %v497, %v502
    %v507 = vmul.f32 %v261, %v496
    %v508 = vmul.f32 %v262, %v506
    %v509 = vld [vmem:[%s1] sm:$0x1]
    %v510 = vperm.slane %v509, 0
    %v511 = vmul.f32 %v507, %v510
    %v512 = vmul.f32 %v508, %v510
    %v513 = vld [vmem:[%s1 + $0x1] sm:$0x1]
    %v514 = vperm.slane %v513, 0
    %v515 = vadd.f32 %v511, %v514
    %v516 = vadd.f32 %v512, %v514
    %v517 = vld [vmem:[%s2] sm:$0xff]
    %v518 = vld [vmem:[%s2 + $0x8] sm:$0xff]
    %v519 = vld [vmem:[%s2 + $0x10] sm:$0xff]
    %v520 = vld [vmem:[%s2 + $0x18] sm:$0xff]
    %v521 = vld [vmem:[%s2 + $0x60] sm:$0x1]
    %v522 = vperm.slane %v521, 0
    %v524 = vsel %vm38, %v515, 0
    %v527 = vsel %vm38, %v516, 0
    %529 = vmatpush.msra.mxu0 0.0
    %530 = vmatpush.msra.mxu0 0.0
    %531 = vmatpush.msra.mxu0 0.0
    %532 = vmatpush.msra.mxu0 0.0
    %533 = vmatpush.msra.mxu0 0.0
    %534 = vmatpush.msra.mxu0 0.0
    %535 = vmatpush.msra.mxu0 0.0
    %536 = vmatpush.msra.mxu0 0.0
    %537 = vmatpush.msra.mxu0 0.0
    %538 = vmatpush.msra.mxu0 0.0
    %539 = vmatpush.msra.mxu0 0.0
    %540 = vmatpush.msra.mxu0 0.0
    %541 = vmatpush.msra.mxu0 %v520
    %542 = vmatpush.msra.mxu0 %v519
    %543 = vmatpush.msra.mxu0 %v518
    %544 = vmatpush.msra.mxu0 %v517
    %545 = vmatmul.f32.gmra.mxu0 %v524
    %v546 = vpop.f32.mrf.mxu0
    %v547 = vadd.f32 %v522, %v546
    %548 = vmatmul.f32.gmra.mxu0 %v527
    %v549 = vpop.f32.mrf.mxu0
    %v550 = vadd.f32 %v522, %v549
    %551 = vdwg.mxu0
    %v552 = vand.u32 2147483647, %v547
    %v553 = vand.u32 2147483647, %v550
    %v554 = vsub.f32 0.0, %v552
    %v555 = vsub.f32 0.0, %v553
    %v556 = vmul.f32 %v554, 1.442695
    %v557 = vpow.pop %v556
    %v558 = vmul.f32 %v555, 1.442695
    %v559 = vpow.pop %v558
    %v560 = vadd.f32 %v557, 1.0
    %v561 = vadd.f32 %v559, 1.0
    %v562 = vrcp.pop %v560
    %v563 = vrcp.pop %v561
    %vm564 = vcmp.ge.f32.partialorder %v547, 0.0
    %vm565 = vcmp.ge.f32.partialorder %v550, 0.0
    %v566 = vmul.f32 %v557, %v562
    %v567 = vmul.f32 %v559, %v563
    %v568 = vsel %vm564, %v562, %v566
    %v569 = vsel %vm565, %v563, %v567
    %v570 = vmul.f32 %v547, %v568
    %v571 = vmul.f32 %v550, %v569
    %v572 = vld [vmem:[%s1 + $0xe8] sm:$0xff]
    %v573 = vld [vmem:[%s1 + $0xf0] sm:$0xff]
    %v574 = vld [vmem:[%s1 + $0xf8] sm:$0xff]
    %v575 = vld [vmem:[%s1 + $0x100] sm:$0xff]
    %v576 = vld [vmem:[%s1 + $0x108] sm:$0xff]
    %v577 = vld [vmem:[%s1 + $0x110] sm:$0xff]
    %v578 = vld [vmem:[%s1 + $0x118] sm:$0xff]
    %v579 = vld [vmem:[%s1 + $0x120] sm:$0xff]
    %v580 = vld [vmem:[%s1 + $0x128] sm:$0xff]
    %v581 = vld [vmem:[%s1 + $0x130] sm:$0xff]
    %v582 = vld [vmem:[%s1 + $0x138] sm:$0xff]
    %v583 = vld [vmem:[%s1 + $0x140] sm:$0xff]
    %v584 = vld [vmem:[%s1 + $0x148] sm:$0xff]
    %v585 = vld [vmem:[%s1 + $0x150] sm:$0xff]
    %v586 = vld [vmem:[%s1 + $0x158] sm:$0xff]
    %v587 = vld [vmem:[%s1 + $0x160] sm:$0xff]
    %v588 = vld [vmem:[%s1 + $0x2] sm:$0x1]
    %v589 = vperm.slane %v588, 0
    %590 = vmatpush.msra.mxu0 %v587
    %591 = vmatpush.msra.mxu0 %v586
    %592 = vmatpush.msra.mxu0 %v585
    %593 = vmatpush.msra.mxu0 %v584
    %594 = vmatpush.msra.mxu0 %v583
    %595 = vmatpush.msra.mxu0 %v582
    %596 = vmatpush.msra.mxu0 %v581
    %597 = vmatpush.msra.mxu0 %v580
    %598 = vmatpush.msra.mxu0 %v579
    %599 = vmatpush.msra.mxu0 %v578
    %600 = vmatpush.msra.mxu0 %v577
    %601 = vmatpush.msra.mxu0 %v576
    %602 = vmatpush.msra.mxu0 %v575
    %603 = vmatpush.msra.mxu0 %v574
    %604 = vmatpush.msra.mxu0 %v573
    %605 = vmatpush.msra.mxu0 %v572
    %606 = vmatmul.f32.gmra.mxu0 %v570
    %v607 = vpop.f32.mrf.mxu0
    %v608 = vadd.f32 %v589, %v607
    %609 = vmatmul.f32.gmra.mxu0 %v571
    %v610 = vpop.f32.mrf.mxu0
    %v611 = vadd.f32 %v589, %v610
    %612 = vdwg.mxu0
    %v613 = vmul.f32 %v608, 0.5
    %v614 = vmul.f32 %v611, 0.5
    %v615 = vadd.f32 %v613, %v36
    %v616 = vadd.f32 %v614, %v37
    %v618 = vsel %vm38, %v615, 0
    %v621 = vsel %vm38, %v616, 0
    %623 = vmatpush.msra.mxu0 0.0
    %624 = vmatpush.msra.mxu0 0.0
    %625 = vmatpush.msra.mxu0 0.0
    %626 = vmatpush.msra.mxu0 0.0
    %627 = vmatpush.msra.mxu0 0.0
    %628 = vmatpush.msra.mxu0 0.0
    %629 = vmatpush.msra.mxu0 0.0
    %630 = vmatpush.msra.mxu0 0.0
    %631 = vmatpush.msra.mxu0 0.0
    %632 = vmatpush.msra.mxu0 0.0
    %633 = vmatpush.msra.mxu0 0.0
    %634 = vmatpush.msra.mxu0 0.0
    %v635 = vand.u32 %v35, 4294901760
    %636 = vmatpush.msra.mxu0 %v635
    %v637 = vand.u32 %v34, 4294901760
    %638 = vmatpush.msra.mxu0 %v637
    %v639 = vand.u32 %v33, 4294901760
    %640 = vmatpush.msra.mxu0 %v639
    %v641 = vand.u32 %v32, 4294901760
    %642 = vmatpush.msra.mxu0 %v641
    %v643 = vand.u32 %v618, 4294901760
    %v644 = vsub.f32 %v618, %v643
    %v645 = vand.u32 %v644, 4294901760
    %v646 = vsub.f32 %v644, %v645
    %v647 = vand.u32 %v646, 4294901760
    %648 = vmatmul.f32.gmra.mxu0 %v647
    %v649 = vpop.f32.mrf.mxu0
    %v650 = vadd.f32 0.0, %v649
    %v651 = vand.u32 %v621, 4294901760
    %v652 = vsub.f32 %v621, %v651
    %v653 = vand.u32 %v652, 4294901760
    %v654 = vsub.f32 %v652, %v653
    %v655 = vand.u32 %v654, 4294901760
    %656 = vmatmul.f32.gmra.mxu0 %v655
    %v657 = vpop.f32.mrf.mxu0
    %v658 = vadd.f32 0.0, %v657
    %659 = vdwg.mxu0
    %660 = vmatpush.msra.mxu0 0.0
    %661 = vmatpush.msra.mxu0 0.0
    %662 = vmatpush.msra.mxu0 0.0
    %663 = vmatpush.msra.mxu0 0.0
    %664 = vmatpush.msra.mxu0 0.0
    %665 = vmatpush.msra.mxu0 0.0
    %666 = vmatpush.msra.mxu0 0.0
    %667 = vmatpush.msra.mxu0 0.0
    %668 = vmatpush.msra.mxu0 0.0
    %669 = vmatpush.msra.mxu0 0.0
    %670 = vmatpush.msra.mxu0 0.0
    %671 = vmatpush.msra.mxu0 0.0
    %v672 = vand.u32 %v35, 4294901760
    %v673 = vsub.f32 %v35, %v672
    %v674 = vand.u32 %v673, 4294901760
    %v675 = vsub.f32 %v673, %v674
    %v676 = vand.u32 %v675, 4294901760
    %677 = vmatpush.msra.mxu0 %v676
    %v678 = vand.u32 %v34, 4294901760
    %v679 = vsub.f32 %v34, %v678
    %v680 = vand.u32 %v679, 4294901760
    %v681 = vsub.f32 %v679, %v680
    %v682 = vand.u32 %v681, 4294901760
    %683 = vmatpush.msra.mxu0 %v682
    %v684 = vand.u32 %v33, 4294901760
    %v685 = vsub.f32 %v33, %v684
    %v686 = vand.u32 %v685, 4294901760
    %v687 = vsub.f32 %v685, %v686
    %v688 = vand.u32 %v687, 4294901760
    %689 = vmatpush.msra.mxu0 %v688
    %v690 = vand.u32 %v32, 4294901760
    %v691 = vsub.f32 %v32, %v690
    %v692 = vand.u32 %v691, 4294901760
    %v693 = vsub.f32 %v691, %v692
    %v694 = vand.u32 %v693, 4294901760
    %695 = vmatpush.msra.mxu0 %v694
    %v696 = vand.u32 %v618, 4294901760
    %697 = vmatmul.f32.gmra.mxu0 %v696
    %v698 = vpop.f32.mrf.mxu0
    %v699 = vadd.f32 %v650, %v698
    %v700 = vand.u32 %v621, 4294901760
    %701 = vmatmul.f32.gmra.mxu0 %v700
    %v702 = vpop.f32.mrf.mxu0
    %v703 = vadd.f32 %v658, %v702
    %704 = vdwg.mxu0
    %705 = vmatpush.msra.mxu0 0.0
    %706 = vmatpush.msra.mxu0 0.0
    %707 = vmatpush.msra.mxu0 0.0
    %708 = vmatpush.msra.mxu0 0.0
    %709 = vmatpush.msra.mxu0 0.0
    %710 = vmatpush.msra.mxu0 0.0
    %711 = vmatpush.msra.mxu0 0.0
    %712 = vmatpush.msra.mxu0 0.0
    %713 = vmatpush.msra.mxu0 0.0
    %714 = vmatpush.msra.mxu0 0.0
    %715 = vmatpush.msra.mxu0 0.0
    %716 = vmatpush.msra.mxu0 0.0
    %v717 = vand.u32 %v35, 4294901760
    %v718 = vsub.f32 %v35, %v717
    %719 = vmatpush.msra.mxu0 %v718
    %v720 = vand.u32 %v34, 4294901760
    %v721 = vsub.f32 %v34, %v720
    %722 = vmatpush.msra.mxu0 %v721
    %v723 = vand.u32 %v33, 4294901760
    %v724 = vsub.f32 %v33, %v723
    %725 = vmatpush.msra.mxu0 %v724
    %v726 = vand.u32 %v32, 4294901760
    %v727 = vsub.f32 %v32, %v726
    %728 = vmatpush.msra.mxu0 %v727
    %v729 = vand.u32 %v618, 4294901760
    %v730 = vsub.f32 %v618, %v729
    %731 = vmatmul.f32.gmra.mxu0 %v730
    %v732 = vpop.f32.mrf.mxu0
    %v733 = vadd.f32 %v699, %v732
    %v734 = vand.u32 %v621, 4294901760
    %v735 = vsub.f32 %v621, %v734
    %736 = vmatmul.f32.gmra.mxu0 %v735
    %v737 = vpop.f32.mrf.mxu0
    %v738 = vadd.f32 %v703, %v737
    %739 = vdwg.mxu0
    %740 = vmatpush.msra.mxu0 0.0
    %741 = vmatpush.msra.mxu0 0.0
    %742 = vmatpush.msra.mxu0 0.0
    %743 = vmatpush.msra.mxu0 0.0
    %744 = vmatpush.msra.mxu0 0.0
    %745 = vmatpush.msra.mxu0 0.0
    %746 = vmatpush.msra.mxu0 0.0
    %747 = vmatpush.msra.mxu0 0.0
    %748 = vmatpush.msra.mxu0 0.0
    %749 = vmatpush.msra.mxu0 0.0
    %750 = vmatpush.msra.mxu0 0.0
    %751 = vmatpush.msra.mxu0 0.0
    %v752 = vand.u32 %v35, 4294901760
    %753 = vmatpush.msra.mxu0 %v752
    %v754 = vand.u32 %v34, 4294901760
    %755 = vmatpush.msra.mxu0 %v754
    %v756 = vand.u32 %v33, 4294901760
    %757 = vmatpush.msra.mxu0 %v756
    %v758 = vand.u32 %v32, 4294901760
    %759 = vmatpush.msra.mxu0 %v758
    %v760 = vand.u32 %v618, 4294901760
    %v761 = vsub.f32 %v618, %v760
    %v762 = vand.u32 %v761, 4294901760
    %763 = vmatmul.f32.gmra.mxu0 %v762
    %v764 = vpop.f32.mrf.mxu0
    %v765 = vadd.f32 %v733, %v764
    %v766 = vand.u32 %v621, 4294901760
    %v767 = vsub.f32 %v621, %v766
    %v768 = vand.u32 %v767, 4294901760
    %769 = vmatmul.f32.gmra.mxu0 %v768
    %v770 = vpop.f32.mrf.mxu0
    %v771 = vadd.f32 %v738, %v770
    %772 = vdwg.mxu0
    %773 = vmatpush.msra.mxu0 0.0
    %774 = vmatpush.msra.mxu0 0.0
    %775 = vmatpush.msra.mxu0 0.0
    %776 = vmatpush.msra.mxu0 0.0
    %777 = vmatpush.msra.mxu0 0.0
    %778 = vmatpush.msra.mxu0 0.0
    %779 = vmatpush.msra.mxu0 0.0
    %780 = vmatpush.msra.mxu0 0.0
    %781 = vmatpush.msra.mxu0 0.0
    %782 = vmatpush.msra.mxu0 0.0
    %783 = vmatpush.msra.mxu0 0.0
    %784 = vmatpush.msra.mxu0 0.0
    %v785 = vand.u32 %v35, 4294901760
    %v786 = vsub.f32 %v35, %v785
    %v787 = vand.u32 %v786, 4294901760
    %788 = vmatpush.msra.mxu0 %v787
    %v789 = vand.u32 %v34, 4294901760
    %v790 = vsub.f32 %v34, %v789
    %v791 = vand.u32 %v790, 4294901760
    %792 = vmatpush.msra.mxu0 %v791
    %v793 = vand.u32 %v33, 4294901760
    %v794 = vsub.f32 %v33, %v793
    %v795 = vand.u32 %v794, 4294901760
    %796 = vmatpush.msra.mxu0 %v795
    %v797 = vand.u32 %v32, 4294901760
    %v798 = vsub.f32 %v32, %v797
    %v799 = vand.u32 %v798, 4294901760
    %800 = vmatpush.msra.mxu0 %v799
    %v801 = vand.u32 %v618, 4294901760
    %802 = vmatmul.f32.gmra.mxu0 %v801
    %v803 = vpop.f32.mrf.mxu0
    %v804 = vadd.f32 %v765, %v803
    %v805 = vand.u32 %v621, 4294901760
    %806 = vmatmul.f32.gmra.mxu0 %v805
    %v807 = vpop.f32.mrf.mxu0
    %v808 = vadd.f32 %v771, %v807
    %809 = vdwg.mxu0
    %810 = vmatpush.msra.mxu0 0.0
    %811 = vmatpush.msra.mxu0 0.0
    %812 = vmatpush.msra.mxu0 0.0
    %813 = vmatpush.msra.mxu0 0.0
    %814 = vmatpush.msra.mxu0 0.0
    %815 = vmatpush.msra.mxu0 0.0
    %816 = vmatpush.msra.mxu0 0.0
    %817 = vmatpush.msra.mxu0 0.0
    %818 = vmatpush.msra.mxu0 0.0
    %819 = vmatpush.msra.mxu0 0.0
    %820 = vmatpush.msra.mxu0 0.0
    %821 = vmatpush.msra.mxu0 0.0
    %v822 = vand.u32 %v35, 4294901760
    %823 = vmatpush.msra.mxu0 %v822
    %v824 = vand.u32 %v34, 4294901760
    %825 = vmatpush.msra.mxu0 %v824
    %v826 = vand.u32 %v33, 4294901760
    %827 = vmatpush.msra.mxu0 %v826
    %v828 = vand.u32 %v32, 4294901760
    %829 = vmatpush.msra.mxu0 %v828
    %v830 = vand.u32 %v618, 4294901760
    %831 = vmatmul.f32.gmra.mxu0 %v830
    %v832 = vpop.f32.mrf.mxu0
    %v833 = vadd.f32 %v804, %v832
    %v834 = vand.u32 %v621, 4294901760
    %835 = vmatmul.f32.gmra.mxu0 %v834
    %v836 = vpop.f32.mrf.mxu0
    %v837 = vadd.f32 %v808, %v836
    %838 = vdwg.mxu0
    %v839 = vsub.f32 %v615, %v833
    %v840 = vsub.f32 %v616, %v837
    %v841 = vmul.f32 %v839, %v839
    %v842 = vmul.f32 %v840, %v840
    %v844 = vsel %vm38, %v841, 0
    %v847 = vsel %vm38, %v842, 0
    %849 = vmatpush.msra.mxu0 0.0
    %850 = vmatpush.msra.mxu0 0.0
    %851 = vmatpush.msra.mxu0 0.0
    %852 = vmatpush.msra.mxu0 0.0
    %853 = vmatpush.msra.mxu0 0.0
    %854 = vmatpush.msra.mxu0 0.0
    %855 = vmatpush.msra.mxu0 0.0
    %856 = vmatpush.msra.mxu0 0.0
    %857 = vmatpush.msra.mxu0 0.0
    %858 = vmatpush.msra.mxu0 0.0
    %859 = vmatpush.msra.mxu0 0.0
    %860 = vmatpush.msra.mxu0 0.0
    %v861 = vand.u32 %v35, 4294901760
    %862 = vmatpush.msra.mxu0 %v861
    %v863 = vand.u32 %v34, 4294901760
    %864 = vmatpush.msra.mxu0 %v863
    %v865 = vand.u32 %v33, 4294901760
    %866 = vmatpush.msra.mxu0 %v865
    %v867 = vand.u32 %v32, 4294901760
    %868 = vmatpush.msra.mxu0 %v867
    %v869 = vand.u32 %v844, 4294901760
    %v870 = vsub.f32 %v844, %v869
    %v871 = vand.u32 %v870, 4294901760
    %v872 = vsub.f32 %v870, %v871
    %v873 = vand.u32 %v872, 4294901760
    %874 = vmatmul.f32.gmra.mxu0 %v873
    %v875 = vpop.f32.mrf.mxu0
    %v876 = vadd.f32 1e-05, %v875
    %v877 = vand.u32 %v847, 4294901760
    %v878 = vsub.f32 %v847, %v877
    %v879 = vand.u32 %v878, 4294901760
    %v880 = vsub.f32 %v878, %v879
    %v881 = vand.u32 %v880, 4294901760
    %882 = vmatmul.f32.gmra.mxu0 %v881
    %v883 = vpop.f32.mrf.mxu0
    %v884 = vadd.f32 1e-05, %v883
    %885 = vdwg.mxu0
    %886 = vmatpush.msra.mxu0 0.0
    %887 = vmatpush.msra.mxu0 0.0
    %888 = vmatpush.msra.mxu0 0.0
    %889 = vmatpush.msra.mxu0 0.0
    %890 = vmatpush.msra.mxu0 0.0
    %891 = vmatpush.msra.mxu0 0.0
    %892 = vmatpush.msra.mxu0 0.0
    %893 = vmatpush.msra.mxu0 0.0
    %894 = vmatpush.msra.mxu0 0.0
    %895 = vmatpush.msra.mxu0 0.0
    %896 = vmatpush.msra.mxu0 0.0
    %897 = vmatpush.msra.mxu0 0.0
    %v898 = vand.u32 %v35, 4294901760
    %v899 = vsub.f32 %v35, %v898
    %v900 = vand.u32 %v899, 4294901760
    %v901 = vsub.f32 %v899, %v900
    %v902 = vand.u32 %v901, 4294901760
    %903 = vmatpush.msra.mxu0 %v902
    %v904 = vand.u32 %v34, 4294901760
    %v905 = vsub.f32 %v34, %v904
    %v906 = vand.u32 %v905, 4294901760
    %v907 = vsub.f32 %v905, %v906
    %v908 = vand.u32 %v907, 4294901760
    %909 = vmatpush.msra.mxu0 %v908
    %v910 = vand.u32 %v33, 4294901760
    %v911 = vsub.f32 %v33, %v910
    %v912 = vand.u32 %v911, 4294901760
    %v913 = vsub.f32 %v911, %v912
    %v914 = vand.u32 %v913, 4294901760
    %915 = vmatpush.msra.mxu0 %v914
    %v916 = vand.u32 %v32, 4294901760
    %v917 = vsub.f32 %v32, %v916
    %v918 = vand.u32 %v917, 4294901760
    %v919 = vsub.f32 %v917, %v918
    %v920 = vand.u32 %v919, 4294901760
    %921 = vmatpush.msra.mxu0 %v920
    %v922 = vand.u32 %v844, 4294901760
    %923 = vmatmul.f32.gmra.mxu0 %v922
    %v924 = vpop.f32.mrf.mxu0
    %v925 = vadd.f32 %v876, %v924
    %v926 = vand.u32 %v847, 4294901760
    %927 = vmatmul.f32.gmra.mxu0 %v926
    %v928 = vpop.f32.mrf.mxu0
    %v929 = vadd.f32 %v884, %v928
    %930 = vdwg.mxu0
    %931 = vmatpush.msra.mxu0 0.0
    %932 = vmatpush.msra.mxu0 0.0
    %933 = vmatpush.msra.mxu0 0.0
    %934 = vmatpush.msra.mxu0 0.0
    %935 = vmatpush.msra.mxu0 0.0
    %936 = vmatpush.msra.mxu0 0.0
    %937 = vmatpush.msra.mxu0 0.0
    %938 = vmatpush.msra.mxu0 0.0
    %939 = vmatpush.msra.mxu0 0.0
    %940 = vmatpush.msra.mxu0 0.0
    %941 = vmatpush.msra.mxu0 0.0
    %942 = vmatpush.msra.mxu0 0.0
    %v943 = vand.u32 %v35, 4294901760
    %v944 = vsub.f32 %v35, %v943
    %945 = vmatpush.msra.mxu0 %v944
    %v946 = vand.u32 %v34, 4294901760
    %v947 = vsub.f32 %v34, %v946
    %948 = vmatpush.msra.mxu0 %v947
    %v949 = vand.u32 %v33, 4294901760
    %v950 = vsub.f32 %v33, %v949
    %951 = vmatpush.msra.mxu0 %v950
    %v952 = vand.u32 %v32, 4294901760
    %v953 = vsub.f32 %v32, %v952
    %954 = vmatpush.msra.mxu0 %v953
    %v955 = vand.u32 %v844, 4294901760
    %v956 = vsub.f32 %v844, %v955
    %957 = vmatmul.f32.gmra.mxu0 %v956
    %v958 = vpop.f32.mrf.mxu0
    %v959 = vadd.f32 %v925, %v958
    %v960 = vand.u32 %v847, 4294901760
    %v961 = vsub.f32 %v847, %v960
    %962 = vmatmul.f32.gmra.mxu0 %v961
    %v963 = vpop.f32.mrf.mxu0
    %v964 = vadd.f32 %v929, %v963
    %965 = vdwg.mxu0
    %966 = vmatpush.msra.mxu0 0.0
    %967 = vmatpush.msra.mxu0 0.0
    %968 = vmatpush.msra.mxu0 0.0
    %969 = vmatpush.msra.mxu0 0.0
    %970 = vmatpush.msra.mxu0 0.0
    %971 = vmatpush.msra.mxu0 0.0
    %972 = vmatpush.msra.mxu0 0.0
    %973 = vmatpush.msra.mxu0 0.0
    %974 = vmatpush.msra.mxu0 0.0
    %975 = vmatpush.msra.mxu0 0.0
    %976 = vmatpush.msra.mxu0 0.0
    %977 = vmatpush.msra.mxu0 0.0
    %v978 = vand.u32 %v35, 4294901760
    %979 = vmatpush.msra.mxu0 %v978
    %v980 = vand.u32 %v34, 4294901760
    %981 = vmatpush.msra.mxu0 %v980
    %v982 = vand.u32 %v33, 4294901760
    %983 = vmatpush.msra.mxu0 %v982
    %v984 = vand.u32 %v32, 4294901760
    %985 = vmatpush.msra.mxu0 %v984
    %v986 = vand.u32 %v844, 4294901760
    %v987 = vsub.f32 %v844, %v986
    %v988 = vand.u32 %v987, 4294901760
    %989 = vmatmul.f32.gmra.mxu0 %v988
    %v990 = vpop.f32.mrf.mxu0
    %v991 = vadd.f32 %v959, %v990
    %v992 = vand.u32 %v847, 4294901760
    %v993 = vsub.f32 %v847, %v992
    %v994 = vand.u32 %v993, 4294901760
    %995 = vmatmul.f32.gmra.mxu0 %v994
    %v996 = vpop.f32.mrf.mxu0
    %v997 = vadd.f32 %v964, %v996
    %998 = vdwg.mxu0
    %999 = vmatpush.msra.mxu0 0.0
    %1000 = vmatpush.msra.mxu0 0.0
    %1001 = vmatpush.msra.mxu0 0.0
    %1002 = vmatpush.msra.mxu0 0.0
    %1003 = vmatpush.msra.mxu0 0.0
    %1004 = vmatpush.msra.mxu0 0.0
    %1005 = vmatpush.msra.mxu0 0.0
    %1006 = vmatpush.msra.mxu0 0.0
    %1007 = vmatpush.msra.mxu0 0.0
    %1008 = vmatpush.msra.mxu0 0.0
    %1009 = vmatpush.msra.mxu0 0.0
    %1010 = vmatpush.msra.mxu0 0.0
    %v1011 = vand.u32 %v35, 4294901760
    %v1012 = vsub.f32 %v35, %v1011
    %v1013 = vand.u32 %v1012, 4294901760
    %1014 = vmatpush.msra.mxu0 %v1013
    %v1015 = vand.u32 %v34, 4294901760
    %v1016 = vsub.f32 %v34, %v1015
    %v1017 = vand.u32 %v1016, 4294901760
    %1018 = vmatpush.msra.mxu0 %v1017
    %v1019 = vand.u32 %v33, 4294901760
    %v1020 = vsub.f32 %v33, %v1019
    %v1021 = vand.u32 %v1020, 4294901760
    %1022 = vmatpush.msra.mxu0 %v1021
    %v1023 = vand.u32 %v32, 4294901760
    %v1024 = vsub.f32 %v32, %v1023
    %v1025 = vand.u32 %v1024, 4294901760
    %1026 = vmatpush.msra.mxu0 %v1025
    %v1027 = vand.u32 %v844, 4294901760
    %1028 = vmatmul.f32.gmra.mxu0 %v1027
    %v1029 = vpop.f32.mrf.mxu0
    %v1030 = vadd.f32 %v991, %v1029
    %v1031 = vand.u32 %v847, 4294901760
    %1032 = vmatmul.f32.gmra.mxu0 %v1031
    %v1033 = vpop.f32.mrf.mxu0
    %v1034 = vadd.f32 %v997, %v1033
    %1035 = vdwg.mxu0
    %1036 = vmatpush.msra.mxu0 0.0
    %1037 = vmatpush.msra.mxu0 0.0
    %1038 = vmatpush.msra.mxu0 0.0
    %1039 = vmatpush.msra.mxu0 0.0
    %1040 = vmatpush.msra.mxu0 0.0
    %1041 = vmatpush.msra.mxu0 0.0
    %1042 = vmatpush.msra.mxu0 0.0
    %1043 = vmatpush.msra.mxu0 0.0
    %1044 = vmatpush.msra.mxu0 0.0
    %1045 = vmatpush.msra.mxu0 0.0
    %1046 = vmatpush.msra.mxu0 0.0
    %1047 = vmatpush.msra.mxu0 0.0
    %v1048 = vand.u32 %v35, 4294901760
    %1049 = vmatpush.msra.mxu0 %v1048
    %v1050 = vand.u32 %v34, 4294901760
    %1051 = vmatpush.msra.mxu0 %v1050
    %v1052 = vand.u32 %v33, 4294901760
    %1053 = vmatpush.msra.mxu0 %v1052
    %v1054 = vand.u32 %v32, 4294901760
    %1055 = vmatpush.msra.mxu0 %v1054
    %v1056 = vand.u32 %v844, 4294901760
    %1057 = vmatmul.f32.gmra.mxu0 %v1056
    %v1058 = vpop.f32.mrf.mxu0
    %v1059 = vadd.f32 %v1030, %v1058
    %v1060 = vand.u32 %v847, 4294901760
    %1061 = vmatmul.f32.gmra.mxu0 %v1060
    %v1062 = vpop.f32.mrf.mxu0
    %v1063 = vadd.f32 %v1034, %v1062
    %1064 = vdwg.mxu0
    %v1065 = vrsqrt.pop %v1059
    %v1066 = vmul.f32 %v1065, %v1059
    %v1067 = vmul.f32 %v1066, %v1065
    %v1068 = vmul.f32 0.5, %v1067
    %v1069 = vsub.f32 1.5, %v1068
    %v1070 = vmul.f32 %v1065, %v1069
    %vm1071 = vweird.f32 %v1059
    %vm1072 = vweird.f32 %v1065
    %vm1073 = vmor %vm1071, %vm1072
    %v1074 = vsel %vm1073, %v1065, %v1070
    %v1075 = vrsqrt.pop %v1063
    %v1076 = vmul.f32 %v1075, %v1063
    %v1077 = vmul.f32 %v1076, %v1075
    %v1078 = vmul.f32 0.5, %v1077
    %v1079 = vsub.f32 1.5, %v1078
    %v1080 = vmul.f32 %v1075, %v1079
    %vm1081 = vweird.f32 %v1063
    %vm1082 = vweird.f32 %v1075
    %vm1083 = vmor %vm1081, %vm1082
    %v1084 = vsel %vm1083, %v1075, %v1080
    %v1085 = vmul.f32 %v839, %v1074
    %v1086 = vmul.f32 %v840, %v1084
    %v1087 = vld [vmem:[%s1 + $0x3] sm:$0x1]
    %v1088 = vperm.slane %v1087, 0
    %v1089 = vmul.f32 %v1085, %v1088
    %v1090 = vmul.f32 %v1086, %v1088
    %v1091 = vld [vmem:[%s1 + $0x4] sm:$0x1]
    %v1092 = vperm.slane %v1091, 0
    %v1093 = vadd.f32 %v1089, %v1092
    %v1094 = vadd.f32 %v1090, %v1092
    %v1095 = vld [vmem:[%s4 + $0xf0] sm:$0xff]
    %vm1096 = vcmask 130048
    %v1098 = vsel %vm1096, %v1095, 0
    %1100 = vmatpush.msra.mxu0 0.0
    %1101 = vmatpush.msra.mxu0 0.0
    %1102 = vmatpush.msra.mxu0 0.0
    %1103 = vmatpush.msra.mxu0 0.0
    %1104 = vmatpush.msra.mxu0 0.0
    %1105 = vmatpush.msra.mxu0 0.0
    %1106 = vmatpush.msra.mxu0 0.0
    %1107 = vmatpush.msra.mxu0 0.0
    %1108 = vmatpush.msra.mxu0 0.0
    %1109 = vmatpush.msra.mxu0 0.0
    %1110 = vmatpush.msra.mxu0 0.0
    %1111 = vmatpush.msra.mxu0 0.0
    %1112 = vmatpush.msra.mxu0 0.0
    %1113 = vmatpush.msra.mxu0 0.0
    %v1114 = vand.u32 %v1094, 4294901760
    %1115 = vmatpush.msra.mxu0 %v1114
    %v1116 = vand.u32 %v1093, 4294901760
    %1117 = vmatpush.msra.mxu0 %v1116
    %v1118 = vand.u32 %v1098, 4294901760
    %v1119 = vsub.f32 %v1098, %v1118
    %v1120 = vand.u32 %v1119, 4294901760
    %v1121 = vsub.f32 %v1119, %v1120
    %v1122 = vand.u32 %v1121, 4294901760
    %1123 = vmatmul.f32.gmra.mxu0 %v1122
    %v1124 = vpop.f32.mrf.mxu0
    %v1125 = vadd.f32 0.0, %v1124
    %1126 = vdwg.mxu0
    %1127 = vmatpush.msra.mxu0 0.0
    %1128 = vmatpush.msra.mxu0 0.0
    %1129 = vmatpush.msra.mxu0 0.0
    %1130 = vmatpush.msra.mxu0 0.0
    %1131 = vmatpush.msra.mxu0 0.0
    %1132 = vmatpush.msra.mxu0 0.0
    %1133 = vmatpush.msra.mxu0 0.0
    %1134 = vmatpush.msra.mxu0 0.0
    %1135 = vmatpush.msra.mxu0 0.0
    %1136 = vmatpush.msra.mxu0 0.0
    %1137 = vmatpush.msra.mxu0 0.0
    %1138 = vmatpush.msra.mxu0 0.0
    %1139 = vmatpush.msra.mxu0 0.0
    %1140 = vmatpush.msra.mxu0 0.0
    %v1141 = vand.u32 %v1094, 4294901760
    %v1142 = vsub.f32 %v1094, %v1141
    %v1143 = vand.u32 %v1142, 4294901760
    %v1144 = vsub.f32 %v1142, %v1143
    %v1145 = vand.u32 %v1144, 4294901760
    %1146 = vmatpush.msra.mxu0 %v1145
    %v1147 = vand.u32 %v1093, 4294901760
    %v1148 = vsub.f32 %v1093, %v1147
    %v1149 = vand.u32 %v1148, 4294901760
    %v1150 = vsub.f32 %v1148, %v1149
    %v1151 = vand.u32 %v1150, 4294901760
    %1152 = vmatpush.msra.mxu0 %v1151
    %v1153 = vand.u32 %v1098, 4294901760
    %1154 = vmatmul.f32.gmra.mxu0 %v1153
    %v1155 = vpop.f32.mrf.mxu0
    %v1156 = vadd.f32 %v1125, %v1155
    %1157 = vdwg.mxu0
    %1158 = vmatpush.msra.mxu0 0.0
    %1159 = vmatpush.msra.mxu0 0.0
    %1160 = vmatpush.msra.mxu0 0.0
    %1161 = vmatpush.msra.mxu0 0.0
    %1162 = vmatpush.msra.mxu0 0.0
    %1163 = vmatpush.msra.mxu0 0.0
    %1164 = vmatpush.msra.mxu0 0.0
    %1165 = vmatpush.msra.mxu0 0.0
    %1166 = vmatpush.msra.mxu0 0.0
    %1167 = vmatpush.msra.mxu0 0.0
    %1168 = vmatpush.msra.mxu0 0.0
    %1169 = vmatpush.msra.mxu0 0.0
    %1170 = vmatpush.msra.mxu0 0.0
    %1171 = vmatpush.msra.mxu0 0.0
    %v1172 = vand.u32 %v1094, 4294901760
    %v1173 = vsub.f32 %v1094, %v1172
    %1174 = vmatpush.msra.mxu0 %v1173
    %v1175 = vand.u32 %v1093, 4294901760
    %v1176 = vsub.f32 %v1093, %v1175
    %1177 = vmatpush.msra.mxu0 %v1176
    %v1178 = vand.u32 %v1098, 4294901760
    %v1179 = vsub.f32 %v1098, %v1178
    %1180 = vmatmul.f32.gmra.mxu0 %v1179
    %v1181 = vpop.f32.mrf.mxu0
    %v1182 = vadd.f32 %v1156, %v1181
    %1183 = vdwg.mxu0
    %1184 = vmatpush.msra.mxu0 0.0
    %1185 = vmatpush.msra.mxu0 0.0
    %1186 = vmatpush.msra.mxu0 0.0
    %1187 = vmatpush.msra.mxu0 0.0
    %1188 = vmatpush.msra.mxu0 0.0
    %1189 = vmatpush.msra.mxu0 0.0
    %1190 = vmatpush.msra.mxu0 0.0
    %1191 = vmatpush.msra.mxu0 0.0
    %1192 = vmatpush.msra.mxu0 0.0
    %1193 = vmatpush.msra.mxu0 0.0
    %1194 = vmatpush.msra.mxu0 0.0
    %1195 = vmatpush.msra.mxu0 0.0
    %1196 = vmatpush.msra.mxu0 0.0
    %1197 = vmatpush.msra.mxu0 0.0
    %v1198 = vand.u32 %v1094, 4294901760
    %1199 = vmatpush.msra.mxu0 %v1198
    %v1200 = vand.u32 %v1093, 4294901760
    %1201 = vmatpush.msra.mxu0 %v1200
    %v1202 = vand.u32 %v1098, 4294901760
    %v1203 = vsub.f32 %v1098, %v1202
    %v1204 = vand.u32 %v1203, 4294901760
    %1205 = vmatmul.f32.gmra.mxu0 %v1204
    %v1206 = vpop.f32.mrf.mxu0
    %v1207 = vadd.f32 %v1182, %v1206
    %1208 = vdwg.mxu0
    %1209 = vmatpush.msra.mxu0 0.0
    %1210 = vmatpush.msra.mxu0 0.0
    %1211 = vmatpush.msra.mxu0 0.0
    %1212 = vmatpush.msra.mxu0 0.0
    %1213 = vmatpush.msra.mxu0 0.0
    %1214 = vmatpush.msra.mxu0 0.0
    %1215 = vmatpush.msra.mxu0 0.0
    %1216 = vmatpush.msra.mxu0 0.0
    %1217 = vmatpush.msra.mxu0 0.0
    %1218 = vmatpush.msra.mxu0 0.0
    %1219 = vmatpush.msra.mxu0 0.0
    %1220 = vmatpush.msra.mxu0 0.0
    %1221 = vmatpush.msra.mxu0 0.0
    %1222 = vmatpush.msra.mxu0 0.0
    %v1223 = vand.u32 %v1094, 4294901760
    %v1224 = vsub.f32 %v1094, %v1223
    %v1225 = vand.u32 %v1224, 4294901760
    %1226 = vmatpush.msra.mxu0 %v1225
    %v1227 = vand.u32 %v1093, 4294901760
    %v1228 = vsub.f32 %v1093, %v1227
    %v1229 = vand.u32 %v1228, 4294901760
    %1230 = vmatpush.msra.mxu0 %v1229
    %v1231 = vand.u32 %v1098, 4294901760
    %1232 = vmatmul.f32.gmra.mxu0 %v1231
    %v1233 = vpop.f32.mrf.mxu0
    %v1234 = vadd.f32 %v1207, %v1233
    %1235 = vdwg.mxu0
    %1236 = vmatpush.msra.mxu0 0.0
    %1237 = vmatpush.msra.mxu0 0.0
    %1238 = vmatpush.msra.mxu0 0.0
    %1239 = vmatpush.msra.mxu0 0.0
    %1240 = vmatpush.msra.mxu0 0.0
    %1241 = vmatpush.msra.mxu0 0.0
    %1242 = vmatpush.msra.mxu0 0.0
    %1243 = vmatpush.msra.mxu0 0.0
    %1244 = vmatpush.msra.mxu0 0.0
    %1245 = vmatpush.msra.mxu0 0.0
    %1246 = vmatpush.msra.mxu0 0.0
    %1247 = vmatpush.msra.mxu0 0.0
    %1248 = vmatpush.msra.mxu0 0.0
    %1249 = vmatpush.msra.mxu0 0.0
    %v1250 = vand.u32 %v1094, 4294901760
    %1251 = vmatpush.msra.mxu0 %v1250
    %v1252 = vand.u32 %v1093, 4294901760
    %1253 = vmatpush.msra.mxu0 %v1252
    %v1254 = vand.u32 %v1098, 4294901760
    %1255 = vmatmul.f32.gmra.mxu0 %v1254
    %v1256 = vpop.f32.mrf.mxu0
    %v1257 = vadd.f32 %v1234, %v1256
    %1258 = vdwg.mxu0
    %v1259 = vld [vmem:[%s1 + $0x80] sm:$0xff]
    %v1260 = vmul.f32 %v1257, %v1259
    %v1261 = vld [vmem:[%s1 + $0x60] sm:$0xff]
    %v1262 = vld [vmem:[%s1 + $0x68] sm:$0xff]
    %v1263 = vld [vmem:[%s1 + $0x70] sm:$0xff]
    %v1264 = vld [vmem:[%s1 + $0x78] sm:$0xff]
    %v1265 = vld [vmem:[%s1 + $0x5] sm:$0x1]
    %v1266 = vperm.slane %v1265, 0
    %v1268 = vsel %vm38, %v1260, 0
    %1270 = vmatpush.msra.mxu0 0.0
    %1271 = vmatpush.msra.mxu0 0.0
    %1272 = vmatpush.msra.mxu0 0.0
    %1273 = vmatpush.msra.mxu0 0.0
    %1274 = vmatpush.msra.mxu0 0.0
    %1275 = vmatpush.msra.mxu0 0.0
    %1276 = vmatpush.msra.mxu0 0.0
    %1277 = vmatpush.msra.mxu0 0.0
    %1278 = vmatpush.msra.mxu0 0.0
    %1279 = vmatpush.msra.mxu0 0.0
    %1280 = vmatpush.msra.mxu0 0.0
    %1281 = vmatpush.msra.mxu0 0.0
    %1282 = vmatpush.msra.mxu0 %v1264
    %1283 = vmatpush.msra.mxu0 %v1263
    %1284 = vmatpush.msra.mxu0 %v1262
    %1285 = vmatpush.msra.mxu0 %v1261
    %1286 = vmatmul.f32.gmra.mxu0 %v1268
    %v1287 = vpop.f32.mrf.mxu0
    %v1288 = vadd.f32 %v1266, %v1287
    %1289 = vdwg.mxu0
    %v1290 = vld [vmem:[%s1 + $0x40] sm:$0xff]
    %v1291 = vld [vmem:[%s1 + $0x48] sm:$0xff]
    %v1292 = vld [vmem:[%s1 + $0x50] sm:$0xff]
    %v1293 = vld [vmem:[%s1 + $0x58] sm:$0xff]
    %v1295 = vsel %vm38, %v1288, 0
    %1297 = vmatpush.msra.mxu0 0.0
    %1298 = vmatpush.msra.mxu0 0.0
    %1299 = vmatpush.msra.mxu0 0.0
    %1300 = vmatpush.msra.mxu0 0.0
    %1301 = vmatpush.msra.mxu0 0.0
    %1302 = vmatpush.msra.mxu0 0.0
    %1303 = vmatpush.msra.mxu0 0.0
    %1304 = vmatpush.msra.mxu0 0.0
    %1305 = vmatpush.msra.mxu0 0.0
    %1306 = vmatpush.msra.mxu0 0.0
    %1307 = vmatpush.msra.mxu0 0.0
    %1308 = vmatpush.msra.mxu0 0.0
    %v1309 = vand.u32 %v1293, 4294901760
    %1310 = vmatpush.msra.mxu0 %v1309
    %v1311 = vand.u32 %v1292, 4294901760
    %1312 = vmatpush.msra.mxu0 %v1311
    %v1313 = vand.u32 %v1291, 4294901760
    %1314 = vmatpush.msra.mxu0 %v1313
    %v1315 = vand.u32 %v1290, 4294901760
    %1316 = vmatpush.msra.mxu0 %v1315
    %v1317 = vand.u32 %v1295, 4294901760
    %v1318 = vsub.f32 %v1295, %v1317
    %v1319 = vand.u32 %v1318, 4294901760
    %v1320 = vsub.f32 %v1318, %v1319
    %v1321 = vand.u32 %v1320, 4294901760
    %1322 = vmatmul.f32.gmra.mxu0 %v1321
    %v1323 = vpop.f32.mrf.mxu0
    %v1324 = vadd.f32 0.0, %v1323
    %1325 = vdwg.mxu0
    %1326 = vmatpush.msra.mxu0 0.0
    %1327 = vmatpush.msra.mxu0 0.0
    %1328 = vmatpush.msra.mxu0 0.0
    %1329 = vmatpush.msra.mxu0 0.0
    %1330 = vmatpush.msra.mxu0 0.0
    %1331 = vmatpush.msra.mxu0 0.0
    %1332 = vmatpush.msra.mxu0 0.0
    %1333 = vmatpush.msra.mxu0 0.0
    %1334 = vmatpush.msra.mxu0 0.0
    %1335 = vmatpush.msra.mxu0 0.0
    %1336 = vmatpush.msra.mxu0 0.0
    %1337 = vmatpush.msra.mxu0 0.0
    %v1338 = vand.u32 %v1293, 4294901760
    %v1339 = vsub.f32 %v1293, %v1338
    %v1340 = vand.u32 %v1339, 4294901760
    %v1341 = vsub.f32 %v1339, %v1340
    %v1342 = vand.u32 %v1341, 4294901760
    %1343 = vmatpush.msra.mxu0 %v1342
    %v1344 = vand.u32 %v1292, 4294901760
    %v1345 = vsub.f32 %v1292, %v1344
    %v1346 = vand.u32 %v1345, 4294901760
    %v1347 = vsub.f32 %v1345, %v1346
    %v1348 = vand.u32 %v1347, 4294901760
    %1349 = vmatpush.msra.mxu0 %v1348
    %v1350 = vand.u32 %v1291, 4294901760
    %v1351 = vsub.f32 %v1291, %v1350
    %v1352 = vand.u32 %v1351, 4294901760
    %v1353 = vsub.f32 %v1351, %v1352
    %v1354 = vand.u32 %v1353, 4294901760
    %1355 = vmatpush.msra.mxu0 %v1354
    %v1356 = vand.u32 %v1290, 4294901760
    %v1357 = vsub.f32 %v1290, %v1356
    %v1358 = vand.u32 %v1357, 4294901760
    %v1359 = vsub.f32 %v1357, %v1358
    %v1360 = vand.u32 %v1359, 4294901760
    %1361 = vmatpush.msra.mxu0 %v1360
    %v1362 = vand.u32 %v1295, 4294901760
    %1363 = vmatmul.f32.gmra.mxu0 %v1362
    %v1364 = vpop.f32.mrf.mxu0
    %v1365 = vadd.f32 %v1324, %v1364
    %1366 = vdwg.mxu0
    %1367 = vmatpush.msra.mxu0 0.0
    %1368 = vmatpush.msra.mxu0 0.0
    %1369 = vmatpush.msra.mxu0 0.0
    %1370 = vmatpush.msra.mxu0 0.0
    %1371 = vmatpush.msra.mxu0 0.0
    %1372 = vmatpush.msra.mxu0 0.0
    %1373 = vmatpush.msra.mxu0 0.0
    %1374 = vmatpush.msra.mxu0 0.0
    %1375 = vmatpush.msra.mxu0 0.0
    %1376 = vmatpush.msra.mxu0 0.0
    %1377 = vmatpush.msra.mxu0 0.0
    %1378 = vmatpush.msra.mxu0 0.0
    %v1379 = vand.u32 %v1293, 4294901760
    %v1380 = vsub.f32 %v1293, %v1379
    %1381 = vmatpush.msra.mxu0 %v1380
    %v1382 = vand.u32 %v1292, 4294901760
    %v1383 = vsub.f32 %v1292, %v1382
    %1384 = vmatpush.msra.mxu0 %v1383
    %v1385 = vand.u32 %v1291, 4294901760
    %v1386 = vsub.f32 %v1291, %v1385
    %1387 = vmatpush.msra.mxu0 %v1386
    %v1388 = vand.u32 %v1290, 4294901760
    %v1389 = vsub.f32 %v1290, %v1388
    %1390 = vmatpush.msra.mxu0 %v1389
    %v1391 = vand.u32 %v1295, 4294901760
    %v1392 = vsub.f32 %v1295, %v1391
    %1393 = vmatmul.f32.gmra.mxu0 %v1392
    %v1394 = vpop.f32.mrf.mxu0
    %v1395 = vadd.f32 %v1365, %v1394
    %1396 = vdwg.mxu0
    %1397 = vmatpush.msra.mxu0 0.0
    %1398 = vmatpush.msra.mxu0 0.0
    %1399 = vmatpush.msra.mxu0 0.0
    %1400 = vmatpush.msra.mxu0 0.0
    %1401 = vmatpush.msra.mxu0 0.0
    %1402 = vmatpush.msra.mxu0 0.0
    %1403 = vmatpush.msra.mxu0 0.0
    %1404 = vmatpush.msra.mxu0 0.0
    %1405 = vmatpush.msra.mxu0 0.0
    %1406 = vmatpush.msra.mxu0 0.0
    %1407 = vmatpush.msra.mxu0 0.0
    %1408 = vmatpush.msra.mxu0 0.0
    %v1409 = vand.u32 %v1293, 4294901760
    %1410 = vmatpush.msra.mxu0 %v1409
    %v1411 = vand.u32 %v1292, 4294901760
    %1412 = vmatpush.msra.mxu0 %v1411
    %v1413 = vand.u32 %v1291, 4294901760
    %1414 = vmatpush.msra.mxu0 %v1413
    %v1415 = vand.u32 %v1290, 4294901760
    %1416 = vmatpush.msra.mxu0 %v1415
    %v1417 = vand.u32 %v1295, 4294901760
    %v1418 = vsub.f32 %v1295, %v1417
    %v1419 = vand.u32 %v1418, 4294901760
    %1420 = vmatmul.f32.gmra.mxu0 %v1419
    %v1421 = vpop.f32.mrf.mxu0
    %v1422 = vadd.f32 %v1395, %v1421
    %1423 = vdwg.mxu0
    %1424 = vmatpush.msra.mxu0 0.0
    %1425 = vmatpush.msra.mxu0 0.0
    %1426 = vmatpush.msra.mxu0 0.0
    %1427 = vmatpush.msra.mxu0 0.0
    %1428 = vmatpush.msra.mxu0 0.0
    %1429 = vmatpush.msra.mxu0 0.0
    %1430 = vmatpush.msra.mxu0 0.0
    %1431 = vmatpush.msra.mxu0 0.0
    %1432 = vmatpush.msra.mxu0 0.0
    %1433 = vmatpush.msra.mxu0 0.0
    %1434 = vmatpush.msra.mxu0 0.0
    %1435 = vmatpush.msra.mxu0 0.0
    %v1436 = vand.u32 %v1293, 4294901760
    %v1437 = vsub.f32 %v1293, %v1436
    %v1438 = vand.u32 %v1437, 4294901760
    %1439 = vmatpush.msra.mxu0 %v1438
    %v1440 = vand.u32 %v1292, 4294901760
    %v1441 = vsub.f32 %v1292, %v1440
    %v1442 = vand.u32 %v1441, 4294901760
    %1443 = vmatpush.msra.mxu0 %v1442
    %v1444 = vand.u32 %v1291, 4294901760
    %v1445 = vsub.f32 %v1291, %v1444
    %v1446 = vand.u32 %v1445, 4294901760
    %1447 = vmatpush.msra.mxu0 %v1446
    %v1448 = vand.u32 %v1290, 4294901760
    %v1449 = vsub.f32 %v1290, %v1448
    %v1450 = vand.u32 %v1449, 4294901760
    %1451 = vmatpush.msra.mxu0 %v1450
    %v1452 = vand.u32 %v1295, 4294901760
    %1453 = vmatmul.f32.gmra.mxu0 %v1452
    %v1454 = vpop.f32.mrf.mxu0
    %v1455 = vadd.f32 %v1422, %v1454
    %1456 = vdwg.mxu0
    %1457 = vmatpush.msra.mxu0 0.0
    %1458 = vmatpush.msra.mxu0 0.0
    %1459 = vmatpush.msra.mxu0 0.0
    %1460 = vmatpush.msra.mxu0 0.0
    %1461 = vmatpush.msra.mxu0 0.0
    %1462 = vmatpush.msra.mxu0 0.0
    %1463 = vmatpush.msra.mxu0 0.0
    %1464 = vmatpush.msra.mxu0 0.0
    %1465 = vmatpush.msra.mxu0 0.0
    %1466 = vmatpush.msra.mxu0 0.0
    %1467 = vmatpush.msra.mxu0 0.0
    %1468 = vmatpush.msra.mxu0 0.0
    %v1469 = vand.u32 %v1293, 4294901760
    %1470 = vmatpush.msra.mxu0 %v1469
    %v1471 = vand.u32 %v1292, 4294901760
    %1472 = vmatpush.msra.mxu0 %v1471
    %v1473 = vand.u32 %v1291, 4294901760
    %1474 = vmatpush.msra.mxu0 %v1473
    %v1475 = vand.u32 %v1290, 4294901760
    %1476 = vmatpush.msra.mxu0 %v1475
    %v1477 = vand.u32 %v1295, 4294901760
    %1478 = vmatmul.f32.gmra.mxu0 %v1477
    %v1479 = vpop.f32.mrf.mxu0
    %v1480 = vadd.f32 %v1455, %v1479
    %1481 = vdwg.mxu0
    %v1482 = vsub.f32 %v1288, %v1480
    %v1483 = vmul.f32 %v1482, %v1482
    %v1485 = vsel %vm38, %v1483, 0
    %1487 = vmatpush.msra.mxu0 0.0
    %1488 = vmatpush.msra.mxu0 0.0
    %1489 = vmatpush.msra.mxu0 0.0
    %1490 = vmatpush.msra.mxu0 0.0
    %1491 = vmatpush.msra.mxu0 0.0
    %1492 = vmatpush.msra.mxu0 0.0
    %1493 = vmatpush.msra.mxu0 0.0
    %1494 = vmatpush.msra.mxu0 0.0
    %1495 = vmatpush.msra.mxu0 0.0
    %1496 = vmatpush.msra.mxu0 0.0
    %1497 = vmatpush.msra.mxu0 0.0
    %1498 = vmatpush.msra.mxu0 0.0
    %v1499 = vand.u32 %v1293, 4294901760
    %1500 = vmatpush.msra.mxu0 %v1499
    %v1501 = vand.u32 %v1292, 4294901760
    %1502 = vmatpush.msra.mxu0 %v1501
    %v1503 = vand.u32 %v1291, 4294901760
    %1504 = vmatpush.msra.mxu0 %v1503
    %v1505 = vand.u32 %v1290, 4294901760
    %1506 = vmatpush.msra.mxu0 %v1505
    %v1507 = vand.u32 %v1485, 4294901760
    %v1508 = vsub.f32 %v1485, %v1507
    %v1509 = vand.u32 %v1508, 4294901760
    %v1510 = vsub.f32 %v1508, %v1509
    %v1511 = vand.u32 %v1510, 4294901760
    %1512 = vmatmul.f32.gmra.mxu0 %v1511
    %v1513 = vpop.f32.mrf.mxu0
    %v1514 = vadd.f32 1e-05, %v1513
    %1515 = vdwg.mxu0
    %1516 = vmatpush.msra.mxu0 0.0
    %1517 = vmatpush.msra.mxu0 0.0
    %1518 = vmatpush.msra.mxu0 0.0
    %1519 = vmatpush.msra.mxu0 0.0
    %1520 = vmatpush.msra.mxu0 0.0
    %1521 = vmatpush.msra.mxu0 0.0
    %1522 = vmatpush.msra.mxu0 0.0
    %1523 = vmatpush.msra.mxu0 0.0
    %1524 = vmatpush.msra.mxu0 0.0
    %1525 = vmatpush.msra.mxu0 0.0
    %1526 = vmatpush.msra.mxu0 0.0
    %1527 = vmatpush.msra.mxu0 0.0
    %v1528 = vand.u32 %v1293, 4294901760
    %v1529 = vsub.f32 %v1293, %v1528
    %v1530 = vand.u32 %v1529, 4294901760
    %v1531 = vsub.f32 %v1529, %v1530
    %v1532 = vand.u32 %v1531, 4294901760
    %1533 = vmatpush.msra.mxu0 %v1532
    %v1534 = vand.u32 %v1292, 4294901760
    %v1535 = vsub.f32 %v1292, %v1534
    %v1536 = vand.u32 %v1535, 4294901760
    %v1537 = vsub.f32 %v1535, %v1536
    %v1538 = vand.u32 %v1537, 4294901760
    %1539 = vmatpush.msra.mxu0 %v1538
    %v1540 = vand.u32 %v1291, 4294901760
    %v1541 = vsub.f32 %v1291, %v1540
    %v1542 = vand.u32 %v1541, 4294901760
    %v1543 = vsub.f32 %v1541, %v1542
    %v1544 = vand.u32 %v1543, 4294901760
    %1545 = vmatpush.msra.mxu0 %v1544
    %v1546 = vand.u32 %v1290, 4294901760
    %v1547 = vsub.f32 %v1290, %v1546
    %v1548 = vand.u32 %v1547, 4294901760
    %v1549 = vsub.f32 %v1547, %v1548
    %v1550 = vand.u32 %v1549, 4294901760
    %1551 = vmatpush.msra.mxu0 %v1550
    %v1552 = vand.u32 %v1485, 4294901760
    %1553 = vmatmul.f32.gmra.mxu0 %v1552
    %v1554 = vpop.f32.mrf.mxu0
    %v1555 = vadd.f32 %v1514, %v1554
    %1556 = vdwg.mxu0
    %1557 = vmatpush.msra.mxu0 0.0
    %1558 = vmatpush.msra.mxu0 0.0
    %1559 = vmatpush.msra.mxu0 0.0
    %1560 = vmatpush.msra.mxu0 0.0
    %1561 = vmatpush.msra.mxu0 0.0
    %1562 = vmatpush.msra.mxu0 0.0
    %1563 = vmatpush.msra.mxu0 0.0
    %1564 = vmatpush.msra.mxu0 0.0
    %1565 = vmatpush.msra.mxu0 0.0
    %1566 = vmatpush.msra.mxu0 0.0
    %1567 = vmatpush.msra.mxu0 0.0
    %1568 = vmatpush.msra.mxu0 0.0
    %v1569 = vand.u32 %v1293, 4294901760
    %v1570 = vsub.f32 %v1293, %v1569
    %1571 = vmatpush.msra.mxu0 %v1570
    %v1572 = vand.u32 %v1292, 4294901760
    %v1573 = vsub.f32 %v1292, %v1572
    %1574 = vmatpush.msra.mxu0 %v1573
    %v1575 = vand.u32 %v1291, 4294901760
    %v1576 = vsub.f32 %v1291, %v1575
    %1577 = vmatpush.msra.mxu0 %v1576
    %v1578 = vand.u32 %v1290, 4294901760
    %v1579 = vsub.f32 %v1290, %v1578
    %1580 = vmatpush.msra.mxu0 %v1579
    %v1581 = vand.u32 %v1485, 4294901760
    %v1582 = vsub.f32 %v1485, %v1581
    %1583 = vmatmul.f32.gmra.mxu0 %v1582
    %v1584 = vpop.f32.mrf.mxu0
    %v1585 = vadd.f32 %v1555, %v1584
    %1586 = vdwg.mxu0
    %1587 = vmatpush.msra.mxu0 0.0
    %1588 = vmatpush.msra.mxu0 0.0
    %1589 = vmatpush.msra.mxu0 0.0
    %1590 = vmatpush.msra.mxu0 0.0
    %1591 = vmatpush.msra.mxu0 0.0
    %1592 = vmatpush.msra.mxu0 0.0
    %1593 = vmatpush.msra.mxu0 0.0
    %1594 = vmatpush.msra.mxu0 0.0
    %1595 = vmatpush.msra.mxu0 0.0
    %1596 = vmatpush.msra.mxu0 0.0
    %1597 = vmatpush.msra.mxu0 0.0
    %1598 = vmatpush.msra.mxu0 0.0
    %v1599 = vand.u32 %v1293, 4294901760
    %1600 = vmatpush.msra.mxu0 %v1599
    %v1601 = vand.u32 %v1292, 4294901760
    %1602 = vmatpush.msra.mxu0 %v1601
    %v1603 = vand.u32 %v1291, 4294901760
    %1604 = vmatpush.msra.mxu0 %v1603
    %v1605 = vand.u32 %v1290, 4294901760
    %1606 = vmatpush.msra.mxu0 %v1605
    %v1607 = vand.u32 %v1485, 4294901760
    %v1608 = vsub.f32 %v1485, %v1607
    %v1609 = vand.u32 %v1608, 4294901760
    %1610 = vmatmul.f32.gmra.mxu0 %v1609
    %v1611 = vpop.f32.mrf.mxu0
    %v1612 = vadd.f32 %v1585, %v1611
    %1613 = vdwg.mxu0
    %1614 = vmatpush.msra.mxu0 0.0
    %1615 = vmatpush.msra.mxu0 0.0
    %1616 = vmatpush.msra.mxu0 0.0
    %1617 = vmatpush.msra.mxu0 0.0
    %1618 = vmatpush.msra.mxu0 0.0
    %1619 = vmatpush.msra.mxu0 0.0
    %1620 = vmatpush.msra.mxu0 0.0
    %1621 = vmatpush.msra.mxu0 0.0
    %1622 = vmatpush.msra.mxu0 0.0
    %1623 = vmatpush.msra.mxu0 0.0
    %1624 = vmatpush.msra.mxu0 0.0
    %1625 = vmatpush.msra.mxu0 0.0
    %v1626 = vand.u32 %v1293, 4294901760
    %v1627 = vsub.f32 %v1293, %v1626
    %v1628 = vand.u32 %v1627, 4294901760
    %1629 = vmatpush.msra.mxu0 %v1628
    %v1630 = vand.u32 %v1292, 4294901760
    %v1631 = vsub.f32 %v1292, %v1630
    %v1632 = vand.u32 %v1631, 4294901760
    %1633 = vmatpush.msra.mxu0 %v1632
    %v1634 = vand.u32 %v1291, 4294901760
    %v1635 = vsub.f32 %v1291, %v1634
    %v1636 = vand.u32 %v1635, 4294901760
    %1637 = vmatpush.msra.mxu0 %v1636
    %v1638 = vand.u32 %v1290, 4294901760
    %v1639 = vsub.f32 %v1290, %v1638
    %v1640 = vand.u32 %v1639, 4294901760
    %1641 = vmatpush.msra.mxu0 %v1640
    %v1642 = vand.u32 %v1485, 4294901760
    %1643 = vmatmul.f32.gmra.mxu0 %v1642
    %v1644 = vpop.f32.mrf.mxu0
    %v1645 = vadd.f32 %v1612, %v1644
    %1646 = vdwg.mxu0
    %1647 = vmatpush.msra.mxu0 0.0
    %1648 = vmatpush.msra.mxu0 0.0
    %1649 = vmatpush.msra.mxu0 0.0
    %1650 = vmatpush.msra.mxu0 0.0
    %1651 = vmatpush.msra.mxu0 0.0
    %1652 = vmatpush.msra.mxu0 0.0
    %1653 = vmatpush.msra.mxu0 0.0
    %1654 = vmatpush.msra.mxu0 0.0
    %1655 = vmatpush.msra.mxu0 0.0
    %1656 = vmatpush.msra.mxu0 0.0
    %1657 = vmatpush.msra.mxu0 0.0
    %1658 = vmatpush.msra.mxu0 0.0
    %v1659 = vand.u32 %v1293, 4294901760
    %1660 = vmatpush.msra.mxu0 %v1659
    %v1661 = vand.u32 %v1292, 4294901760
    %1662 = vmatpush.msra.mxu0 %v1661
    %v1663 = vand.u32 %v1291, 4294901760
    %1664 = vmatpush.msra.mxu0 %v1663
    %v1665 = vand.u32 %v1290, 4294901760
    %1666 = vmatpush.msra.mxu0 %v1665
    %v1667 = vand.u32 %v1485, 4294901760
    %1668 = vmatmul.f32.gmra.mxu0 %v1667
    %v1669 = vpop.f32.mrf.mxu0
    %v1670 = vadd.f32 %v1645, %v1669
    %1671 = vdwg.mxu0
    %v1672 = vrsqrt.pop %v1670
    %v1673 = vmul.f32 %v1672, %v1670
    %v1674 = vmul.f32 %v1673, %v1672
    %v1675 = vmul.f32 0.5, %v1674
    %v1676 = vsub.f32 1.5, %v1675
    %v1677 = vmul.f32 %v1672, %v1676
    %vm1678 = vweird.f32 %v1670
    %vm1679 = vweird.f32 %v1672
    %vm1680 = vmor %vm1678, %vm1679
    %v1681 = vsel %vm1680, %v1672, %v1677
    %v1682 = vmul.f32 %v1482, %v1681
    %v1683 = vld [vmem:[%s1 + $0x6] sm:$0x1]
    %v1684 = vperm.slane %v1683, 0
    %v1685 = vmul.f32 %v1682, %v1684
    %v1686 = vld [vmem:[%s1 + $0x7] sm:$0x1]
    %v1687 = vperm.slane %v1686, 0
    %v1688 = vadd.f32 %v1685, %v1687
    %v1689 = vmul.f32 %v1688, 0.5
    %v1690 = vmul.f32 %v1688, 0.70710677
    %vm1691 = vcmp.ge.f32.partialorder %v1690, 0.0
    %v1692 = vsel %vm1691, 1.0, -1.0
    %v1693 = vand.u32 2147483647, %v1690
    %v1694 = vmul.f32 %v1693, 0.3275911
    %v1695 = vadd.f32 %v1694, 1.0
    %v1696 = vrcp.pop %v1695
    %v1697 = vmul.f32 %v1695, %v1696
    %v1698 = vsub.f32 1.0, %v1697
    %v1699 = vmul.f32 %v1696, %v1698
    %v1700 = vadd.f32 %v1696, %v1699
    %vm1701 = vweird.f32 %v1695
    %vm1702 = vweird.f32 %v1696
    %vm1703 = vmor %vm1701, %vm1702
    %v1704 = vsel %vm1703, %v1696, %v1700
    %v1705 = vand.u32 2147483647, %v1695
    %vm1706 = vcmp.eq.f32.partialorder %v1705, 8.507059e+37
    %v1707 = vand.u32 %v1695, 2147483648
    %v1708 = vor.u32 1.1754944e-38, %v1707
    %v1709 = vsel %vm1706, %v1708, %v1704
    %v1710 = vmul.f32 1.0, %v1709
    %v1711 = vmul.f32 %v1710, 1.0614054
    %v1712 = vadd.f32 %v1711, -1.4531521
    %v1713 = vmul.f32 %v1710, %v1712
    %v1714 = vadd.f32 %v1713, 1.4214138
    %v1715 = vmul.f32 %v1710, %v1714
    %v1716 = vadd.f32 %v1715, -0.28449672
    %v1717 = vmul.f32 %v1710, %v1716
    %v1718 = vadd.f32 %v1717, 0.2548296
    %v1719 = vmul.f32 %v1710, %v1718
    %v1720 = vsub.f32 0.0, %v1693
    %v1721 = vmul.f32 %v1720, %v1693
    %v1722 = vmul.f32 %v1721, 1.442695
    %v1723 = vpow.pop %v1722
    %v1724 = vmul.f32 %v1719, %v1723
    %v1725 = vsub.f32 1.0, %v1724
    %v1726 = vmul.f32 %v1692, %v1725
    %v1727 = vadd.f32 %v1726, 1.0
    %v1728 = vmul.f32 %v1689, %v1727
    %v1729 = vld [vmem:[%s1 + $0x18] sm:$0xff]
    %v1730 = vadd.f32 %v1728, %v1729
    %v1731 = vld [vmem:[%s3] sm:$0xff]
    %v1732 = vld [vmem:[%s3 + $0x8] sm:$0xff]
    %v1733 = vld [vmem:[%s3 + $0x10] sm:$0xff]
    %v1734 = vld [vmem:[%s3 + $0x18] sm:$0xff]
    %v1736 = vsel %vm38, %v1093, 0
    %v1739 = vsel %vm38, %v1094, 0
    %v1742 = vsel %vm38, %v1730, 0
    %1744 = vmatpush.msra.mxu0 0.0
    %1745 = vmatpush.msra.mxu0 0.0
    %1746 = vmatpush.msra.mxu0 0.0
    %1747 = vmatpush.msra.mxu0 0.0
    %1748 = vmatpush.msra.mxu0 0.0
    %1749 = vmatpush.msra.mxu0 0.0
    %1750 = vmatpush.msra.mxu0 0.0
    %1751 = vmatpush.msra.mxu0 0.0
    %1752 = vmatpush.msra.mxu0 0.0
    %1753 = vmatpush.msra.mxu0 0.0
    %1754 = vmatpush.msra.mxu0 0.0
    %1755 = vmatpush.msra.mxu0 0.0
    %1756 = vmatpush.msra.mxu0 %v1734
    %1757 = vmatpush.msra.mxu0 %v1733
    %1758 = vmatpush.msra.mxu0 %v1732
    %1759 = vmatpush.msra.mxu0 %v1731
    %1760 = vmatmul.f32.gmra.mxu0 %v1736
    %v1761 = vpop.f32.mrf.mxu0
    %v1762 = vadd.f32 0.0, %v1761
    %1763 = vmatmul.f32.gmra.mxu0 %v1739
    %v1764 = vpop.f32.mrf.mxu0
    %v1765 = vadd.f32 0.0, %v1764
    %1766 = vmatmul.f32.gmra.mxu0 %v1742
    %v1767 = vpop.f32.mrf.mxu0
    %v1768 = vadd.f32 0.0, %v1767
    %1769 = vdwg.mxu0
    %v1770 = vld [vmem:[%s1 + $0x88] sm:$0xff]
    %v1771 = vld [vmem:[%s1 + $0x90] sm:$0xff]
    %v1772 = vld [vmem:[%s1 + $0x98] sm:$0xff]
    %v1773 = vld [vmem:[%s1 + $0xa0] sm:$0xff]
    %v1774 = vld [vmem:[%s1 + $0xa8] sm:$0xff]
    %v1775 = vld [vmem:[%s1 + $0xb0] sm:$0xff]
    %v1776 = vld [vmem:[%s1 + $0xb8] sm:$0xff]
    %v1777 = vld [vmem:[%s1 + $0xc0] sm:$0xff]
    %v1778 = vld [vmem:[%s1 + $0xc8] sm:$0xff]
    %v1779 = vld [vmem:[%s1 + $0xd0] sm:$0xff]
    %v1780 = vld [vmem:[%s1 + $0xd8] sm:$0xff]
    %v1781 = vld [vmem:[%s1 + $0xe0] sm:$0xff]
    %1794 = vrot.lane.b32.xlu0 %v1770, 32
    %v1795 = vpop.permute.xlu0 %1794
    %1796 = vrot.lane.b32.xlu0 %v1771, 32
    %v1797 = vpop.permute.xlu0 %1796
    %1798 = vrot.lane.b32.xlu0 %v1772, 32
    %v1799 = vpop.permute.xlu0 %1798
    %1800 = vrot.lane.b32.xlu0 %v1773, 32
    %v1801 = vpop.permute.xlu0 %1800
    %1802 = vrot.lane.b32.xlu0 %v1774, 32
    %v1803 = vpop.permute.xlu0 %1802
    %1804 = vrot.lane.b32.xlu0 %v1775, 32
    %v1805 = vpop.permute.xlu0 %1804
    %1806 = vrot.lane.b32.xlu0 %v1776, 32
    %v1807 = vpop.permute.xlu0 %1806
    %1808 = vrot.lane.b32.xlu0 %v1777, 32
    %v1809 = vpop.permute.xlu0 %1808
    %1810 = vrot.lane.b32.xlu0 %v1778, 32
    %v1811 = vpop.permute.xlu0 %1810
    %1812 = vrot.lane.b32.xlu0 %v1779, 32
    %v1813 = vpop.permute.xlu0 %1812
    %1814 = vrot.lane.b32.xlu0 %v1780, 32
    %v1815 = vpop.permute.xlu0 %1814
    %1816 = vrot.lane.b32.xlu0 %v1781, 32
    %v1817 = vpop.permute.xlu0 %1816
    %v1830 = vmul.f32 %v1762, %v1795
    %v1831 = vmul.f32 %v1765, %v1797
    %v1832 = vmul.f32 %v1768, %v1799
    %v1833 = vmul.f32 %v1762, %v1801
    %v1834 = vmul.f32 %v1765, %v1803
    %v1835 = vmul.f32 %v1768, %v1805
    %v1836 = vmul.f32 %v1762, %v1807
    %v1837 = vmul.f32 %v1765, %v1809
    %v1838 = vmul.f32 %v1768, %v1811
    %v1839 = vmul.f32 %v1762, %v1813
    %v1840 = vmul.f32 %v1765, %v1815
    %v1841 = vmul.f32 %v1768, %v1817
    %1842 = vrot.lane.b32.xlu0 %v1770, 64
    %v1843 = vpop.permute.xlu0 %1842
    %1844 = vrot.lane.b32.xlu0 %v1771, 64
    %v1845 = vpop.permute.xlu0 %1844
    %1846 = vrot.lane.b32.xlu0 %v1772, 64
    %v1847 = vpop.permute.xlu0 %1846
    %1848 = vrot.lane.b32.xlu0 %v1773, 64
    %v1849 = vpop.permute.xlu0 %1848
    %1850 = vrot.lane.b32.xlu0 %v1774, 64
    %v1851 = vpop.permute.xlu0 %1850
    %1852 = vrot.lane.b32.xlu0 %v1775, 64
    %v1853 = vpop.permute.xlu0 %1852
    %1854 = vrot.lane.b32.xlu0 %v1776, 64
    %v1855 = vpop.permute.xlu0 %1854
    %1856 = vrot.lane.b32.xlu0 %v1777, 64
    %v1857 = vpop.permute.xlu0 %1856
    %1858 = vrot.lane.b32.xlu0 %v1778, 64
    %v1859 = vpop.permute.xlu0 %1858
    %1860 = vrot.lane.b32.xlu0 %v1779, 64
    %v1861 = vpop.permute.xlu0 %1860
    %1862 = vrot.lane.b32.xlu0 %v1780, 64
    %v1863 = vpop.permute.xlu0 %1862
    %1864 = vrot.lane.b32.xlu0 %v1781, 64
    %v1865 = vpop.permute.xlu0 %1864
    %v1878 = vmul.f32 %v1762, %v1843
    %v1879 = vmul.f32 %v1765, %v1845
    %v1880 = vmul.f32 %v1768, %v1847
    %v1881 = vmul.f32 %v1762, %v1849
    %v1882 = vmul.f32 %v1765, %v1851
    %v1883 = vmul.f32 %v1768, %v1853
    %v1884 = vmul.f32 %v1762, %v1855
    %v1885 = vmul.f32 %v1765, %v1857
    %v1886 = vmul.f32 %v1768, %v1859
    %v1887 = vmul.f32 %v1762, %v1861
    %v1888 = vmul.f32 %v1765, %v1863
    %v1889 = vmul.f32 %v1768, %v1865
    %1902 = vrot.lane.b32.xlu0 %v1830, 96
    %v1903 = vpop.permute.xlu0 %1902
    %1904 = vrot.lane.b32.xlu0 %v1831, 96
    %v1905 = vpop.permute.xlu0 %1904
    %1906 = vrot.lane.b32.xlu0 %v1832, 96
    %v1907 = vpop.permute.xlu0 %1906
    %1908 = vrot.lane.b32.xlu0 %v1833, 96
    %v1909 = vpop.permute.xlu0 %1908
    %1910 = vrot.lane.b32.xlu0 %v1834, 96
    %v1911 = vpop.permute.xlu0 %1910
    %1912 = vrot.lane.b32.xlu0 %v1835, 96
    %v1913 = vpop.permute.xlu0 %1912
    %1914 = vrot.lane.b32.xlu0 %v1836, 96
    %v1915 = vpop.permute.xlu0 %1914
    %1916 = vrot.lane.b32.xlu0 %v1837, 96
    %v1917 = vpop.permute.xlu0 %1916
    %1918 = vrot.lane.b32.xlu0 %v1838, 96
    %v1919 = vpop.permute.xlu0 %1918
    %1920 = vrot.lane.b32.xlu0 %v1839, 96
    %v1921 = vpop.permute.xlu0 %1920
    %1922 = vrot.lane.b32.xlu0 %v1840, 96
    %v1923 = vpop.permute.xlu0 %1922
    %1924 = vrot.lane.b32.xlu0 %v1841, 96
    %v1925 = vpop.permute.xlu0 %1924
    %v1927 = vsel %vm38, %v1762, 0
    %v1930 = vsel %vm38, %v1765, 0
    %v1933 = vsel %vm38, %v1768, 0
    %v1935 = vsel %vm38, %v1903, 0
    %v1937 = vsel %vm38, %v1905, 0
    %v1939 = vsel %vm38, %v1907, 0
    %v1941 = vsel %vm38, %v1909, 0
    %v1943 = vsel %vm38, %v1911, 0
    %v1945 = vsel %vm38, %v1913, 0
    %v1947 = vsel %vm38, %v1915, 0
    %v1949 = vsel %vm38, %v1917, 0
    %v1951 = vsel %vm38, %v1919, 0
    %v1953 = vsel %vm38, %v1921, 0
    %v1955 = vsel %vm38, %v1923, 0
    %v1957 = vsel %vm38, %v1925, 0
    %1959 = vmatpush.xpose.msra.mxu0 0.0
    %1960 = vmatpush.xpose.msra.mxu0 0.0
    %1961 = vmatpush.xpose.msra.mxu0 0.0
    %1962 = vmatpush.xpose.msra.mxu0 0.0
    %1963 = vmatpush.xpose.msra.mxu0 %v1957
    %1964 = vmatpush.xpose.msra.mxu0 %v1955
    %1965 = vmatpush.xpose.msra.mxu0 %v1953
    %1966 = vmatpush.xpose.msra.mxu0 %v1951
    %1967 = vmatpush.xpose.msra.mxu0 %v1949
    %1968 = vmatpush.xpose.msra.mxu0 %v1947
    %1969 = vmatpush.xpose.msra.mxu0 %v1945
    %1970 = vmatpush.xpose.msra.mxu0 %v1943
    %1971 = vmatpush.xpose.msra.mxu0 %v1941
    %1972 = vmatpush.xpose.msra.mxu0 %v1939
    %1973 = vmatpush.xpose.msra.mxu0 %v1937
    %1974 = vmatpush.xpose.msra.mxu0 %v1935
    %1975 = vmatmul.f32.gmra.mxu0 %v1927
    %v1976 = vpop.f32.mrf.mxu0
    %v1977 = vadd.f32 0.0, %v1976
    %1978 = vmatmul.f32.gmra.mxu0 %v1930
    %v1979 = vpop.f32.mrf.mxu0
    %v1980 = vadd.f32 0.0, %v1979
    %1981 = vmatmul.f32.gmra.mxu0 %v1933
    %v1982 = vpop.f32.mrf.mxu0
    %v1983 = vadd.f32 0.0, %v1982
    %1984 = vdwg.mxu0
    %v1985 = vmul.f32 %v1977, 0.35355338
    %v1986 = vmul.f32 %v1980, 0.35355338
    %v1987 = vmul.f32 %v1983, 0.35355338
    %v1988 = vld [vmem:[%s3 + $0x20] sm:$0xff]
    %v1989 = vld [vmem:[%s3 + $0x28] sm:$0xff]
    %v1990 = vld [vmem:[%s3 + $0x30] sm:$0xff]
    %v1991 = vadd.f32 %v1985, %v1988
    %v1992 = vadd.f32 %v1986, %v1989
    %v1993 = vadd.f32 %v1987, %v1990
    %vm1994 = vcmask 785408
    %v1995 = vsel %vm1994, %v1991, -inf
    %1996 = vmax.xlane.f32.xlu0 %v1995
    %v1997 = vpop.xlane.xlu0 %1996
    %v1998 = vsel %vm1994, %v1992, -inf
    %1999 = vmax.xlane.f32.xlu0 %v1998
    %v2000 = vpop.xlane.xlu0 %1999
    %v2001 = vsel %vm1994, %v1993, -inf
    %2002 = vmax.xlane.f32.xlu0 %v2001
    %v2003 = vpop.xlane.xlu0 %2002
    %v2004 = vsub.f32 %v1991, %v1997
    %v2005 = vsub.f32 %v1992, %v2000
    %v2006 = vsub.f32 %v1993, %v2003
    %v2007 = vmul.f32 %v2004, 1.442695
    %v2008 = vpow.pop %v2007
    %v2009 = vmul.f32 %v2005, 1.442695
    %v2010 = vpow.pop %v2009
    %v2011 = vmul.f32 %v2006, 1.442695
    %v2012 = vpow.pop %v2011
    %v2013 = vld [vmem:[%s3 + $0x38] sm:$0xff]
    %v2014 = vld [vmem:[%s3 + $0x40] sm:$0xff]
    %v2015 = vld [vmem:[%s3 + $0x48] sm:$0xff]
    %v2016 = vld [vmem:[%s3 + $0x50] sm:$0xff]
    %v2017 = vld [vmem:[%s3 + $0x58] sm:$0xff]
    %v2018 = vld [vmem:[%s3 + $0x60] sm:$0xff]
    %v2019 = vld [vmem:[%s3 + $0x68] sm:$0xff]
    %v2020 = vld [vmem:[%s3 + $0x70] sm:$0xff]
    %v2021 = vld [vmem:[%s3 + $0x78] sm:$0xff]
    %v2022 = vld [vmem:[%s3 + $0x80] sm:$0xff]
    %v2023 = vld [vmem:[%s3 + $0x88] sm:$0xff]
    %v2024 = vld [vmem:[%s3 + $0x90] sm:$0xff]
    %v2026 = vsel %vm1994, %v2008, 0
    %v2029 = vsel %vm1994, %v2010, 0
    %v2032 = vsel %vm1994, %v2012, 0
    %2034 = vmatpush.msra.mxu0 0.0
    %2035 = vmatpush.msra.mxu0 0.0
    %2036 = vmatpush.msra.mxu0 0.0
    %2037 = vmatpush.msra.mxu0 0.0
    %v2038 = vand.u32 %v2024, 4294901760
    %2039 = vmatpush.msra.mxu0 %v2038
    %v2040 = vand.u32 %v2023, 4294901760
    %2041 = vmatpush.msra.mxu0 %v2040
    %v2042 = vand.u32 %v2022, 4294901760
    %2043 = vmatpush.msra.mxu0 %v2042
    %v2044 = vand.u32 %v2021, 4294901760
    %2045 = vmatpush.msra.mxu0 %v2044
    %v2046 = vand.u32 %v2020, 4294901760
    %2047 = vmatpush.msra.mxu0 %v2046
    %v2048 = vand.u32 %v2019, 4294901760
    %2049 = vmatpush.msra.mxu0 %v2048
    %v2050 = vand.u32 %v2018, 4294901760
    %2051 = vmatpush.msra.mxu0 %v2050
    %v2052 = vand.u32 %v2017, 4294901760
    %2053 = vmatpush.msra.mxu0 %v2052
    %v2054 = vand.u32 %v2016, 4294901760
    %2055 = vmatpush.msra.mxu0 %v2054
    %v2056 = vand.u32 %v2015, 4294901760
    %2057 = vmatpush.msra.mxu0 %v2056
    %v2058 = vand.u32 %v2014, 4294901760
    %2059 = vmatpush.msra.mxu0 %v2058
    %v2060 = vand.u32 %v2013, 4294901760
    %2061 = vmatpush.msra.mxu0 %v2060
    %v2062 = vand.u32 %v2026, 4294901760
    %v2063 = vsub.f32 %v2026, %v2062
    %v2064 = vand.u32 %v2063, 4294901760
    %v2065 = vsub.f32 %v2063, %v2064
    %v2066 = vand.u32 %v2065, 4294901760
    %2067 = vmatmul.f32.gmra.mxu0 %v2066
    %v2068 = vpop.f32.mrf.mxu0
    %v2069 = vadd.f32 0.0, %v2068
    %v2070 = vand.u32 %v2029, 4294901760
    %v2071 = vsub.f32 %v2029, %v2070
    %v2072 = vand.u32 %v2071, 4294901760
    %v2073 = vsub.f32 %v2071, %v2072
    %v2074 = vand.u32 %v2073, 4294901760
    %2075 = vmatmul.f32.gmra.mxu0 %v2074
    %v2076 = vpop.f32.mrf.mxu0
    %v2077 = vadd.f32 0.0, %v2076
    %v2078 = vand.u32 %v2032, 4294901760
    %v2079 = vsub.f32 %v2032, %v2078
    %v2080 = vand.u32 %v2079, 4294901760
    %v2081 = vsub.f32 %v2079, %v2080
    %v2082 = vand.u32 %v2081, 4294901760
    %2083 = vmatmul.f32.gmra.mxu0 %v2082
    %v2084 = vpop.f32.mrf.mxu0
    %v2085 = vadd.f32 0.0, %v2084
    %2086 = vdwg.mxu0
    %2087 = vmatpush.msra.mxu0 0.0
    %2088 = vmatpush.msra.mxu0 0.0
    %2089 = vmatpush.msra.mxu0 0.0
    %2090 = vmatpush.msra.mxu0 0.0
    %v2091 = vand.u32 %v2024, 4294901760
    %v2092 = vsub.f32 %v2024, %v2091
    %v2093 = vand.u32 %v2092, 4294901760
    %v2094 = vsub.f32 %v2092, %v2093
    %v2095 = vand.u32 %v2094, 4294901760
    %2096 = vmatpush.msra.mxu0 %v2095
    %v2097 = vand.u32 %v2023, 4294901760
    %v2098 = vsub.f32 %v2023, %v2097
    %v2099 = vand.u32 %v2098, 4294901760
    %v2100 = vsub.f32 %v2098, %v2099
    %v2101 = vand.u32 %v2100, 4294901760
    %2102 = vmatpush.msra.mxu0 %v2101
    %v2103 = vand.u32 %v2022, 4294901760
    %v2104 = vsub.f32 %v2022, %v2103
    %v2105 = vand.u32 %v2104, 4294901760
    %v2106 = vsub.f32 %v2104, %v2105
    %v2107 = vand.u32 %v2106, 4294901760
    %2108 = vmatpush.msra.mxu0 %v2107
    %v2109 = vand.u32 %v2021, 4294901760
    %v2110 = vsub.f32 %v2021, %v2109
    %v2111 = vand.u32 %v2110, 4294901760
    %v2112 = vsub.f32 %v2110, %v2111
    %v2113 = vand.u32 %v2112, 4294901760
    %2114 = vmatpush.msra.mxu0 %v2113
    %v2115 = vand.u32 %v2020, 4294901760
    %v2116 = vsub.f32 %v2020, %v2115
    %v2117 = vand.u32 %v2116, 4294901760
    %v2118 = vsub.f32 %v2116, %v2117
    %v2119 = vand.u32 %v2118, 4294901760
    %2120 = vmatpush.msra.mxu0 %v2119
    %v2121 = vand.u32 %v2019, 4294901760
    %v2122 = vsub.f32 %v2019, %v2121
    %v2123 = vand.u32 %v2122, 4294901760
    %v2124 = vsub.f32 %v2122, %v2123
    %v2125 = vand.u32 %v2124, 4294901760
    %2126 = vmatpush.msra.mxu0 %v2125
    %v2127 = vand.u32 %v2018, 4294901760
    %v2128 = vsub.f32 %v2018, %v2127
    %v2129 = vand.u32 %v2128, 4294901760
    %v2130 = vsub.f32 %v2128, %v2129
    %v2131 = vand.u32 %v2130, 4294901760
    %2132 = vmatpush.msra.mxu0 %v2131
    %v2133 = vand.u32 %v2017, 4294901760
    %v2134 = vsub.f32 %v2017, %v2133
    %v2135 = vand.u32 %v2134, 4294901760
    %v2136 = vsub.f32 %v2134, %v2135
    %v2137 = vand.u32 %v2136, 4294901760
    %2138 = vmatpush.msra.mxu0 %v2137
    %v2139 = vand.u32 %v2016, 4294901760
    %v2140 = vsub.f32 %v2016, %v2139
    %v2141 = vand.u32 %v2140, 4294901760
    %v2142 = vsub.f32 %v2140, %v2141
    %v2143 = vand.u32 %v2142, 4294901760
    %2144 = vmatpush.msra.mxu0 %v2143
    %v2145 = vand.u32 %v2015, 4294901760
    %v2146 = vsub.f32 %v2015, %v2145
    %v2147 = vand.u32 %v2146, 4294901760
    %v2148 = vsub.f32 %v2146, %v2147
    %v2149 = vand.u32 %v2148, 4294901760
    %2150 = vmatpush.msra.mxu0 %v2149
    %v2151 = vand.u32 %v2014, 4294901760
    %v2152 = vsub.f32 %v2014, %v2151
    %v2153 = vand.u32 %v2152, 4294901760
    %v2154 = vsub.f32 %v2152, %v2153
    %v2155 = vand.u32 %v2154, 4294901760
    %2156 = vmatpush.msra.mxu0 %v2155
    %v2157 = vand.u32 %v2013, 4294901760
    %v2158 = vsub.f32 %v2013, %v2157
    %v2159 = vand.u32 %v2158, 4294901760
    %v2160 = vsub.f32 %v2158, %v2159
    %v2161 = vand.u32 %v2160, 4294901760
    %2162 = vmatpush.msra.mxu0 %v2161
    %v2163 = vand.u32 %v2026, 4294901760
    %2164 = vmatmul.f32.gmra.mxu0 %v2163
    %v2165 = vpop.f32.mrf.mxu0
    %v2166 = vadd.f32 %v2069, %v2165
    %v2167 = vand.u32 %v2029, 4294901760
    %2168 = vmatmul.f32.gmra.mxu0 %v2167
    %v2169 = vpop.f32.mrf.mxu0
    %v2170 = vadd.f32 %v2077, %v2169
    %v2171 = vand.u32 %v2032, 4294901760
    %2172 = vmatmul.f32.gmra.mxu0 %v2171
    %v2173 = vpop.f32.mrf.mxu0
    %v2174 = vadd.f32 %v2085, %v2173
    %2175 = vdwg.mxu0
    %2176 = vmatpush.msra.mxu0 0.0
    %2177 = vmatpush.msra.mxu0 0.0
    %2178 = vmatpush.msra.mxu0 0.0
    %2179 = vmatpush.msra.mxu0 0.0
    %v2180 = vand.u32 %v2024, 4294901760
    %v2181 = vsub.f32 %v2024, %v2180
    %2182 = vmatpush.msra.mxu0 %v2181
    %v2183 = vand.u32 %v2023, 4294901760
    %v2184 = vsub.f32 %v2023, %v2183
    %2185 = vmatpush.msra.mxu0 %v2184
    %v2186 = vand.u32 %v2022, 4294901760
    %v2187 = vsub.f32 %v2022, %v2186
    %2188 = vmatpush.msra.mxu0 %v2187
    %v2189 = vand.u32 %v2021, 4294901760
    %v2190 = vsub.f32 %v2021, %v2189
    %2191 = vmatpush.msra.mxu0 %v2190
    %v2192 = vand.u32 %v2020, 4294901760
    %v2193 = vsub.f32 %v2020, %v2192
    %2194 = vmatpush.msra.mxu0 %v2193
    %v2195 = vand.u32 %v2019, 4294901760
    %v2196 = vsub.f32 %v2019, %v2195
    %2197 = vmatpush.msra.mxu0 %v2196
    %v2198 = vand.u32 %v2018, 4294901760
    %v2199 = vsub.f32 %v2018, %v2198
    %2200 = vmatpush.msra.mxu0 %v2199
    %v2201 = vand.u32 %v2017, 4294901760
    %v2202 = vsub.f32 %v2017, %v2201
    %2203 = vmatpush.msra.mxu0 %v2202
    %v2204 = vand.u32 %v2016, 4294901760
    %v2205 = vsub.f32 %v2016, %v2204
    %2206 = vmatpush.msra.mxu0 %v2205
    %v2207 = vand.u32 %v2015, 4294901760
    %v2208 = vsub.f32 %v2015, %v2207
    %2209 = vmatpush.msra.mxu0 %v2208
    %v2210 = vand.u32 %v2014, 4294901760
    %v2211 = vsub.f32 %v2014, %v2210
    %2212 = vmatpush.msra.mxu0 %v2211
    %v2213 = vand.u32 %v2013, 4294901760
    %v2214 = vsub.f32 %v2013, %v2213
    %2215 = vmatpush.msra.mxu0 %v2214
    %v2216 = vand.u32 %v2026, 4294901760
    %v2217 = vsub.f32 %v2026, %v2216
    %2218 = vmatmul.f32.gmra.mxu0 %v2217
    %v2219 = vpop.f32.mrf.mxu0
    %v2220 = vadd.f32 %v2166, %v2219
    %v2221 = vand.u32 %v2029, 4294901760
    %v2222 = vsub.f32 %v2029, %v2221
    %2223 = vmatmul.f32.gmra.mxu0 %v2222
    %v2224 = vpop.f32.mrf.mxu0
    %v2225 = vadd.f32 %v2170, %v2224
    %v2226 = vand.u32 %v2032, 4294901760
    %v2227 = vsub.f32 %v2032, %v2226
    %2228 = vmatmul.f32.gmra.mxu0 %v2227
    %v2229 = vpop.f32.mrf.mxu0
    %v2230 = vadd.f32 %v2174, %v2229
    %2231 = vdwg.mxu0
    %2232 = vmatpush.msra.mxu0 0.0
    %2233 = vmatpush.msra.mxu0 0.0
    %2234 = vmatpush.msra.mxu0 0.0
    %2235 = vmatpush.msra.mxu0 0.0
    %v2236 = vand.u32 %v2024, 4294901760
    %2237 = vmatpush.msra.mxu0 %v2236
    %v2238 = vand.u32 %v2023, 4294901760
    %2239 = vmatpush.msra.mxu0 %v2238
    %v2240 = vand.u32 %v2022, 4294901760
    %2241 = vmatpush.msra.mxu0 %v2240
    %v2242 = vand.u32 %v2021, 4294901760
    %2243 = vmatpush.msra.mxu0 %v2242
    %v2244 = vand.u32 %v2020, 4294901760
    %2245 = vmatpush.msra.mxu0 %v2244
    %v2246 = vand.u32 %v2019, 4294901760
    %2247 = vmatpush.msra.mxu0 %v2246
    %v2248 = vand.u32 %v2018, 4294901760
    %2249 = vmatpush.msra.mxu0 %v2248
    %v2250 = vand.u32 %v2017, 4294901760
    %2251 = vmatpush.msra.mxu0 %v2250
    %v2252 = vand.u32 %v2016, 4294901760
    %2253 = vmatpush.msra.mxu0 %v2252
    %v2254 = vand.u32 %v2015, 4294901760
    %2255 = vmatpush.msra.mxu0 %v2254
    %v2256 = vand.u32 %v2014, 4294901760
    %2257 = vmatpush.msra.mxu0 %v2256
    %v2258 = vand.u32 %v2013, 4294901760
    %2259 = vmatpush.msra.mxu0 %v2258
    %v2260 = vand.u32 %v2026, 4294901760
    %v2261 = vsub.f32 %v2026, %v2260
    %v2262 = vand.u32 %v2261, 4294901760
    %2263 = vmatmul.f32.gmra.mxu0 %v2262
    %v2264 = vpop.f32.mrf.mxu0
    %v2265 = vadd.f32 %v2220, %v2264
    %v2266 = vand.u32 %v2029, 4294901760
    %v2267 = vsub.f32 %v2029, %v2266
    %v2268 = vand.u32 %v2267, 4294901760
    %2269 = vmatmul.f32.gmra.mxu0 %v2268
    %v2270 = vpop.f32.mrf.mxu0
    %v2271 = vadd.f32 %v2225, %v2270
    %v2272 = vand.u32 %v2032, 4294901760
    %v2273 = vsub.f32 %v2032, %v2272
    %v2274 = vand.u32 %v2273, 4294901760
    %2275 = vmatmul.f32.gmra.mxu0 %v2274
    %v2276 = vpop.f32.mrf.mxu0
    %v2277 = vadd.f32 %v2230, %v2276
    %2278 = vdwg.mxu0
    %2279 = vmatpush.msra.mxu0 0.0
    %2280 = vmatpush.msra.mxu0 0.0
    %2281 = vmatpush.msra.mxu0 0.0
    %2282 = vmatpush.msra.mxu0 0.0
    %v2283 = vand.u32 %v2024, 4294901760
    %v2284 = vsub.f32 %v2024, %v2283
    %v2285 = vand.u32 %v2284, 4294901760
    %2286 = vmatpush.msra.mxu0 %v2285
    %v2287 = vand.u32 %v2023, 4294901760
    %v2288 = vsub.f32 %v2023, %v2287
    %v2289 = vand.u32 %v2288, 4294901760
    %2290 = vmatpush.msra.mxu0 %v2289
    %v2291 = vand.u32 %v2022, 4294901760
    %v2292 = vsub.f32 %v2022, %v2291
    %v2293 = vand.u32 %v2292, 4294901760
    %2294 = vmatpush.msra.mxu0 %v2293
    %v2295 = vand.u32 %v2021, 4294901760
    %v2296 = vsub.f32 %v2021, %v2295
    %v2297 = vand.u32 %v2296, 4294901760
    %2298 = vmatpush.msra.mxu0 %v2297
    %v2299 = vand.u32 %v2020, 4294901760
    %v2300 = vsub.f32 %v2020, %v2299
    %v2301 = vand.u32 %v2300, 4294901760
    %2302 = vmatpush.msra.mxu0 %v2301
    %v2303 = vand.u32 %v2019, 4294901760
    %v2304 = vsub.f32 %v2019, %v2303
    %v2305 = vand.u32 %v2304, 4294901760
    %2306 = vmatpush.msra.mxu0 %v2305
    %v2307 = vand.u32 %v2018, 4294901760
    %v2308 = vsub.f32 %v2018, %v2307
    %v2309 = vand.u32 %v2308, 4294901760
    %2310 = vmatpush.msra.mxu0 %v2309
    %v2311 = vand.u32 %v2017, 4294901760
    %v2312 = vsub.f32 %v2017, %v2311
    %v2313 = vand.u32 %v2312, 4294901760
    %2314 = vmatpush.msra.mxu0 %v2313
    %v2315 = vand.u32 %v2016, 4294901760
    %v2316 = vsub.f32 %v2016, %v2315
    %v2317 = vand.u32 %v2316, 4294901760
    %2318 = vmatpush.msra.mxu0 %v2317
    %v2319 = vand.u32 %v2015, 4294901760
    %v2320 = vsub.f32 %v2015, %v2319
    %v2321 = vand.u32 %v2320, 4294901760
    %2322 = vmatpush.msra.mxu0 %v2321
    %v2323 = vand.u32 %v2014, 4294901760
    %v2324 = vsub.f32 %v2014, %v2323
    %v2325 = vand.u32 %v2324, 4294901760
    %2326 = vmatpush.msra.mxu0 %v2325
    %v2327 = vand.u32 %v2013, 4294901760
    %v2328 = vsub.f32 %v2013, %v2327
    %v2329 = vand.u32 %v2328, 4294901760
    %2330 = vmatpush.msra.mxu0 %v2329
    %v2331 = vand.u32 %v2026, 4294901760
    %2332 = vmatmul.f32.gmra.mxu0 %v2331
    %v2333 = vpop.f32.mrf.mxu0
    %v2334 = vadd.f32 %v2265, %v2333
    %v2335 = vand.u32 %v2029, 4294901760
    %2336 = vmatmul.f32.gmra.mxu0 %v2335
    %v2337 = vpop.f32.mrf.mxu0
    %v2338 = vadd.f32 %v2271, %v2337
    %v2339 = vand.u32 %v2032, 4294901760
    %2340 = vmatmul.f32.gmra.mxu0 %v2339
    %v2341 = vpop.f32.mrf.mxu0
    %v2342 = vadd.f32 %v2277, %v2341
    %2343 = vdwg.mxu0
    %2344 = vmatpush.msra.mxu0 0.0
    %2345 = vmatpush.msra.mxu0 0.0
    %2346 = vmatpush.msra.mxu0 0.0
    %2347 = vmatpush.msra.mxu0 0.0
    %v2348 = vand.u32 %v2024, 4294901760
    %2349 = vmatpush.msra.mxu0 %v2348
    %v2350 = vand.u32 %v2023, 4294901760
    %2351 = vmatpush.msra.mxu0 %v2350
    %v2352 = vand.u32 %v2022, 4294901760
    %2353 = vmatpush.msra.mxu0 %v2352
    %v2354 = vand.u32 %v2021, 4294901760
    %2355 = vmatpush.msra.mxu0 %v2354
    %v2356 = vand.u32 %v2020, 4294901760
    %2357 = vmatpush.msra.mxu0 %v2356
    %v2358 = vand.u32 %v2019, 4294901760
    %2359 = vmatpush.msra.mxu0 %v2358
    %v2360 = vand.u32 %v2018, 4294901760
    %2361 = vmatpush.msra.mxu0 %v2360
    %v2362 = vand.u32 %v2017, 4294901760
    %2363 = vmatpush.msra.mxu0 %v2362
    %v2364 = vand.u32 %v2016, 4294901760
    %2365 = vmatpush.msra.mxu0 %v2364
    %v2366 = vand.u32 %v2015, 4294901760
    %2367 = vmatpush.msra.mxu0 %v2366
    %v2368 = vand.u32 %v2014, 4294901760
    %2369 = vmatpush.msra.mxu0 %v2368
    %v2370 = vand.u32 %v2013, 4294901760
    %2371 = vmatpush.msra.mxu0 %v2370
    %v2372 = vand.u32 %v2026, 4294901760
    %2373 = vmatmul.f32.gmra.mxu0 %v2372
    %v2374 = vpop.f32.mrf.mxu0
    %v2375 = vadd.f32 %v2334, %v2374
    %v2376 = vand.u32 %v2029, 4294901760
    %2377 = vmatmul.f32.gmra.mxu0 %v2376
    %v2378 = vpop.f32.mrf.mxu0
    %v2379 = vadd.f32 %v2338, %v2378
    %v2380 = vand.u32 %v2032, 4294901760
    %2381 = vmatmul.f32.gmra.mxu0 %v2380
    %v2382 = vpop.f32.mrf.mxu0
    %v2383 = vadd.f32 %v2342, %v2382
    %2384 = vdwg.mxu0
    %v2385 = vrcp.pop %v2375
    %v2386 = vrcp.pop %v2379
    %v2387 = vrcp.pop %v2383
    %v2388 = vmul.f32 %v2008, %v2385
    %v2389 = vmul.f32 %v2010, %v2386
    %v2390 = vmul.f32 %v2012, %v2387
    %2391 = vst.msk [vmem:[%s9] sm:$0xff] %vm1994, %v2388
    %2392 = vst.msk [vmem:[%s9 + $0x8] sm:$0xff] %vm1994, %v2389
    %2393 = vst.msk [vmem:[%s9 + $0x10] sm:$0xff] %vm1994, %v2390
    %2406 = vrot.lane.b32.xlu0 %v1878, 64
    %v2407 = vpop.permute.xlu0 %2406
    %2408 = vrot.lane.b32.xlu0 %v1879, 64
    %v2409 = vpop.permute.xlu0 %2408
    %2410 = vrot.lane.b32.xlu0 %v1880, 64
    %v2411 = vpop.permute.xlu0 %2410
    %2412 = vrot.lane.b32.xlu0 %v1881, 64
    %v2413 = vpop.permute.xlu0 %2412
    %2414 = vrot.lane.b32.xlu0 %v1882, 64
    %v2415 = vpop.permute.xlu0 %2414
    %2416 = vrot.lane.b32.xlu0 %v1883, 64
    %v2417 = vpop.permute.xlu0 %2416
    %2418 = vrot.lane.b32.xlu0 %v1884, 64
    %v2419 = vpop.permute.xlu0 %2418
    %2420 = vrot.lane.b32.xlu0 %v1885, 64
    %v2421 = vpop.permute.xlu0 %2420
    %2422 = vrot.lane.b32.xlu0 %v1886, 64
    %v2423 = vpop.permute.xlu0 %2422
    %2424 = vrot.lane.b32.xlu0 %v1887, 64
    %v2425 = vpop.permute.xlu0 %2424
    %2426 = vrot.lane.b32.xlu0 %v1888, 64
    %v2427 = vpop.permute.xlu0 %2426
    %2428 = vrot.lane.b32.xlu0 %v1889, 64
    %v2429 = vpop.permute.xlu0 %2428
    %v2443 = vsel %vm1994, %v2388, 0
    %v2446 = vsel %vm1994, %v2389, 0
    %v2449 = vsel %vm1994, %v2390, 0
    %2451 = vmatpush.msra.mxu0 0.0
    %2452 = vmatpush.msra.mxu0 0.0
    %2453 = vmatpush.msra.mxu0 0.0
    %2454 = vmatpush.msra.mxu0 0.0
    %2455 = vmatpush.msra.mxu0 %v2429
    %2456 = vmatpush.msra.mxu0 %v2427
    %2457 = vmatpush.msra.mxu0 %v2425
    %2458 = vmatpush.msra.mxu0 %v2423
    %2459 = vmatpush.msra.mxu0 %v2421
    %2460 = vmatpush.msra.mxu0 %v2419
    %2461 = vmatpush.msra.mxu0 %v2417
    %2462 = vmatpush.msra.mxu0 %v2415
    %2463 = vmatpush.msra.mxu0 %v2413
    %2464 = vmatpush.msra.mxu0 %v2411
    %2465 = vmatpush.msra.mxu0 %v2409
    %2466 = vmatpush.msra.mxu0 %v2407
    %2467 = vmatmul.f32.gmra.mxu0 %v2443
    %v2468 = vpop.f32.mrf.mxu0
    %v2469 = vadd.f32 0.0, %v2468
    %2470 = vmatmul.f32.gmra.mxu0 %v2446
    %v2471 = vpop.f32.mrf.mxu0
    %v2472 = vadd.f32 0.0, %v2471
    %2473 = vmatmul.f32.gmra.mxu0 %v2449
    %v2474 = vpop.f32.mrf.mxu0
    %v2475 = vadd.f32 0.0, %v2474
    %2476 = vdwg.mxu0
    %v2477 = vld [vmem:[%s1 + $0x228] sm:$0xff]
    %v2478 = vld [vmem:[%s1 + $0x230] sm:$0xff]
    %v2479 = vld [vmem:[%s1 + $0x238] sm:$0xff]
    %v2480 = vld [vmem:[%s1 + $0x240] sm:$0xff]
    %v2481 = vld [vmem:[%s1 + $0x8] sm:$0x1]
    %v2482 = vperm.slane %v2481, 0
    %v2484 = vsel %vm38, %v2469, 0
    %v2487 = vsel %vm38, %v2472, 0
    %v2490 = vsel %vm38, %v2475, 0
    %2492 = vmatpush.msra.mxu0 0.0
    %2493 = vmatpush.msra.mxu0 0.0
    %2494 = vmatpush.msra.mxu0 0.0
    %2495 = vmatpush.msra.mxu0 0.0
    %2496 = vmatpush.msra.mxu0 0.0
    %2497 = vmatpush.msra.mxu0 0.0
    %2498 = vmatpush.msra.mxu0 0.0
    %2499 = vmatpush.msra.mxu0 0.0
    %2500 = vmatpush.msra.mxu0 0.0
    %2501 = vmatpush.msra.mxu0 0.0
    %2502 = vmatpush.msra.mxu0 0.0
    %2503 = vmatpush.msra.mxu0 0.0
    %2504 = vmatpush.msra.mxu0 %v2480
    %2505 = vmatpush.msra.mxu0 %v2479
    %2506 = vmatpush.msra.mxu0 %v2478
    %2507 = vmatpush.msra.mxu0 %v2477
    %2508 = vmatmul.f32.gmra.mxu0 %v2484
    %v2509 = vpop.f32.mrf.mxu0
    %v2510 = vadd.f32 %v2482, %v2509
    %2511 = vmatmul.f32.gmra.mxu0 %v2487
    %v2512 = vpop.f32.mrf.mxu0
    %v2513 = vadd.f32 %v2482, %v2512
    %2514 = vmatmul.f32.gmra.mxu0 %v2490
    %v2515 = vpop.f32.mrf.mxu0
    %v2516 = vadd.f32 %v2482, %v2515
    %2517 = vdwg.mxu0
    %v2518 = vld [vmem:[%s6] sm:$0xff]
    %v2519 = vld [vmem:[%s6 + $0x8] sm:$0xff]
    %vm2520 = vcmask 195584
    %v2522 = vsel %vm2520, %v2518, 0
    %v2525 = vsel %vm2520, %v2519, 0
    %2527 = vmatpush.msra.mxu0 0.0
    %2528 = vmatpush.msra.mxu0 0.0
    %2529 = vmatpush.msra.mxu0 0.0
    %2530 = vmatpush.msra.mxu0 0.0
    %2531 = vmatpush.msra.mxu0 0.0
    %2532 = vmatpush.msra.mxu0 0.0
    %2533 = vmatpush.msra.mxu0 0.0
    %2534 = vmatpush.msra.mxu0 0.0
    %2535 = vmatpush.msra.mxu0 0.0
    %2536 = vmatpush.msra.mxu0 0.0
    %2537 = vmatpush.msra.mxu0 0.0
    %2538 = vmatpush.msra.mxu0 0.0
    %2539 = vmatpush.msra.mxu0 0.0
    %v2540 = vand.u32 %v2516, 4294901760
    %2541 = vmatpush.msra.mxu0 %v2540
    %v2542 = vand.u32 %v2513, 4294901760
    %2543 = vmatpush.msra.mxu0 %v2542
    %v2544 = vand.u32 %v2510, 4294901760
    %2545 = vmatpush.msra.mxu0 %v2544
    %v2546 = vand.u32 %v2522, 4294901760
    %v2547 = vsub.f32 %v2522, %v2546
    %v2548 = vand.u32 %v2547, 4294901760
    %v2549 = vsub.f32 %v2547, %v2548
    %v2550 = vand.u32 %v2549, 4294901760
    %2551 = vmatmul.f32.gmra.mxu0 %v2550
    %v2552 = vpop.f32.mrf.mxu0
    %v2553 = vadd.f32 %v615, %v2552
    %v2554 = vand.u32 %v2525, 4294901760
    %v2555 = vsub.f32 %v2525, %v2554
    %v2556 = vand.u32 %v2555, 4294901760
    %v2557 = vsub.f32 %v2555, %v2556
    %v2558 = vand.u32 %v2557, 4294901760
    %2559 = vmatmul.f32.gmra.mxu0 %v2558
    %v2560 = vpop.f32.mrf.mxu0
    %v2561 = vadd.f32 %v616, %v2560
    %2562 = vdwg.mxu0
    %2563 = vmatpush.msra.mxu0 0.0
    %2564 = vmatpush.msra.mxu0 0.0
    %2565 = vmatpush.msra.mxu0 0.0
    %2566 = vmatpush.msra.mxu0 0.0
    %2567 = vmatpush.msra.mxu0 0.0
    %2568 = vmatpush.msra.mxu0 0.0
    %2569 = vmatpush.msra.mxu0 0.0
    %2570 = vmatpush.msra.mxu0 0.0
    %2571 = vmatpush.msra.mxu0 0.0
    %2572 = vmatpush.msra.mxu0 0.0
    %2573 = vmatpush.msra.mxu0 0.0
    %2574 = vmatpush.msra.mxu0 0.0
    %2575 = vmatpush.msra.mxu0 0.0
    %v2576 = vand.u32 %v2516, 4294901760
    %v2577 = vsub.f32 %v2516, %v2576
    %v2578 = vand.u32 %v2577, 4294901760
    %v2579 = vsub.f32 %v2577, %v2578
    %v2580 = vand.u32 %v2579, 4294901760
    %2581 = vmatpush.msra.mxu0 %v2580
    %v2582 = vand.u32 %v2513, 4294901760
    %v2583 = vsub.f32 %v2513, %v2582
    %v2584 = vand.u32 %v2583, 4294901760
    %v2585 = vsub.f32 %v2583, %v2584
    %v2586 = vand.u32 %v2585, 4294901760
    %2587 = vmatpush.msra.mxu0 %v2586
    %v2588 = vand.u32 %v2510, 4294901760
    %v2589 = vsub.f32 %v2510, %v2588
    %v2590 = vand.u32 %v2589, 4294901760
    %v2591 = vsub.f32 %v2589, %v2590
    %v2592 = vand.u32 %v2591, 4294901760
    %2593 = vmatpush.msra.mxu0 %v2592
    %v2594 = vand.u32 %v2522, 4294901760
    %2595 = vmatmul.f32.gmra.mxu0 %v2594
    %v2596 = vpop.f32.mrf.mxu0
    %v2597 = vadd.f32 %v2553, %v2596
    %v2598 = vand.u32 %v2525, 4294901760
    %2599 = vmatmul.f32.gmra.mxu0 %v2598
    %v2600 = vpop.f32.mrf.mxu0
    %v2601 = vadd.f32 %v2561, %v2600
    %2602 = vdwg.mxu0
    %2603 = vmatpush.msra.mxu0 0.0
    %2604 = vmatpush.msra.mxu0 0.0
    %2605 = vmatpush.msra.mxu0 0.0
    %2606 = vmatpush.msra.mxu0 0.0
    %2607 = vmatpush.msra.mxu0 0.0
    %2608 = vmatpush.msra.mxu0 0.0
    %2609 = vmatpush.msra.mxu0 0.0
    %2610 = vmatpush.msra.mxu0 0.0
    %2611 = vmatpush.msra.mxu0 0.0
    %2612 = vmatpush.msra.mxu0 0.0
    %2613 = vmatpush.msra.mxu0 0.0
    %2614 = vmatpush.msra.mxu0 0.0
    %2615 = vmatpush.msra.mxu0 0.0
    %v2616 = vand.u32 %v2516, 4294901760
    %v2617 = vsub.f32 %v2516, %v2616
    %2618 = vmatpush.msra.mxu0 %v2617
    %v2619 = vand.u32 %v2513, 4294901760
    %v2620 = vsub.f32 %v2513, %v2619
    %2621 = vmatpush.msra.mxu0 %v2620
    %v2622 = vand.u32 %v2510, 4294901760
    %v2623 = vsub.f32 %v2510, %v2622
    %2624 = vmatpush.msra.mxu0 %v2623
    %v2625 = vand.u32 %v2522, 4294901760
    %v2626 = vsub.f32 %v2522, %v2625
    %2627 = vmatmul.f32.gmra.mxu0 %v2626
    %v2628 = vpop.f32.mrf.mxu0
    %v2629 = vadd.f32 %v2597, %v2628
    %v2630 = vand.u32 %v2525, 4294901760
    %v2631 = vsub.f32 %v2525, %v2630
    %2632 = vmatmul.f32.gmra.mxu0 %v2631
    %v2633 = vpop.f32.mrf.mxu0
    %v2634 = vadd.f32 %v2601, %v2633
    %2635 = vdwg.mxu0
    %2636 = vmatpush.msra.mxu0 0.0
    %2637 = vmatpush.msra.mxu0 0.0
    %2638 = vmatpush.msra.mxu0 0.0
    %2639 = vmatpush.msra.mxu0 0.0
    %2640 = vmatpush.msra.mxu0 0.0
    %2641 = vmatpush.msra.mxu0 0.0
    %2642 = vmatpush.msra.mxu0 0.0
    %2643 = vmatpush.msra.mxu0 0.0
    %2644 = vmatpush.msra.mxu0 0.0
    %2645 = vmatpush.msra.mxu0 0.0
    %2646 = vmatpush.msra.mxu0 0.0
    %2647 = vmatpush.msra.mxu0 0.0
    %2648 = vmatpush.msra.mxu0 0.0
    %v2649 = vand.u32 %v2516, 4294901760
    %2650 = vmatpush.msra.mxu0 %v2649
    %v2651 = vand.u32 %v2513, 4294901760
    %2652 = vmatpush.msra.mxu0 %v2651
    %v2653 = vand.u32 %v2510, 4294901760
    %2654 = vmatpush.msra.mxu0 %v2653
    %v2655 = vand.u32 %v2522, 4294901760
    %v2656 = vsub.f32 %v2522, %v2655
    %v2657 = vand.u32 %v2656, 4294901760
    %2658 = vmatmul.f32.gmra.mxu0 %v2657
    %v2659 = vpop.f32.mrf.mxu0
    %v2660 = vadd.f32 %v2629, %v2659
    %v2661 = vand.u32 %v2525, 4294901760
    %v2662 = vsub.f32 %v2525, %v2661
    %v2663 = vand.u32 %v2662, 4294901760
    %2664 = vmatmul.f32.gmra.mxu0 %v2663
    %v2665 = vpop.f32.mrf.mxu0
    %v2666 = vadd.f32 %v2634, %v2665
    %2667 = vdwg.mxu0
    %2668 = vmatpush.msra.mxu0 0.0
    %2669 = vmatpush.msra.mxu0 0.0
    %2670 = vmatpush.msra.mxu0 0.0
    %2671 = vmatpush.msra.mxu0 0.0
    %2672 = vmatpush.msra.mxu0 0.0
    %2673 = vmatpush.msra.mxu0 0.0
    %2674 = vmatpush.msra.mxu0 0.0
    %2675 = vmatpush.msra.mxu0 0.0
    %2676 = vmatpush.msra.mxu0 0.0
    %2677 = vmatpush.msra.mxu0 0.0
    %2678 = vmatpush.msra.mxu0 0.0
    %2679 = vmatpush.msra.mxu0 0.0
    %2680 = vmatpush.msra.mxu0 0.0
    %v2681 = vand.u32 %v2516, 4294901760
    %v2682 = vsub.f32 %v2516, %v2681
    %v2683 = vand.u32 %v2682, 4294901760
    %2684 = vmatpush.msra.mxu0 %v2683
    %v2685 = vand.u32 %v2513, 4294901760
    %v2686 = vsub.f32 %v2513, %v2685
    %v2687 = vand.u32 %v2686, 4294901760
    %2688 = vmatpush.msra.mxu0 %v2687
    %v2689 = vand.u32 %v2510, 4294901760
    %v2690 = vsub.f32 %v2510, %v2689
    %v2691 = vand.u32 %v2690, 4294901760
    %2692 = vmatpush.msra.mxu0 %v2691
    %v2693 = vand.u32 %v2522, 4294901760
    %2694 = vmatmul.f32.gmra.mxu0 %v2693
    %v2695 = vpop.f32.mrf.mxu0
    %v2696 = vadd.f32 %v2660, %v2695
    %v2697 = vand.u32 %v2525, 4294901760
    %2698 = vmatmul.f32.gmra.mxu0 %v2697
    %v2699 = vpop.f32.mrf.mxu0
    %v2700 = vadd.f32 %v2666, %v2699
    %2701 = vdwg.mxu0
    %2702 = vmatpush.msra.mxu0 0.0
    %2703 = vmatpush.msra.mxu0 0.0
    %2704 = vmatpush.msra.mxu0 0.0
    %2705 = vmatpush.msra.mxu0 0.0
    %2706 = vmatpush.msra.mxu0 0.0
    %2707 = vmatpush.msra.mxu0 0.0
    %2708 = vmatpush.msra.mxu0 0.0
    %2709 = vmatpush.msra.mxu0 0.0
    %2710 = vmatpush.msra.mxu0 0.0
    %2711 = vmatpush.msra.mxu0 0.0
    %2712 = vmatpush.msra.mxu0 0.0
    %2713 = vmatpush.msra.mxu0 0.0
    %2714 = vmatpush.msra.mxu0 0.0
    %v2715 = vand.u32 %v2516, 4294901760
    %2716 = vmatpush.msra.mxu0 %v2715
    %v2717 = vand.u32 %v2513, 4294901760
    %2718 = vmatpush.msra.mxu0 %v2717
    %v2719 = vand.u32 %v2510, 4294901760
    %2720 = vmatpush.msra.mxu0 %v2719
    %v2721 = vand.u32 %v2522, 4294901760
    %2722 = vmatmul.f32.gmra.mxu0 %v2721
    %v2723 = vpop.f32.mrf.mxu0
    %v2724 = vadd.f32 %v2696, %v2723
    %v2725 = vand.u32 %v2525, 4294901760
    %2726 = vmatmul.f32.gmra.mxu0 %v2725
    %v2727 = vpop.f32.mrf.mxu0
    %v2728 = vadd.f32 %v2700, %v2727
    %2729 = vdwg.mxu0
    %v2731 = vsel %vm38, %v2724, 0
    %v2734 = vsel %vm38, %v2728, 0
    %2736 = vmatpush.msra.mxu0 0.0
    %2737 = vmatpush.msra.mxu0 0.0
    %2738 = vmatpush.msra.mxu0 0.0
    %2739 = vmatpush.msra.mxu0 0.0
    %2740 = vmatpush.msra.mxu0 0.0
    %2741 = vmatpush.msra.mxu0 0.0
    %2742 = vmatpush.msra.mxu0 0.0
    %2743 = vmatpush.msra.mxu0 0.0
    %2744 = vmatpush.msra.mxu0 0.0
    %2745 = vmatpush.msra.mxu0 0.0
    %2746 = vmatpush.msra.mxu0 0.0
    %2747 = vmatpush.msra.mxu0 0.0
    %v2748 = vand.u32 %v35, 4294901760
    %2749 = vmatpush.msra.mxu0 %v2748
    %v2750 = vand.u32 %v34, 4294901760
    %2751 = vmatpush.msra.mxu0 %v2750
    %v2752 = vand.u32 %v33, 4294901760
    %2753 = vmatpush.msra.mxu0 %v2752
    %v2754 = vand.u32 %v32, 4294901760
    %2755 = vmatpush.msra.mxu0 %v2754
    %v2756 = vand.u32 %v2731, 4294901760
    %v2757 = vsub.f32 %v2731, %v2756
    %v2758 = vand.u32 %v2757, 4294901760
    %v2759 = vsub.f32 %v2757, %v2758
    %v2760 = vand.u32 %v2759, 4294901760
    %2761 = vmatmul.f32.gmra.mxu0 %v2760
    %v2762 = vpop.f32.mrf.mxu0
    %v2763 = vadd.f32 0.0, %v2762
    %v2764 = vand.u32 %v2734, 4294901760
    %v2765 = vsub.f32 %v2734, %v2764
    %v2766 = vand.u32 %v2765, 4294901760
    %v2767 = vsub.f32 %v2765, %v2766
    %v2768 = vand.u32 %v2767, 4294901760
    %2769 = vmatmul.f32.gmra.mxu0 %v2768
    %v2770 = vpop.f32.mrf.mxu0
    %v2771 = vadd.f32 0.0, %v2770
    %2772 = vdwg.mxu0
    %2773 = vmatpush.msra.mxu0 0.0
    %2774 = vmatpush.msra.mxu0 0.0
    %2775 = vmatpush.msra.mxu0 0.0
    %2776 = vmatpush.msra.mxu0 0.0
    %2777 = vmatpush.msra.mxu0 0.0
    %2778 = vmatpush.msra.mxu0 0.0
    %2779 = vmatpush.msra.mxu0 0.0
    %2780 = vmatpush.msra.mxu0 0.0
    %2781 = vmatpush.msra.mxu0 0.0
    %2782 = vmatpush.msra.mxu0 0.0
    %2783 = vmatpush.msra.mxu0 0.0
    %2784 = vmatpush.msra.mxu0 0.0
    %v2785 = vand.u32 %v35, 4294901760
    %v2786 = vsub.f32 %v35, %v2785
    %v2787 = vand.u32 %v2786, 4294901760
    %v2788 = vsub.f32 %v2786, %v2787
    %v2789 = vand.u32 %v2788, 4294901760
    %2790 = vmatpush.msra.mxu0 %v2789
    %v2791 = vand.u32 %v34, 4294901760
    %v2792 = vsub.f32 %v34, %v2791
    %v2793 = vand.u32 %v2792, 4294901760
    %v2794 = vsub.f32 %v2792, %v2793
    %v2795 = vand.u32 %v2794, 4294901760
    %2796 = vmatpush.msra.mxu0 %v2795
    %v2797 = vand.u32 %v33, 4294901760
    %v2798 = vsub.f32 %v33, %v2797
    %v2799 = vand.u32 %v2798, 4294901760
    %v2800 = vsub.f32 %v2798, %v2799
    %v2801 = vand.u32 %v2800, 4294901760
    %2802 = vmatpush.msra.mxu0 %v2801
    %v2803 = vand.u32 %v32, 4294901760
    %v2804 = vsub.f32 %v32, %v2803
    %v2805 = vand.u32 %v2804, 4294901760
    %v2806 = vsub.f32 %v2804, %v2805
    %v2807 = vand.u32 %v2806, 4294901760
    %2808 = vmatpush.msra.mxu0 %v2807
    %v2809 = vand.u32 %v2731, 4294901760
    %2810 = vmatmul.f32.gmra.mxu0 %v2809
    %v2811 = vpop.f32.mrf.mxu0
    %v2812 = vadd.f32 %v2763, %v2811
    %v2813 = vand.u32 %v2734, 4294901760
    %2814 = vmatmul.f32.gmra.mxu0 %v2813
    %v2815 = vpop.f32.mrf.mxu0
    %v2816 = vadd.f32 %v2771, %v2815
    %2817 = vdwg.mxu0
    %2818 = vmatpush.msra.mxu0 0.0
    %2819 = vmatpush.msra.mxu0 0.0
    %2820 = vmatpush.msra.mxu0 0.0
    %2821 = vmatpush.msra.mxu0 0.0
    %2822 = vmatpush.msra.mxu0 0.0
    %2823 = vmatpush.msra.mxu0 0.0
    %2824 = vmatpush.msra.mxu0 0.0
    %2825 = vmatpush.msra.mxu0 0.0
    %2826 = vmatpush.msra.mxu0 0.0
    %2827 = vmatpush.msra.mxu0 0.0
    %2828 = vmatpush.msra.mxu0 0.0
    %2829 = vmatpush.msra.mxu0 0.0
    %v2830 = vand.u32 %v35, 4294901760
    %v2831 = vsub.f32 %v35, %v2830
    %2832 = vmatpush.msra.mxu0 %v2831
    %v2833 = vand.u32 %v34, 4294901760
    %v2834 = vsub.f32 %v34, %v2833
    %2835 = vmatpush.msra.mxu0 %v2834
    %v2836 = vand.u32 %v33, 4294901760
    %v2837 = vsub.f32 %v33, %v2836
    %2838 = vmatpush.msra.mxu0 %v2837
    %v2839 = vand.u32 %v32, 4294901760
    %v2840 = vsub.f32 %v32, %v2839
    %2841 = vmatpush.msra.mxu0 %v2840
    %v2842 = vand.u32 %v2731, 4294901760
    %v2843 = vsub.f32 %v2731, %v2842
    %2844 = vmatmul.f32.gmra.mxu0 %v2843
    %v2845 = vpop.f32.mrf.mxu0
    %v2846 = vadd.f32 %v2812, %v2845
    %v2847 = vand.u32 %v2734, 4294901760
    %v2848 = vsub.f32 %v2734, %v2847
    %2849 = vmatmul.f32.gmra.mxu0 %v2848
    %v2850 = vpop.f32.mrf.mxu0
    %v2851 = vadd.f32 %v2816, %v2850
    %2852 = vdwg.mxu0
    %2853 = vmatpush.msra.mxu0 0.0
    %2854 = vmatpush.msra.mxu0 0.0
    %2855 = vmatpush.msra.mxu0 0.0
    %2856 = vmatpush.msra.mxu0 0.0
    %2857 = vmatpush.msra.mxu0 0.0
    %2858 = vmatpush.msra.mxu0 0.0
    %2859 = vmatpush.msra.mxu0 0.0
    %2860 = vmatpush.msra.mxu0 0.0
    %2861 = vmatpush.msra.mxu0 0.0
    %2862 = vmatpush.msra.mxu0 0.0
    %2863 = vmatpush.msra.mxu0 0.0
    %2864 = vmatpush.msra.mxu0 0.0
    %v2865 = vand.u32 %v35, 4294901760
    %2866 = vmatpush.msra.mxu0 %v2865
    %v2867 = vand.u32 %v34, 4294901760
    %2868 = vmatpush.msra.mxu0 %v2867
    %v2869 = vand.u32 %v33, 4294901760
    %2870 = vmatpush.msra.mxu0 %v2869
    %v2871 = vand.u32 %v32, 4294901760
    %2872 = vmatpush.msra.mxu0 %v2871
    %v2873 = vand.u32 %v2731, 4294901760
    %v2874 = vsub.f32 %v2731, %v2873
    %v2875 = vand.u32 %v2874, 4294901760
    %2876 = vmatmul.f32.gmra.mxu0 %v2875
    %v2877 = vpop.f32.mrf.mxu0
    %v2878 = vadd.f32 %v2846, %v2877
    %v2879 = vand.u32 %v2734, 4294901760
    %v2880 = vsub.f32 %v2734, %v2879
    %v2881 = vand.u32 %v2880, 4294901760
    %2882 = vmatmul.f32.gmra.mxu0 %v2881
    %v2883 = vpop.f32.mrf.mxu0
    %v2884 = vadd.f32 %v2851, %v2883
    %2885 = vdwg.mxu0
    %2886 = vmatpush.msra.mxu0 0.0
    %2887 = vmatpush.msra.mxu0 0.0
    %2888 = vmatpush.msra.mxu0 0.0
    %2889 = vmatpush.msra.mxu0 0.0
    %2890 = vmatpush.msra.mxu0 0.0
    %2891 = vmatpush.msra.mxu0 0.0
    %2892 = vmatpush.msra.mxu0 0.0
    %2893 = vmatpush.msra.mxu0 0.0
    %2894 = vmatpush.msra.mxu0 0.0
    %2895 = vmatpush.msra.mxu0 0.0
    %2896 = vmatpush.msra.mxu0 0.0
    %2897 = vmatpush.msra.mxu0 0.0
    %v2898 = vand.u32 %v35, 4294901760
    %v2899 = vsub.f32 %v35, %v2898
    %v2900 = vand.u32 %v2899, 4294901760
    %2901 = vmatpush.msra.mxu0 %v2900
    %v2902 = vand.u32 %v34, 4294901760
    %v2903 = vsub.f32 %v34, %v2902
    %v2904 = vand.u32 %v2903, 4294901760
    %2905 = vmatpush.msra.mxu0 %v2904
    %v2906 = vand.u32 %v33, 4294901760
    %v2907 = vsub.f32 %v33, %v2906
    %v2908 = vand.u32 %v2907, 4294901760
    %2909 = vmatpush.msra.mxu0 %v2908
    %v2910 = vand.u32 %v32, 4294901760
    %v2911 = vsub.f32 %v32, %v2910
    %v2912 = vand.u32 %v2911, 4294901760
    %2913 = vmatpush.msra.mxu0 %v2912
    %v2914 = vand.u32 %v2731, 4294901760
    %2915 = vmatmul.f32.gmra.mxu0 %v2914
    %v2916 = vpop.f32.mrf.mxu0
    %v2917 = vadd.f32 %v2878, %v2916
    %v2918 = vand.u32 %v2734, 4294901760
    %2919 = vmatmul.f32.gmra.mxu0 %v2918
    %v2920 = vpop.f32.mrf.mxu0
    %v2921 = vadd.f32 %v2884, %v2920
    %2922 = vdwg.mxu0
    %2923 = vmatpush.msra.mxu0 0.0
    %2924 = vmatpush.msra.mxu0 0.0
    %2925 = vmatpush.msra.mxu0 0.0
    %2926 = vmatpush.msra.mxu0 0.0
    %2927 = vmatpush.msra.mxu0 0.0
    %2928 = vmatpush.msra.mxu0 0.0
    %2929 = vmatpush.msra.mxu0 0.0
    %2930 = vmatpush.msra.mxu0 0.0
    %2931 = vmatpush.msra.mxu0 0.0
    %2932 = vmatpush.msra.mxu0 0.0
    %2933 = vmatpush.msra.mxu0 0.0
    %2934 = vmatpush.msra.mxu0 0.0
    %v2935 = vand.u32 %v35, 4294901760
    %2936 = vmatpush.msra.mxu0 %v2935
    %v2937 = vand.u32 %v34, 4294901760
    %2938 = vmatpush.msra.mxu0 %v2937
    %v2939 = vand.u32 %v33, 4294901760
    %2940 = vmatpush.msra.mxu0 %v2939
    %v2941 = vand.u32 %v32, 4294901760
    %2942 = vmatpush.msra.mxu0 %v2941
    %v2943 = vand.u32 %v2731, 4294901760
    %2944 = vmatmul.f32.gmra.mxu0 %v2943
    %v2945 = vpop.f32.mrf.mxu0
    %v2946 = vadd.f32 %v2917, %v2945
    %v2947 = vand.u32 %v2734, 4294901760
    %2948 = vmatmul.f32.gmra.mxu0 %v2947
    %v2949 = vpop.f32.mrf.mxu0
    %v2950 = vadd.f32 %v2921, %v2949
    %2951 = vdwg.mxu0
    %v2952 = vsub.f32 %v2724, %v2946
    %v2953 = vsub.f32 %v2728, %v2950
    %v2954 = vmul.f32 %v2952, %v2952
    %v2955 = vmul.f32 %v2953, %v2953
    %v2957 = vsel %vm38, %v2954, 0
    %v2960 = vsel %vm38, %v2955, 0
    %2962 = vmatpush.msra.mxu0 0.0
    %2963 = vmatpush.msra.mxu0 0.0
    %2964 = vmatpush.msra.mxu0 0.0
    %2965 = vmatpush.msra.mxu0 0.0
    %2966 = vmatpush.msra.mxu0 0.0
    %2967 = vmatpush.msra.mxu0 0.0
    %2968 = vmatpush.msra.mxu0 0.0
    %2969 = vmatpush.msra.mxu0 0.0
    %2970 = vmatpush.msra.mxu0 0.0
    %2971 = vmatpush.msra.mxu0 0.0
    %2972 = vmatpush.msra.mxu0 0.0
    %2973 = vmatpush.msra.mxu0 0.0
    %v2974 = vand.u32 %v35, 4294901760
    %2975 = vmatpush.msra.mxu0 %v2974
    %v2976 = vand.u32 %v34, 4294901760
    %2977 = vmatpush.msra.mxu0 %v2976
    %v2978 = vand.u32 %v33, 4294901760
    %2979 = vmatpush.msra.mxu0 %v2978
    %v2980 = vand.u32 %v32, 4294901760
    %2981 = vmatpush.msra.mxu0 %v2980
    %v2982 = vand.u32 %v2957, 4294901760
    %v2983 = vsub.f32 %v2957, %v2982
    %v2984 = vand.u32 %v2983, 4294901760
    %v2985 = vsub.f32 %v2983, %v2984
    %v2986 = vand.u32 %v2985, 4294901760
    %2987 = vmatmul.f32.gmra.mxu0 %v2986
    %v2988 = vpop.f32.mrf.mxu0
    %v2989 = vadd.f32 1e-05, %v2988
    %v2990 = vand.u32 %v2960, 4294901760
    %v2991 = vsub.f32 %v2960, %v2990
    %v2992 = vand.u32 %v2991, 4294901760
    %v2993 = vsub.f32 %v2991, %v2992
    %v2994 = vand.u32 %v2993, 4294901760
    %2995 = vmatmul.f32.gmra.mxu0 %v2994
    %v2996 = vpop.f32.mrf.mxu0
    %v2997 = vadd.f32 1e-05, %v2996
    %2998 = vdwg.mxu0
    %2999 = vmatpush.msra.mxu0 0.0
    %3000 = vmatpush.msra.mxu0 0.0
    %3001 = vmatpush.msra.mxu0 0.0
    %3002 = vmatpush.msra.mxu0 0.0
    %3003 = vmatpush.msra.mxu0 0.0
    %3004 = vmatpush.msra.mxu0 0.0
    %3005 = vmatpush.msra.mxu0 0.0
    %3006 = vmatpush.msra.mxu0 0.0
    %3007 = vmatpush.msra.mxu0 0.0
    %3008 = vmatpush.msra.mxu0 0.0
    %3009 = vmatpush.msra.mxu0 0.0
    %3010 = vmatpush.msra.mxu0 0.0
    %v3011 = vand.u32 %v35, 4294901760
    %v3012 = vsub.f32 %v35, %v3011
    %v3013 = vand.u32 %v3012, 4294901760
    %v3014 = vsub.f32 %v3012, %v3013
    %v3015 = vand.u32 %v3014, 4294901760
    %3016 = vmatpush.msra.mxu0 %v3015
    %v3017 = vand.u32 %v34, 4294901760
    %v3018 = vsub.f32 %v34, %v3017
    %v3019 = vand.u32 %v3018, 4294901760
    %v3020 = vsub.f32 %v3018, %v3019
    %v3021 = vand.u32 %v3020, 4294901760
    %3022 = vmatpush.msra.mxu0 %v3021
    %v3023 = vand.u32 %v33, 4294901760
    %v3024 = vsub.f32 %v33, %v3023
    %v3025 = vand.u32 %v3024, 4294901760
    %v3026 = vsub.f32 %v3024, %v3025
    %v3027 = vand.u32 %v3026, 4294901760
    %3028 = vmatpush.msra.mxu0 %v3027
    %v3029 = vand.u32 %v32, 4294901760
    %v3030 = vsub.f32 %v32, %v3029
    %v3031 = vand.u32 %v3030, 4294901760
    %v3032 = vsub.f32 %v3030, %v3031
    %v3033 = vand.u32 %v3032, 4294901760
    %3034 = vmatpush.msra.mxu0 %v3033
    %v3035 = vand.u32 %v2957, 4294901760
    %3036 = vmatmul.f32.gmra.mxu0 %v3035
    %v3037 = vpop.f32.mrf.mxu0
    %v3038 = vadd.f32 %v2989, %v3037
    %v3039 = vand.u32 %v2960, 4294901760
    %3040 = vmatmul.f32.gmra.mxu0 %v3039
    %v3041 = vpop.f32.mrf.mxu0
    %v3042 = vadd.f32 %v2997, %v3041
    %3043 = vdwg.mxu0
    %3044 = vmatpush.msra.mxu0 0.0
    %3045 = vmatpush.msra.mxu0 0.0
    %3046 = vmatpush.msra.mxu0 0.0
    %3047 = vmatpush.msra.mxu0 0.0
    %3048 = vmatpush.msra.mxu0 0.0
    %3049 = vmatpush.msra.mxu0 0.0
    %3050 = vmatpush.msra.mxu0 0.0
    %3051 = vmatpush.msra.mxu0 0.0
    %3052 = vmatpush.msra.mxu0 0.0
    %3053 = vmatpush.msra.mxu0 0.0
    %3054 = vmatpush.msra.mxu0 0.0
    %3055 = vmatpush.msra.mxu0 0.0
    %v3056 = vand.u32 %v35, 4294901760
    %v3057 = vsub.f32 %v35, %v3056
    %3058 = vmatpush.msra.mxu0 %v3057
    %v3059 = vand.u32 %v34, 4294901760
    %v3060 = vsub.f32 %v34, %v3059
    %3061 = vmatpush.msra.mxu0 %v3060
    %v3062 = vand.u32 %v33, 4294901760
    %v3063 = vsub.f32 %v33, %v3062
    %3064 = vmatpush.msra.mxu0 %v3063
    %v3065 = vand.u32 %v32, 4294901760
    %v3066 = vsub.f32 %v32, %v3065
    %3067 = vmatpush.msra.mxu0 %v3066
    %v3068 = vand.u32 %v2957, 4294901760
    %v3069 = vsub.f32 %v2957, %v3068
    %3070 = vmatmul.f32.gmra.mxu0 %v3069
    %v3071 = vpop.f32.mrf.mxu0
    %v3072 = vadd.f32 %v3038, %v3071
    %v3073 = vand.u32 %v2960, 4294901760
    %v3074 = vsub.f32 %v2960, %v3073
    %3075 = vmatmul.f32.gmra.mxu0 %v3074
    %v3076 = vpop.f32.mrf.mxu0
    %v3077 = vadd.f32 %v3042, %v3076
    %3078 = vdwg.mxu0
    %3079 = vmatpush.msra.mxu0 0.0
    %3080 = vmatpush.msra.mxu0 0.0
    %3081 = vmatpush.msra.mxu0 0.0
    %3082 = vmatpush.msra.mxu0 0.0
    %3083 = vmatpush.msra.mxu0 0.0
    %3084 = vmatpush.msra.mxu0 0.0
    %3085 = vmatpush.msra.mxu0 0.0
    %3086 = vmatpush.msra.mxu0 0.0
    %3087 = vmatpush.msra.mxu0 0.0
    %3088 = vmatpush.msra.mxu0 0.0
    %3089 = vmatpush.msra.mxu0 0.0
    %3090 = vmatpush.msra.mxu0 0.0
    %v3091 = vand.u32 %v35, 4294901760
    %3092 = vmatpush.msra.mxu0 %v3091
    %v3093 = vand.u32 %v34, 4294901760
    %3094 = vmatpush.msra.mxu0 %v3093
    %v3095 = vand.u32 %v33, 4294901760
    %3096 = vmatpush.msra.mxu0 %v3095
    %v3097 = vand.u32 %v32, 4294901760
    %3098 = vmatpush.msra.mxu0 %v3097
    %v3099 = vand.u32 %v2957, 4294901760
    %v3100 = vsub.f32 %v2957, %v3099
    %v3101 = vand.u32 %v3100, 4294901760
    %3102 = vmatmul.f32.gmra.mxu0 %v3101
    %v3103 = vpop.f32.mrf.mxu0
    %v3104 = vadd.f32 %v3072, %v3103
    %v3105 = vand.u32 %v2960, 4294901760
    %v3106 = vsub.f32 %v2960, %v3105
    %v3107 = vand.u32 %v3106, 4294901760
    %3108 = vmatmul.f32.gmra.mxu0 %v3107
    %v3109 = vpop.f32.mrf.mxu0
    %v3110 = vadd.f32 %v3077, %v3109
    %3111 = vdwg.mxu0
    %3112 = vmatpush.msra.mxu0 0.0
    %3113 = vmatpush.msra.mxu0 0.0
    %3114 = vmatpush.msra.mxu0 0.0
    %3115 = vmatpush.msra.mxu0 0.0
    %3116 = vmatpush.msra.mxu0 0.0
    %3117 = vmatpush.msra.mxu0 0.0
    %3118 = vmatpush.msra.mxu0 0.0
    %3119 = vmatpush.msra.mxu0 0.0
    %3120 = vmatpush.msra.mxu0 0.0
    %3121 = vmatpush.msra.mxu0 0.0
    %3122 = vmatpush.msra.mxu0 0.0
    %3123 = vmatpush.msra.mxu0 0.0
    %v3124 = vand.u32 %v35, 4294901760
    %v3125 = vsub.f32 %v35, %v3124
    %v3126 = vand.u32 %v3125, 4294901760
    %3127 = vmatpush.msra.mxu0 %v3126
    %v3128 = vand.u32 %v34, 4294901760
    %v3129 = vsub.f32 %v34, %v3128
    %v3130 = vand.u32 %v3129, 4294901760
    %3131 = vmatpush.msra.mxu0 %v3130
    %v3132 = vand.u32 %v33, 4294901760
    %v3133 = vsub.f32 %v33, %v3132
    %v3134 = vand.u32 %v3133, 4294901760
    %3135 = vmatpush.msra.mxu0 %v3134
    %v3136 = vand.u32 %v32, 4294901760
    %v3137 = vsub.f32 %v32, %v3136
    %v3138 = vand.u32 %v3137, 4294901760
    %3139 = vmatpush.msra.mxu0 %v3138
    %v3140 = vand.u32 %v2957, 4294901760
    %3141 = vmatmul.f32.gmra.mxu0 %v3140
    %v3142 = vpop.f32.mrf.mxu0
    %v3143 = vadd.f32 %v3104, %v3142
    %v3144 = vand.u32 %v2960, 4294901760
    %3145 = vmatmul.f32.gmra.mxu0 %v3144
    %v3146 = vpop.f32.mrf.mxu0
    %v3147 = vadd.f32 %v3110, %v3146
    %3148 = vdwg.mxu0
    %3149 = vmatpush.msra.mxu0 0.0
    %3150 = vmatpush.msra.mxu0 0.0
    %3151 = vmatpush.msra.mxu0 0.0
    %3152 = vmatpush.msra.mxu0 0.0
    %3153 = vmatpush.msra.mxu0 0.0
    %3154 = vmatpush.msra.mxu0 0.0
    %3155 = vmatpush.msra.mxu0 0.0
    %3156 = vmatpush.msra.mxu0 0.0
    %3157 = vmatpush.msra.mxu0 0.0
    %3158 = vmatpush.msra.mxu0 0.0
    %3159 = vmatpush.msra.mxu0 0.0
    %3160 = vmatpush.msra.mxu0 0.0
    %v3161 = vand.u32 %v35, 4294901760
    %3162 = vmatpush.msra.mxu0 %v3161
    %v3163 = vand.u32 %v34, 4294901760
    %3164 = vmatpush.msra.mxu0 %v3163
    %v3165 = vand.u32 %v33, 4294901760
    %3166 = vmatpush.msra.mxu0 %v3165
    %v3167 = vand.u32 %v32, 4294901760
    %3168 = vmatpush.msra.mxu0 %v3167
    %v3169 = vand.u32 %v2957, 4294901760
    %3170 = vmatmul.f32.gmra.mxu0 %v3169
    %v3171 = vpop.f32.mrf.mxu0
    %v3172 = vadd.f32 %v3143, %v3171
    %v3173 = vand.u32 %v2960, 4294901760
    %3174 = vmatmul.f32.gmra.mxu0 %v3173
    %v3175 = vpop.f32.mrf.mxu0
    %v3176 = vadd.f32 %v3147, %v3175
    %3177 = vdwg.mxu0
    %v3178 = vrsqrt.pop %v3172
    %v3179 = vmul.f32 %v3178, %v3172
    %v3180 = vmul.f32 %v3179, %v3178
    %v3181 = vmul.f32 0.5, %v3180
    %v3182 = vsub.f32 1.5, %v3181
    %v3183 = vmul.f32 %v3178, %v3182
    %vm3184 = vweird.f32 %v3172
    %vm3185 = vweird.f32 %v3178
    %vm3186 = vmor %vm3184, %vm3185
    %v3187 = vsel %vm3186, %v3178, %v3183
    %v3188 = vrsqrt.pop %v3176
    %v3189 = vmul.f32 %v3188, %v3176
    %v3190 = vmul.f32 %v3189, %v3188
    %v3191 = vmul.f32 0.5, %v3190
    %v3192 = vsub.f32 1.5, %v3191
    %v3193 = vmul.f32 %v3188, %v3192
    %vm3194 = vweird.f32 %v3176
    %vm3195 = vweird.f32 %v3188
    %vm3196 = vmor %vm3194, %vm3195
    %v3197 = vsel %vm3196, %v3188, %v3193
    %v3198 = vmul.f32 %v2952, %v3187
    %v3199 = vmul.f32 %v2953, %v3197
    %v3200 = vld [vmem:[%s1 + $0x9] sm:$0x1]
    %v3201 = vperm.slane %v3200, 0
    %v3202 = vmul.f32 %v3198, %v3201
    %v3203 = vmul.f32 %v3199, %v3201
    %v3204 = vld [vmem:[%s1 + $0xa] sm:$0x1]
    %v3205 = vperm.slane %v3204, 0
    %v3206 = vadd.f32 %v3202, %v3205
    %v3207 = vadd.f32 %v3203, %v3205
    %v3208 = vld [vmem:[%s2 + $0x20] sm:$0xff]
    %v3209 = vld [vmem:[%s2 + $0x28] sm:$0xff]
    %v3210 = vld [vmem:[%s2 + $0x30] sm:$0xff]
    %v3211 = vld [vmem:[%s2 + $0x38] sm:$0xff]
    %v3212 = vld [vmem:[%s2 + $0x61] sm:$0x1]
    %v3213 = vperm.slane %v3212, 0
    %v3215 = vsel %vm38, %v3206, 0
    %v3218 = vsel %vm38, %v3207, 0
    %3220 = vmatpush.msra.mxu0 0.0
    %3221 = vmatpush.msra.mxu0 0.0
    %3222 = vmatpush.msra.mxu0 0.0
    %3223 = vmatpush.msra.mxu0 0.0
    %3224 = vmatpush.msra.mxu0 0.0
    %3225 = vmatpush.msra.mxu0 0.0
    %3226 = vmatpush.msra.mxu0 0.0
    %3227 = vmatpush.msra.mxu0 0.0
    %3228 = vmatpush.msra.mxu0 0.0
    %3229 = vmatpush.msra.mxu0 0.0
    %3230 = vmatpush.msra.mxu0 0.0
    %3231 = vmatpush.msra.mxu0 0.0
    %3232 = vmatpush.msra.mxu0 %v3211
    %3233 = vmatpush.msra.mxu0 %v3210
    %3234 = vmatpush.msra.mxu0 %v3209
    %3235 = vmatpush.msra.mxu0 %v3208
    %3236 = vmatmul.f32.gmra.mxu0 %v3215
    %v3237 = vpop.f32.mrf.mxu0
    %v3238 = vadd.f32 %v3213, %v3237
    %3239 = vmatmul.f32.gmra.mxu0 %v3218
    %v3240 = vpop.f32.mrf.mxu0
    %v3241 = vadd.f32 %v3213, %v3240
    %3242 = vdwg.mxu0
    %v3243 = vand.u32 2147483647, %v3238
    %v3244 = vand.u32 2147483647, %v3241
    %v3245 = vsub.f32 0.0, %v3243
    %v3246 = vsub.f32 0.0, %v3244
    %v3247 = vmul.f32 %v3245, 1.442695
    %v3248 = vpow.pop %v3247
    %v3249 = vmul.f32 %v3246, 1.442695
    %v3250 = vpow.pop %v3249
    %v3251 = vadd.f32 %v3248, 1.0
    %v3252 = vadd.f32 %v3250, 1.0
    %v3253 = vrcp.pop %v3251
    %v3254 = vrcp.pop %v3252
    %vm3255 = vcmp.ge.f32.partialorder %v3238, 0.0
    %vm3256 = vcmp.ge.f32.partialorder %v3241, 0.0
    %v3257 = vmul.f32 %v3248, %v3253
    %v3258 = vmul.f32 %v3250, %v3254
    %v3259 = vsel %vm3255, %v3253, %v3257
    %v3260 = vsel %vm3256, %v3254, %v3258
    %3263 = vrot.lane.b32.xlu0 %v3259, 64
    %v3264 = vpop.permute.xlu0 %3263
    %3265 = vrot.lane.b32.xlu0 %v3260, 64
    %v3266 = vpop.permute.xlu0 %3265
    %v3269 = vmul.f32 %v3238, %v3264
    %v3270 = vmul.f32 %v3241, %v3266
    %v3271 = vld [vmem:[%s4] sm:$0xff]
    %v3272 = vld [vmem:[%s4 + $0x8] sm:$0xff]
    %v3273 = vld [vmem:[%s4 + $0x10] sm:$0xff]
    %v3274 = vld [vmem:[%s4 + $0x18] sm:$0xff]
    %v3275 = vld [vmem:[%s4 + $0x20] sm:$0xff]
    %v3276 = vld [vmem:[%s4 + $0x28] sm:$0xff]
    %v3277 = vld [vmem:[%s4 + $0x30] sm:$0xff]
    %v3278 = vld [vmem:[%s4 + $0x38] sm:$0xff]
    %v3279 = vld [vmem:[%s4 + $0x40] sm:$0xff]
    %v3280 = vld [vmem:[%s4 + $0x48] sm:$0xff]
    %v3281 = vld [vmem:[%s4 + $0x50] sm:$0xff]
    %v3282 = vld [vmem:[%s4 + $0x58] sm:$0xff]
    %v3283 = vld [vmem:[%s4 + $0x60] sm:$0xff]
    %v3284 = vld [vmem:[%s4 + $0x68] sm:$0xff]
    %v3285 = vld [vmem:[%s4 + $0x70] sm:$0xff]
    %v3286 = vld [vmem:[%s4 + $0x78] sm:$0xff]
    %v3287 = vld [vmem:[%s4 + $0x80] sm:$0xff]
    %v3288 = vld [vmem:[%s4 + $0x88] sm:$0xff]
    %v3289 = vld [vmem:[%s4 + $0x90] sm:$0xff]
    %v3290 = vld [vmem:[%s4 + $0x98] sm:$0xff]
    %v3291 = vld [vmem:[%s4 + $0xa0] sm:$0xff]
    %v3292 = vld [vmem:[%s4 + $0xa8] sm:$0xff]
    %v3293 = vld [vmem:[%s4 + $0xb0] sm:$0xff]
    %v3294 = vld [vmem:[%s4 + $0xb8] sm:$0xff]
    %v3295 = vld [vmem:[%s4 + $0xc0] sm:$0xff]
    %v3296 = vld [vmem:[%s4 + $0xc8] sm:$0xff]
    %v3297 = vld [vmem:[%s4 + $0xd0] sm:$0xff]
    %v3298 = vld [vmem:[%s4 + $0xd8] sm:$0xff]
    %v3299 = vld [vmem:[%s4 + $0xe0] sm:$0xff]
    %v3300 = vld [vmem:[%s4 + $0xe8] sm:$0xff]
    %v3302 = vsel %vm1096, %v3271, 0
    %v3305 = vsel %vm1096, %v3272, 0
    %v3308 = vsel %vm1096, %v3273, 0
    %v3311 = vsel %vm1096, %v3274, 0
    %v3314 = vsel %vm1096, %v3275, 0
    %v3317 = vsel %vm1096, %v3276, 0
    %v3320 = vsel %vm1096, %v3277, 0
    %v3323 = vsel %vm1096, %v3278, 0
    %v3326 = vsel %vm1096, %v3279, 0
    %v3329 = vsel %vm1096, %v3280, 0
    %v3332 = vsel %vm1096, %v3281, 0
    %v3335 = vsel %vm1096, %v3282, 0
    %v3338 = vsel %vm1096, %v3283, 0
    %v3341 = vsel %vm1096, %v3284, 0
    %v3344 = vsel %vm1096, %v3285, 0
    %v3347 = vsel %vm1096, %v3286, 0
    %v3350 = vsel %vm1096, %v3287, 0
    %v3353 = vsel %vm1096, %v3288, 0
    %v3356 = vsel %vm1096, %v3289, 0
    %v3359 = vsel %vm1096, %v3290, 0
    %v3362 = vsel %vm1096, %v3291, 0
    %v3365 = vsel %vm1096, %v3292, 0
    %v3368 = vsel %vm1096, %v3293, 0
    %v3371 = vsel %vm1096, %v3294, 0
    %v3374 = vsel %vm1096, %v3295, 0
    %v3377 = vsel %vm1096, %v3296, 0
    %v3380 = vsel %vm1096, %v3297, 0
    %v3383 = vsel %vm1096, %v3298, 0
    %v3386 = vsel %vm1096, %v3299, 0
    %v3389 = vsel %vm1096, %v3300, 0
    %3391 = vmatpush.msra.mxu0 0.0
    %3392 = vmatpush.msra.mxu0 0.0
    %3393 = vmatpush.msra.mxu0 0.0
    %3394 = vmatpush.msra.mxu0 0.0
    %3395 = vmatpush.msra.mxu0 0.0
    %3396 = vmatpush.msra.mxu0 0.0
    %3397 = vmatpush.msra.mxu0 0.0
    %3398 = vmatpush.msra.mxu0 0.0
    %3399 = vmatpush.msra.mxu0 0.0
    %3400 = vmatpush.msra.mxu0 0.0
    %3401 = vmatpush.msra.mxu0 0.0
    %3402 = vmatpush.msra.mxu0 0.0
    %3403 = vmatpush.msra.mxu0 0.0
    %3404 = vmatpush.msra.mxu0 0.0
    %v3405 = vand.u32 %v3270, 4294901760
    %3406 = vmatpush.msra.mxu0 %v3405
    %v3407 = vand.u32 %v3269, 4294901760
    %3408 = vmatpush.msra.mxu0 %v3407
    %v3409 = vand.u32 %v3302, 4294901760
    %v3410 = vsub.f32 %v3302, %v3409
    %v3411 = vand.u32 %v3410, 4294901760
    %v3412 = vsub.f32 %v3410, %v3411
    %v3413 = vand.u32 %v3412, 4294901760
    %3414 = vmatmul.f32.gmra.mxu0 %v3413
    %v3415 = vpop.f32.mrf.mxu0
    %v3416 = vadd.f32 0.0, %v3415
    %v3417 = vand.u32 %v3305, 4294901760
    %v3418 = vsub.f32 %v3305, %v3417
    %v3419 = vand.u32 %v3418, 4294901760
    %v3420 = vsub.f32 %v3418, %v3419
    %v3421 = vand.u32 %v3420, 4294901760
    %3422 = vmatmul.f32.gmra.mxu0 %v3421
    %v3423 = vpop.f32.mrf.mxu0
    %v3424 = vadd.f32 0.0, %v3423
    %v3425 = vand.u32 %v3308, 4294901760
    %v3426 = vsub.f32 %v3308, %v3425
    %v3427 = vand.u32 %v3426, 4294901760
    %v3428 = vsub.f32 %v3426, %v3427
    %v3429 = vand.u32 %v3428, 4294901760
    %3430 = vmatmul.f32.gmra.mxu0 %v3429
    %v3431 = vpop.f32.mrf.mxu0
    %v3432 = vadd.f32 0.0, %v3431
    %v3433 = vand.u32 %v3311, 4294901760
    %v3434 = vsub.f32 %v3311, %v3433
    %v3435 = vand.u32 %v3434, 4294901760
    %v3436 = vsub.f32 %v3434, %v3435
    %v3437 = vand.u32 %v3436, 4294901760
    %3438 = vmatmul.f32.gmra.mxu0 %v3437
    %v3439 = vpop.f32.mrf.mxu0
    %v3440 = vadd.f32 0.0, %v3439
    %v3441 = vand.u32 %v3314, 4294901760
    %v3442 = vsub.f32 %v3314, %v3441
    %v3443 = vand.u32 %v3442, 4294901760
    %v3444 = vsub.f32 %v3442, %v3443
    %v3445 = vand.u32 %v3444, 4294901760
    %3446 = vmatmul.f32.gmra.mxu0 %v3445
    %v3447 = vpop.f32.mrf.mxu0
    %v3448 = vadd.f32 0.0, %v3447
    %v3449 = vand.u32 %v3317, 4294901760
    %v3450 = vsub.f32 %v3317, %v3449
    %v3451 = vand.u32 %v3450, 4294901760
    %v3452 = vsub.f32 %v3450, %v3451
    %v3453 = vand.u32 %v3452, 4294901760
    %3454 = vmatmul.f32.gmra.mxu0 %v3453
    %v3455 = vpop.f32.mrf.mxu0
    %v3456 = vadd.f32 0.0, %v3455
    %v3457 = vand.u32 %v3320, 4294901760
    %v3458 = vsub.f32 %v3320, %v3457
    %v3459 = vand.u32 %v3458, 4294901760
    %v3460 = vsub.f32 %v3458, %v3459
    %v3461 = vand.u32 %v3460, 4294901760
    %3462 = vmatmul.f32.gmra.mxu0 %v3461
    %v3463 = vpop.f32.mrf.mxu0
    %v3464 = vadd.f32 0.0, %v3463
    %v3465 = vand.u32 %v3323, 4294901760
    %v3466 = vsub.f32 %v3323, %v3465
    %v3467 = vand.u32 %v3466, 4294901760
    %v3468 = vsub.f32 %v3466, %v3467
    %v3469 = vand.u32 %v3468, 4294901760
    %3470 = vmatmul.f32.gmra.mxu0 %v3469
    %v3471 = vpop.f32.mrf.mxu0
    %v3472 = vadd.f32 0.0, %v3471
    %v3473 = vand.u32 %v3326, 4294901760
    %v3474 = vsub.f32 %v3326, %v3473
    %v3475 = vand.u32 %v3474, 4294901760
    %v3476 = vsub.f32 %v3474, %v3475
    %v3477 = vand.u32 %v3476, 4294901760
    %3478 = vmatmul.f32.gmra.mxu0 %v3477
    %v3479 = vpop.f32.mrf.mxu0
    %v3480 = vadd.f32 0.0, %v3479
    %v3481 = vand.u32 %v3329, 4294901760
    %v3482 = vsub.f32 %v3329, %v3481
    %v3483 = vand.u32 %v3482, 4294901760
    %v3484 = vsub.f32 %v3482, %v3483
    %v3485 = vand.u32 %v3484, 4294901760
    %3486 = vmatmul.f32.gmra.mxu0 %v3485
    %v3487 = vpop.f32.mrf.mxu0
    %v3488 = vadd.f32 0.0, %v3487
    %v3489 = vand.u32 %v3332, 4294901760
    %v3490 = vsub.f32 %v3332, %v3489
    %v3491 = vand.u32 %v3490, 4294901760
    %v3492 = vsub.f32 %v3490, %v3491
    %v3493 = vand.u32 %v3492, 4294901760
    %3494 = vmatmul.f32.gmra.mxu0 %v3493
    %v3495 = vpop.f32.mrf.mxu0
    %v3496 = vadd.f32 0.0, %v3495
    %v3497 = vand.u32 %v3335, 4294901760
    %v3498 = vsub.f32 %v3335, %v3497
    %v3499 = vand.u32 %v3498, 4294901760
    %v3500 = vsub.f32 %v3498, %v3499
    %v3501 = vand.u32 %v3500, 4294901760
    %3502 = vmatmul.f32.gmra.mxu0 %v3501
    %v3503 = vpop.f32.mrf.mxu0
    %v3504 = vadd.f32 0.0, %v3503
    %v3505 = vand.u32 %v3338, 4294901760
    %v3506 = vsub.f32 %v3338, %v3505
    %v3507 = vand.u32 %v3506, 4294901760
    %v3508 = vsub.f32 %v3506, %v3507
    %v3509 = vand.u32 %v3508, 4294901760
    %3510 = vmatmul.f32.gmra.mxu0 %v3509
    %v3511 = vpop.f32.mrf.mxu0
    %v3512 = vadd.f32 0.0, %v3511
    %v3513 = vand.u32 %v3341, 4294901760
    %v3514 = vsub.f32 %v3341, %v3513
    %v3515 = vand.u32 %v3514, 4294901760
    %v3516 = vsub.f32 %v3514, %v3515
    %v3517 = vand.u32 %v3516, 4294901760
    %3518 = vmatmul.f32.gmra.mxu0 %v3517
    %v3519 = vpop.f32.mrf.mxu0
    %v3520 = vadd.f32 0.0, %v3519
    %v3521 = vand.u32 %v3344, 4294901760
    %v3522 = vsub.f32 %v3344, %v3521
    %v3523 = vand.u32 %v3522, 4294901760
    %v3524 = vsub.f32 %v3522, %v3523
    %v3525 = vand.u32 %v3524, 4294901760
    %3526 = vmatmul.f32.gmra.mxu0 %v3525
    %v3527 = vpop.f32.mrf.mxu0
    %v3528 = vadd.f32 0.0, %v3527
    %v3529 = vand.u32 %v3347, 4294901760
    %v3530 = vsub.f32 %v3347, %v3529
    %v3531 = vand.u32 %v3530, 4294901760
    %v3532 = vsub.f32 %v3530, %v3531
    %v3533 = vand.u32 %v3532, 4294901760
    %3534 = vmatmul.f32.gmra.mxu0 %v3533
    %v3535 = vpop.f32.mrf.mxu0
    %v3536 = vadd.f32 0.0, %v3535
    %v3537 = vand.u32 %v3350, 4294901760
    %v3538 = vsub.f32 %v3350, %v3537
    %v3539 = vand.u32 %v3538, 4294901760
    %v3540 = vsub.f32 %v3538, %v3539
    %v3541 = vand.u32 %v3540, 4294901760
    %3542 = vmatmul.f32.gmra.mxu0 %v3541
    %v3543 = vpop.f32.mrf.mxu0
    %v3544 = vadd.f32 0.0, %v3543
    %v3545 = vand.u32 %v3353, 4294901760
    %v3546 = vsub.f32 %v3353, %v3545
    %v3547 = vand.u32 %v3546, 4294901760
    %v3548 = vsub.f32 %v3546, %v3547
    %v3549 = vand.u32 %v3548, 4294901760
    %3550 = vmatmul.f32.gmra.mxu0 %v3549
    %v3551 = vpop.f32.mrf.mxu0
    %v3552 = vadd.f32 0.0, %v3551
    %v3553 = vand.u32 %v3356, 4294901760
    %v3554 = vsub.f32 %v3356, %v3553
    %v3555 = vand.u32 %v3554, 4294901760
    %v3556 = vsub.f32 %v3554, %v3555
    %v3557 = vand.u32 %v3556, 4294901760
    %3558 = vmatmul.f32.gmra.mxu0 %v3557
    %v3559 = vpop.f32.mrf.mxu0
    %v3560 = vadd.f32 0.0, %v3559
    %v3561 = vand.u32 %v3359, 4294901760
    %v3562 = vsub.f32 %v3359, %v3561
    %v3563 = vand.u32 %v3562, 4294901760
    %v3564 = vsub.f32 %v3562, %v3563
    %v3565 = vand.u32 %v3564, 4294901760
    %3566 = vmatmul.f32.gmra.mxu0 %v3565
    %v3567 = vpop.f32.mrf.mxu0
    %v3568 = vadd.f32 0.0, %v3567
    %v3569 = vand.u32 %v3362, 4294901760
    %v3570 = vsub.f32 %v3362, %v3569
    %v3571 = vand.u32 %v3570, 4294901760
    %v3572 = vsub.f32 %v3570, %v3571
    %v3573 = vand.u32 %v3572, 4294901760
    %3574 = vmatmul.f32.gmra.mxu0 %v3573
    %v3575 = vpop.f32.mrf.mxu0
    %v3576 = vadd.f32 0.0, %v3575
    %v3577 = vand.u32 %v3365, 4294901760
    %v3578 = vsub.f32 %v3365, %v3577
    %v3579 = vand.u32 %v3578, 4294901760
    %v3580 = vsub.f32 %v3578, %v3579
    %v3581 = vand.u32 %v3580, 4294901760
    %3582 = vmatmul.f32.gmra.mxu0 %v3581
    %v3583 = vpop.f32.mrf.mxu0
    %v3584 = vadd.f32 0.0, %v3583
    %v3585 = vand.u32 %v3368, 4294901760
    %v3586 = vsub.f32 %v3368, %v3585
    %v3587 = vand.u32 %v3586, 4294901760
    %v3588 = vsub.f32 %v3586, %v3587
    %v3589 = vand.u32 %v3588, 4294901760
    %3590 = vmatmul.f32.gmra.mxu0 %v3589
    %v3591 = vpop.f32.mrf.mxu0
    %v3592 = vadd.f32 0.0, %v3591
    %v3593 = vand.u32 %v3371, 4294901760
    %v3594 = vsub.f32 %v3371, %v3593
    %v3595 = vand.u32 %v3594, 4294901760
    %v3596 = vsub.f32 %v3594, %v3595
    %v3597 = vand.u32 %v3596, 4294901760
    %3598 = vmatmul.f32.gmra.mxu0 %v3597
    %v3599 = vpop.f32.mrf.mxu0
    %v3600 = vadd.f32 0.0, %v3599
    %v3601 = vand.u32 %v3374, 4294901760
    %v3602 = vsub.f32 %v3374, %v3601
    %v3603 = vand.u32 %v3602, 4294901760
    %v3604 = vsub.f32 %v3602, %v3603
    %v3605 = vand.u32 %v3604, 4294901760
    %3606 = vmatmul.f32.gmra.mxu0 %v3605
    %v3607 = vpop.f32.mrf.mxu0
    %v3608 = vadd.f32 0.0, %v3607
    %v3609 = vand.u32 %v3377, 4294901760
    %v3610 = vsub.f32 %v3377, %v3609
    %v3611 = vand.u32 %v3610, 4294901760
    %v3612 = vsub.f32 %v3610, %v3611
    %v3613 = vand.u32 %v3612, 4294901760
    %3614 = vmatmul.f32.gmra.mxu0 %v3613
    %v3615 = vpop.f32.mrf.mxu0
    %v3616 = vadd.f32 0.0, %v3615
    %v3617 = vand.u32 %v3380, 4294901760
    %v3618 = vsub.f32 %v3380, %v3617
    %v3619 = vand.u32 %v3618, 4294901760
    %v3620 = vsub.f32 %v3618, %v3619
    %v3621 = vand.u32 %v3620, 4294901760
    %3622 = vmatmul.f32.gmra.mxu0 %v3621
    %v3623 = vpop.f32.mrf.mxu0
    %v3624 = vadd.f32 0.0, %v3623
    %v3625 = vand.u32 %v3383, 4294901760
    %v3626 = vsub.f32 %v3383, %v3625
    %v3627 = vand.u32 %v3626, 4294901760
    %v3628 = vsub.f32 %v3626, %v3627
    %v3629 = vand.u32 %v3628, 4294901760
    %3630 = vmatmul.f32.gmra.mxu0 %v3629
    %v3631 = vpop.f32.mrf.mxu0
    %v3632 = vadd.f32 0.0, %v3631
    %v3633 = vand.u32 %v3386, 4294901760
    %v3634 = vsub.f32 %v3386, %v3633
    %v3635 = vand.u32 %v3634, 4294901760
    %v3636 = vsub.f32 %v3634, %v3635
    %v3637 = vand.u32 %v3636, 4294901760
    %3638 = vmatmul.f32.gmra.mxu0 %v3637
    %v3639 = vpop.f32.mrf.mxu0
    %v3640 = vadd.f32 0.0, %v3639
    %v3641 = vand.u32 %v3389, 4294901760
    %v3642 = vsub.f32 %v3389, %v3641
    %v3643 = vand.u32 %v3642, 4294901760
    %v3644 = vsub.f32 %v3642, %v3643
    %v3645 = vand.u32 %v3644, 4294901760
    %3646 = vmatmul.f32.gmra.mxu0 %v3645
    %v3647 = vpop.f32.mrf.mxu0
    %v3648 = vadd.f32 0.0, %v3647
    %3649 = vdwg.mxu0
    %3650 = vmatpush.msra.mxu0 0.0
    %3651 = vmatpush.msra.mxu0 0.0
    %3652 = vmatpush.msra.mxu0 0.0
    %3653 = vmatpush.msra.mxu0 0.0
    %3654 = vmatpush.msra.mxu0 0.0
    %3655 = vmatpush.msra.mxu0 0.0
    %3656 = vmatpush.msra.mxu0 0.0
    %3657 = vmatpush.msra.mxu0 0.0
    %3658 = vmatpush.msra.mxu0 0.0
    %3659 = vmatpush.msra.mxu0 0.0
    %3660 = vmatpush.msra.mxu0 0.0
    %3661 = vmatpush.msra.mxu0 0.0
    %3662 = vmatpush.msra.mxu0 0.0
    %3663 = vmatpush.msra.mxu0 0.0
    %v3664 = vand.u32 %v3270, 4294901760
    %v3665 = vsub.f32 %v3270, %v3664
    %v3666 = vand.u32 %v3665, 4294901760
    %v3667 = vsub.f32 %v3665, %v3666
    %v3668 = vand.u32 %v3667, 4294901760
    %3669 = vmatpush.msra.mxu0 %v3668
    %v3670 = vand.u32 %v3269, 4294901760
    %v3671 = vsub.f32 %v3269, %v3670
    %v3672 = vand.u32 %v3671, 4294901760
    %v3673 = vsub.f32 %v3671, %v3672
    %v3674 = vand.u32 %v3673, 4294901760
    %3675 = vmatpush.msra.mxu0 %v3674
    %v3676 = vand.u32 %v3302, 4294901760
    %3677 = vmatmul.f32.gmra.mxu0 %v3676
    %v3678 = vpop.f32.mrf.mxu0
    %v3679 = vadd.f32 %v3416, %v3678
    %v3680 = vand.u32 %v3305, 4294901760
    %3681 = vmatmul.f32.gmra.mxu0 %v3680
    %v3682 = vpop.f32.mrf.mxu0
    %v3683 = vadd.f32 %v3424, %v3682
    %v3684 = vand.u32 %v3308, 4294901760
    %3685 = vmatmul.f32.gmra.mxu0 %v3684
    %v3686 = vpop.f32.mrf.mxu0
    %v3687 = vadd.f32 %v3432, %v3686
    %v3688 = vand.u32 %v3311, 4294901760
    %3689 = vmatmul.f32.gmra.mxu0 %v3688
    %v3690 = vpop.f32.mrf.mxu0
    %v3691 = vadd.f32 %v3440, %v3690
    %v3692 = vand.u32 %v3314, 4294901760
    %3693 = vmatmul.f32.gmra.mxu0 %v3692
    %v3694 = vpop.f32.mrf.mxu0
    %v3695 = vadd.f32 %v3448, %v3694
    %v3696 = vand.u32 %v3317, 4294901760
    %3697 = vmatmul.f32.gmra.mxu0 %v3696
    %v3698 = vpop.f32.mrf.mxu0
    %v3699 = vadd.f32 %v3456, %v3698
    %v3700 = vand.u32 %v3320, 4294901760
    %3701 = vmatmul.f32.gmra.mxu0 %v3700
    %v3702 = vpop.f32.mrf.mxu0
    %v3703 = vadd.f32 %v3464, %v3702
    %v3704 = vand.u32 %v3323, 4294901760
    %3705 = vmatmul.f32.gmra.mxu0 %v3704
    %v3706 = vpop.f32.mrf.mxu0
    %v3707 = vadd.f32 %v3472, %v3706
    %v3708 = vand.u32 %v3326, 4294901760
    %3709 = vmatmul.f32.gmra.mxu0 %v3708
    %v3710 = vpop.f32.mrf.mxu0
    %v3711 = vadd.f32 %v3480, %v3710
    %v3712 = vand.u32 %v3329, 4294901760
    %3713 = vmatmul.f32.gmra.mxu0 %v3712
    %v3714 = vpop.f32.mrf.mxu0
    %v3715 = vadd.f32 %v3488, %v3714
    %v3716 = vand.u32 %v3332, 4294901760
    %3717 = vmatmul.f32.gmra.mxu0 %v3716
    %v3718 = vpop.f32.mrf.mxu0
    %v3719 = vadd.f32 %v3496, %v3718
    %v3720 = vand.u32 %v3335, 4294901760
    %3721 = vmatmul.f32.gmra.mxu0 %v3720
    %v3722 = vpop.f32.mrf.mxu0
    %v3723 = vadd.f32 %v3504, %v3722
    %v3724 = vand.u32 %v3338, 4294901760
    %3725 = vmatmul.f32.gmra.mxu0 %v3724
    %v3726 = vpop.f32.mrf.mxu0
    %v3727 = vadd.f32 %v3512, %v3726
    %v3728 = vand.u32 %v3341, 4294901760
    %3729 = vmatmul.f32.gmra.mxu0 %v3728
    %v3730 = vpop.f32.mrf.mxu0
    %v3731 = vadd.f32 %v3520, %v3730
    %v3732 = vand.u32 %v3344, 4294901760
    %3733 = vmatmul.f32.gmra.mxu0 %v3732
    %v3734 = vpop.f32.mrf.mxu0
    %v3735 = vadd.f32 %v3528, %v3734
    %v3736 = vand.u32 %v3347, 4294901760
    %3737 = vmatmul.f32.gmra.mxu0 %v3736
    %v3738 = vpop.f32.mrf.mxu0
    %v3739 = vadd.f32 %v3536, %v3738
    %v3740 = vand.u32 %v3350, 4294901760
    %3741 = vmatmul.f32.gmra.mxu0 %v3740
    %v3742 = vpop.f32.mrf.mxu0
    %v3743 = vadd.f32 %v3544, %v3742
    %v3744 = vand.u32 %v3353, 4294901760
    %3745 = vmatmul.f32.gmra.mxu0 %v3744
    %v3746 = vpop.f32.mrf.mxu0
    %v3747 = vadd.f32 %v3552, %v3746
    %v3748 = vand.u32 %v3356, 4294901760
    %3749 = vmatmul.f32.gmra.mxu0 %v3748
    %v3750 = vpop.f32.mrf.mxu0
    %v3751 = vadd.f32 %v3560, %v3750
    %v3752 = vand.u32 %v3359, 4294901760
    %3753 = vmatmul.f32.gmra.mxu0 %v3752
    %v3754 = vpop.f32.mrf.mxu0
    %v3755 = vadd.f32 %v3568, %v3754
    %v3756 = vand.u32 %v3362, 4294901760
    %3757 = vmatmul.f32.gmra.mxu0 %v3756
    %v3758 = vpop.f32.mrf.mxu0
    %v3759 = vadd.f32 %v3576, %v3758
    %v3760 = vand.u32 %v3365, 4294901760
    %3761 = vmatmul.f32.gmra.mxu0 %v3760
    %v3762 = vpop.f32.mrf.mxu0
    %v3763 = vadd.f32 %v3584, %v3762
    %v3764 = vand.u32 %v3368, 4294901760
    %3765 = vmatmul.f32.gmra.mxu0 %v3764
    %v3766 = vpop.f32.mrf.mxu0
    %v3767 = vadd.f32 %v3592, %v3766
    %v3768 = vand.u32 %v3371, 4294901760
    %3769 = vmatmul.f32.gmra.mxu0 %v3768
    %v3770 = vpop.f32.mrf.mxu0
    %v3771 = vadd.f32 %v3600, %v3770
    %v3772 = vand.u32 %v3374, 4294901760
    %3773 = vmatmul.f32.gmra.mxu0 %v3772
    %v3774 = vpop.f32.mrf.mxu0
    %v3775 = vadd.f32 %v3608, %v3774
    %v3776 = vand.u32 %v3377, 4294901760
    %3777 = vmatmul.f32.gmra.mxu0 %v3776
    %v3778 = vpop.f32.mrf.mxu0
    %v3779 = vadd.f32 %v3616, %v3778
    %v3780 = vand.u32 %v3380, 4294901760
    %3781 = vmatmul.f32.gmra.mxu0 %v3780
    %v3782 = vpop.f32.mrf.mxu0
    %v3783 = vadd.f32 %v3624, %v3782
    %v3784 = vand.u32 %v3383, 4294901760
    %3785 = vmatmul.f32.gmra.mxu0 %v3784
    %v3786 = vpop.f32.mrf.mxu0
    %v3787 = vadd.f32 %v3632, %v3786
    %v3788 = vand.u32 %v3386, 4294901760
    %3789 = vmatmul.f32.gmra.mxu0 %v3788
    %v3790 = vpop.f32.mrf.mxu0
    %v3791 = vadd.f32 %v3640, %v3790
    %v3792 = vand.u32 %v3389, 4294901760
    %3793 = vmatmul.f32.gmra.mxu0 %v3792
    %v3794 = vpop.f32.mrf.mxu0
    %v3795 = vadd.f32 %v3648, %v3794
    %3796 = vdwg.mxu0
    %3797 = vmatpush.msra.mxu0 0.0
    %3798 = vmatpush.msra.mxu0 0.0
    %3799 = vmatpush.msra.mxu0 0.0
    %3800 = vmatpush.msra.mxu0 0.0
    %3801 = vmatpush.msra.mxu0 0.0
    %3802 = vmatpush.msra.mxu0 0.0
    %3803 = vmatpush.msra.mxu0 0.0
    %3804 = vmatpush.msra.mxu0 0.0
    %3805 = vmatpush.msra.mxu0 0.0
    %3806 = vmatpush.msra.mxu0 0.0
    %3807 = vmatpush.msra.mxu0 0.0
    %3808 = vmatpush.msra.mxu0 0.0
    %3809 = vmatpush.msra.mxu0 0.0
    %3810 = vmatpush.msra.mxu0 0.0
    %v3811 = vand.u32 %v3270, 4294901760
    %v3812 = vsub.f32 %v3270, %v3811
    %3813 = vmatpush.msra.mxu0 %v3812
    %v3814 = vand.u32 %v3269, 4294901760
    %v3815 = vsub.f32 %v3269, %v3814
    %3816 = vmatpush.msra.mxu0 %v3815
    %v3817 = vand.u32 %v3302, 4294901760
    %v3818 = vsub.f32 %v3302, %v3817
    %3819 = vmatmul.f32.gmra.mxu0 %v3818
    %v3820 = vpop.f32.mrf.mxu0
    %v3821 = vadd.f32 %v3679, %v3820
    %v3822 = vand.u32 %v3305, 4294901760
    %v3823 = vsub.f32 %v3305, %v3822
    %3824 = vmatmul.f32.gmra.mxu0 %v3823
    %v3825 = vpop.f32.mrf.mxu0
    %v3826 = vadd.f32 %v3683, %v3825
    %v3827 = vand.u32 %v3308, 4294901760
    %v3828 = vsub.f32 %v3308, %v3827
    %3829 = vmatmul.f32.gmra.mxu0 %v3828
    %v3830 = vpop.f32.mrf.mxu0
    %v3831 = vadd.f32 %v3687, %v3830
    %v3832 = vand.u32 %v3311, 4294901760
    %v3833 = vsub.f32 %v3311, %v3832
    %3834 = vmatmul.f32.gmra.mxu0 %v3833
    %v3835 = vpop.f32.mrf.mxu0
    %v3836 = vadd.f32 %v3691, %v3835
    %v3837 = vand.u32 %v3314, 4294901760
    %v3838 = vsub.f32 %v3314, %v3837
    %3839 = vmatmul.f32.gmra.mxu0 %v3838
    %v3840 = vpop.f32.mrf.mxu0
    %v3841 = vadd.f32 %v3695, %v3840
    %v3842 = vand.u32 %v3317, 4294901760
    %v3843 = vsub.f32 %v3317, %v3842
    %3844 = vmatmul.f32.gmra.mxu0 %v3843
    %v3845 = vpop.f32.mrf.mxu0
    %v3846 = vadd.f32 %v3699, %v3845
    %v3847 = vand.u32 %v3320, 4294901760
    %v3848 = vsub.f32 %v3320, %v3847
    %3849 = vmatmul.f32.gmra.mxu0 %v3848
    %v3850 = vpop.f32.mrf.mxu0
    %v3851 = vadd.f32 %v3703, %v3850
    %v3852 = vand.u32 %v3323, 4294901760
    %v3853 = vsub.f32 %v3323, %v3852
    %3854 = vmatmul.f32.gmra.mxu0 %v3853
    %v3855 = vpop.f32.mrf.mxu0
    %v3856 = vadd.f32 %v3707, %v3855
    %v3857 = vand.u32 %v3326, 4294901760
    %v3858 = vsub.f32 %v3326, %v3857
    %3859 = vmatmul.f32.gmra.mxu0 %v3858
    %v3860 = vpop.f32.mrf.mxu0
    %v3861 = vadd.f32 %v3711, %v3860
    %v3862 = vand.u32 %v3329, 4294901760
    %v3863 = vsub.f32 %v3329, %v3862
    %3864 = vmatmul.f32.gmra.mxu0 %v3863
    %v3865 = vpop.f32.mrf.mxu0
    %v3866 = vadd.f32 %v3715, %v3865
    %v3867 = vand.u32 %v3332, 4294901760
    %v3868 = vsub.f32 %v3332, %v3867
    %3869 = vmatmul.f32.gmra.mxu0 %v3868
    %v3870 = vpop.f32.mrf.mxu0
    %v3871 = vadd.f32 %v3719, %v3870
    %v3872 = vand.u32 %v3335, 4294901760
    %v3873 = vsub.f32 %v3335, %v3872
    %3874 = vmatmul.f32.gmra.mxu0 %v3873
    %v3875 = vpop.f32.mrf.mxu0
    %v3876 = vadd.f32 %v3723, %v3875
    %v3877 = vand.u32 %v3338, 4294901760
    %v3878 = vsub.f32 %v3338, %v3877
    %3879 = vmatmul.f32.gmra.mxu0 %v3878
    %v3880 = vpop.f32.mrf.mxu0
    %v3881 = vadd.f32 %v3727, %v3880
    %v3882 = vand.u32 %v3341, 4294901760
    %v3883 = vsub.f32 %v3341, %v3882
    %3884 = vmatmul.f32.gmra.mxu0 %v3883
    %v3885 = vpop.f32.mrf.mxu0
    %v3886 = vadd.f32 %v3731, %v3885
    %v3887 = vand.u32 %v3344, 4294901760
    %v3888 = vsub.f32 %v3344, %v3887
    %3889 = vmatmul.f32.gmra.mxu0 %v3888
    %v3890 = vpop.f32.mrf.mxu0
    %v3891 = vadd.f32 %v3735, %v3890
    %v3892 = vand.u32 %v3347, 4294901760
    %v3893 = vsub.f32 %v3347, %v3892
    %3894 = vmatmul.f32.gmra.mxu0 %v3893
    %v3895 = vpop.f32.mrf.mxu0
    %v3896 = vadd.f32 %v3739, %v3895
    %v3897 = vand.u32 %v3350, 4294901760
    %v3898 = vsub.f32 %v3350, %v3897
    %3899 = vmatmul.f32.gmra.mxu0 %v3898
    %v3900 = vpop.f32.mrf.mxu0
    %v3901 = vadd.f32 %v3743, %v3900
    %v3902 = vand.u32 %v3353, 4294901760
    %v3903 = vsub.f32 %v3353, %v3902
    %3904 = vmatmul.f32.gmra.mxu0 %v3903
    %v3905 = vpop.f32.mrf.mxu0
    %v3906 = vadd.f32 %v3747, %v3905
    %v3907 = vand.u32 %v3356, 4294901760
    %v3908 = vsub.f32 %v3356, %v3907
    %3909 = vmatmul.f32.gmra.mxu0 %v3908
    %v3910 = vpop.f32.mrf.mxu0
    %v3911 = vadd.f32 %v3751, %v3910
    %v3912 = vand.u32 %v3359, 4294901760
    %v3913 = vsub.f32 %v3359, %v3912
    %3914 = vmatmul.f32.gmra.mxu0 %v3913
    %v3915 = vpop.f32.mrf.mxu0
    %v3916 = vadd.f32 %v3755, %v3915
    %v3917 = vand.u32 %v3362, 4294901760
    %v3918 = vsub.f32 %v3362, %v3917
    %3919 = vmatmul.f32.gmra.mxu0 %v3918
    %v3920 = vpop.f32.mrf.mxu0
    %v3921 = vadd.f32 %v3759, %v3920
    %v3922 = vand.u32 %v3365, 4294901760
    %v3923 = vsub.f32 %v3365, %v3922
    %3924 = vmatmul.f32.gmra.mxu0 %v3923
    %v3925 = vpop.f32.mrf.mxu0
    %v3926 = vadd.f32 %v3763, %v3925
    %v3927 = vand.u32 %v3368, 4294901760
    %v3928 = vsub.f32 %v3368, %v3927
    %3929 = vmatmul.f32.gmra.mxu0 %v3928
    %v3930 = vpop.f32.mrf.mxu0
    %v3931 = vadd.f32 %v3767, %v3930
    %v3932 = vand.u32 %v3371, 4294901760
    %v3933 = vsub.f32 %v3371, %v3932
    %3934 = vmatmul.f32.gmra.mxu0 %v3933
    %v3935 = vpop.f32.mrf.mxu0
    %v3936 = vadd.f32 %v3771, %v3935
    %v3937 = vand.u32 %v3374, 4294901760
    %v3938 = vsub.f32 %v3374, %v3937
    %3939 = vmatmul.f32.gmra.mxu0 %v3938
    %v3940 = vpop.f32.mrf.mxu0
    %v3941 = vadd.f32 %v3775, %v3940
    %v3942 = vand.u32 %v3377, 4294901760
    %v3943 = vsub.f32 %v3377, %v3942
    %3944 = vmatmul.f32.gmra.mxu0 %v3943
    %v3945 = vpop.f32.mrf.mxu0
    %v3946 = vadd.f32 %v3779, %v3945
    %v3947 = vand.u32 %v3380, 4294901760
    %v3948 = vsub.f32 %v3380, %v3947
    %3949 = vmatmul.f32.gmra.mxu0 %v3948
    %v3950 = vpop.f32.mrf.mxu0
    %v3951 = vadd.f32 %v3783, %v3950
    %v3952 = vand.u32 %v3383, 4294901760
    %v3953 = vsub.f32 %v3383, %v3952
    %3954 = vmatmul.f32.gmra.mxu0 %v3953
    %v3955 = vpop.f32.mrf.mxu0
    %v3956 = vadd.f32 %v3787, %v3955
    %v3957 = vand.u32 %v3386, 4294901760
    %v3958 = vsub.f32 %v3386, %v3957
    %3959 = vmatmul.f32.gmra.mxu0 %v3958
    %v3960 = vpop.f32.mrf.mxu0
    %v3961 = vadd.f32 %v3791, %v3960
    %v3962 = vand.u32 %v3389, 4294901760
    %v3963 = vsub.f32 %v3389, %v3962
    %3964 = vmatmul.f32.gmra.mxu0 %v3963
    %v3965 = vpop.f32.mrf.mxu0
    %v3966 = vadd.f32 %v3795, %v3965
    %3967 = vdwg.mxu0
    %3968 = vmatpush.msra.mxu0 0.0
    %3969 = vmatpush.msra.mxu0 0.0
    %3970 = vmatpush.msra.mxu0 0.0
    %3971 = vmatpush.msra.mxu0 0.0
    %3972 = vmatpush.msra.mxu0 0.0
    %3973 = vmatpush.msra.mxu0 0.0
    %3974 = vmatpush.msra.mxu0 0.0
    %3975 = vmatpush.msra.mxu0 0.0
    %3976 = vmatpush.msra.mxu0 0.0
    %3977 = vmatpush.msra.mxu0 0.0
    %3978 = vmatpush.msra.mxu0 0.0
    %3979 = vmatpush.msra.mxu0 0.0
    %3980 = vmatpush.msra.mxu0 0.0
    %3981 = vmatpush.msra.mxu0 0.0
    %v3982 = vand.u32 %v3270, 4294901760
    %3983 = vmatpush.msra.mxu0 %v3982
    %v3984 = vand.u32 %v3269, 4294901760
    %3985 = vmatpush.msra.mxu0 %v3984
    %v3986 = vand.u32 %v3302, 4294901760
    %v3987 = vsub.f32 %v3302, %v3986
    %v3988 = vand.u32 %v3987, 4294901760
    %3989 = vmatmul.f32.gmra.mxu0 %v3988
    %v3990 = vpop.f32.mrf.mxu0
    %v3991 = vadd.f32 %v3821, %v3990
    %v3992 = vand.u32 %v3305, 4294901760
    %v3993 = vsub.f32 %v3305, %v3992
    %v3994 = vand.u32 %v3993, 4294901760
    %3995 = vmatmul.f32.gmra.mxu0 %v3994
    %v3996 = vpop.f32.mrf.mxu0
    %v3997 = vadd.f32 %v3826, %v3996
    %v3998 = vand.u32 %v3308, 4294901760
    %v3999 = vsub.f32 %v3308, %v3998
    %v4000 = vand.u32 %v3999, 4294901760
    %4001 = vmatmul.f32.gmra.mxu0 %v4000
    %v4002 = vpop.f32.mrf.mxu0
    %v4003 = vadd.f32 %v3831, %v4002
    %v4004 = vand.u32 %v3311, 4294901760
    %v4005 = vsub.f32 %v3311, %v4004
    %v4006 = vand.u32 %v4005, 4294901760
    %4007 = vmatmul.f32.gmra.mxu0 %v4006
    %v4008 = vpop.f32.mrf.mxu0
    %v4009 = vadd.f32 %v3836, %v4008
    %v4010 = vand.u32 %v3314, 4294901760
    %v4011 = vsub.f32 %v3314, %v4010
    %v4012 = vand.u32 %v4011, 4294901760
    %4013 = vmatmul.f32.gmra.mxu0 %v4012
    %v4014 = vpop.f32.mrf.mxu0
    %v4015 = vadd.f32 %v3841, %v4014
    %v4016 = vand.u32 %v3317, 4294901760
    %v4017 = vsub.f32 %v3317, %v4016
    %v4018 = vand.u32 %v4017, 4294901760
    %4019 = vmatmul.f32.gmra.mxu0 %v4018
    %v4020 = vpop.f32.mrf.mxu0
    %v4021 = vadd.f32 %v3846, %v4020
    %v4022 = vand.u32 %v3320, 4294901760
    %v4023 = vsub.f32 %v3320, %v4022
    %v4024 = vand.u32 %v4023, 4294901760
    %4025 = vmatmul.f32.gmra.mxu0 %v4024
    %v4026 = vpop.f32.mrf.mxu0
    %v4027 = vadd.f32 %v3851, %v4026
    %v4028 = vand.u32 %v3323, 4294901760
    %v4029 = vsub.f32 %v3323, %v4028
    %v4030 = vand.u32 %v4029, 4294901760
    %4031 = vmatmul.f32.gmra.mxu0 %v4030
    %v4032 = vpop.f32.mrf.mxu0
    %v4033 = vadd.f32 %v3856, %v4032
    %v4034 = vand.u32 %v3326, 4294901760
    %v4035 = vsub.f32 %v3326, %v4034
    %v4036 = vand.u32 %v4035, 4294901760
    %4037 = vmatmul.f32.gmra.mxu0 %v4036
    %v4038 = vpop.f32.mrf.mxu0
    %v4039 = vadd.f32 %v3861, %v4038
    %v4040 = vand.u32 %v3329, 4294901760
    %v4041 = vsub.f32 %v3329, %v4040
    %v4042 = vand.u32 %v4041, 4294901760
    %4043 = vmatmul.f32.gmra.mxu0 %v4042
    %v4044 = vpop.f32.mrf.mxu0
    %v4045 = vadd.f32 %v3866, %v4044
    %v4046 = vand.u32 %v3332, 4294901760
    %v4047 = vsub.f32 %v3332, %v4046
    %v4048 = vand.u32 %v4047, 4294901760
    %4049 = vmatmul.f32.gmra.mxu0 %v4048
    %v4050 = vpop.f32.mrf.mxu0
    %v4051 = vadd.f32 %v3871, %v4050
    %v4052 = vand.u32 %v3335, 4294901760
    %v4053 = vsub.f32 %v3335, %v4052
    %v4054 = vand.u32 %v4053, 4294901760
    %4055 = vmatmul.f32.gmra.mxu0 %v4054
    %v4056 = vpop.f32.mrf.mxu0
    %v4057 = vadd.f32 %v3876, %v4056
    %v4058 = vand.u32 %v3338, 4294901760
    %v4059 = vsub.f32 %v3338, %v4058
    %v4060 = vand.u32 %v4059, 4294901760
    %4061 = vmatmul.f32.gmra.mxu0 %v4060
    %v4062 = vpop.f32.mrf.mxu0
    %v4063 = vadd.f32 %v3881, %v4062
    %v4064 = vand.u32 %v3341, 4294901760
    %v4065 = vsub.f32 %v3341, %v4064
    %v4066 = vand.u32 %v4065, 4294901760
    %4067 = vmatmul.f32.gmra.mxu0 %v4066
    %v4068 = vpop.f32.mrf.mxu0
    %v4069 = vadd.f32 %v3886, %v4068
    %v4070 = vand.u32 %v3344, 4294901760
    %v4071 = vsub.f32 %v3344, %v4070
    %v4072 = vand.u32 %v4071, 4294901760
    %4073 = vmatmul.f32.gmra.mxu0 %v4072
    %v4074 = vpop.f32.mrf.mxu0
    %v4075 = vadd.f32 %v3891, %v4074
    %v4076 = vand.u32 %v3347, 4294901760
    %v4077 = vsub.f32 %v3347, %v4076
    %v4078 = vand.u32 %v4077, 4294901760
    %4079 = vmatmul.f32.gmra.mxu0 %v4078
    %v4080 = vpop.f32.mrf.mxu0
    %v4081 = vadd.f32 %v3896, %v4080
    %v4082 = vand.u32 %v3350, 4294901760
    %v4083 = vsub.f32 %v3350, %v4082
    %v4084 = vand.u32 %v4083, 4294901760
    %4085 = vmatmul.f32.gmra.mxu0 %v4084
    %v4086 = vpop.f32.mrf.mxu0
    %v4087 = vadd.f32 %v3901, %v4086
    %v4088 = vand.u32 %v3353, 4294901760
    %v4089 = vsub.f32 %v3353, %v4088
    %v4090 = vand.u32 %v4089, 4294901760
    %4091 = vmatmul.f32.gmra.mxu0 %v4090
    %v4092 = vpop.f32.mrf.mxu0
    %v4093 = vadd.f32 %v3906, %v4092
    %v4094 = vand.u32 %v3356, 4294901760
    %v4095 = vsub.f32 %v3356, %v4094
    %v4096 = vand.u32 %v4095, 4294901760
    %4097 = vmatmul.f32.gmra.mxu0 %v4096
    %v4098 = vpop.f32.mrf.mxu0
    %v4099 = vadd.f32 %v3911, %v4098
    %v4100 = vand.u32 %v3359, 4294901760
    %v4101 = vsub.f32 %v3359, %v4100
    %v4102 = vand.u32 %v4101, 4294901760
    %4103 = vmatmul.f32.gmra.mxu0 %v4102
    %v4104 = vpop.f32.mrf.mxu0
    %v4105 = vadd.f32 %v3916, %v4104
    %v4106 = vand.u32 %v3362, 4294901760
    %v4107 = vsub.f32 %v3362, %v4106
    %v4108 = vand.u32 %v4107, 4294901760
    %4109 = vmatmul.f32.gmra.mxu0 %v4108
    %v4110 = vpop.f32.mrf.mxu0
    %v4111 = vadd.f32 %v3921, %v4110
    %v4112 = vand.u32 %v3365, 4294901760
    %v4113 = vsub.f32 %v3365, %v4112
    %v4114 = vand.u32 %v4113, 4294901760
    %4115 = vmatmul.f32.gmra.mxu0 %v4114
    %v4116 = vpop.f32.mrf.mxu0
    %v4117 = vadd.f32 %v3926, %v4116
    %v4118 = vand.u32 %v3368, 4294901760
    %v4119 = vsub.f32 %v3368, %v4118
    %v4120 = vand.u32 %v4119, 4294901760
    %4121 = vmatmul.f32.gmra.mxu0 %v4120
    %v4122 = vpop.f32.mrf.mxu0
    %v4123 = vadd.f32 %v3931, %v4122
    %v4124 = vand.u32 %v3371, 4294901760
    %v4125 = vsub.f32 %v3371, %v4124
    %v4126 = vand.u32 %v4125, 4294901760
    %4127 = vmatmul.f32.gmra.mxu0 %v4126
    %v4128 = vpop.f32.mrf.mxu0
    %v4129 = vadd.f32 %v3936, %v4128
    %v4130 = vand.u32 %v3374, 4294901760
    %v4131 = vsub.f32 %v3374, %v4130
    %v4132 = vand.u32 %v4131, 4294901760
    %4133 = vmatmul.f32.gmra.mxu0 %v4132
    %v4134 = vpop.f32.mrf.mxu0
    %v4135 = vadd.f32 %v3941, %v4134
    %v4136 = vand.u32 %v3377, 4294901760
    %v4137 = vsub.f32 %v3377, %v4136
    %v4138 = vand.u32 %v4137, 4294901760
    %4139 = vmatmul.f32.gmra.mxu0 %v4138
    %v4140 = vpop.f32.mrf.mxu0
    %v4141 = vadd.f32 %v3946, %v4140
    %v4142 = vand.u32 %v3380, 4294901760
    %v4143 = vsub.f32 %v3380, %v4142
    %v4144 = vand.u32 %v4143, 4294901760
    %4145 = vmatmul.f32.gmra.mxu0 %v4144
    %v4146 = vpop.f32.mrf.mxu0
    %v4147 = vadd.f32 %v3951, %v4146
    %v4148 = vand.u32 %v3383, 4294901760
    %v4149 = vsub.f32 %v3383, %v4148
    %v4150 = vand.u32 %v4149, 4294901760
    %4151 = vmatmul.f32.gmra.mxu0 %v4150
    %v4152 = vpop.f32.mrf.mxu0
    %v4153 = vadd.f32 %v3956, %v4152
    %v4154 = vand.u32 %v3386, 4294901760
    %v4155 = vsub.f32 %v3386, %v4154
    %v4156 = vand.u32 %v4155, 4294901760
    %4157 = vmatmul.f32.gmra.mxu0 %v4156
    %v4158 = vpop.f32.mrf.mxu0
    %v4159 = vadd.f32 %v3961, %v4158
    %v4160 = vand.u32 %v3389, 4294901760
    %v4161 = vsub.f32 %v3389, %v4160
    %v4162 = vand.u32 %v4161, 4294901760
    %4163 = vmatmul.f32.gmra.mxu0 %v4162
    %v4164 = vpop.f32.mrf.mxu0
    %v4165 = vadd.f32 %v3966, %v4164
    %4166 = vdwg.mxu0
    %4167 = vmatpush.msra.mxu0 0.0
    %4168 = vmatpush.msra.mxu0 0.0
    %4169 = vmatpush.msra.mxu0 0.0
    %4170 = vmatpush.msra.mxu0 0.0
    %4171 = vmatpush.msra.mxu0 0.0
    %4172 = vmatpush.msra.mxu0 0.0
    %4173 = vmatpush.msra.mxu0 0.0
    %4174 = vmatpush.msra.mxu0 0.0
    %4175 = vmatpush.msra.mxu0 0.0
    %4176 = vmatpush.msra.mxu0 0.0
    %4177 = vmatpush.msra.mxu0 0.0
    %4178 = vmatpush.msra.mxu0 0.0
    %4179 = vmatpush.msra.mxu0 0.0
    %4180 = vmatpush.msra.mxu0 0.0
    %v4181 = vand.u32 %v3270, 4294901760
    %v4182 = vsub.f32 %v3270, %v4181
    %v4183 = vand.u32 %v4182, 4294901760
    %4184 = vmatpush.msra.mxu0 %v4183
    %v4185 = vand.u32 %v3269, 4294901760
    %v4186 = vsub.f32 %v3269, %v4185
    %v4187 = vand.u32 %v4186, 4294901760
    %4188 = vmatpush.msra.mxu0 %v4187
    %v4189 = vand.u32 %v3302, 4294901760
    %4190 = vmatmul.f32.gmra.mxu0 %v4189
    %v4191 = vpop.f32.mrf.mxu0
    %v4192 = vadd.f32 %v3991, %v4191
    %v4193 = vand.u32 %v3305, 4294901760
    %4194 = vmatmul.f32.gmra.mxu0 %v4193
    %v4195 = vpop.f32.mrf.mxu0
    %v4196 = vadd.f32 %v3997, %v4195
    %v4197 = vand.u32 %v3308, 4294901760
    %4198 = vmatmul.f32.gmra.mxu0 %v4197
    %v4199 = vpop.f32.mrf.mxu0
    %v4200 = vadd.f32 %v4003, %v4199
    %v4201 = vand.u32 %v3311, 4294901760
    %4202 = vmatmul.f32.gmra.mxu0 %v4201
    %v4203 = vpop.f32.mrf.mxu0
    %v4204 = vadd.f32 %v4009, %v4203
    %v4205 = vand.u32 %v3314, 4294901760
    %4206 = vmatmul.f32.gmra.mxu0 %v4205
    %v4207 = vpop.f32.mrf.mxu0
    %v4208 = vadd.f32 %v4015, %v4207
    %v4209 = vand.u32 %v3317, 4294901760
    %4210 = vmatmul.f32.gmra.mxu0 %v4209
    %v4211 = vpop.f32.mrf.mxu0
    %v4212 = vadd.f32 %v4021, %v4211
    %v4213 = vand.u32 %v3320, 4294901760
    %4214 = vmatmul.f32.gmra.mxu0 %v4213
    %v4215 = vpop.f32.mrf.mxu0
    %v4216 = vadd.f32 %v4027, %v4215
    %v4217 = vand.u32 %v3323, 4294901760
    %4218 = vmatmul.f32.gmra.mxu0 %v4217
    %v4219 = vpop.f32.mrf.mxu0
    %v4220 = vadd.f32 %v4033, %v4219
    %v4221 = vand.u32 %v3326, 4294901760
    %4222 = vmatmul.f32.gmra.mxu0 %v4221
    %v4223 = vpop.f32.mrf.mxu0
    %v4224 = vadd.f32 %v4039, %v4223
    %v4225 = vand.u32 %v3329, 4294901760
    %4226 = vmatmul.f32.gmra.mxu0 %v4225
    %v4227 = vpop.f32.mrf.mxu0
    %v4228 = vadd.f32 %v4045, %v4227
    %v4229 = vand.u32 %v3332, 4294901760
    %4230 = vmatmul.f32.gmra.mxu0 %v4229
    %v4231 = vpop.f32.mrf.mxu0
    %v4232 = vadd.f32 %v4051, %v4231
    %v4233 = vand.u32 %v3335, 4294901760
    %4234 = vmatmul.f32.gmra.mxu0 %v4233
    %v4235 = vpop.f32.mrf.mxu0
    %v4236 = vadd.f32 %v4057, %v4235
    %v4237 = vand.u32 %v3338, 4294901760
    %4238 = vmatmul.f32.gmra.mxu0 %v4237
    %v4239 = vpop.f32.mrf.mxu0
    %v4240 = vadd.f32 %v4063, %v4239
    %v4241 = vand.u32 %v3341, 4294901760
    %4242 = vmatmul.f32.gmra.mxu0 %v4241
    %v4243 = vpop.f32.mrf.mxu0
    %v4244 = vadd.f32 %v4069, %v4243
    %v4245 = vand.u32 %v3344, 4294901760
    %4246 = vmatmul.f32.gmra.mxu0 %v4245
    %v4247 = vpop.f32.mrf.mxu0
    %v4248 = vadd.f32 %v4075, %v4247
    %v4249 = vand.u32 %v3347, 4294901760
    %4250 = vmatmul.f32.gmra.mxu0 %v4249
    %v4251 = vpop.f32.mrf.mxu0
    %v4252 = vadd.f32 %v4081, %v4251
    %v4253 = vand.u32 %v3350, 4294901760
    %4254 = vmatmul.f32.gmra.mxu0 %v4253
    %v4255 = vpop.f32.mrf.mxu0
    %v4256 = vadd.f32 %v4087, %v4255
    %v4257 = vand.u32 %v3353, 4294901760
    %4258 = vmatmul.f32.gmra.mxu0 %v4257
    %v4259 = vpop.f32.mrf.mxu0
    %v4260 = vadd.f32 %v4093, %v4259
    %v4261 = vand.u32 %v3356, 4294901760
    %4262 = vmatmul.f32.gmra.mxu0 %v4261
    %v4263 = vpop.f32.mrf.mxu0
    %v4264 = vadd.f32 %v4099, %v4263
    %v4265 = vand.u32 %v3359, 4294901760
    %4266 = vmatmul.f32.gmra.mxu0 %v4265
    %v4267 = vpop.f32.mrf.mxu0
    %v4268 = vadd.f32 %v4105, %v4267
    %v4269 = vand.u32 %v3362, 4294901760
    %4270 = vmatmul.f32.gmra.mxu0 %v4269
    %v4271 = vpop.f32.mrf.mxu0
    %v4272 = vadd.f32 %v4111, %v4271
    %v4273 = vand.u32 %v3365, 4294901760
    %4274 = vmatmul.f32.gmra.mxu0 %v4273
    %v4275 = vpop.f32.mrf.mxu0
    %v4276 = vadd.f32 %v4117, %v4275
    %v4277 = vand.u32 %v3368, 4294901760
    %4278 = vmatmul.f32.gmra.mxu0 %v4277
    %v4279 = vpop.f32.mrf.mxu0
    %v4280 = vadd.f32 %v4123, %v4279
    %v4281 = vand.u32 %v3371, 4294901760
    %4282 = vmatmul.f32.gmra.mxu0 %v4281
    %v4283 = vpop.f32.mrf.mxu0
    %v4284 = vadd.f32 %v4129, %v4283
    %v4285 = vand.u32 %v3374, 4294901760
    %4286 = vmatmul.f32.gmra.mxu0 %v4285
    %v4287 = vpop.f32.mrf.mxu0
    %v4288 = vadd.f32 %v4135, %v4287
    %v4289 = vand.u32 %v3377, 4294901760
    %4290 = vmatmul.f32.gmra.mxu0 %v4289
    %v4291 = vpop.f32.mrf.mxu0
    %v4292 = vadd.f32 %v4141, %v4291
    %v4293 = vand.u32 %v3380, 4294901760
    %4294 = vmatmul.f32.gmra.mxu0 %v4293
    %v4295 = vpop.f32.mrf.mxu0
    %v4296 = vadd.f32 %v4147, %v4295
    %v4297 = vand.u32 %v3383, 4294901760
    %4298 = vmatmul.f32.gmra.mxu0 %v4297
    %v4299 = vpop.f32.mrf.mxu0
    %v4300 = vadd.f32 %v4153, %v4299
    %v4301 = vand.u32 %v3386, 4294901760
    %4302 = vmatmul.f32.gmra.mxu0 %v4301
    %v4303 = vpop.f32.mrf.mxu0
    %v4304 = vadd.f32 %v4159, %v4303
    %v4305 = vand.u32 %v3389, 4294901760
    %4306 = vmatmul.f32.gmra.mxu0 %v4305
    %v4307 = vpop.f32.mrf.mxu0
    %v4308 = vadd.f32 %v4165, %v4307
    %4309 = vdwg.mxu0
    %4310 = vmatpush.msra.mxu0 0.0
    %4311 = vmatpush.msra.mxu0 0.0
    %4312 = vmatpush.msra.mxu0 0.0
    %4313 = vmatpush.msra.mxu0 0.0
    %4314 = vmatpush.msra.mxu0 0.0
    %4315 = vmatpush.msra.mxu0 0.0
    %4316 = vmatpush.msra.mxu0 0.0
    %4317 = vmatpush.msra.mxu0 0.0
    %4318 = vmatpush.msra.mxu0 0.0
    %4319 = vmatpush.msra.mxu0 0.0
    %4320 = vmatpush.msra.mxu0 0.0
    %4321 = vmatpush.msra.mxu0 0.0
    %4322 = vmatpush.msra.mxu0 0.0
    %4323 = vmatpush.msra.mxu0 0.0
    %v4324 = vand.u32 %v3270, 4294901760
    %4325 = vmatpush.msra.mxu0 %v4324
    %v4326 = vand.u32 %v3269, 4294901760
    %4327 = vmatpush.msra.mxu0 %v4326
    %v4328 = vand.u32 %v3302, 4294901760
    %4329 = vmatmul.f32.gmra.mxu0 %v4328
    %v4330 = vpop.f32.mrf.mxu0
    %v4331 = vadd.f32 %v4192, %v4330
    %v4332 = vand.u32 %v3305, 4294901760
    %4333 = vmatmul.f32.gmra.mxu0 %v4332
    %v4334 = vpop.f32.mrf.mxu0
    %v4335 = vadd.f32 %v4196, %v4334
    %v4336 = vand.u32 %v3308, 4294901760
    %4337 = vmatmul.f32.gmra.mxu0 %v4336
    %v4338 = vpop.f32.mrf.mxu0
    %v4339 = vadd.f32 %v4200, %v4338
    %v4340 = vand.u32 %v3311, 4294901760
    %4341 = vmatmul.f32.gmra.mxu0 %v4340
    %v4342 = vpop.f32.mrf.mxu0
    %v4343 = vadd.f32 %v4204, %v4342
    %v4344 = vand.u32 %v3314, 4294901760
    %4345 = vmatmul.f32.gmra.mxu0 %v4344
    %v4346 = vpop.f32.mrf.mxu0
    %v4347 = vadd.f32 %v4208, %v4346
    %v4348 = vand.u32 %v3317, 4294901760
    %4349 = vmatmul.f32.gmra.mxu0 %v4348
    %v4350 = vpop.f32.mrf.mxu0
    %v4351 = vadd.f32 %v4212, %v4350
    %v4352 = vand.u32 %v3320, 4294901760
    %4353 = vmatmul.f32.gmra.mxu0 %v4352
    %v4354 = vpop.f32.mrf.mxu0
    %v4355 = vadd.f32 %v4216, %v4354
    %v4356 = vand.u32 %v3323, 4294901760
    %4357 = vmatmul.f32.gmra.mxu0 %v4356
    %v4358 = vpop.f32.mrf.mxu0
    %v4359 = vadd.f32 %v4220, %v4358
    %v4360 = vand.u32 %v3326, 4294901760
    %4361 = vmatmul.f32.gmra.mxu0 %v4360
    %v4362 = vpop.f32.mrf.mxu0
    %v4363 = vadd.f32 %v4224, %v4362
    %v4364 = vand.u32 %v3329, 4294901760
    %4365 = vmatmul.f32.gmra.mxu0 %v4364
    %v4366 = vpop.f32.mrf.mxu0
    %v4367 = vadd.f32 %v4228, %v4366
    %v4368 = vand.u32 %v3332, 4294901760
    %4369 = vmatmul.f32.gmra.mxu0 %v4368
    %v4370 = vpop.f32.mrf.mxu0
    %v4371 = vadd.f32 %v4232, %v4370
    %v4372 = vand.u32 %v3335, 4294901760
    %4373 = vmatmul.f32.gmra.mxu0 %v4372
    %v4374 = vpop.f32.mrf.mxu0
    %v4375 = vadd.f32 %v4236, %v4374
    %v4376 = vand.u32 %v3338, 4294901760
    %4377 = vmatmul.f32.gmra.mxu0 %v4376
    %v4378 = vpop.f32.mrf.mxu0
    %v4379 = vadd.f32 %v4240, %v4378
    %v4380 = vand.u32 %v3341, 4294901760
    %4381 = vmatmul.f32.gmra.mxu0 %v4380
    %v4382 = vpop.f32.mrf.mxu0
    %v4383 = vadd.f32 %v4244, %v4382
    %v4384 = vand.u32 %v3344, 4294901760
    %4385 = vmatmul.f32.gmra.mxu0 %v4384
    %v4386 = vpop.f32.mrf.mxu0
    %v4387 = vadd.f32 %v4248, %v4386
    %v4388 = vand.u32 %v3347, 4294901760
    %4389 = vmatmul.f32.gmra.mxu0 %v4388
    %v4390 = vpop.f32.mrf.mxu0
    %v4391 = vadd.f32 %v4252, %v4390
    %v4392 = vand.u32 %v3350, 4294901760
    %4393 = vmatmul.f32.gmra.mxu0 %v4392
    %v4394 = vpop.f32.mrf.mxu0
    %v4395 = vadd.f32 %v4256, %v4394
    %v4396 = vand.u32 %v3353, 4294901760
    %4397 = vmatmul.f32.gmra.mxu0 %v4396
    %v4398 = vpop.f32.mrf.mxu0
    %v4399 = vadd.f32 %v4260, %v4398
    %v4400 = vand.u32 %v3356, 4294901760
    %4401 = vmatmul.f32.gmra.mxu0 %v4400
    %v4402 = vpop.f32.mrf.mxu0
    %v4403 = vadd.f32 %v4264, %v4402
    %v4404 = vand.u32 %v3359, 4294901760
    %4405 = vmatmul.f32.gmra.mxu0 %v4404
    %v4406 = vpop.f32.mrf.mxu0
    %v4407 = vadd.f32 %v4268, %v4406
    %v4408 = vand.u32 %v3362, 4294901760
    %4409 = vmatmul.f32.gmra.mxu0 %v4408
    %v4410 = vpop.f32.mrf.mxu0
    %v4411 = vadd.f32 %v4272, %v4410
    %v4412 = vand.u32 %v3365, 4294901760
    %4413 = vmatmul.f32.gmra.mxu0 %v4412
    %v4414 = vpop.f32.mrf.mxu0
    %v4415 = vadd.f32 %v4276, %v4414
    %v4416 = vand.u32 %v3368, 4294901760
    %4417 = vmatmul.f32.gmra.mxu0 %v4416
    %v4418 = vpop.f32.mrf.mxu0
    %v4419 = vadd.f32 %v4280, %v4418
    %v4420 = vand.u32 %v3371, 4294901760
    %4421 = vmatmul.f32.gmra.mxu0 %v4420
    %v4422 = vpop.f32.mrf.mxu0
    %v4423 = vadd.f32 %v4284, %v4422
    %v4424 = vand.u32 %v3374, 4294901760
    %4425 = vmatmul.f32.gmra.mxu0 %v4424
    %v4426 = vpop.f32.mrf.mxu0
    %v4427 = vadd.f32 %v4288, %v4426
    %v4428 = vand.u32 %v3377, 4294901760
    %4429 = vmatmul.f32.gmra.mxu0 %v4428
    %v4430 = vpop.f32.mrf.mxu0
    %v4431 = vadd.f32 %v4292, %v4430
    %v4432 = vand.u32 %v3380, 4294901760
    %4433 = vmatmul.f32.gmra.mxu0 %v4432
    %v4434 = vpop.f32.mrf.mxu0
    %v4435 = vadd.f32 %v4296, %v4434
    %v4436 = vand.u32 %v3383, 4294901760
    %4437 = vmatmul.f32.gmra.mxu0 %v4436
    %v4438 = vpop.f32.mrf.mxu0
    %v4439 = vadd.f32 %v4300, %v4438
    %v4440 = vand.u32 %v3386, 4294901760
    %4441 = vmatmul.f32.gmra.mxu0 %v4440
    %v4442 = vpop.f32.mrf.mxu0
    %v4443 = vadd.f32 %v4304, %v4442
    %v4444 = vand.u32 %v3389, 4294901760
    %4445 = vmatmul.f32.gmra.mxu0 %v4444
    %v4446 = vpop.f32.mrf.mxu0
    %v4447 = vadd.f32 %v4308, %v4446
    %4448 = vdwg.mxu0
    %v4449 = vld [vmem:[%s7] sm:$0xff]
    %v4450 = vld [vmem:[%s7 + $0x8] sm:$0xff]
    %v4451 = vld [vmem:[%s7 + $0x10] sm:$0xff]
    %v4452 = vld [vmem:[%s7 + $0x18] sm:$0xff]
    %v4453 = vld [vmem:[%s5] sm:$0xff]
    %v4454 = vld [vmem:[%s5 + $0x8] sm:$0xff]
    %v4455 = vld [vmem:[%s5 + $0x10] sm:$0xff]
    %v4456 = vld [vmem:[%s5 + $0x18] sm:$0xff]
    %v4457 = vld [vmem:[%s5 + $0x20] sm:$0xff]
    %v4458 = vld [vmem:[%s5 + $0x28] sm:$0xff]
    %v4459 = vld [vmem:[%s5 + $0x30] sm:$0xff]
    %v4460 = vld [vmem:[%s5 + $0x38] sm:$0xff]
    %v4461 = vld [vmem:[%s5 + $0x40] sm:$0xff]
    %v4462 = vld [vmem:[%s5 + $0x48] sm:$0xff]
    %v4463 = vld [vmem:[%s5 + $0x50] sm:$0xff]
    %v4464 = vld [vmem:[%s5 + $0x58] sm:$0xff]
    %v4465 = vld [vmem:[%s5 + $0x60] sm:$0xff]
    %v4466 = vld [vmem:[%s5 + $0x68] sm:$0xff]
    %v4467 = vld [vmem:[%s5 + $0x70] sm:$0xff]
    %v4468 = vld [vmem:[%s5 + $0x78] sm:$0xff]
    %v4469 = vld [vmem:[%s5 + $0x80] sm:$0xff]
    %v4470 = vld [vmem:[%s5 + $0x88] sm:$0xff]
    %v4471 = vld [vmem:[%s5 + $0x90] sm:$0xff]
    %v4472 = vld [vmem:[%s5 + $0x98] sm:$0xff]
    %v4473 = vld [vmem:[%s5 + $0xa0] sm:$0xff]
    %v4474 = vld [vmem:[%s5 + $0xa8] sm:$0xff]
    %v4475 = vld [vmem:[%s5 + $0xb0] sm:$0xff]
    %v4476 = vld [vmem:[%s5 + $0xb8] sm:$0xff]
    %v4477 = vld [vmem:[%s5 + $0xc0] sm:$0xff]
    %v4478 = vld [vmem:[%s5 + $0xc8] sm:$0xff]
    %v4479 = vld [vmem:[%s5 + $0xd0] sm:$0xff]
    %v4480 = vld [vmem:[%s5 + $0xd8] sm:$0xff]
    %v4481 = vld [vmem:[%s5 + $0xe0] sm:$0xff]
    %v4482 = vld [vmem:[%s5 + $0xe8] sm:$0xff]
    %v4483 = vmul.f32 %v4331, %v4453
    %v4484 = vmul.f32 %v4335, %v4454
    %v4485 = vmul.f32 %v4339, %v4455
    %v4486 = vmul.f32 %v4343, %v4456
    %v4487 = vmul.f32 %v4347, %v4457
    %v4488 = vmul.f32 %v4351, %v4458
    %v4489 = vmul.f32 %v4355, %v4459
    %v4490 = vmul.f32 %v4359, %v4460
    %v4491 = vmul.f32 %v4363, %v4461
    %v4492 = vmul.f32 %v4367, %v4462
    %v4493 = vmul.f32 %v4371, %v4463
    %v4494 = vmul.f32 %v4375, %v4464
    %v4495 = vmul.f32 %v4379, %v4465
    %v4496 = vmul.f32 %v4383, %v4466
    %v4497 = vmul.f32 %v4387, %v4467
    %v4498 = vmul.f32 %v4391, %v4468
    %v4499 = vmul.f32 %v4395, %v4469
    %v4500 = vmul.f32 %v4399, %v4470
    %v4501 = vmul.f32 %v4403, %v4471
    %v4502 = vmul.f32 %v4407, %v4472
    %v4503 = vmul.f32 %v4411, %v4473
    %v4504 = vmul.f32 %v4415, %v4474
    %v4505 = vmul.f32 %v4419, %v4475
    %v4506 = vmul.f32 %v4423, %v4476
    %v4507 = vmul.f32 %v4427, %v4477
    %v4508 = vmul.f32 %v4431, %v4478
    %v4509 = vmul.f32 %v4435, %v4479
    %v4510 = vmul.f32 %v4439, %v4480
    %v4511 = vmul.f32 %v4443, %v4481
    %v4512 = vmul.f32 %v4447, %v4482
    %v4513 = vld [vmem:[%s5 + $0xf0] sm:$0x1]
    %v4514 = vperm.slane %v4513, 0
    %vm4515 = vcmask 916480
    %v4517 = vsel %vm4515, %v4450, 0
    %v4520 = vsel %vm4515, %v4452, 0
    %v4522 = vand.u32 %v4498, 4294901760
    %4523 = vmatpush.msra.mxu0 %v4522
    %v4524 = vand.u32 %v4497, 4294901760
    %4525 = vmatpush.msra.mxu0 %v4524
    %v4526 = vand.u32 %v4496, 4294901760
    %4527 = vmatpush.msra.mxu0 %v4526
    %v4528 = vand.u32 %v4495, 4294901760
    %4529 = vmatpush.msra.mxu0 %v4528
    %v4530 = vand.u32 %v4494, 4294901760
    %4531 = vmatpush.msra.mxu0 %v4530
    %v4532 = vand.u32 %v4493, 4294901760
    %4533 = vmatpush.msra.mxu0 %v4532
    %v4534 = vand.u32 %v4492, 4294901760
    %4535 = vmatpush.msra.mxu0 %v4534
    %v4536 = vand.u32 %v4491, 4294901760
    %4537 = vmatpush.msra.mxu0 %v4536
    %v4538 = vand.u32 %v4490, 4294901760
    %4539 = vmatpush.msra.mxu0 %v4538
    %v4540 = vand.u32 %v4489, 4294901760
    %4541 = vmatpush.msra.mxu0 %v4540
    %v4542 = vand.u32 %v4488, 4294901760
    %4543 = vmatpush.msra.mxu0 %v4542
    %v4544 = vand.u32 %v4487, 4294901760
    %4545 = vmatpush.msra.mxu0 %v4544
    %v4546 = vand.u32 %v4486, 4294901760
    %4547 = vmatpush.msra.mxu0 %v4546
    %v4548 = vand.u32 %v4485, 4294901760
    %4549 = vmatpush.msra.mxu0 %v4548
    %v4550 = vand.u32 %v4484, 4294901760
    %4551 = vmatpush.msra.mxu0 %v4550
    %v4552 = vand.u32 %v4483, 4294901760
    %4553 = vmatpush.msra.mxu0 %v4552
    %v4554 = vand.u32 %v4449, 4294901760
    %v4555 = vsub.f32 %v4449, %v4554
    %v4556 = vand.u32 %v4555, 4294901760
    %v4557 = vsub.f32 %v4555, %v4556
    %v4558 = vand.u32 %v4557, 4294901760
    %4559 = vmatmul.f32.gmra.mxu0 %v4558
    %v4560 = vpop.f32.mrf.mxu0
    %v4561 = vadd.f32 %v4514, %v4560
    %v4562 = vand.u32 %v4451, 4294901760
    %v4563 = vsub.f32 %v4451, %v4562
    %v4564 = vand.u32 %v4563, 4294901760
    %v4565 = vsub.f32 %v4563, %v4564
    %v4566 = vand.u32 %v4565, 4294901760
    %4567 = vmatmul.f32.gmra.mxu0 %v4566
    %v4568 = vpop.f32.mrf.mxu0
    %v4569 = vadd.f32 %v4514, %v4568
    %4570 = vdwg.mxu0
    %v4571 = vand.u32 %v4498, 4294901760
    %v4572 = vsub.f32 %v4498, %v4571
    %v4573 = vand.u32 %v4572, 4294901760
    %v4574 = vsub.f32 %v4572, %v4573
    %v4575 = vand.u32 %v4574, 4294901760
    %4576 = vmatpush.msra.mxu0 %v4575
    %v4577 = vand.u32 %v4497, 4294901760
    %v4578 = vsub.f32 %v4497, %v4577
    %v4579 = vand.u32 %v4578, 4294901760
    %v4580 = vsub.f32 %v4578, %v4579
    %v4581 = vand.u32 %v4580, 4294901760
    %4582 = vmatpush.msra.mxu0 %v4581
    %v4583 = vand.u32 %v4496, 4294901760
    %v4584 = vsub.f32 %v4496, %v4583
    %v4585 = vand.u32 %v4584, 4294901760
    %v4586 = vsub.f32 %v4584, %v4585
    %v4587 = vand.u32 %v4586, 4294901760
    %4588 = vmatpush.msra.mxu0 %v4587
    %v4589 = vand.u32 %v4495, 4294901760
    %v4590 = vsub.f32 %v4495, %v4589
    %v4591 = vand.u32 %v4590, 4294901760
    %v4592 = vsub.f32 %v4590, %v4591
    %v4593 = vand.u32 %v4592, 4294901760
    %4594 = vmatpush.msra.mxu0 %v4593
    %v4595 = vand.u32 %v4494, 4294901760
    %v4596 = vsub.f32 %v4494, %v4595
    %v4597 = vand.u32 %v4596, 4294901760
    %v4598 = vsub.f32 %v4596, %v4597
    %v4599 = vand.u32 %v4598, 4294901760
    %4600 = vmatpush.msra.mxu0 %v4599
    %v4601 = vand.u32 %v4493, 4294901760
    %v4602 = vsub.f32 %v4493, %v4601
    %v4603 = vand.u32 %v4602, 4294901760
    %v4604 = vsub.f32 %v4602, %v4603
    %v4605 = vand.u32 %v4604, 4294901760
    %4606 = vmatpush.msra.mxu0 %v4605
    %v4607 = vand.u32 %v4492, 4294901760
    %v4608 = vsub.f32 %v4492, %v4607
    %v4609 = vand.u32 %v4608, 4294901760
    %v4610 = vsub.f32 %v4608, %v4609
    %v4611 = vand.u32 %v4610, 4294901760
    %4612 = vmatpush.msra.mxu0 %v4611
    %v4613 = vand.u32 %v4491, 4294901760
    %v4614 = vsub.f32 %v4491, %v4613
    %v4615 = vand.u32 %v4614, 4294901760
    %v4616 = vsub.f32 %v4614, %v4615
    %v4617 = vand.u32 %v4616, 4294901760
    %4618 = vmatpush.msra.mxu0 %v4617
    %v4619 = vand.u32 %v4490, 4294901760
    %v4620 = vsub.f32 %v4490, %v4619
    %v4621 = vand.u32 %v4620, 4294901760
    %v4622 = vsub.f32 %v4620, %v4621
    %v4623 = vand.u32 %v4622, 4294901760
    %4624 = vmatpush.msra.mxu0 %v4623
    %v4625 = vand.u32 %v4489, 4294901760
    %v4626 = vsub.f32 %v4489, %v4625
    %v4627 = vand.u32 %v4626, 4294901760
    %v4628 = vsub.f32 %v4626, %v4627
    %v4629 = vand.u32 %v4628, 4294901760
    %4630 = vmatpush.msra.mxu0 %v4629
    %v4631 = vand.u32 %v4488, 4294901760
    %v4632 = vsub.f32 %v4488, %v4631
    %v4633 = vand.u32 %v4632, 4294901760
    %v4634 = vsub.f32 %v4632, %v4633
    %v4635 = vand.u32 %v4634, 4294901760
    %4636 = vmatpush.msra.mxu0 %v4635
    %v4637 = vand.u32 %v4487, 4294901760
    %v4638 = vsub.f32 %v4487, %v4637
    %v4639 = vand.u32 %v4638, 4294901760
    %v4640 = vsub.f32 %v4638, %v4639
    %v4641 = vand.u32 %v4640, 4294901760
    %4642 = vmatpush.msra.mxu0 %v4641
    %v4643 = vand.u32 %v4486, 4294901760
    %v4644 = vsub.f32 %v4486, %v4643
    %v4645 = vand.u32 %v4644, 4294901760
    %v4646 = vsub.f32 %v4644, %v4645
    %v4647 = vand.u32 %v4646, 4294901760
    %4648 = vmatpush.msra.mxu0 %v4647
    %v4649 = vand.u32 %v4485, 4294901760
    %v4650 = vsub.f32 %v4485, %v4649
    %v4651 = vand.u32 %v4650, 4294901760
    %v4652 = vsub.f32 %v4650, %v4651
    %v4653 = vand.u32 %v4652, 4294901760
    %4654 = vmatpush.msra.mxu0 %v4653
    %v4655 = vand.u32 %v4484, 4294901760
    %v4656 = vsub.f32 %v4484, %v4655
    %v4657 = vand.u32 %v4656, 4294901760
    %v4658 = vsub.f32 %v4656, %v4657
    %v4659 = vand.u32 %v4658, 4294901760
    %4660 = vmatpush.msra.mxu0 %v4659
    %v4661 = vand.u32 %v4483, 4294901760
    %v4662 = vsub.f32 %v4483, %v4661
    %v4663 = vand.u32 %v4662, 4294901760
    %v4664 = vsub.f32 %v4662, %v4663
    %v4665 = vand.u32 %v4664, 4294901760
    %4666 = vmatpush.msra.mxu0 %v4665
    %v4667 = vand.u32 %v4449, 4294901760
    %4668 = vmatmul.f32.gmra.mxu0 %v4667
    %v4669 = vpop.f32.mrf.mxu0
    %v4670 = vadd.f32 %v4561, %v4669
    %v4671 = vand.u32 %v4451, 4294901760
    %4672 = vmatmul.f32.gmra.mxu0 %v4671
    %v4673 = vpop.f32.mrf.mxu0
    %v4674 = vadd.f32 %v4569, %v4673
    %4675 = vdwg.mxu0
    %v4676 = vand.u32 %v4498, 4294901760
    %v4677 = vsub.f32 %v4498, %v4676
    %4678 = vmatpush.msra.mxu0 %v4677
    %v4679 = vand.u32 %v4497, 4294901760
    %v4680 = vsub.f32 %v4497, %v4679
    %4681 = vmatpush.msra.mxu0 %v4680
    %v4682 = vand.u32 %v4496, 4294901760
    %v4683 = vsub.f32 %v4496, %v4682
    %4684 = vmatpush.msra.mxu0 %v4683
    %v4685 = vand.u32 %v4495, 4294901760
    %v4686 = vsub.f32 %v4495, %v4685
    %4687 = vmatpush.msra.mxu0 %v4686
    %v4688 = vand.u32 %v4494, 4294901760
    %v4689 = vsub.f32 %v4494, %v4688
    %4690 = vmatpush.msra.mxu0 %v4689
    %v4691 = vand.u32 %v4493, 4294901760
    %v4692 = vsub.f32 %v4493, %v4691
    %4693 = vmatpush.msra.mxu0 %v4692
    %v4694 = vand.u32 %v4492, 4294901760
    %v4695 = vsub.f32 %v4492, %v4694
    %4696 = vmatpush.msra.mxu0 %v4695
    %v4697 = vand.u32 %v4491, 4294901760
    %v4698 = vsub.f32 %v4491, %v4697
    %4699 = vmatpush.msra.mxu0 %v4698
    %v4700 = vand.u32 %v4490, 4294901760
    %v4701 = vsub.f32 %v4490, %v4700
    %4702 = vmatpush.msra.mxu0 %v4701
    %v4703 = vand.u32 %v4489, 4294901760
    %v4704 = vsub.f32 %v4489, %v4703
    %4705 = vmatpush.msra.mxu0 %v4704
    %v4706 = vand.u32 %v4488, 4294901760
    %v4707 = vsub.f32 %v4488, %v4706
    %4708 = vmatpush.msra.mxu0 %v4707
    %v4709 = vand.u32 %v4487, 4294901760
    %v4710 = vsub.f32 %v4487, %v4709
    %4711 = vmatpush.msra.mxu0 %v4710
    %v4712 = vand.u32 %v4486, 4294901760
    %v4713 = vsub.f32 %v4486, %v4712
    %4714 = vmatpush.msra.mxu0 %v4713
    %v4715 = vand.u32 %v4485, 4294901760
    %v4716 = vsub.f32 %v4485, %v4715
    %4717 = vmatpush.msra.mxu0 %v4716
    %v4718 = vand.u32 %v4484, 4294901760
    %v4719 = vsub.f32 %v4484, %v4718
    %4720 = vmatpush.msra.mxu0 %v4719
    %v4721 = vand.u32 %v4483, 4294901760
    %v4722 = vsub.f32 %v4483, %v4721
    %4723 = vmatpush.msra.mxu0 %v4722
    %v4724 = vand.u32 %v4449, 4294901760
    %v4725 = vsub.f32 %v4449, %v4724
    %4726 = vmatmul.f32.gmra.mxu0 %v4725
    %v4727 = vpop.f32.mrf.mxu0
    %v4728 = vadd.f32 %v4670, %v4727
    %v4729 = vand.u32 %v4451, 4294901760
    %v4730 = vsub.f32 %v4451, %v4729
    %4731 = vmatmul.f32.gmra.mxu0 %v4730
    %v4732 = vpop.f32.mrf.mxu0
    %v4733 = vadd.f32 %v4674, %v4732
    %4734 = vdwg.mxu0
    %v4735 = vand.u32 %v4498, 4294901760
    %4736 = vmatpush.msra.mxu0 %v4735
    %v4737 = vand.u32 %v4497, 4294901760
    %4738 = vmatpush.msra.mxu0 %v4737
    %v4739 = vand.u32 %v4496, 4294901760
    %4740 = vmatpush.msra.mxu0 %v4739
    %v4741 = vand.u32 %v4495, 4294901760
    %4742 = vmatpush.msra.mxu0 %v4741
    %v4743 = vand.u32 %v4494, 4294901760
    %4744 = vmatpush.msra.mxu0 %v4743
    %v4745 = vand.u32 %v4493, 4294901760
    %4746 = vmatpush.msra.mxu0 %v4745
    %v4747 = vand.u32 %v4492, 4294901760
    %4748 = vmatpush.msra.mxu0 %v4747
    %v4749 = vand.u32 %v4491, 4294901760
    %4750 = vmatpush.msra.mxu0 %v4749
    %v4751 = vand.u32 %v4490, 4294901760
    %4752 = vmatpush.msra.mxu0 %v4751
    %v4753 = vand.u32 %v4489, 4294901760
    %4754 = vmatpush.msra.mxu0 %v4753
    %v4755 = vand.u32 %v4488, 4294901760
    %4756 = vmatpush.msra.mxu0 %v4755
    %v4757 = vand.u32 %v4487, 4294901760
    %4758 = vmatpush.msra.mxu0 %v4757
    %v4759 = vand.u32 %v4486, 4294901760
    %4760 = vmatpush.msra.mxu0 %v4759
    %v4761 = vand.u32 %v4485, 4294901760
    %4762 = vmatpush.msra.mxu0 %v4761
    %v4763 = vand.u32 %v4484, 4294901760
    %4764 = vmatpush.msra.mxu0 %v4763
    %v4765 = vand.u32 %v4483, 4294901760
    %4766 = vmatpush.msra.mxu0 %v4765
    %v4767 = vand.u32 %v4449, 4294901760
    %v4768 = vsub.f32 %v4449, %v4767
    %v4769 = vand.u32 %v4768, 4294901760
    %4770 = vmatmul.f32.gmra.mxu0 %v4769
    %v4771 = vpop.f32.mrf.mxu0
    %v4772 = vadd.f32 %v4728, %v4771
    %v4773 = vand.u32 %v4451, 4294901760
    %v4774 = vsub.f32 %v4451, %v4773
    %v4775 = vand.u32 %v4774, 4294901760
    %4776 = vmatmul.f32.gmra.mxu0 %v4775
    %v4777 = vpop.f32.mrf.mxu0
    %v4778 = vadd.f32 %v4733, %v4777
    %4779 = vdwg.mxu0
    %v4780 = vand.u32 %v4498, 4294901760
    %v4781 = vsub.f32 %v4498, %v4780
    %v4782 = vand.u32 %v4781, 4294901760
    %4783 = vmatpush.msra.mxu0 %v4782
    %v4784 = vand.u32 %v4497, 4294901760
    %v4785 = vsub.f32 %v4497, %v4784
    %v4786 = vand.u32 %v4785, 4294901760
    %4787 = vmatpush.msra.mxu0 %v4786
    %v4788 = vand.u32 %v4496, 4294901760
    %v4789 = vsub.f32 %v4496, %v4788
    %v4790 = vand.u32 %v4789, 4294901760
    %4791 = vmatpush.msra.mxu0 %v4790
    %v4792 = vand.u32 %v4495, 4294901760
    %v4793 = vsub.f32 %v4495, %v4792
    %v4794 = vand.u32 %v4793, 4294901760
    %4795 = vmatpush.msra.mxu0 %v4794
    %v4796 = vand.u32 %v4494, 4294901760
    %v4797 = vsub.f32 %v4494, %v4796
    %v4798 = vand.u32 %v4797, 4294901760
    %4799 = vmatpush.msra.mxu0 %v4798
    %v4800 = vand.u32 %v4493, 4294901760
    %v4801 = vsub.f32 %v4493, %v4800
    %v4802 = vand.u32 %v4801, 4294901760
    %4803 = vmatpush.msra.mxu0 %v4802
    %v4804 = vand.u32 %v4492, 4294901760
    %v4805 = vsub.f32 %v4492, %v4804
    %v4806 = vand.u32 %v4805, 4294901760
    %4807 = vmatpush.msra.mxu0 %v4806
    %v4808 = vand.u32 %v4491, 4294901760
    %v4809 = vsub.f32 %v4491, %v4808
    %v4810 = vand.u32 %v4809, 4294901760
    %4811 = vmatpush.msra.mxu0 %v4810
    %v4812 = vand.u32 %v4490, 4294901760
    %v4813 = vsub.f32 %v4490, %v4812
    %v4814 = vand.u32 %v4813, 4294901760
    %4815 = vmatpush.msra.mxu0 %v4814
    %v4816 = vand.u32 %v4489, 4294901760
    %v4817 = vsub.f32 %v4489, %v4816
    %v4818 = vand.u32 %v4817, 4294901760
    %4819 = vmatpush.msra.mxu0 %v4818
    %v4820 = vand.u32 %v4488, 4294901760
    %v4821 = vsub.f32 %v4488, %v4820
    %v4822 = vand.u32 %v4821, 4294901760
    %4823 = vmatpush.msra.mxu0 %v4822
    %v4824 = vand.u32 %v4487, 4294901760
    %v4825 = vsub.f32 %v4487, %v4824
    %v4826 = vand.u32 %v4825, 4294901760
    %4827 = vmatpush.msra.mxu0 %v4826
    %v4828 = vand.u32 %v4486, 4294901760
    %v4829 = vsub.f32 %v4486, %v4828
    %v4830 = vand.u32 %v4829, 4294901760
    %4831 = vmatpush.msra.mxu0 %v4830
    %v4832 = vand.u32 %v4485, 4294901760
    %v4833 = vsub.f32 %v4485, %v4832
    %v4834 = vand.u32 %v4833, 4294901760
    %4835 = vmatpush.msra.mxu0 %v4834
    %v4836 = vand.u32 %v4484, 4294901760
    %v4837 = vsub.f32 %v4484, %v4836
    %v4838 = vand.u32 %v4837, 4294901760
    %4839 = vmatpush.msra.mxu0 %v4838
    %v4840 = vand.u32 %v4483, 4294901760
    %v4841 = vsub.f32 %v4483, %v4840
    %v4842 = vand.u32 %v4841, 4294901760
    %4843 = vmatpush.msra.mxu0 %v4842
    %v4844 = vand.u32 %v4449, 4294901760
    %4845 = vmatmul.f32.gmra.mxu0 %v4844
    %v4846 = vpop.f32.mrf.mxu0
    %v4847 = vadd.f32 %v4772, %v4846
    %v4848 = vand.u32 %v4451, 4294901760
    %4849 = vmatmul.f32.gmra.mxu0 %v4848
    %v4850 = vpop.f32.mrf.mxu0
    %v4851 = vadd.f32 %v4778, %v4850
    %4852 = vdwg.mxu0
    %v4853 = vand.u32 %v4498, 4294901760
    %4854 = vmatpush.msra.mxu0 %v4853
    %v4855 = vand.u32 %v4497, 4294901760
    %4856 = vmatpush.msra.mxu0 %v4855
    %v4857 = vand.u32 %v4496, 4294901760
    %4858 = vmatpush.msra.mxu0 %v4857
    %v4859 = vand.u32 %v4495, 4294901760
    %4860 = vmatpush.msra.mxu0 %v4859
    %v4861 = vand.u32 %v4494, 4294901760
    %4862 = vmatpush.msra.mxu0 %v4861
    %v4863 = vand.u32 %v4493, 4294901760
    %4864 = vmatpush.msra.mxu0 %v4863
    %v4865 = vand.u32 %v4492, 4294901760
    %4866 = vmatpush.msra.mxu0 %v4865
    %v4867 = vand.u32 %v4491, 4294901760
    %4868 = vmatpush.msra.mxu0 %v4867
    %v4869 = vand.u32 %v4490, 4294901760
    %4870 = vmatpush.msra.mxu0 %v4869
    %v4871 = vand.u32 %v4489, 4294901760
    %4872 = vmatpush.msra.mxu0 %v4871
    %v4873 = vand.u32 %v4488, 4294901760
    %4874 = vmatpush.msra.mxu0 %v4873
    %v4875 = vand.u32 %v4487, 4294901760
    %4876 = vmatpush.msra.mxu0 %v4875
    %v4877 = vand.u32 %v4486, 4294901760
    %4878 = vmatpush.msra.mxu0 %v4877
    %v4879 = vand.u32 %v4485, 4294901760
    %4880 = vmatpush.msra.mxu0 %v4879
    %v4881 = vand.u32 %v4484, 4294901760
    %4882 = vmatpush.msra.mxu0 %v4881
    %v4883 = vand.u32 %v4483, 4294901760
    %4884 = vmatpush.msra.mxu0 %v4883
    %v4885 = vand.u32 %v4449, 4294901760
    %4886 = vmatmul.f32.gmra.mxu0 %v4885
    %v4887 = vpop.f32.mrf.mxu0
    %v4888 = vadd.f32 %v4847, %v4887
    %v4889 = vand.u32 %v4451, 4294901760
    %4890 = vmatmul.f32.gmra.mxu0 %v4889
    %v4891 = vpop.f32.mrf.mxu0
    %v4892 = vadd.f32 %v4851, %v4891
    %4893 = vdwg.mxu0
    %4894 = vmatpush.msra.mxu0 0.0
    %4895 = vmatpush.msra.mxu0 0.0
    %v4896 = vand.u32 %v4512, 4294901760
    %4897 = vmatpush.msra.mxu0 %v4896
    %v4898 = vand.u32 %v4511, 4294901760
    %4899 = vmatpush.msra.mxu0 %v4898
    %v4900 = vand.u32 %v4510, 4294901760
    %4901 = vmatpush.msra.mxu0 %v4900
    %v4902 = vand.u32 %v4509, 4294901760
    %4903 = vmatpush.msra.mxu0 %v4902
    %v4904 = vand.u32 %v4508, 4294901760
    %4905 = vmatpush.msra.mxu0 %v4904
    %v4906 = vand.u32 %v4507, 4294901760
    %4907 = vmatpush.msra.mxu0 %v4906
    %v4908 = vand.u32 %v4506, 4294901760
    %4909 = vmatpush.msra.mxu0 %v4908
    %v4910 = vand.u32 %v4505, 4294901760
    %4911 = vmatpush.msra.mxu0 %v4910
    %v4912 = vand.u32 %v4504, 4294901760
    %4913 = vmatpush.msra.mxu0 %v4912
    %v4914 = vand.u32 %v4503, 4294901760
    %4915 = vmatpush.msra.mxu0 %v4914
    %v4916 = vand.u32 %v4502, 4294901760
    %4917 = vmatpush.msra.mxu0 %v4916
    %v4918 = vand.u32 %v4501, 4294901760
    %4919 = vmatpush.msra.mxu0 %v4918
    %v4920 = vand.u32 %v4500, 4294901760
    %4921 = vmatpush.msra.mxu0 %v4920
    %v4922 = vand.u32 %v4499, 4294901760
    %4923 = vmatpush.msra.mxu0 %v4922
    %v4924 = vand.u32 %v4517, 4294901760
    %v4925 = vsub.f32 %v4517, %v4924
    %v4926 = vand.u32 %v4925, 4294901760
    %v4927 = vsub.f32 %v4925, %v4926
    %v4928 = vand.u32 %v4927, 4294901760
    %4929 = vmatmul.f32.gmra.mxu0 %v4928
    %v4930 = vpop.f32.mrf.mxu0
    %v4931 = vadd.f32 %v4888, %v4930
    %v4932 = vand.u32 %v4520, 4294901760
    %v4933 = vsub.f32 %v4520, %v4932
    %v4934 = vand.u32 %v4933, 4294901760
    %v4935 = vsub.f32 %v4933, %v4934
    %v4936 = vand.u32 %v4935, 4294901760
    %4937 = vmatmul.f32.gmra.mxu0 %v4936
    %v4938 = vpop.f32.mrf.mxu0
    %v4939 = vadd.f32 %v4892, %v4938
    %4940 = vdwg.mxu0
    %4941 = vmatpush.msra.mxu0 0.0
    %4942 = vmatpush.msra.mxu0 0.0
    %v4943 = vand.u32 %v4512, 4294901760
    %v4944 = vsub.f32 %v4512, %v4943
    %v4945 = vand.u32 %v4944, 4294901760
    %v4946 = vsub.f32 %v4944, %v4945
    %v4947 = vand.u32 %v4946, 4294901760
    %4948 = vmatpush.msra.mxu0 %v4947
    %v4949 = vand.u32 %v4511, 4294901760
    %v4950 = vsub.f32 %v4511, %v4949
    %v4951 = vand.u32 %v4950, 4294901760
    %v4952 = vsub.f32 %v4950, %v4951
    %v4953 = vand.u32 %v4952, 4294901760
    %4954 = vmatpush.msra.mxu0 %v4953
    %v4955 = vand.u32 %v4510, 4294901760
    %v4956 = vsub.f32 %v4510, %v4955
    %v4957 = vand.u32 %v4956, 4294901760
    %v4958 = vsub.f32 %v4956, %v4957
    %v4959 = vand.u32 %v4958, 4294901760
    %4960 = vmatpush.msra.mxu0 %v4959
    %v4961 = vand.u32 %v4509, 4294901760
    %v4962 = vsub.f32 %v4509, %v4961
    %v4963 = vand.u32 %v4962, 4294901760
    %v4964 = vsub.f32 %v4962, %v4963
    %v4965 = vand.u32 %v4964, 4294901760
    %4966 = vmatpush.msra.mxu0 %v4965
    %v4967 = vand.u32 %v4508, 4294901760
    %v4968 = vsub.f32 %v4508, %v4967
    %v4969 = vand.u32 %v4968, 4294901760
    %v4970 = vsub.f32 %v4968, %v4969
    %v4971 = vand.u32 %v4970, 4294901760
    %4972 = vmatpush.msra.mxu0 %v4971
    %v4973 = vand.u32 %v4507, 4294901760
    %v4974 = vsub.f32 %v4507, %v4973
    %v4975 = vand.u32 %v4974, 4294901760
    %v4976 = vsub.f32 %v4974, %v4975
    %v4977 = vand.u32 %v4976, 4294901760
    %4978 = vmatpush.msra.mxu0 %v4977
    %v4979 = vand.u32 %v4506, 4294901760
    %v4980 = vsub.f32 %v4506, %v4979
    %v4981 = vand.u32 %v4980, 4294901760
    %v4982 = vsub.f32 %v4980, %v4981
    %v4983 = vand.u32 %v4982, 4294901760
    %4984 = vmatpush.msra.mxu0 %v4983
    %v4985 = vand.u32 %v4505, 4294901760
    %v4986 = vsub.f32 %v4505, %v4985
    %v4987 = vand.u32 %v4986, 4294901760
    %v4988 = vsub.f32 %v4986, %v4987
    %v4989 = vand.u32 %v4988, 4294901760
    %4990 = vmatpush.msra.mxu0 %v4989
    %v4991 = vand.u32 %v4504, 4294901760
    %v4992 = vsub.f32 %v4504, %v4991
    %v4993 = vand.u32 %v4992, 4294901760
    %v4994 = vsub.f32 %v4992, %v4993
    %v4995 = vand.u32 %v4994, 4294901760
    %4996 = vmatpush.msra.mxu0 %v4995
    %v4997 = vand.u32 %v4503, 4294901760
    %v4998 = vsub.f32 %v4503, %v4997
    %v4999 = vand.u32 %v4998, 4294901760
    %v5000 = vsub.f32 %v4998, %v4999
    %v5001 = vand.u32 %v5000, 4294901760
    %5002 = vmatpush.msra.mxu0 %v5001
    %v5003 = vand.u32 %v4502, 4294901760
    %v5004 = vsub.f32 %v4502, %v5003
    %v5005 = vand.u32 %v5004, 4294901760
    %v5006 = vsub.f32 %v5004, %v5005
    %v5007 = vand.u32 %v5006, 4294901760
    %5008 = vmatpush.msra.mxu0 %v5007
    %v5009 = vand.u32 %v4501, 4294901760
    %v5010 = vsub.f32 %v4501, %v5009
    %v5011 = vand.u32 %v5010, 4294901760
    %v5012 = vsub.f32 %v5010, %v5011
    %v5013 = vand.u32 %v5012, 4294901760
    %5014 = vmatpush.msra.mxu0 %v5013
    %v5015 = vand.u32 %v4500, 4294901760
    %v5016 = vsub.f32 %v4500, %v5015
    %v5017 = vand.u32 %v5016, 4294901760
    %v5018 = vsub.f32 %v5016, %v5017
    %v5019 = vand.u32 %v5018, 4294901760
    %5020 = vmatpush.msra.mxu0 %v5019
    %v5021 = vand.u32 %v4499, 4294901760
    %v5022 = vsub.f32 %v4499, %v5021
    %v5023 = vand.u32 %v5022, 4294901760
    %v5024 = vsub.f32 %v5022, %v5023
    %v5025 = vand.u32 %v5024, 4294901760
    %5026 = vmatpush.msra.mxu0 %v5025
    %v5027 = vand.u32 %v4517, 4294901760
    %5028 = vmatmul.f32.gmra.mxu0 %v5027
    %v5029 = vpop.f32.mrf.mxu0
    %v5030 = vadd.f32 %v4931, %v5029
    %v5031 = vand.u32 %v4520, 4294901760
    %5032 = vmatmul.f32.gmra.mxu0 %v5031
    %v5033 = vpop.f32.mrf.mxu0
    %v5034 = vadd.f32 %v4939, %v5033
    %5035 = vdwg.mxu0
    %5036 = vmatpush.msra.mxu0 0.0
    %5037 = vmatpush.msra.mxu0 0.0
    %v5038 = vand.u32 %v4512, 4294901760
    %v5039 = vsub.f32 %v4512, %v5038
    %5040 = vmatpush.msra.mxu0 %v5039
    %v5041 = vand.u32 %v4511, 4294901760
    %v5042 = vsub.f32 %v4511, %v5041
    %5043 = vmatpush.msra.mxu0 %v5042
    %v5044 = vand.u32 %v4510, 4294901760
    %v5045 = vsub.f32 %v4510, %v5044
    %5046 = vmatpush.msra.mxu0 %v5045
    %v5047 = vand.u32 %v4509, 4294901760
    %v5048 = vsub.f32 %v4509, %v5047
    %5049 = vmatpush.msra.mxu0 %v5048
    %v5050 = vand.u32 %v4508, 4294901760
    %v5051 = vsub.f32 %v4508, %v5050
    %5052 = vmatpush.msra.mxu0 %v5051
    %v5053 = vand.u32 %v4507, 4294901760
    %v5054 = vsub.f32 %v4507, %v5053
    %5055 = vmatpush.msra.mxu0 %v5054
    %v5056 = vand.u32 %v4506, 4294901760
    %v5057 = vsub.f32 %v4506, %v5056
    %5058 = vmatpush.msra.mxu0 %v5057
    %v5059 = vand.u32 %v4505, 4294901760
    %v5060 = vsub.f32 %v4505, %v5059
    %5061 = vmatpush.msra.mxu0 %v5060
    %v5062 = vand.u32 %v4504, 4294901760
    %v5063 = vsub.f32 %v4504, %v5062
    %5064 = vmatpush.msra.mxu0 %v5063
    %v5065 = vand.u32 %v4503, 4294901760
    %v5066 = vsub.f32 %v4503, %v5065
    %5067 = vmatpush.msra.mxu0 %v5066
    %v5068 = vand.u32 %v4502, 4294901760
    %v5069 = vsub.f32 %v4502, %v5068
    %5070 = vmatpush.msra.mxu0 %v5069
    %v5071 = vand.u32 %v4501, 4294901760
    %v5072 = vsub.f32 %v4501, %v5071
    %5073 = vmatpush.msra.mxu0 %v5072
    %v5074 = vand.u32 %v4500, 4294901760
    %v5075 = vsub.f32 %v4500, %v5074
    %5076 = vmatpush.msra.mxu0 %v5075
    %v5077 = vand.u32 %v4499, 4294901760
    %v5078 = vsub.f32 %v4499, %v5077
    %5079 = vmatpush.msra.mxu0 %v5078
    %v5080 = vand.u32 %v4517, 4294901760
    %v5081 = vsub.f32 %v4517, %v5080
    %5082 = vmatmul.f32.gmra.mxu0 %v5081
    %v5083 = vpop.f32.mrf.mxu0
    %v5084 = vadd.f32 %v5030, %v5083
    %v5085 = vand.u32 %v4520, 4294901760
    %v5086 = vsub.f32 %v4520, %v5085
    %5087 = vmatmul.f32.gmra.mxu0 %v5086
    %v5088 = vpop.f32.mrf.mxu0
    %v5089 = vadd.f32 %v5034, %v5088
    %5090 = vdwg.mxu0
    %5091 = vmatpush.msra.mxu0 0.0
    %5092 = vmatpush.msra.mxu0 0.0
    %v5093 = vand.u32 %v4512, 4294901760
    %5094 = vmatpush.msra.mxu0 %v5093
    %v5095 = vand.u32 %v4511, 4294901760
    %5096 = vmatpush.msra.mxu0 %v5095
    %v5097 = vand.u32 %v4510, 4294901760
    %5098 = vmatpush.msra.mxu0 %v5097
    %v5099 = vand.u32 %v4509, 4294901760
    %5100 = vmatpush.msra.mxu0 %v5099
    %v5101 = vand.u32 %v4508, 4294901760
    %5102 = vmatpush.msra.mxu0 %v5101
    %v5103 = vand.u32 %v4507, 4294901760
    %5104 = vmatpush.msra.mxu0 %v5103
    %v5105 = vand.u32 %v4506, 4294901760
    %5106 = vmatpush.msra.mxu0 %v5105
    %v5107 = vand.u32 %v4505, 4294901760
    %5108 = vmatpush.msra.mxu0 %v5107
    %v5109 = vand.u32 %v4504, 4294901760
    %5110 = vmatpush.msra.mxu0 %v5109
    %v5111 = vand.u32 %v4503, 4294901760
    %5112 = vmatpush.msra.mxu0 %v5111
    %v5113 = vand.u32 %v4502, 4294901760
    %5114 = vmatpush.msra.mxu0 %v5113
    %v5115 = vand.u32 %v4501, 4294901760
    %5116 = vmatpush.msra.mxu0 %v5115
    %v5117 = vand.u32 %v4500, 4294901760
    %5118 = vmatpush.msra.mxu0 %v5117
    %v5119 = vand.u32 %v4499, 4294901760
    %5120 = vmatpush.msra.mxu0 %v5119
    %v5121 = vand.u32 %v4517, 4294901760
    %v5122 = vsub.f32 %v4517, %v5121
    %v5123 = vand.u32 %v5122, 4294901760
    %5124 = vmatmul.f32.gmra.mxu0 %v5123
    %v5125 = vpop.f32.mrf.mxu0
    %v5126 = vadd.f32 %v5084, %v5125
    %v5127 = vand.u32 %v4520, 4294901760
    %v5128 = vsub.f32 %v4520, %v5127
    %v5129 = vand.u32 %v5128, 4294901760
    %5130 = vmatmul.f32.gmra.mxu0 %v5129
    %v5131 = vpop.f32.mrf.mxu0
    %v5132 = vadd.f32 %v5089, %v5131
    %5133 = vdwg.mxu0
    %5134 = vmatpush.msra.mxu0 0.0
    %5135 = vmatpush.msra.mxu0 0.0
    %v5136 = vand.u32 %v4512, 4294901760
    %v5137 = vsub.f32 %v4512, %v5136
    %v5138 = vand.u32 %v5137, 4294901760
    %5139 = vmatpush.msra.mxu0 %v5138
    %v5140 = vand.u32 %v4511, 4294901760
    %v5141 = vsub.f32 %v4511, %v5140
    %v5142 = vand.u32 %v5141, 4294901760
    %5143 = vmatpush.msra.mxu0 %v5142
    %v5144 = vand.u32 %v4510, 4294901760
    %v5145 = vsub.f32 %v4510, %v5144
    %v5146 = vand.u32 %v5145, 4294901760
    %5147 = vmatpush.msra.mxu0 %v5146
    %v5148 = vand.u32 %v4509, 4294901760
    %v5149 = vsub.f32 %v4509, %v5148
    %v5150 = vand.u32 %v5149, 4294901760
    %5151 = vmatpush.msra.mxu0 %v5150
    %v5152 = vand.u32 %v4508, 4294901760
    %v5153 = vsub.f32 %v4508, %v5152
    %v5154 = vand.u32 %v5153, 4294901760
    %5155 = vmatpush.msra.mxu0 %v5154
    %v5156 = vand.u32 %v4507, 4294901760
    %v5157 = vsub.f32 %v4507, %v5156
    %v5158 = vand.u32 %v5157, 4294901760
    %5159 = vmatpush.msra.mxu0 %v5158
    %v5160 = vand.u32 %v4506, 4294901760
    %v5161 = vsub.f32 %v4506, %v5160
    %v5162 = vand.u32 %v5161, 4294901760
    %5163 = vmatpush.msra.mxu0 %v5162
    %v5164 = vand.u32 %v4505, 4294901760
    %v5165 = vsub.f32 %v4505, %v5164
    %v5166 = vand.u32 %v5165, 4294901760
    %5167 = vmatpush.msra.mxu0 %v5166
    %v5168 = vand.u32 %v4504, 4294901760
    %v5169 = vsub.f32 %v4504, %v5168
    %v5170 = vand.u32 %v5169, 4294901760
    %5171 = vmatpush.msra.mxu0 %v5170
    %v5172 = vand.u32 %v4503, 4294901760
    %v5173 = vsub.f32 %v4503, %v5172
    %v5174 = vand.u32 %v5173, 4294901760
    %5175 = vmatpush.msra.mxu0 %v5174
    %v5176 = vand.u32 %v4502, 4294901760
    %v5177 = vsub.f32 %v4502, %v5176
    %v5178 = vand.u32 %v5177, 4294901760
    %5179 = vmatpush.msra.mxu0 %v5178
    %v5180 = vand.u32 %v4501, 4294901760
    %v5181 = vsub.f32 %v4501, %v5180
    %v5182 = vand.u32 %v5181, 4294901760
    %5183 = vmatpush.msra.mxu0 %v5182
    %v5184 = vand.u32 %v4500, 4294901760
    %v5185 = vsub.f32 %v4500, %v5184
    %v5186 = vand.u32 %v5185, 4294901760
    %5187 = vmatpush.msra.mxu0 %v5186
    %v5188 = vand.u32 %v4499, 4294901760
    %v5189 = vsub.f32 %v4499, %v5188
    %v5190 = vand.u32 %v5189, 4294901760
    %5191 = vmatpush.msra.mxu0 %v5190
    %v5192 = vand.u32 %v4517, 4294901760
    %5193 = vmatmul.f32.gmra.mxu0 %v5192
    %v5194 = vpop.f32.mrf.mxu0
    %v5195 = vadd.f32 %v5126, %v5194
    %v5196 = vand.u32 %v4520, 4294901760
    %5197 = vmatmul.f32.gmra.mxu0 %v5196
    %v5198 = vpop.f32.mrf.mxu0
    %v5199 = vadd.f32 %v5132, %v5198
    %5200 = vdwg.mxu0
    %5201 = vmatpush.msra.mxu0 0.0
    %5202 = vmatpush.msra.mxu0 0.0
    %v5203 = vand.u32 %v4512, 4294901760
    %5204 = vmatpush.msra.mxu0 %v5203
    %v5205 = vand.u32 %v4511, 4294901760
    %5206 = vmatpush.msra.mxu0 %v5205
    %v5207 = vand.u32 %v4510, 4294901760
    %5208 = vmatpush.msra.mxu0 %v5207
    %v5209 = vand.u32 %v4509, 4294901760
    %5210 = vmatpush.msra.mxu0 %v5209
    %v5211 = vand.u32 %v4508, 4294901760
    %5212 = vmatpush.msra.mxu0 %v5211
    %v5213 = vand.u32 %v4507, 4294901760
    %5214 = vmatpush.msra.mxu0 %v5213
    %v5215 = vand.u32 %v4506, 4294901760
    %5216 = vmatpush.msra.mxu0 %v5215
    %v5217 = vand.u32 %v4505, 4294901760
    %5218 = vmatpush.msra.mxu0 %v5217
    %v5219 = vand.u32 %v4504, 4294901760
    %5220 = vmatpush.msra.mxu0 %v5219
    %v5221 = vand.u32 %v4503, 4294901760
    %5222 = vmatpush.msra.mxu0 %v5221
    %v5223 = vand.u32 %v4502, 4294901760
    %5224 = vmatpush.msra.mxu0 %v5223
    %v5225 = vand.u32 %v4501, 4294901760
    %5226 = vmatpush.msra.mxu0 %v5225
    %v5227 = vand.u32 %v4500, 4294901760
    %5228 = vmatpush.msra.mxu0 %v5227
    %v5229 = vand.u32 %v4499, 4294901760
    %5230 = vmatpush.msra.mxu0 %v5229
    %v5231 = vand.u32 %v4517, 4294901760
    %5232 = vmatmul.f32.gmra.mxu0 %v5231
    %v5233 = vpop.f32.mrf.mxu0
    %v5234 = vadd.f32 %v5195, %v5233
    %v5235 = vand.u32 %v4520, 4294901760
    %5236 = vmatmul.f32.gmra.mxu0 %v5235
    %v5237 = vpop.f32.mrf.mxu0
    %v5238 = vadd.f32 %v5199, %v5237
    %5239 = vdwg.mxu0
    %v5240 = vld [vmem:[%s4 + $0xf8] sm:$0xff]
    %v5241 = vld [vmem:[%s4 + $0x100] sm:$0xff]
    %v5243 = vsel %vm1096, %v5240, 0
    %v5246 = vsel %vm1096, %v5241, 0
    %5248 = vmatpush.msra.mxu0 0.0
    %5249 = vmatpush.msra.mxu0 0.0
    %5250 = vmatpush.msra.mxu0 0.0
    %5251 = vmatpush.msra.mxu0 0.0
    %5252 = vmatpush.msra.mxu0 0.0
    %5253 = vmatpush.msra.mxu0 0.0
    %5254 = vmatpush.msra.mxu0 0.0
    %5255 = vmatpush.msra.mxu0 0.0
    %5256 = vmatpush.msra.mxu0 0.0
    %5257 = vmatpush.msra.mxu0 0.0
    %5258 = vmatpush.msra.mxu0 0.0
    %5259 = vmatpush.msra.mxu0 0.0
    %5260 = vmatpush.msra.mxu0 0.0
    %5261 = vmatpush.msra.mxu0 0.0
    %v5262 = vand.u32 %v5238, 4294901760
    %5263 = vmatpush.msra.mxu0 %v5262
    %v5264 = vand.u32 %v5234, 4294901760
    %5265 = vmatpush.msra.mxu0 %v5264
    %v5266 = vand.u32 %v5243, 4294901760
    %v5267 = vsub.f32 %v5243, %v5266
    %v5268 = vand.u32 %v5267, 4294901760
    %v5269 = vsub.f32 %v5267, %v5268
    %v5270 = vand.u32 %v5269, 4294901760
    %5271 = vmatmul.f32.gmra.mxu0 %v5270
    %v5272 = vpop.f32.mrf.mxu0
    %v5273 = vadd.f32 0.0, %v5272
    %v5274 = vand.u32 %v5246, 4294901760
    %v5275 = vsub.f32 %v5246, %v5274
    %v5276 = vand.u32 %v5275, 4294901760
    %v5277 = vsub.f32 %v5275, %v5276
    %v5278 = vand.u32 %v5277, 4294901760
    %5279 = vmatmul.f32.gmra.mxu0 %v5278
    %v5280 = vpop.f32.mrf.mxu0
    %v5281 = vadd.f32 0.0, %v5280
    %5282 = vdwg.mxu0
    %5283 = vmatpush.msra.mxu0 0.0
    %5284 = vmatpush.msra.mxu0 0.0
    %5285 = vmatpush.msra.mxu0 0.0
    %5286 = vmatpush.msra.mxu0 0.0
    %5287 = vmatpush.msra.mxu0 0.0
    %5288 = vmatpush.msra.mxu0 0.0
    %5289 = vmatpush.msra.mxu0 0.0
    %5290 = vmatpush.msra.mxu0 0.0
    %5291 = vmatpush.msra.mxu0 0.0
    %5292 = vmatpush.msra.mxu0 0.0
    %5293 = vmatpush.msra.mxu0 0.0
    %5294 = vmatpush.msra.mxu0 0.0
    %5295 = vmatpush.msra.mxu0 0.0
    %5296 = vmatpush.msra.mxu0 0.0
    %v5297 = vand.u32 %v5238, 4294901760
    %v5298 = vsub.f32 %v5238, %v5297
    %v5299 = vand.u32 %v5298, 4294901760
    %v5300 = vsub.f32 %v5298, %v5299
    %v5301 = vand.u32 %v5300, 4294901760
    %5302 = vmatpush.msra.mxu0 %v5301
    %v5303 = vand.u32 %v5234, 4294901760
    %v5304 = vsub.f32 %v5234, %v5303
    %v5305 = vand.u32 %v5304, 4294901760
    %v5306 = vsub.f32 %v5304, %v5305
    %v5307 = vand.u32 %v5306, 4294901760
    %5308 = vmatpush.msra.mxu0 %v5307
    %v5309 = vand.u32 %v5243, 4294901760
    %5310 = vmatmul.f32.gmra.mxu0 %v5309
    %v5311 = vpop.f32.mrf.mxu0
    %v5312 = vadd.f32 %v5273, %v5311
    %v5313 = vand.u32 %v5246, 4294901760
    %5314 = vmatmul.f32.gmra.mxu0 %v5313
    %v5315 = vpop.f32.mrf.mxu0
    %v5316 = vadd.f32 %v5281, %v5315
    %5317 = vdwg.mxu0
    %5318 = vmatpush.msra.mxu0 0.0
    %5319 = vmatpush.msra.mxu0 0.0
    %5320 = vmatpush.msra.mxu0 0.0
    %5321 = vmatpush.msra.mxu0 0.0
    %5322 = vmatpush.msra.mxu0 0.0
    %5323 = vmatpush.msra.mxu0 0.0
    %5324 = vmatpush.msra.mxu0 0.0
    %5325 = vmatpush.msra.mxu0 0.0
    %5326 = vmatpush.msra.mxu0 0.0
    %5327 = vmatpush.msra.mxu0 0.0
    %5328 = vmatpush.msra.mxu0 0.0
    %5329 = vmatpush.msra.mxu0 0.0
    %5330 = vmatpush.msra.mxu0 0.0
    %5331 = vmatpush.msra.mxu0 0.0
    %v5332 = vand.u32 %v5238, 4294901760
    %v5333 = vsub.f32 %v5238, %v5332
    %5334 = vmatpush.msra.mxu0 %v5333
    %v5335 = vand.u32 %v5234, 4294901760
    %v5336 = vsub.f32 %v5234, %v5335
    %5337 = vmatpush.msra.mxu0 %v5336
    %v5338 = vand.u32 %v5243, 4294901760
    %v5339 = vsub.f32 %v5243, %v5338
    %5340 = vmatmul.f32.gmra.mxu0 %v5339
    %v5341 = vpop.f32.mrf.mxu0
    %v5342 = vadd.f32 %v5312, %v5341
    %v5343 = vand.u32 %v5246, 4294901760
    %v5344 = vsub.f32 %v5246, %v5343
    %5345 = vmatmul.f32.gmra.mxu0 %v5344
    %v5346 = vpop.f32.mrf.mxu0
    %v5347 = vadd.f32 %v5316, %v5346
    %5348 = vdwg.mxu0
    %5349 = vmatpush.msra.mxu0 0.0
    %5350 = vmatpush.msra.mxu0 0.0
    %5351 = vmatpush.msra.mxu0 0.0
    %5352 = vmatpush.msra.mxu0 0.0
    %5353 = vmatpush.msra.mxu0 0.0
    %5354 = vmatpush.msra.mxu0 0.0
    %5355 = vmatpush.msra.mxu0 0.0
    %5356 = vmatpush.msra.mxu0 0.0
    %5357 = vmatpush.msra.mxu0 0.0
    %5358 = vmatpush.msra.mxu0 0.0
    %5359 = vmatpush.msra.mxu0 0.0
    %5360 = vmatpush.msra.mxu0 0.0
    %5361 = vmatpush.msra.mxu0 0.0
    %5362 = vmatpush.msra.mxu0 0.0
    %v5363 = vand.u32 %v5238, 4294901760
    %5364 = vmatpush.msra.mxu0 %v5363
    %v5365 = vand.u32 %v5234, 4294901760
    %5366 = vmatpush.msra.mxu0 %v5365
    %v5367 = vand.u32 %v5243, 4294901760
    %v5368 = vsub.f32 %v5243, %v5367
    %v5369 = vand.u32 %v5368, 4294901760
    %5370 = vmatmul.f32.gmra.mxu0 %v5369
    %v5371 = vpop.f32.mrf.mxu0
    %v5372 = vadd.f32 %v5342, %v5371
    %v5373 = vand.u32 %v5246, 4294901760
    %v5374 = vsub.f32 %v5246, %v5373
    %v5375 = vand.u32 %v5374, 4294901760
    %5376 = vmatmul.f32.gmra.mxu0 %v5375
    %v5377 = vpop.f32.mrf.mxu0
    %v5378 = vadd.f32 %v5347, %v5377
    %5379 = vdwg.mxu0
    %5380 = vmatpush.msra.mxu0 0.0
    %5381 = vmatpush.msra.mxu0 0.0
    %5382 = vmatpush.msra.mxu0 0.0
    %5383 = vmatpush.msra.mxu0 0.0
    %5384 = vmatpush.msra.mxu0 0.0
    %5385 = vmatpush.msra.mxu0 0.0
    %5386 = vmatpush.msra.mxu0 0.0
    %5387 = vmatpush.msra.mxu0 0.0
    %5388 = vmatpush.msra.mxu0 0.0
    %5389 = vmatpush.msra.mxu0 0.0
    %5390 = vmatpush.msra.mxu0 0.0
    %5391 = vmatpush.msra.mxu0 0.0
    %5392 = vmatpush.msra.mxu0 0.0
    %5393 = vmatpush.msra.mxu0 0.0
    %v5394 = vand.u32 %v5238, 4294901760
    %v5395 = vsub.f32 %v5238, %v5394
    %v5396 = vand.u32 %v5395, 4294901760
    %5397 = vmatpush.msra.mxu0 %v5396
    %v5398 = vand.u32 %v5234, 4294901760
    %v5399 = vsub.f32 %v5234, %v5398
    %v5400 = vand.u32 %v5399, 4294901760
    %5401 = vmatpush.msra.mxu0 %v5400
    %v5402 = vand.u32 %v5243, 4294901760
    %5403 = vmatmul.f32.gmra.mxu0 %v5402
    %v5404 = vpop.f32.mrf.mxu0
    %v5405 = vadd.f32 %v5372, %v5404
    %v5406 = vand.u32 %v5246, 4294901760
    %5407 = vmatmul.f32.gmra.mxu0 %v5406
    %v5408 = vpop.f32.mrf.mxu0
    %v5409 = vadd.f32 %v5378, %v5408
    %5410 = vdwg.mxu0
    %5411 = vmatpush.msra.mxu0 0.0
    %5412 = vmatpush.msra.mxu0 0.0
    %5413 = vmatpush.msra.mxu0 0.0
    %5414 = vmatpush.msra.mxu0 0.0
    %5415 = vmatpush.msra.mxu0 0.0
    %5416 = vmatpush.msra.mxu0 0.0
    %5417 = vmatpush.msra.mxu0 0.0
    %5418 = vmatpush.msra.mxu0 0.0
    %5419 = vmatpush.msra.mxu0 0.0
    %5420 = vmatpush.msra.mxu0 0.0
    %5421 = vmatpush.msra.mxu0 0.0
    %5422 = vmatpush.msra.mxu0 0.0
    %5423 = vmatpush.msra.mxu0 0.0
    %5424 = vmatpush.msra.mxu0 0.0
    %v5425 = vand.u32 %v5238, 4294901760
    %5426 = vmatpush.msra.mxu0 %v5425
    %v5427 = vand.u32 %v5234, 4294901760
    %5428 = vmatpush.msra.mxu0 %v5427
    %v5429 = vand.u32 %v5243, 4294901760
    %5430 = vmatmul.f32.gmra.mxu0 %v5429
    %v5431 = vpop.f32.mrf.mxu0
    %v5432 = vadd.f32 %v5405, %v5431
    %v5433 = vand.u32 %v5246, 4294901760
    %5434 = vmatmul.f32.gmra.mxu0 %v5433
    %v5435 = vpop.f32.mrf.mxu0
    %v5436 = vadd.f32 %v5409, %v5435
    %5437 = vdwg.mxu0
    %v5438 = vsub.f32 %v5234, %v5432
    %v5439 = vsub.f32 %v5238, %v5436
    %v5440 = vmul.f32 %v5438, %v5438
    %v5441 = vmul.f32 %v5439, %v5439
    %5442 = vmatpush.msra.mxu0 0.0
    %5443 = vmatpush.msra.mxu0 0.0
    %5444 = vmatpush.msra.mxu0 0.0
    %5445 = vmatpush.msra.mxu0 0.0
    %5446 = vmatpush.msra.mxu0 0.0
    %5447 = vmatpush.msra.mxu0 0.0
    %5448 = vmatpush.msra.mxu0 0.0
    %5449 = vmatpush.msra.mxu0 0.0
    %5450 = vmatpush.msra.mxu0 0.0
    %5451 = vmatpush.msra.mxu0 0.0
    %5452 = vmatpush.msra.mxu0 0.0
    %5453 = vmatpush.msra.mxu0 0.0
    %5454 = vmatpush.msra.mxu0 0.0
    %5455 = vmatpush.msra.mxu0 0.0
    %v5456 = vand.u32 %v5441, 4294901760
    %5457 = vmatpush.msra.mxu0 %v5456
    %v5458 = vand.u32 %v5440, 4294901760
    %5459 = vmatpush.msra.mxu0 %v5458
    %v5460 = vand.u32 %v5243, 4294901760
    %v5461 = vsub.f32 %v5243, %v5460
    %v5462 = vand.u32 %v5461, 4294901760
    %v5463 = vsub.f32 %v5461, %v5462
    %v5464 = vand.u32 %v5463, 4294901760
    %5465 = vmatmul.f32.gmra.mxu0 %v5464
    %v5466 = vpop.f32.mrf.mxu0
    %v5467 = vadd.f32 1e-05, %v5466
    %v5468 = vand.u32 %v5246, 4294901760
    %v5469 = vsub.f32 %v5246, %v5468
    %v5470 = vand.u32 %v5469, 4294901760
    %v5471 = vsub.f32 %v5469, %v5470
    %v5472 = vand.u32 %v5471, 4294901760
    %5473 = vmatmul.f32.gmra.mxu0 %v5472
    %v5474 = vpop.f32.mrf.mxu0
    %v5475 = vadd.f32 1e-05, %v5474
    %5476 = vdwg.mxu0
    %5477 = vmatpush.msra.mxu0 0.0
    %5478 = vmatpush.msra.mxu0 0.0
    %5479 = vmatpush.msra.mxu0 0.0
    %5480 = vmatpush.msra.mxu0 0.0
    %5481 = vmatpush.msra.mxu0 0.0
    %5482 = vmatpush.msra.mxu0 0.0
    %5483 = vmatpush.msra.mxu0 0.0
    %5484 = vmatpush.msra.mxu0 0.0
    %5485 = vmatpush.msra.mxu0 0.0
    %5486 = vmatpush.msra.mxu0 0.0
    %5487 = vmatpush.msra.mxu0 0.0
    %5488 = vmatpush.msra.mxu0 0.0
    %5489 = vmatpush.msra.mxu0 0.0
    %5490 = vmatpush.msra.mxu0 0.0
    %v5491 = vand.u32 %v5441, 4294901760
    %v5492 = vsub.f32 %v5441, %v5491
    %v5493 = vand.u32 %v5492, 4294901760
    %v5494 = vsub.f32 %v5492, %v5493
    %v5495 = vand.u32 %v5494, 4294901760
    %5496 = vmatpush.msra.mxu0 %v5495
    %v5497 = vand.u32 %v5440, 4294901760
    %v5498 = vsub.f32 %v5440, %v5497
    %v5499 = vand.u32 %v5498, 4294901760
    %v5500 = vsub.f32 %v5498, %v5499
    %v5501 = vand.u32 %v5500, 4294901760
    %5502 = vmatpush.msra.mxu0 %v5501
    %v5503 = vand.u32 %v5243, 4294901760
    %5504 = vmatmul.f32.gmra.mxu0 %v5503
    %v5505 = vpop.f32.mrf.mxu0
    %v5506 = vadd.f32 %v5467, %v5505
    %v5507 = vand.u32 %v5246, 4294901760
    %5508 = vmatmul.f32.gmra.mxu0 %v5507
    %v5509 = vpop.f32.mrf.mxu0
    %v5510 = vadd.f32 %v5475, %v5509
    %5511 = vdwg.mxu0
    %5512 = vmatpush.msra.mxu0 0.0
    %5513 = vmatpush.msra.mxu0 0.0
    %5514 = vmatpush.msra.mxu0 0.0
    %5515 = vmatpush.msra.mxu0 0.0
    %5516 = vmatpush.msra.mxu0 0.0
    %5517 = vmatpush.msra.mxu0 0.0
    %5518 = vmatpush.msra.mxu0 0.0
    %5519 = vmatpush.msra.mxu0 0.0
    %5520 = vmatpush.msra.mxu0 0.0
    %5521 = vmatpush.msra.mxu0 0.0
    %5522 = vmatpush.msra.mxu0 0.0
    %5523 = vmatpush.msra.mxu0 0.0
    %5524 = vmatpush.msra.mxu0 0.0
    %5525 = vmatpush.msra.mxu0 0.0
    %v5526 = vand.u32 %v5441, 4294901760
    %v5527 = vsub.f32 %v5441, %v5526
    %5528 = vmatpush.msra.mxu0 %v5527
    %v5529 = vand.u32 %v5440, 4294901760
    %v5530 = vsub.f32 %v5440, %v5529
    %5531 = vmatpush.msra.mxu0 %v5530
    %v5532 = vand.u32 %v5243, 4294901760
    %v5533 = vsub.f32 %v5243, %v5532
    %5534 = vmatmul.f32.gmra.mxu0 %v5533
    %v5535 = vpop.f32.mrf.mxu0
    %v5536 = vadd.f32 %v5506, %v5535
    %v5537 = vand.u32 %v5246, 4294901760
    %v5538 = vsub.f32 %v5246, %v5537
    %5539 = vmatmul.f32.gmra.mxu0 %v5538
    %v5540 = vpop.f32.mrf.mxu0
    %v5541 = vadd.f32 %v5510, %v5540
    %5542 = vdwg.mxu0
    %5543 = vmatpush.msra.mxu0 0.0
    %5544 = vmatpush.msra.mxu0 0.0
    %5545 = vmatpush.msra.mxu0 0.0
    %5546 = vmatpush.msra.mxu0 0.0
    %5547 = vmatpush.msra.mxu0 0.0
    %5548 = vmatpush.msra.mxu0 0.0
    %5549 = vmatpush.msra.mxu0 0.0
    %5550 = vmatpush.msra.mxu0 0.0
    %5551 = vmatpush.msra.mxu0 0.0
    %5552 = vmatpush.msra.mxu0 0.0
    %5553 = vmatpush.msra.mxu0 0.0
    %5554 = vmatpush.msra.mxu0 0.0
    %5555 = vmatpush.msra.mxu0 0.0
    %5556 = vmatpush.msra.mxu0 0.0
    %v5557 = vand.u32 %v5441, 4294901760
    %5558 = vmatpush.msra.mxu0 %v5557
    %v5559 = vand.u32 %v5440, 4294901760
    %5560 = vmatpush.msra.mxu0 %v5559
    %v5561 = vand.u32 %v5243, 4294901760
    %v5562 = vsub.f32 %v5243, %v5561
    %v5563 = vand.u32 %v5562, 4294901760
    %5564 = vmatmul.f32.gmra.mxu0 %v5563
    %v5565 = vpop.f32.mrf.mxu0
    %v5566 = vadd.f32 %v5536, %v5565
    %v5567 = vand.u32 %v5246, 4294901760
    %v5568 = vsub.f32 %v5246, %v5567
    %v5569 = vand.u32 %v5568, 4294901760
    %5570 = vmatmul.f32.gmra.mxu0 %v5569
    %v5571 = vpop.f32.mrf.mxu0
    %v5572 = vadd.f32 %v5541, %v5571
    %5573 = vdwg.mxu0
    %5574 = vmatpush.msra.mxu0 0.0
    %5575 = vmatpush.msra.mxu0 0.0
    %5576 = vmatpush.msra.mxu0 0.0
    %5577 = vmatpush.msra.mxu0 0.0
    %5578 = vmatpush.msra.mxu0 0.0
    %5579 = vmatpush.msra.mxu0 0.0
    %5580 = vmatpush.msra.mxu0 0.0
    %5581 = vmatpush.msra.mxu0 0.0
    %5582 = vmatpush.msra.mxu0 0.0
    %5583 = vmatpush.msra.mxu0 0.0
    %5584 = vmatpush.msra.mxu0 0.0
    %5585 = vmatpush.msra.mxu0 0.0
    %5586 = vmatpush.msra.mxu0 0.0
    %5587 = vmatpush.msra.mxu0 0.0
    %v5588 = vand.u32 %v5441, 4294901760
    %v5589 = vsub.f32 %v5441, %v5588
    %v5590 = vand.u32 %v5589, 4294901760
    %5591 = vmatpush.msra.mxu0 %v5590
    %v5592 = vand.u32 %v5440, 4294901760
    %v5593 = vsub.f32 %v5440, %v5592
    %v5594 = vand.u32 %v5593, 4294901760
    %5595 = vmatpush.msra.mxu0 %v5594
    %v5596 = vand.u32 %v5243, 4294901760
    %5597 = vmatmul.f32.gmra.mxu0 %v5596
    %v5598 = vpop.f32.mrf.mxu0
    %v5599 = vadd.f32 %v5566, %v5598
    %v5600 = vand.u32 %v5246, 4294901760
    %5601 = vmatmul.f32.gmra.mxu0 %v5600
    %v5602 = vpop.f32.mrf.mxu0
    %v5603 = vadd.f32 %v5572, %v5602
    %5604 = vdwg.mxu0
    %5605 = vmatpush.msra.mxu0 0.0
    %5606 = vmatpush.msra.mxu0 0.0
    %5607 = vmatpush.msra.mxu0 0.0
    %5608 = vmatpush.msra.mxu0 0.0
    %5609 = vmatpush.msra.mxu0 0.0
    %5610 = vmatpush.msra.mxu0 0.0
    %5611 = vmatpush.msra.mxu0 0.0
    %5612 = vmatpush.msra.mxu0 0.0
    %5613 = vmatpush.msra.mxu0 0.0
    %5614 = vmatpush.msra.mxu0 0.0
    %5615 = vmatpush.msra.mxu0 0.0
    %5616 = vmatpush.msra.mxu0 0.0
    %5617 = vmatpush.msra.mxu0 0.0
    %5618 = vmatpush.msra.mxu0 0.0
    %v5619 = vand.u32 %v5441, 4294901760
    %5620 = vmatpush.msra.mxu0 %v5619
    %v5621 = vand.u32 %v5440, 4294901760
    %5622 = vmatpush.msra.mxu0 %v5621
    %v5623 = vand.u32 %v5243, 4294901760
    %5624 = vmatmul.f32.gmra.mxu0 %v5623
    %v5625 = vpop.f32.mrf.mxu0
    %v5626 = vadd.f32 %v5599, %v5625
    %v5627 = vand.u32 %v5246, 4294901760
    %5628 = vmatmul.f32.gmra.mxu0 %v5627
    %v5629 = vpop.f32.mrf.mxu0
    %v5630 = vadd.f32 %v5603, %v5629
    %5631 = vdwg.mxu0
    %v5632 = vrsqrt.pop %v5626
    %v5633 = vmul.f32 %v5632, %v5626
    %v5634 = vmul.f32 %v5633, %v5632
    %v5635 = vmul.f32 0.5, %v5634
    %v5636 = vsub.f32 1.5, %v5635
    %v5637 = vmul.f32 %v5632, %v5636
    %vm5638 = vweird.f32 %v5626
    %vm5639 = vweird.f32 %v5632
    %vm5640 = vmor %vm5638, %vm5639
    %v5641 = vsel %vm5640, %v5632, %v5637
    %v5642 = vrsqrt.pop %v5630
    %v5643 = vmul.f32 %v5642, %v5630
    %v5644 = vmul.f32 %v5643, %v5642
    %v5645 = vmul.f32 0.5, %v5644
    %v5646 = vsub.f32 1.5, %v5645
    %v5647 = vmul.f32 %v5642, %v5646
    %vm5648 = vweird.f32 %v5630
    %vm5649 = vweird.f32 %v5642
    %vm5650 = vmor %vm5648, %vm5649
    %v5651 = vsel %vm5650, %v5642, %v5647
    %v5652 = vmul.f32 %v5438, %v5641
    %v5653 = vmul.f32 %v5439, %v5651
    %v5654 = vld [vmem:[%s5 + $0xf1] sm:$0x1]
    %v5655 = vperm.slane %v5654, 0
    %v5656 = vmul.f32 %v5652, %v5655
    %v5657 = vmul.f32 %v5653, %v5655
    %v5658 = vld [vmem:[%s5 + $0xf2] sm:$0x1]
    %v5659 = vperm.slane %v5658, 0
    %v5660 = vadd.f32 %v5656, %v5659
    %v5661 = vadd.f32 %v5657, %v5659
    %v5662 = vand.u32 2147483647, %v5660
    %v5663 = vand.u32 2147483647, %v5661
    %v5664 = vsub.f32 0.0, %v5662
    %v5665 = vsub.f32 0.0, %v5663
    %v5666 = vmul.f32 %v5664, 1.442695
    %v5667 = vpow.pop %v5666
    %v5668 = vmul.f32 %v5665, 1.442695
    %v5669 = vpow.pop %v5668
    %v5670 = vadd.f32 %v5667, 1.0
    %v5671 = vadd.f32 %v5669, 1.0
    %v5672 = vrcp.pop %v5670
    %v5673 = vrcp.pop %v5671
    %vm5674 = vcmp.ge.f32.partialorder %v5660, 0.0
    %vm5675 = vcmp.ge.f32.partialorder %v5661, 0.0
    %v5676 = vmul.f32 %v5667, %v5672
    %v5677 = vmul.f32 %v5669, %v5673
    %v5678 = vsel %vm5674, %v5672, %v5676
    %v5679 = vsel %vm5675, %v5673, %v5677
    %v5680 = vmul.f32 %v5660, %v5678
    %v5681 = vmul.f32 %v5661, %v5679
    %v5682 = vld [vmem:[%s1 + $0x1e8] sm:$0xff]
    %v5683 = vld [vmem:[%s1 + $0x1f0] sm:$0xff]
    %v5684 = vld [vmem:[%s1 + $0x1f8] sm:$0xff]
    %v5685 = vld [vmem:[%s1 + $0x200] sm:$0xff]
    %v5686 = vld [vmem:[%s1 + $0x208] sm:$0xff]
    %v5687 = vld [vmem:[%s1 + $0x210] sm:$0xff]
    %v5688 = vld [vmem:[%s1 + $0x218] sm:$0xff]
    %v5689 = vld [vmem:[%s1 + $0x220] sm:$0xff]
    %v5690 = vld [vmem:[%s1 + $0xb] sm:$0x1]
    %v5691 = vperm.slane %v5690, 0
    %vm5692 = vcmask 523264
    %v5694 = vsel %vm5692, %v5680, 0
    %v5697 = vsel %vm5692, %v5681, 0
    %5699 = vmatpush.msra.mxu0 0.0
    %5700 = vmatpush.msra.mxu0 0.0
    %5701 = vmatpush.msra.mxu0 0.0
    %5702 = vmatpush.msra.mxu0 0.0
    %5703 = vmatpush.msra.mxu0 0.0
    %5704 = vmatpush.msra.mxu0 0.0
    %5705 = vmatpush.msra.mxu0 0.0
    %5706 = vmatpush.msra.mxu0 0.0
    %5707 = vmatpush.msra.mxu0 %v5689
    %5708 = vmatpush.msra.mxu0 %v5688
    %5709 = vmatpush.msra.mxu0 %v5687
    %5710 = vmatpush.msra.mxu0 %v5686
    %5711 = vmatpush.msra.mxu0 %v5685
    %5712 = vmatpush.msra.mxu0 %v5684
    %5713 = vmatpush.msra.mxu0 %v5683
    %5714 = vmatpush.msra.mxu0 %v5682
    %5715 = vmatmul.f32.gmra.mxu0 %v5694
    %v5716 = vpop.f32.mrf.mxu0
    %v5717 = vadd.f32 %v5691, %v5716
    %5718 = vmatmul.f32.gmra.mxu0 %v5697
    %v5719 = vpop.f32.mrf.mxu0
    %v5720 = vadd.f32 %v5691, %v5719
    %5721 = vdwg.mxu0
    %v5722 = vadd.f32 %v5717, %v2724
    %v5723 = vadd.f32 %v5720, %v2728
    %v5725 = vsel %vm38, %v5722, 0
    %v5728 = vsel %vm38, %v5723, 0
    %5730 = vmatpush.msra.mxu0 0.0
    %5731 = vmatpush.msra.mxu0 0.0
    %5732 = vmatpush.msra.mxu0 0.0
    %5733 = vmatpush.msra.mxu0 0.0
    %5734 = vmatpush.msra.mxu0 0.0
    %5735 = vmatpush.msra.mxu0 0.0
    %5736 = vmatpush.msra.mxu0 0.0
    %5737 = vmatpush.msra.mxu0 0.0
    %5738 = vmatpush.msra.mxu0 0.0
    %5739 = vmatpush.msra.mxu0 0.0
    %5740 = vmatpush.msra.mxu0 0.0
    %5741 = vmatpush.msra.mxu0 0.0
    %v5742 = vand.u32 %v35, 4294901760
    %5743 = vmatpush.msra.mxu0 %v5742
    %v5744 = vand.u32 %v34, 4294901760
    %5745 = vmatpush.msra.mxu0 %v5744
    %v5746 = vand.u32 %v33, 4294901760
    %5747 = vmatpush.msra.mxu0 %v5746
    %v5748 = vand.u32 %v32, 4294901760
    %5749 = vmatpush.msra.mxu0 %v5748
    %v5750 = vand.u32 %v5725, 4294901760
    %v5751 = vsub.f32 %v5725, %v5750
    %v5752 = vand.u32 %v5751, 4294901760
    %v5753 = vsub.f32 %v5751, %v5752
    %v5754 = vand.u32 %v5753, 4294901760
    %5755 = vmatmul.f32.gmra.mxu0 %v5754
    %v5756 = vpop.f32.mrf.mxu0
    %v5757 = vadd.f32 0.0, %v5756
    %v5758 = vand.u32 %v5728, 4294901760
    %v5759 = vsub.f32 %v5728, %v5758
    %v5760 = vand.u32 %v5759, 4294901760
    %v5761 = vsub.f32 %v5759, %v5760
    %v5762 = vand.u32 %v5761, 4294901760
    %5763 = vmatmul.f32.gmra.mxu0 %v5762
    %v5764 = vpop.f32.mrf.mxu0
    %v5765 = vadd.f32 0.0, %v5764
    %5766 = vdwg.mxu0
    %5767 = vmatpush.msra.mxu0 0.0
    %5768 = vmatpush.msra.mxu0 0.0
    %5769 = vmatpush.msra.mxu0 0.0
    %5770 = vmatpush.msra.mxu0 0.0
    %5771 = vmatpush.msra.mxu0 0.0
    %5772 = vmatpush.msra.mxu0 0.0
    %5773 = vmatpush.msra.mxu0 0.0
    %5774 = vmatpush.msra.mxu0 0.0
    %5775 = vmatpush.msra.mxu0 0.0
    %5776 = vmatpush.msra.mxu0 0.0
    %5777 = vmatpush.msra.mxu0 0.0
    %5778 = vmatpush.msra.mxu0 0.0
    %v5779 = vand.u32 %v35, 4294901760
    %v5780 = vsub.f32 %v35, %v5779
    %v5781 = vand.u32 %v5780, 4294901760
    %v5782 = vsub.f32 %v5780, %v5781
    %v5783 = vand.u32 %v5782, 4294901760
    %5784 = vmatpush.msra.mxu0 %v5783
    %v5785 = vand.u32 %v34, 4294901760
    %v5786 = vsub.f32 %v34, %v5785
    %v5787 = vand.u32 %v5786, 4294901760
    %v5788 = vsub.f32 %v5786, %v5787
    %v5789 = vand.u32 %v5788, 4294901760
    %5790 = vmatpush.msra.mxu0 %v5789
    %v5791 = vand.u32 %v33, 4294901760
    %v5792 = vsub.f32 %v33, %v5791
    %v5793 = vand.u32 %v5792, 4294901760
    %v5794 = vsub.f32 %v5792, %v5793
    %v5795 = vand.u32 %v5794, 4294901760
    %5796 = vmatpush.msra.mxu0 %v5795
    %v5797 = vand.u32 %v32, 4294901760
    %v5798 = vsub.f32 %v32, %v5797
    %v5799 = vand.u32 %v5798, 4294901760
    %v5800 = vsub.f32 %v5798, %v5799
    %v5801 = vand.u32 %v5800, 4294901760
    %5802 = vmatpush.msra.mxu0 %v5801
    %v5803 = vand.u32 %v5725, 4294901760
    %5804 = vmatmul.f32.gmra.mxu0 %v5803
    %v5805 = vpop.f32.mrf.mxu0
    %v5806 = vadd.f32 %v5757, %v5805
    %v5807 = vand.u32 %v5728, 4294901760
    %5808 = vmatmul.f32.gmra.mxu0 %v5807
    %v5809 = vpop.f32.mrf.mxu0
    %v5810 = vadd.f32 %v5765, %v5809
    %5811 = vdwg.mxu0
    %5812 = vmatpush.msra.mxu0 0.0
    %5813 = vmatpush.msra.mxu0 0.0
    %5814 = vmatpush.msra.mxu0 0.0
    %5815 = vmatpush.msra.mxu0 0.0
    %5816 = vmatpush.msra.mxu0 0.0
    %5817 = vmatpush.msra.mxu0 0.0
    %5818 = vmatpush.msra.mxu0 0.0
    %5819 = vmatpush.msra.mxu0 0.0
    %5820 = vmatpush.msra.mxu0 0.0
    %5821 = vmatpush.msra.mxu0 0.0
    %5822 = vmatpush.msra.mxu0 0.0
    %5823 = vmatpush.msra.mxu0 0.0
    %v5824 = vand.u32 %v35, 4294901760
    %v5825 = vsub.f32 %v35, %v5824
    %5826 = vmatpush.msra.mxu0 %v5825
    %v5827 = vand.u32 %v34, 4294901760
    %v5828 = vsub.f32 %v34, %v5827
    %5829 = vmatpush.msra.mxu0 %v5828
    %v5830 = vand.u32 %v33, 4294901760
    %v5831 = vsub.f32 %v33, %v5830
    %5832 = vmatpush.msra.mxu0 %v5831
    %v5833 = vand.u32 %v32, 4294901760
    %v5834 = vsub.f32 %v32, %v5833
    %5835 = vmatpush.msra.mxu0 %v5834
    %v5836 = vand.u32 %v5725, 4294901760
    %v5837 = vsub.f32 %v5725, %v5836
    %5838 = vmatmul.f32.gmra.mxu0 %v5837
    %v5839 = vpop.f32.mrf.mxu0
    %v5840 = vadd.f32 %v5806, %v5839
    %v5841 = vand.u32 %v5728, 4294901760
    %v5842 = vsub.f32 %v5728, %v5841
    %5843 = vmatmul.f32.gmra.mxu0 %v5842
    %v5844 = vpop.f32.mrf.mxu0
    %v5845 = vadd.f32 %v5810, %v5844
    %5846 = vdwg.mxu0
    %5847 = vmatpush.msra.mxu0 0.0
    %5848 = vmatpush.msra.mxu0 0.0
    %5849 = vmatpush.msra.mxu0 0.0
    %5850 = vmatpush.msra.mxu0 0.0
    %5851 = vmatpush.msra.mxu0 0.0
    %5852 = vmatpush.msra.mxu0 0.0
    %5853 = vmatpush.msra.mxu0 0.0
    %5854 = vmatpush.msra.mxu0 0.0
    %5855 = vmatpush.msra.mxu0 0.0
    %5856 = vmatpush.msra.mxu0 0.0
    %5857 = vmatpush.msra.mxu0 0.0
    %5858 = vmatpush.msra.mxu0 0.0
    %v5859 = vand.u32 %v35, 4294901760
    %5860 = vmatpush.msra.mxu0 %v5859
    %v5861 = vand.u32 %v34, 4294901760
    %5862 = vmatpush.msra.mxu0 %v5861
    %v5863 = vand.u32 %v33, 4294901760
    %5864 = vmatpush.msra.mxu0 %v5863
    %v5865 = vand.u32 %v32, 4294901760
    %5866 = vmatpush.msra.mxu0 %v5865
    %v5867 = vand.u32 %v5725, 4294901760
    %v5868 = vsub.f32 %v5725, %v5867
    %v5869 = vand.u32 %v5868, 4294901760
    %5870 = vmatmul.f32.gmra.mxu0 %v5869
    %v5871 = vpop.f32.mrf.mxu0
    %v5872 = vadd.f32 %v5840, %v5871
    %v5873 = vand.u32 %v5728, 4294901760
    %v5874 = vsub.f32 %v5728, %v5873
    %v5875 = vand.u32 %v5874, 4294901760
    %5876 = vmatmul.f32.gmra.mxu0 %v5875
    %v5877 = vpop.f32.mrf.mxu0
    %v5878 = vadd.f32 %v5845, %v5877
    %5879 = vdwg.mxu0
    %5880 = vmatpush.msra.mxu0 0.0
    %5881 = vmatpush.msra.mxu0 0.0
    %5882 = vmatpush.msra.mxu0 0.0
    %5883 = vmatpush.msra.mxu0 0.0
    %5884 = vmatpush.msra.mxu0 0.0
    %5885 = vmatpush.msra.mxu0 0.0
    %5886 = vmatpush.msra.mxu0 0.0
    %5887 = vmatpush.msra.mxu0 0.0
    %5888 = vmatpush.msra.mxu0 0.0
    %5889 = vmatpush.msra.mxu0 0.0
    %5890 = vmatpush.msra.mxu0 0.0
    %5891 = vmatpush.msra.mxu0 0.0
    %v5892 = vand.u32 %v35, 4294901760
    %v5893 = vsub.f32 %v35, %v5892
    %v5894 = vand.u32 %v5893, 4294901760
    %5895 = vmatpush.msra.mxu0 %v5894
    %v5896 = vand.u32 %v34, 4294901760
    %v5897 = vsub.f32 %v34, %v5896
    %v5898 = vand.u32 %v5897, 4294901760
    %5899 = vmatpush.msra.mxu0 %v5898
    %v5900 = vand.u32 %v33, 4294901760
    %v5901 = vsub.f32 %v33, %v5900
    %v5902 = vand.u32 %v5901, 4294901760
    %5903 = vmatpush.msra.mxu0 %v5902
    %v5904 = vand.u32 %v32, 4294901760
    %v5905 = vsub.f32 %v32, %v5904
    %v5906 = vand.u32 %v5905, 4294901760
    %5907 = vmatpush.msra.mxu0 %v5906
    %v5908 = vand.u32 %v5725, 4294901760
    %5909 = vmatmul.f32.gmra.mxu0 %v5908
    %v5910 = vpop.f32.mrf.mxu0
    %v5911 = vadd.f32 %v5872, %v5910
    %v5912 = vand.u32 %v5728, 4294901760
    %5913 = vmatmul.f32.gmra.mxu0 %v5912
    %v5914 = vpop.f32.mrf.mxu0
    %v5915 = vadd.f32 %v5878, %v5914
    %5916 = vdwg.mxu0
    %5917 = vmatpush.msra.mxu0 0.0
    %5918 = vmatpush.msra.mxu0 0.0
    %5919 = vmatpush.msra.mxu0 0.0
    %5920 = vmatpush.msra.mxu0 0.0
    %5921 = vmatpush.msra.mxu0 0.0
    %5922 = vmatpush.msra.mxu0 0.0
    %5923 = vmatpush.msra.mxu0 0.0
    %5924 = vmatpush.msra.mxu0 0.0
    %5925 = vmatpush.msra.mxu0 0.0
    %5926 = vmatpush.msra.mxu0 0.0
    %5927 = vmatpush.msra.mxu0 0.0
    %5928 = vmatpush.msra.mxu0 0.0
    %v5929 = vand.u32 %v35, 4294901760
    %5930 = vmatpush.msra.mxu0 %v5929
    %v5931 = vand.u32 %v34, 4294901760
    %5932 = vmatpush.msra.mxu0 %v5931
    %v5933 = vand.u32 %v33, 4294901760
    %5934 = vmatpush.msra.mxu0 %v5933
    %v5935 = vand.u32 %v32, 4294901760
    %5936 = vmatpush.msra.mxu0 %v5935
    %v5937 = vand.u32 %v5725, 4294901760
    %5938 = vmatmul.f32.gmra.mxu0 %v5937
    %v5939 = vpop.f32.mrf.mxu0
    %v5940 = vadd.f32 %v5911, %v5939
    %v5941 = vand.u32 %v5728, 4294901760
    %5942 = vmatmul.f32.gmra.mxu0 %v5941
    %v5943 = vpop.f32.mrf.mxu0
    %v5944 = vadd.f32 %v5915, %v5943
    %5945 = vdwg.mxu0
    %v5946 = vsub.f32 %v5722, %v5940
    %v5947 = vsub.f32 %v5723, %v5944
    %v5948 = vmul.f32 %v5946, %v5946
    %v5949 = vmul.f32 %v5947, %v5947
    %v5951 = vsel %vm38, %v5948, 0
    %v5954 = vsel %vm38, %v5949, 0
    %5956 = vmatpush.msra.mxu0 0.0
    %5957 = vmatpush.msra.mxu0 0.0
    %5958 = vmatpush.msra.mxu0 0.0
    %5959 = vmatpush.msra.mxu0 0.0
    %5960 = vmatpush.msra.mxu0 0.0
    %5961 = vmatpush.msra.mxu0 0.0
    %5962 = vmatpush.msra.mxu0 0.0
    %5963 = vmatpush.msra.mxu0 0.0
    %5964 = vmatpush.msra.mxu0 0.0
    %5965 = vmatpush.msra.mxu0 0.0
    %5966 = vmatpush.msra.mxu0 0.0
    %5967 = vmatpush.msra.mxu0 0.0
    %v5968 = vand.u32 %v35, 4294901760
    %5969 = vmatpush.msra.mxu0 %v5968
    %v5970 = vand.u32 %v34, 4294901760
    %5971 = vmatpush.msra.mxu0 %v5970
    %v5972 = vand.u32 %v33, 4294901760
    %5973 = vmatpush.msra.mxu0 %v5972
    %v5974 = vand.u32 %v32, 4294901760
    %5975 = vmatpush.msra.mxu0 %v5974
    %v5976 = vand.u32 %v5951, 4294901760
    %v5977 = vsub.f32 %v5951, %v5976
    %v5978 = vand.u32 %v5977, 4294901760
    %v5979 = vsub.f32 %v5977, %v5978
    %v5980 = vand.u32 %v5979, 4294901760
    %5981 = vmatmul.f32.gmra.mxu0 %v5980
    %v5982 = vpop.f32.mrf.mxu0
    %v5983 = vadd.f32 1e-05, %v5982
    %v5984 = vand.u32 %v5954, 4294901760
    %v5985 = vsub.f32 %v5954, %v5984
    %v5986 = vand.u32 %v5985, 4294901760
    %v5987 = vsub.f32 %v5985, %v5986
    %v5988 = vand.u32 %v5987, 4294901760
    %5989 = vmatmul.f32.gmra.mxu0 %v5988
    %v5990 = vpop.f32.mrf.mxu0
    %v5991 = vadd.f32 1e-05, %v5990
    %5992 = vdwg.mxu0
    %5993 = vmatpush.msra.mxu0 0.0
    %5994 = vmatpush.msra.mxu0 0.0
    %5995 = vmatpush.msra.mxu0 0.0
    %5996 = vmatpush.msra.mxu0 0.0
    %5997 = vmatpush.msra.mxu0 0.0
    %5998 = vmatpush.msra.mxu0 0.0
    %5999 = vmatpush.msra.mxu0 0.0
    %6000 = vmatpush.msra.mxu0 0.0
    %6001 = vmatpush.msra.mxu0 0.0
    %6002 = vmatpush.msra.mxu0 0.0
    %6003 = vmatpush.msra.mxu0 0.0
    %6004 = vmatpush.msra.mxu0 0.0
    %v6005 = vand.u32 %v35, 4294901760
    %v6006 = vsub.f32 %v35, %v6005
    %v6007 = vand.u32 %v6006, 4294901760
    %v6008 = vsub.f32 %v6006, %v6007
    %v6009 = vand.u32 %v6008, 4294901760
    %6010 = vmatpush.msra.mxu0 %v6009
    %v6011 = vand.u32 %v34, 4294901760
    %v6012 = vsub.f32 %v34, %v6011
    %v6013 = vand.u32 %v6012, 4294901760
    %v6014 = vsub.f32 %v6012, %v6013
    %v6015 = vand.u32 %v6014, 4294901760
    %6016 = vmatpush.msra.mxu0 %v6015
    %v6017 = vand.u32 %v33, 4294901760
    %v6018 = vsub.f32 %v33, %v6017
    %v6019 = vand.u32 %v6018, 4294901760
    %v6020 = vsub.f32 %v6018, %v6019
    %v6021 = vand.u32 %v6020, 4294901760
    %6022 = vmatpush.msra.mxu0 %v6021
    %v6023 = vand.u32 %v32, 4294901760
    %v6024 = vsub.f32 %v32, %v6023
    %v6025 = vand.u32 %v6024, 4294901760
    %v6026 = vsub.f32 %v6024, %v6025
    %v6027 = vand.u32 %v6026, 4294901760
    %6028 = vmatpush.msra.mxu0 %v6027
    %v6029 = vand.u32 %v5951, 4294901760
    %6030 = vmatmul.f32.gmra.mxu0 %v6029
    %v6031 = vpop.f32.mrf.mxu0
    %v6032 = vadd.f32 %v5983, %v6031
    %v6033 = vand.u32 %v5954, 4294901760
    %6034 = vmatmul.f32.gmra.mxu0 %v6033
    %v6035 = vpop.f32.mrf.mxu0
    %v6036 = vadd.f32 %v5991, %v6035
    %6037 = vdwg.mxu0
    %6038 = vmatpush.msra.mxu0 0.0
    %6039 = vmatpush.msra.mxu0 0.0
    %6040 = vmatpush.msra.mxu0 0.0
    %6041 = vmatpush.msra.mxu0 0.0
    %6042 = vmatpush.msra.mxu0 0.0
    %6043 = vmatpush.msra.mxu0 0.0
    %6044 = vmatpush.msra.mxu0 0.0
    %6045 = vmatpush.msra.mxu0 0.0
    %6046 = vmatpush.msra.mxu0 0.0
    %6047 = vmatpush.msra.mxu0 0.0
    %6048 = vmatpush.msra.mxu0 0.0
    %6049 = vmatpush.msra.mxu0 0.0
    %v6050 = vand.u32 %v35, 4294901760
    %v6051 = vsub.f32 %v35, %v6050
    %6052 = vmatpush.msra.mxu0 %v6051
    %v6053 = vand.u32 %v34, 4294901760
    %v6054 = vsub.f32 %v34, %v6053
    %6055 = vmatpush.msra.mxu0 %v6054
    %v6056 = vand.u32 %v33, 4294901760
    %v6057 = vsub.f32 %v33, %v6056
    %6058 = vmatpush.msra.mxu0 %v6057
    %v6059 = vand.u32 %v32, 4294901760
    %v6060 = vsub.f32 %v32, %v6059
    %6061 = vmatpush.msra.mxu0 %v6060
    %v6062 = vand.u32 %v5951, 4294901760
    %v6063 = vsub.f32 %v5951, %v6062
    %6064 = vmatmul.f32.gmra.mxu0 %v6063
    %v6065 = vpop.f32.mrf.mxu0
    %v6066 = vadd.f32 %v6032, %v6065
    %v6067 = vand.u32 %v5954, 4294901760
    %v6068 = vsub.f32 %v5954, %v6067
    %6069 = vmatmul.f32.gmra.mxu0 %v6068
    %v6070 = vpop.f32.mrf.mxu0
    %v6071 = vadd.f32 %v6036, %v6070
    %6072 = vdwg.mxu0
    %6073 = vmatpush.msra.mxu0 0.0
    %6074 = vmatpush.msra.mxu0 0.0
    %6075 = vmatpush.msra.mxu0 0.0
    %6076 = vmatpush.msra.mxu0 0.0
    %6077 = vmatpush.msra.mxu0 0.0
    %6078 = vmatpush.msra.mxu0 0.0
    %6079 = vmatpush.msra.mxu0 0.0
    %6080 = vmatpush.msra.mxu0 0.0
    %6081 = vmatpush.msra.mxu0 0.0
    %6082 = vmatpush.msra.mxu0 0.0
    %6083 = vmatpush.msra.mxu0 0.0
    %6084 = vmatpush.msra.mxu0 0.0
    %v6085 = vand.u32 %v35, 4294901760
    %6086 = vmatpush.msra.mxu0 %v6085
    %v6087 = vand.u32 %v34, 4294901760
    %6088 = vmatpush.msra.mxu0 %v6087
    %v6089 = vand.u32 %v33, 4294901760
    %6090 = vmatpush.msra.mxu0 %v6089
    %v6091 = vand.u32 %v32, 4294901760
    %6092 = vmatpush.msra.mxu0 %v6091
    %v6093 = vand.u32 %v5951, 4294901760
    %v6094 = vsub.f32 %v5951, %v6093
    %v6095 = vand.u32 %v6094, 4294901760
    %6096 = vmatmul.f32.gmra.mxu0 %v6095
    %v6097 = vpop.f32.mrf.mxu0
    %v6098 = vadd.f32 %v6066, %v6097
    %v6099 = vand.u32 %v5954, 4294901760
    %v6100 = vsub.f32 %v5954, %v6099
    %v6101 = vand.u32 %v6100, 4294901760
    %6102 = vmatmul.f32.gmra.mxu0 %v6101
    %v6103 = vpop.f32.mrf.mxu0
    %v6104 = vadd.f32 %v6071, %v6103
    %6105 = vdwg.mxu0
    %6106 = vmatpush.msra.mxu0 0.0
    %6107 = vmatpush.msra.mxu0 0.0
    %6108 = vmatpush.msra.mxu0 0.0
    %6109 = vmatpush.msra.mxu0 0.0
    %6110 = vmatpush.msra.mxu0 0.0
    %6111 = vmatpush.msra.mxu0 0.0
    %6112 = vmatpush.msra.mxu0 0.0
    %6113 = vmatpush.msra.mxu0 0.0
    %6114 = vmatpush.msra.mxu0 0.0
    %6115 = vmatpush.msra.mxu0 0.0
    %6116 = vmatpush.msra.mxu0 0.0
    %6117 = vmatpush.msra.mxu0 0.0
    %v6118 = vand.u32 %v35, 4294901760
    %v6119 = vsub.f32 %v35, %v6118
    %v6120 = vand.u32 %v6119, 4294901760
    %6121 = vmatpush.msra.mxu0 %v6120
    %v6122 = vand.u32 %v34, 4294901760
    %v6123 = vsub.f32 %v34, %v6122
    %v6124 = vand.u32 %v6123, 4294901760
    %6125 = vmatpush.msra.mxu0 %v6124
    %v6126 = vand.u32 %v33, 4294901760
    %v6127 = vsub.f32 %v33, %v6126
    %v6128 = vand.u32 %v6127, 4294901760
    %6129 = vmatpush.msra.mxu0 %v6128
    %v6130 = vand.u32 %v32, 4294901760
    %v6131 = vsub.f32 %v32, %v6130
    %v6132 = vand.u32 %v6131, 4294901760
    %6133 = vmatpush.msra.mxu0 %v6132
    %v6134 = vand.u32 %v5951, 4294901760
    %6135 = vmatmul.f32.gmra.mxu0 %v6134
    %v6136 = vpop.f32.mrf.mxu0
    %v6137 = vadd.f32 %v6098, %v6136
    %v6138 = vand.u32 %v5954, 4294901760
    %6139 = vmatmul.f32.gmra.mxu0 %v6138
    %v6140 = vpop.f32.mrf.mxu0
    %v6141 = vadd.f32 %v6104, %v6140
    %6142 = vdwg.mxu0
    %6143 = vmatpush.msra.mxu0 0.0
    %6144 = vmatpush.msra.mxu0 0.0
    %6145 = vmatpush.msra.mxu0 0.0
    %6146 = vmatpush.msra.mxu0 0.0
    %6147 = vmatpush.msra.mxu0 0.0
    %6148 = vmatpush.msra.mxu0 0.0
    %6149 = vmatpush.msra.mxu0 0.0
    %6150 = vmatpush.msra.mxu0 0.0
    %6151 = vmatpush.msra.mxu0 0.0
    %6152 = vmatpush.msra.mxu0 0.0
    %6153 = vmatpush.msra.mxu0 0.0
    %6154 = vmatpush.msra.mxu0 0.0
    %v6155 = vand.u32 %v35, 4294901760
    %6156 = vmatpush.msra.mxu0 %v6155
    %v6157 = vand.u32 %v34, 4294901760
    %6158 = vmatpush.msra.mxu0 %v6157
    %v6159 = vand.u32 %v33, 4294901760
    %6160 = vmatpush.msra.mxu0 %v6159
    %v6161 = vand.u32 %v32, 4294901760
    %6162 = vmatpush.msra.mxu0 %v6161
    %v6163 = vand.u32 %v5951, 4294901760
    %6164 = vmatmul.f32.gmra.mxu0 %v6163
    %v6165 = vpop.f32.mrf.mxu0
    %v6166 = vadd.f32 %v6137, %v6165
    %v6167 = vand.u32 %v5954, 4294901760
    %6168 = vmatmul.f32.gmra.mxu0 %v6167
    %v6169 = vpop.f32.mrf.mxu0
    %v6170 = vadd.f32 %v6141, %v6169
    %6171 = vdwg.mxu0
    %v6172 = vrsqrt.pop %v6166
    %v6173 = vmul.f32 %v6172, %v6166
    %v6174 = vmul.f32 %v6173, %v6172
    %v6175 = vmul.f32 0.5, %v6174
    %v6176 = vsub.f32 1.5, %v6175
    %v6177 = vmul.f32 %v6172, %v6176
    %vm6178 = vweird.f32 %v6166
    %vm6179 = vweird.f32 %v6172
    %vm6180 = vmor %vm6178, %vm6179
    %v6181 = vsel %vm6180, %v6172, %v6177
    %v6182 = vrsqrt.pop %v6170
    %v6183 = vmul.f32 %v6182, %v6170
    %v6184 = vmul.f32 %v6183, %v6182
    %v6185 = vmul.f32 0.5, %v6184
    %v6186 = vsub.f32 1.5, %v6185
    %v6187 = vmul.f32 %v6182, %v6186
    %vm6188 = vweird.f32 %v6170
    %vm6189 = vweird.f32 %v6182
    %vm6190 = vmor %vm6188, %vm6189
    %v6191 = vsel %vm6190, %v6182, %v6187
    %v6192 = vmul.f32 %v5946, %v6181
    %v6193 = vmul.f32 %v5947, %v6191
    %v6194 = vld [vmem:[%s1 + $0xc] sm:$0x1]
    %v6195 = vperm.slane %v6194, 0
    %v6196 = vmul.f32 %v6192, %v6195
    %v6197 = vmul.f32 %v6193, %v6195
    %v6198 = vld [vmem:[%s1 + $0xd] sm:$0x1]
    %v6199 = vperm.slane %v6198, 0
    %v6200 = vadd.f32 %v6196, %v6199
    %v6201 = vadd.f32 %v6197, %v6199
    %v6202 = vld [vmem:[%s2 + $0x40] sm:$0xff]
    %v6203 = vld [vmem:[%s2 + $0x48] sm:$0xff]
    %v6204 = vld [vmem:[%s2 + $0x50] sm:$0xff]
    %v6205 = vld [vmem:[%s2 + $0x58] sm:$0xff]
    %v6206 = vld [vmem:[%s2 + $0x62] sm:$0x1]
    %v6207 = vperm.slane %v6206, 0
    %v6209 = vsel %vm38, %v6200, 0
    %v6212 = vsel %vm38, %v6201, 0
    %6214 = vmatpush.msra.mxu0 0.0
    %6215 = vmatpush.msra.mxu0 0.0
    %6216 = vmatpush.msra.mxu0 0.0
    %6217 = vmatpush.msra.mxu0 0.0
    %6218 = vmatpush.msra.mxu0 0.0
    %6219 = vmatpush.msra.mxu0 0.0
    %6220 = vmatpush.msra.mxu0 0.0
    %6221 = vmatpush.msra.mxu0 0.0
    %6222 = vmatpush.msra.mxu0 0.0
    %6223 = vmatpush.msra.mxu0 0.0
    %6224 = vmatpush.msra.mxu0 0.0
    %6225 = vmatpush.msra.mxu0 0.0
    %6226 = vmatpush.msra.mxu0 %v6205
    %6227 = vmatpush.msra.mxu0 %v6204
    %6228 = vmatpush.msra.mxu0 %v6203
    %6229 = vmatpush.msra.mxu0 %v6202
    %6230 = vmatmul.f32.gmra.mxu0 %v6209
    %v6231 = vpop.f32.mrf.mxu0
    %v6232 = vadd.f32 %v6207, %v6231
    %6233 = vmatmul.f32.gmra.mxu0 %v6212
    %v6234 = vpop.f32.mrf.mxu0
    %v6235 = vadd.f32 %v6207, %v6234
    %6236 = vdwg.mxu0
    %v6237 = vand.u32 2147483647, %v6232
    %v6238 = vand.u32 2147483647, %v6235
    %v6239 = vsub.f32 0.0, %v6237
    %v6240 = vsub.f32 0.0, %v6238
    %v6241 = vmul.f32 %v6239, 1.442695
    %v6242 = vpow.pop %v6241
    %v6243 = vmul.f32 %v6240, 1.442695
    %v6244 = vpow.pop %v6243
    %v6245 = vadd.f32 %v6242, 1.0
    %v6246 = vadd.f32 %v6244, 1.0
    %v6247 = vrcp.pop %v6245
    %v6248 = vrcp.pop %v6246
    %vm6249 = vcmp.ge.f32.partialorder %v6232, 0.0
    %vm6250 = vcmp.ge.f32.partialorder %v6235, 0.0
    %v6251 = vmul.f32 %v6242, %v6247
    %v6252 = vmul.f32 %v6244, %v6248
    %v6253 = vsel %vm6249, %v6247, %v6251
    %v6254 = vsel %vm6250, %v6248, %v6252
    %v6255 = vmul.f32 %v6232, %v6253
    %v6256 = vmul.f32 %v6235, %v6254
    %v6257 = vld [vmem:[%s1 + $0x168] sm:$0xff]
    %v6258 = vld [vmem:[%s1 + $0x170] sm:$0xff]
    %v6259 = vld [vmem:[%s1 + $0x178] sm:$0xff]
    %v6260 = vld [vmem:[%s1 + $0x180] sm:$0xff]
    %v6261 = vld [vmem:[%s1 + $0x188] sm:$0xff]
    %v6262 = vld [vmem:[%s1 + $0x190] sm:$0xff]
    %v6263 = vld [vmem:[%s1 + $0x198] sm:$0xff]
    %v6264 = vld [vmem:[%s1 + $0x1a0] sm:$0xff]
    %v6265 = vld [vmem:[%s1 + $0x1a8] sm:$0xff]
    %v6266 = vld [vmem:[%s1 + $0x1b0] sm:$0xff]
    %v6267 = vld [vmem:[%s1 + $0x1b8] sm:$0xff]
    %v6268 = vld [vmem:[%s1 + $0x1c0] sm:$0xff]
    %v6269 = vld [vmem:[%s1 + $0x1c8] sm:$0xff]
    %v6270 = vld [vmem:[%s1 + $0x1d0] sm:$0xff]
    %v6271 = vld [vmem:[%s1 + $0x1d8] sm:$0xff]
    %v6272 = vld [vmem:[%s1 + $0x1e0] sm:$0xff]
    %v6273 = vld [vmem:[%s1 + $0xe] sm:$0x1]
    %v6274 = vperm.slane %v6273, 0
    %6275 = vmatpush.msra.mxu0 %v6272
    %6276 = vmatpush.msra.mxu0 %v6271
    %6277 = vmatpush.msra.mxu0 %v6270
    %6278 = vmatpush.msra.mxu0 %v6269
    %6279 = vmatpush.msra.mxu0 %v6268
    %6280 = vmatpush.msra.mxu0 %v6267
    %6281 = vmatpush.msra.mxu0 %v6266
    %6282 = vmatpush.msra.mxu0 %v6265
    %6283 = vmatpush.msra.mxu0 %v6264
    %6284 = vmatpush.msra.mxu0 %v6263
    %6285 = vmatpush.msra.mxu0 %v6262
    %6286 = vmatpush.msra.mxu0 %v6261
    %6287 = vmatpush.msra.mxu0 %v6260
    %6288 = vmatpush.msra.mxu0 %v6259
    %6289 = vmatpush.msra.mxu0 %v6258
    %6290 = vmatpush.msra.mxu0 %v6257
    %6291 = vmatmul.f32.gmra.mxu0 %v6255
    %v6292 = vpop.f32.mrf.mxu0
    %v6293 = vadd.f32 %v6274, %v6292
    %6294 = vmatmul.f32.gmra.mxu0 %v6256
    %v6295 = vpop.f32.mrf.mxu0
    %v6296 = vadd.f32 %v6274, %v6295
    %6297 = vdwg.mxu0
    %v6298 = vmul.f32 %v6293, 0.5
    %v6299 = vmul.f32 %v6296, 0.5
    %v6300 = vadd.f32 %v6298, %v5722
    %v6301 = vadd.f32 %v6299, %v5723
    %v6303 = vsel %vm38, %v6300, 0
    %v6306 = vsel %vm38, %v6301, 0
    %6308 = vmatpush.msra.mxu0 0.0
    %6309 = vmatpush.msra.mxu0 0.0
    %6310 = vmatpush.msra.mxu0 0.0
    %6311 = vmatpush.msra.mxu0 0.0
    %6312 = vmatpush.msra.mxu0 0.0
    %6313 = vmatpush.msra.mxu0 0.0
    %6314 = vmatpush.msra.mxu0 0.0
    %6315 = vmatpush.msra.mxu0 0.0
    %6316 = vmatpush.msra.mxu0 0.0
    %6317 = vmatpush.msra.mxu0 0.0
    %6318 = vmatpush.msra.mxu0 0.0
    %6319 = vmatpush.msra.mxu0 0.0
    %v6320 = vand.u32 %v35, 4294901760
    %6321 = vmatpush.msra.mxu0 %v6320
    %v6322 = vand.u32 %v34, 4294901760
    %6323 = vmatpush.msra.mxu0 %v6322
    %v6324 = vand.u32 %v33, 4294901760
    %6325 = vmatpush.msra.mxu0 %v6324
    %v6326 = vand.u32 %v32, 4294901760
    %6327 = vmatpush.msra.mxu0 %v6326
    %v6328 = vand.u32 %v6303, 4294901760
    %v6329 = vsub.f32 %v6303, %v6328
    %v6330 = vand.u32 %v6329, 4294901760
    %v6331 = vsub.f32 %v6329, %v6330
    %v6332 = vand.u32 %v6331, 4294901760
    %6333 = vmatmul.f32.gmra.mxu0 %v6332
    %v6334 = vpop.f32.mrf.mxu0
    %v6335 = vadd.f32 0.0, %v6334
    %v6336 = vand.u32 %v6306, 4294901760
    %v6337 = vsub.f32 %v6306, %v6336
    %v6338 = vand.u32 %v6337, 4294901760
    %v6339 = vsub.f32 %v6337, %v6338
    %v6340 = vand.u32 %v6339, 4294901760
    %6341 = vmatmul.f32.gmra.mxu0 %v6340
    %v6342 = vpop.f32.mrf.mxu0
    %v6343 = vadd.f32 0.0, %v6342
    %6344 = vdwg.mxu0
    %6345 = vmatpush.msra.mxu0 0.0
    %6346 = vmatpush.msra.mxu0 0.0
    %6347 = vmatpush.msra.mxu0 0.0
    %6348 = vmatpush.msra.mxu0 0.0
    %6349 = vmatpush.msra.mxu0 0.0
    %6350 = vmatpush.msra.mxu0 0.0
    %6351 = vmatpush.msra.mxu0 0.0
    %6352 = vmatpush.msra.mxu0 0.0
    %6353 = vmatpush.msra.mxu0 0.0
    %6354 = vmatpush.msra.mxu0 0.0
    %6355 = vmatpush.msra.mxu0 0.0
    %6356 = vmatpush.msra.mxu0 0.0
    %v6357 = vand.u32 %v35, 4294901760
    %v6358 = vsub.f32 %v35, %v6357
    %v6359 = vand.u32 %v6358, 4294901760
    %v6360 = vsub.f32 %v6358, %v6359
    %v6361 = vand.u32 %v6360, 4294901760
    %6362 = vmatpush.msra.mxu0 %v6361
    %v6363 = vand.u32 %v34, 4294901760
    %v6364 = vsub.f32 %v34, %v6363
    %v6365 = vand.u32 %v6364, 4294901760
    %v6366 = vsub.f32 %v6364, %v6365
    %v6367 = vand.u32 %v6366, 4294901760
    %6368 = vmatpush.msra.mxu0 %v6367
    %v6369 = vand.u32 %v33, 4294901760
    %v6370 = vsub.f32 %v33, %v6369
    %v6371 = vand.u32 %v6370, 4294901760
    %v6372 = vsub.f32 %v6370, %v6371
    %v6373 = vand.u32 %v6372, 4294901760
    %6374 = vmatpush.msra.mxu0 %v6373
    %v6375 = vand.u32 %v32, 4294901760
    %v6376 = vsub.f32 %v32, %v6375
    %v6377 = vand.u32 %v6376, 4294901760
    %v6378 = vsub.f32 %v6376, %v6377
    %v6379 = vand.u32 %v6378, 4294901760
    %6380 = vmatpush.msra.mxu0 %v6379
    %v6381 = vand.u32 %v6303, 4294901760
    %6382 = vmatmul.f32.gmra.mxu0 %v6381
    %v6383 = vpop.f32.mrf.mxu0
    %v6384 = vadd.f32 %v6335, %v6383
    %v6385 = vand.u32 %v6306, 4294901760
    %6386 = vmatmul.f32.gmra.mxu0 %v6385
    %v6387 = vpop.f32.mrf.mxu0
    %v6388 = vadd.f32 %v6343, %v6387
    %6389 = vdwg.mxu0
    %6390 = vmatpush.msra.mxu0 0.0
    %6391 = vmatpush.msra.mxu0 0.0
    %6392 = vmatpush.msra.mxu0 0.0
    %6393 = vmatpush.msra.mxu0 0.0
    %6394 = vmatpush.msra.mxu0 0.0
    %6395 = vmatpush.msra.mxu0 0.0
    %6396 = vmatpush.msra.mxu0 0.0
    %6397 = vmatpush.msra.mxu0 0.0
    %6398 = vmatpush.msra.mxu0 0.0
    %6399 = vmatpush.msra.mxu0 0.0
    %6400 = vmatpush.msra.mxu0 0.0
    %6401 = vmatpush.msra.mxu0 0.0
    %v6402 = vand.u32 %v35, 4294901760
    %v6403 = vsub.f32 %v35, %v6402
    %6404 = vmatpush.msra.mxu0 %v6403
    %v6405 = vand.u32 %v34, 4294901760
    %v6406 = vsub.f32 %v34, %v6405
    %6407 = vmatpush.msra.mxu0 %v6406
    %v6408 = vand.u32 %v33, 4294901760
    %v6409 = vsub.f32 %v33, %v6408
    %6410 = vmatpush.msra.mxu0 %v6409
    %v6411 = vand.u32 %v32, 4294901760
    %v6412 = vsub.f32 %v32, %v6411
    %6413 = vmatpush.msra.mxu0 %v6412
    %v6414 = vand.u32 %v6303, 4294901760
    %v6415 = vsub.f32 %v6303, %v6414
    %6416 = vmatmul.f32.gmra.mxu0 %v6415
    %v6417 = vpop.f32.mrf.mxu0
    %v6418 = vadd.f32 %v6384, %v6417
    %v6419 = vand.u32 %v6306, 4294901760
    %v6420 = vsub.f32 %v6306, %v6419
    %6421 = vmatmul.f32.gmra.mxu0 %v6420
    %v6422 = vpop.f32.mrf.mxu0
    %v6423 = vadd.f32 %v6388, %v6422
    %6424 = vdwg.mxu0
    %6425 = vmatpush.msra.mxu0 0.0
    %6426 = vmatpush.msra.mxu0 0.0
    %6427 = vmatpush.msra.mxu0 0.0
    %6428 = vmatpush.msra.mxu0 0.0
    %6429 = vmatpush.msra.mxu0 0.0
    %6430 = vmatpush.msra.mxu0 0.0
    %6431 = vmatpush.msra.mxu0 0.0
    %6432 = vmatpush.msra.mxu0 0.0
    %6433 = vmatpush.msra.mxu0 0.0
    %6434 = vmatpush.msra.mxu0 0.0
    %6435 = vmatpush.msra.mxu0 0.0
    %6436 = vmatpush.msra.mxu0 0.0
    %v6437 = vand.u32 %v35, 4294901760
    %6438 = vmatpush.msra.mxu0 %v6437
    %v6439 = vand.u32 %v34, 4294901760
    %6440 = vmatpush.msra.mxu0 %v6439
    %v6441 = vand.u32 %v33, 4294901760
    %6442 = vmatpush.msra.mxu0 %v6441
    %v6443 = vand.u32 %v32, 4294901760
    %6444 = vmatpush.msra.mxu0 %v6443
    %v6445 = vand.u32 %v6303, 4294901760
    %v6446 = vsub.f32 %v6303, %v6445
    %v6447 = vand.u32 %v6446, 4294901760
    %6448 = vmatmul.f32.gmra.mxu0 %v6447
    %v6449 = vpop.f32.mrf.mxu0
    %v6450 = vadd.f32 %v6418, %v6449
    %v6451 = vand.u32 %v6306, 4294901760
    %v6452 = vsub.f32 %v6306, %v6451
    %v6453 = vand.u32 %v6452, 4294901760
    %6454 = vmatmul.f32.gmra.mxu0 %v6453
    %v6455 = vpop.f32.mrf.mxu0
    %v6456 = vadd.f32 %v6423, %v6455
    %6457 = vdwg.mxu0
    %6458 = vmatpush.msra.mxu0 0.0
    %6459 = vmatpush.msra.mxu0 0.0
    %6460 = vmatpush.msra.mxu0 0.0
    %6461 = vmatpush.msra.mxu0 0.0
    %6462 = vmatpush.msra.mxu0 0.0
    %6463 = vmatpush.msra.mxu0 0.0
    %6464 = vmatpush.msra.mxu0 0.0
    %6465 = vmatpush.msra.mxu0 0.0
    %6466 = vmatpush.msra.mxu0 0.0
    %6467 = vmatpush.msra.mxu0 0.0
    %6468 = vmatpush.msra.mxu0 0.0
    %6469 = vmatpush.msra.mxu0 0.0
    %v6470 = vand.u32 %v35, 4294901760
    %v6471 = vsub.f32 %v35, %v6470
    %v6472 = vand.u32 %v6471, 4294901760
    %6473 = vmatpush.msra.mxu0 %v6472
    %v6474 = vand.u32 %v34, 4294901760
    %v6475 = vsub.f32 %v34, %v6474
    %v6476 = vand.u32 %v6475, 4294901760
    %6477 = vmatpush.msra.mxu0 %v6476
    %v6478 = vand.u32 %v33, 4294901760
    %v6479 = vsub.f32 %v33, %v6478
    %v6480 = vand.u32 %v6479, 4294901760
    %6481 = vmatpush.msra.mxu0 %v6480
    %v6482 = vand.u32 %v32, 4294901760
    %v6483 = vsub.f32 %v32, %v6482
    %v6484 = vand.u32 %v6483, 4294901760
    %6485 = vmatpush.msra.mxu0 %v6484
    %v6486 = vand.u32 %v6303, 4294901760
    %6487 = vmatmul.f32.gmra.mxu0 %v6486
    %v6488 = vpop.f32.mrf.mxu0
    %v6489 = vadd.f32 %v6450, %v6488
    %v6490 = vand.u32 %v6306, 4294901760
    %6491 = vmatmul.f32.gmra.mxu0 %v6490
    %v6492 = vpop.f32.mrf.mxu0
    %v6493 = vadd.f32 %v6456, %v6492
    %6494 = vdwg.mxu0
    %6495 = vmatpush.msra.mxu0 0.0
    %6496 = vmatpush.msra.mxu0 0.0
    %6497 = vmatpush.msra.mxu0 0.0
    %6498 = vmatpush.msra.mxu0 0.0
    %6499 = vmatpush.msra.mxu0 0.0
    %6500 = vmatpush.msra.mxu0 0.0
    %6501 = vmatpush.msra.mxu0 0.0
    %6502 = vmatpush.msra.mxu0 0.0
    %6503 = vmatpush.msra.mxu0 0.0
    %6504 = vmatpush.msra.mxu0 0.0
    %6505 = vmatpush.msra.mxu0 0.0
    %6506 = vmatpush.msra.mxu0 0.0
    %v6507 = vand.u32 %v35, 4294901760
    %6508 = vmatpush.msra.mxu0 %v6507
    %v6509 = vand.u32 %v34, 4294901760
    %6510 = vmatpush.msra.mxu0 %v6509
    %v6511 = vand.u32 %v33, 4294901760
    %6512 = vmatpush.msra.mxu0 %v6511
    %v6513 = vand.u32 %v32, 4294901760
    %6514 = vmatpush.msra.mxu0 %v6513
    %v6515 = vand.u32 %v6303, 4294901760
    %6516 = vmatmul.f32.gmra.mxu0 %v6515
    %v6517 = vpop.f32.mrf.mxu0
    %v6518 = vadd.f32 %v6489, %v6517
    %v6519 = vand.u32 %v6306, 4294901760
    %6520 = vmatmul.f32.gmra.mxu0 %v6519
    %v6521 = vpop.f32.mrf.mxu0
    %v6522 = vadd.f32 %v6493, %v6521
    %6523 = vdwg.mxu0
    %v6524 = vsub.f32 %v6300, %v6518
    %v6525 = vsub.f32 %v6301, %v6522
    %v6526 = vmul.f32 %v6524, %v6524
    %v6527 = vmul.f32 %v6525, %v6525
    %v6529 = vsel %vm38, %v6526, 0
    %v6532 = vsel %vm38, %v6527, 0
    %6534 = vmatpush.msra.mxu0 0.0
    %6535 = vmatpush.msra.mxu0 0.0
    %6536 = vmatpush.msra.mxu0 0.0
    %6537 = vmatpush.msra.mxu0 0.0
    %6538 = vmatpush.msra.mxu0 0.0
    %6539 = vmatpush.msra.mxu0 0.0
    %6540 = vmatpush.msra.mxu0 0.0
    %6541 = vmatpush.msra.mxu0 0.0
    %6542 = vmatpush.msra.mxu0 0.0
    %6543 = vmatpush.msra.mxu0 0.0
    %6544 = vmatpush.msra.mxu0 0.0
    %6545 = vmatpush.msra.mxu0 0.0
    %v6546 = vand.u32 %v35, 4294901760
    %6547 = vmatpush.msra.mxu0 %v6546
    %v6548 = vand.u32 %v34, 4294901760
    %6549 = vmatpush.msra.mxu0 %v6548
    %v6550 = vand.u32 %v33, 4294901760
    %6551 = vmatpush.msra.mxu0 %v6550
    %v6552 = vand.u32 %v32, 4294901760
    %6553 = vmatpush.msra.mxu0 %v6552
    %v6554 = vand.u32 %v6529, 4294901760
    %v6555 = vsub.f32 %v6529, %v6554
    %v6556 = vand.u32 %v6555, 4294901760
    %v6557 = vsub.f32 %v6555, %v6556
    %v6558 = vand.u32 %v6557, 4294901760
    %6559 = vmatmul.f32.gmra.mxu0 %v6558
    %v6560 = vpop.f32.mrf.mxu0
    %v6561 = vadd.f32 1e-05, %v6560
    %v6562 = vand.u32 %v6532, 4294901760
    %v6563 = vsub.f32 %v6532, %v6562
    %v6564 = vand.u32 %v6563, 4294901760
    %v6565 = vsub.f32 %v6563, %v6564
    %v6566 = vand.u32 %v6565, 4294901760
    %6567 = vmatmul.f32.gmra.mxu0 %v6566
    %v6568 = vpop.f32.mrf.mxu0
    %v6569 = vadd.f32 1e-05, %v6568
    %6570 = vdwg.mxu0
    %6571 = vmatpush.msra.mxu0 0.0
    %6572 = vmatpush.msra.mxu0 0.0
    %6573 = vmatpush.msra.mxu0 0.0
    %6574 = vmatpush.msra.mxu0 0.0
    %6575 = vmatpush.msra.mxu0 0.0
    %6576 = vmatpush.msra.mxu0 0.0
    %6577 = vmatpush.msra.mxu0 0.0
    %6578 = vmatpush.msra.mxu0 0.0
    %6579 = vmatpush.msra.mxu0 0.0
    %6580 = vmatpush.msra.mxu0 0.0
    %6581 = vmatpush.msra.mxu0 0.0
    %6582 = vmatpush.msra.mxu0 0.0
    %v6583 = vand.u32 %v35, 4294901760
    %v6584 = vsub.f32 %v35, %v6583
    %v6585 = vand.u32 %v6584, 4294901760
    %v6586 = vsub.f32 %v6584, %v6585
    %v6587 = vand.u32 %v6586, 4294901760
    %6588 = vmatpush.msra.mxu0 %v6587
    %v6589 = vand.u32 %v34, 4294901760
    %v6590 = vsub.f32 %v34, %v6589
    %v6591 = vand.u32 %v6590, 4294901760
    %v6592 = vsub.f32 %v6590, %v6591
    %v6593 = vand.u32 %v6592, 4294901760
    %6594 = vmatpush.msra.mxu0 %v6593
    %v6595 = vand.u32 %v33, 4294901760
    %v6596 = vsub.f32 %v33, %v6595
    %v6597 = vand.u32 %v6596, 4294901760
    %v6598 = vsub.f32 %v6596, %v6597
    %v6599 = vand.u32 %v6598, 4294901760
    %6600 = vmatpush.msra.mxu0 %v6599
    %v6601 = vand.u32 %v32, 4294901760
    %v6602 = vsub.f32 %v32, %v6601
    %v6603 = vand.u32 %v6602, 4294901760
    %v6604 = vsub.f32 %v6602, %v6603
    %v6605 = vand.u32 %v6604, 4294901760
    %6606 = vmatpush.msra.mxu0 %v6605
    %v6607 = vand.u32 %v6529, 4294901760
    %6608 = vmatmul.f32.gmra.mxu0 %v6607
    %v6609 = vpop.f32.mrf.mxu0
    %v6610 = vadd.f32 %v6561, %v6609
    %v6611 = vand.u32 %v6532, 4294901760
    %6612 = vmatmul.f32.gmra.mxu0 %v6611
    %v6613 = vpop.f32.mrf.mxu0
    %v6614 = vadd.f32 %v6569, %v6613
    %6615 = vdwg.mxu0
    %6616 = vmatpush.msra.mxu0 0.0
    %6617 = vmatpush.msra.mxu0 0.0
    %6618 = vmatpush.msra.mxu0 0.0
    %6619 = vmatpush.msra.mxu0 0.0
    %6620 = vmatpush.msra.mxu0 0.0
    %6621 = vmatpush.msra.mxu0 0.0
    %6622 = vmatpush.msra.mxu0 0.0
    %6623 = vmatpush.msra.mxu0 0.0
    %6624 = vmatpush.msra.mxu0 0.0
    %6625 = vmatpush.msra.mxu0 0.0
    %6626 = vmatpush.msra.mxu0 0.0
    %6627 = vmatpush.msra.mxu0 0.0
    %v6628 = vand.u32 %v35, 4294901760
    %v6629 = vsub.f32 %v35, %v6628
    %6630 = vmatpush.msra.mxu0 %v6629
    %v6631 = vand.u32 %v34, 4294901760
    %v6632 = vsub.f32 %v34, %v6631
    %6633 = vmatpush.msra.mxu0 %v6632
    %v6634 = vand.u32 %v33, 4294901760
    %v6635 = vsub.f32 %v33, %v6634
    %6636 = vmatpush.msra.mxu0 %v6635
    %v6637 = vand.u32 %v32, 4294901760
    %v6638 = vsub.f32 %v32, %v6637
    %6639 = vmatpush.msra.mxu0 %v6638
    %v6640 = vand.u32 %v6529, 4294901760
    %v6641 = vsub.f32 %v6529, %v6640
    %6642 = vmatmul.f32.gmra.mxu0 %v6641
    %v6643 = vpop.f32.mrf.mxu0
    %v6644 = vadd.f32 %v6610, %v6643
    %v6645 = vand.u32 %v6532, 4294901760
    %v6646 = vsub.f32 %v6532, %v6645
    %6647 = vmatmul.f32.gmra.mxu0 %v6646
    %v6648 = vpop.f32.mrf.mxu0
    %v6649 = vadd.f32 %v6614, %v6648
    %6650 = vdwg.mxu0
    %6651 = vmatpush.msra.mxu0 0.0
    %6652 = vmatpush.msra.mxu0 0.0
    %6653 = vmatpush.msra.mxu0 0.0
    %6654 = vmatpush.msra.mxu0 0.0
    %6655 = vmatpush.msra.mxu0 0.0
    %6656 = vmatpush.msra.mxu0 0.0
    %6657 = vmatpush.msra.mxu0 0.0
    %6658 = vmatpush.msra.mxu0 0.0
    %6659 = vmatpush.msra.mxu0 0.0
    %6660 = vmatpush.msra.mxu0 0.0
    %6661 = vmatpush.msra.mxu0 0.0
    %6662 = vmatpush.msra.mxu0 0.0
    %v6663 = vand.u32 %v35, 4294901760
    %6664 = vmatpush.msra.mxu0 %v6663
    %v6665 = vand.u32 %v34, 4294901760
    %6666 = vmatpush.msra.mxu0 %v6665
    %v6667 = vand.u32 %v33, 4294901760
    %6668 = vmatpush.msra.mxu0 %v6667
    %v6669 = vand.u32 %v32, 4294901760
    %6670 = vmatpush.msra.mxu0 %v6669
    %v6671 = vand.u32 %v6529, 4294901760
    %v6672 = vsub.f32 %v6529, %v6671
    %v6673 = vand.u32 %v6672, 4294901760
    %6674 = vmatmul.f32.gmra.mxu0 %v6673
    %v6675 = vpop.f32.mrf.mxu0
    %v6676 = vadd.f32 %v6644, %v6675
    %v6677 = vand.u32 %v6532, 4294901760
    %v6678 = vsub.f32 %v6532, %v6677
    %v6679 = vand.u32 %v6678, 4294901760
    %6680 = vmatmul.f32.gmra.mxu0 %v6679
    %v6681 = vpop.f32.mrf.mxu0
    %v6682 = vadd.f32 %v6649, %v6681
    %6683 = vdwg.mxu0
    %6684 = vmatpush.msra.mxu0 0.0
    %6685 = vmatpush.msra.mxu0 0.0
    %6686 = vmatpush.msra.mxu0 0.0
    %6687 = vmatpush.msra.mxu0 0.0
    %6688 = vmatpush.msra.mxu0 0.0
    %6689 = vmatpush.msra.mxu0 0.0
    %6690 = vmatpush.msra.mxu0 0.0
    %6691 = vmatpush.msra.mxu0 0.0
    %6692 = vmatpush.msra.mxu0 0.0
    %6693 = vmatpush.msra.mxu0 0.0
    %6694 = vmatpush.msra.mxu0 0.0
    %6695 = vmatpush.msra.mxu0 0.0
    %v6696 = vand.u32 %v35, 4294901760
    %v6697 = vsub.f32 %v35, %v6696
    %v6698 = vand.u32 %v6697, 4294901760
    %6699 = vmatpush.msra.mxu0 %v6698
    %v6700 = vand.u32 %v34, 4294901760
    %v6701 = vsub.f32 %v34, %v6700
    %v6702 = vand.u32 %v6701, 4294901760
    %6703 = vmatpush.msra.mxu0 %v6702
    %v6704 = vand.u32 %v33, 4294901760
    %v6705 = vsub.f32 %v33, %v6704
    %v6706 = vand.u32 %v6705, 4294901760
    %6707 = vmatpush.msra.mxu0 %v6706
    %v6708 = vand.u32 %v32, 4294901760
    %v6709 = vsub.f32 %v32, %v6708
    %v6710 = vand.u32 %v6709, 4294901760
    %6711 = vmatpush.msra.mxu0 %v6710
    %v6712 = vand.u32 %v6529, 4294901760
    %6713 = vmatmul.f32.gmra.mxu0 %v6712
    %v6714 = vpop.f32.mrf.mxu0
    %v6715 = vadd.f32 %v6676, %v6714
    %v6716 = vand.u32 %v6532, 4294901760
    %6717 = vmatmul.f32.gmra.mxu0 %v6716
    %v6718 = vpop.f32.mrf.mxu0
    %v6719 = vadd.f32 %v6682, %v6718
    %6720 = vdwg.mxu0
    %6721 = vmatpush.msra.mxu0 0.0
    %6722 = vmatpush.msra.mxu0 0.0
    %6723 = vmatpush.msra.mxu0 0.0
    %6724 = vmatpush.msra.mxu0 0.0
    %6725 = vmatpush.msra.mxu0 0.0
    %6726 = vmatpush.msra.mxu0 0.0
    %6727 = vmatpush.msra.mxu0 0.0
    %6728 = vmatpush.msra.mxu0 0.0
    %6729 = vmatpush.msra.mxu0 0.0
    %6730 = vmatpush.msra.mxu0 0.0
    %6731 = vmatpush.msra.mxu0 0.0
    %6732 = vmatpush.msra.mxu0 0.0
    %v6733 = vand.u32 %v35, 4294901760
    %6734 = vmatpush.msra.mxu0 %v6733
    %v6735 = vand.u32 %v34, 4294901760
    %6736 = vmatpush.msra.mxu0 %v6735
    %v6737 = vand.u32 %v33, 4294901760
    %6738 = vmatpush.msra.mxu0 %v6737
    %v6739 = vand.u32 %v32, 4294901760
    %6740 = vmatpush.msra.mxu0 %v6739
    %v6741 = vand.u32 %v6529, 4294901760
    %6742 = vmatmul.f32.gmra.mxu0 %v6741
    %v6743 = vpop.f32.mrf.mxu0
    %v6744 = vadd.f32 %v6715, %v6743
    %v6745 = vand.u32 %v6532, 4294901760
    %6746 = vmatmul.f32.gmra.mxu0 %v6745
    %v6747 = vpop.f32.mrf.mxu0
    %v6748 = vadd.f32 %v6719, %v6747
    %6749 = vdwg.mxu0
    %v6750 = vrsqrt.pop %v6744
    %v6751 = vmul.f32 %v6750, %v6744
    %v6752 = vmul.f32 %v6751, %v6750
    %v6753 = vmul.f32 0.5, %v6752
    %v6754 = vsub.f32 1.5, %v6753
    %v6755 = vmul.f32 %v6750, %v6754
    %vm6756 = vweird.f32 %v6744
    %vm6757 = vweird.f32 %v6750
    %vm6758 = vmor %vm6756, %vm6757
    %v6759 = vsel %vm6758, %v6750, %v6755
    %v6760 = vrsqrt.pop %v6748
    %v6761 = vmul.f32 %v6760, %v6748
    %v6762 = vmul.f32 %v6761, %v6760
    %v6763 = vmul.f32 0.5, %v6762
    %v6764 = vsub.f32 1.5, %v6763
    %v6765 = vmul.f32 %v6760, %v6764
    %vm6766 = vweird.f32 %v6748
    %vm6767 = vweird.f32 %v6760
    %vm6768 = vmor %vm6766, %vm6767
    %v6769 = vsel %vm6768, %v6760, %v6765
    %v6770 = vmul.f32 %v6524, %v6759
    %v6771 = vmul.f32 %v6525, %v6769
    %v6772 = vld [vmem:[%s1 + $0xf] sm:$0x1]
    %v6773 = vperm.slane %v6772, 0
    %v6774 = vmul.f32 %v6770, %v6773
    %v6775 = vmul.f32 %v6771, %v6773
    %v6776 = vld [vmem:[%s1 + $0x10] sm:$0x1]
    %v6777 = vperm.slane %v6776, 0
    %v6778 = vadd.f32 %v6774, %v6777
    %v6779 = vadd.f32 %v6775, %v6777
    %6780 = vst.msk [vmem:[#allocation2] sm:$0xff] %vm38, %v6778
    %6781 = vst.msk [vmem:[#allocation2 + $0x8] sm:$0xff] %vm38, %v6779
    // Predicated region
    $region34: #{conformer_block_pallas.1} parent=1 // pred_check
      _
    $region35: #{conformer_block_pallas.1} parent=1 // pred_check_branch
      %6783 = sbr.rel (0) target = $region37
    $region36: #{conformer_block_pallas.1} parent=1 // pred_region
      %6785 = vsyncadd [#allocation3], 0
      %s6786 = sshll.u32 [#allocation2], 4
      %s6787 = int_to_ptr.vmem [resolvable:$true] %s6786
      %s6788 = sshll.u32 %s8, 4
      %s6789 = int_to_ptr.hbm [resolvable:$true] %s6788
      %6794 = dma.vmem_to_hbm [thread:$0]  %s6787, 256, %s6789, [#allocation3], 128, 128, 8
    $region37: #{conformer_block_pallas.1} parent=1 // pred_fallthru
      _
    // Predicated region
    $region38: #{conformer_block_pallas.1} parent=1 // pred_check
      _
    $region39: #{conformer_block_pallas.1} parent=1 // pred_check_branch
      %6796 = sbr.rel (0) target = $region41
    $region40: #{conformer_block_pallas.1} parent=1 // pred_region
      _
    $region41: #{conformer_block_pallas.1} parent=1 // pred_fallthru
      _
    // Predicated region
    $region42: #{conformer_block_pallas.1} parent=1 // pred_check
      _
    $region43: #{conformer_block_pallas.1} parent=1 // pred_check_branch
      %6798 = sbr.rel (0) target = $region45
    $region44: #{conformer_block_pallas.1} parent=1 // pred_region
      %6800 = dma.done [#allocation3], 256
    $region45: #{conformer_block_pallas.1} parent=1 // pred_fallthru
      _
    // Predicated region
    $region46: #{conformer_block_pallas.1} parent=1 // pred_check
      _
    $region47: #{conformer_block_pallas.1} parent=1 // pred_check_branch
      %6802 = sbr.rel (0) target = $region49
    $region48: #{conformer_block_pallas.1} parent=1 // pred_region
      _
    $region49: #{conformer_block_pallas.1} parent=1 // pred_fallthru
      _
    %6803 = vsyncpa [#allocation3], 1

</llo_original>
